<compile_context>
chip_gen: v7x
topology: tpu7x:2x2x1
jax: 0.10.0
libtpu: 0.0.40
codegen_flags: <defaults>
</compile_context>

<pallas_src>
import functools

import jax
import jax.numpy as jnp
import numpy as np
from jax.experimental import pallas as pl
from jax.experimental.pallas import tpu as pltpu

EPS = 1e-12  # matches torch.nn.functional.normalize default eps


# ----------------------------- math helpers -----------------------------

def _l2n(x):
    """L2 normalize along the last axis (== F.normalize(..., dim=-1)), f32."""
    ss = jnp.sum(x * x, axis=-1, keepdims=True)
    return x * jax.lax.rsqrt(jnp.maximum(ss, EPS * EPS))


def _nres(tok, branch, t):
    """tokens <- l2norm(lerp(tokens, l2norm(branch), t)); t broadcasts (1, D)."""
    br = _l2n(branch)
    return _l2n(tok + (br - tok) * t)


def _normalize_rows(w):  # F.normalize(w, dim=-1)
    n = jnp.sqrt(jnp.sum(w * w, axis=-1, keepdims=True))
    return w / jnp.maximum(n, EPS)


def _normalize_cols(w):  # F.normalize(w, dim=0)
    n = jnp.sqrt(jnp.sum(w * w, axis=0, keepdims=True))
    return w / jnp.maximum(n, EPS)


# ----------------------------- BlockSpec helpers -----------------------------

def _full_spec(shape):
    """Whole array as one block, constant index map (weights / small operands)."""
    n = len(shape)
    return pl.BlockSpec(tuple(shape), lambda *_: (0,) * n)


def _stacked_spec(shape):
    """Leading depth axis indexed by the grid step; trailing dims full."""
    rest = tuple(shape[1:])
    n = len(rest)
    return pl.BlockSpec((1,) + rest, lambda l: (l,) + (0,) * n)


# ----------------------------- encoder kernel -----------------------------

def _encoder_kernel(xp_ref, pw_ref, pos_ref,
                    wqkv_ref, qs_ref, ks_ref, wo_ref, aa_ref,
                    whg_ref, hs_ref, gs_ref, wffo_ref, fa_ref,
                    tok_ref, *, B, N, d, heads, dh, ffi):
    """Patch embed (step 0) + one full nViT layer per depth grid step.

    tok_ref (the output block, constant index over the depth axis) holds the
    (B, N, d) f32 token state resident in VMEM across all depth steps.
    """
    bf16 = jnp.bfloat16
    G = B * heads

    @pl.when(pl.program_id(0) == 0)
    def _patch_embed():
        pd = xp_ref.shape[-1]
        t = jnp.dot(xp_ref[...].reshape(B * N, pd), pw_ref[...],
                    preferred_element_type=jnp.float32)
        t = t.reshape(B, N, d) + pos_ref[...]
        tok_ref[...] = _l2n(t)

    tok = tok_ref[...]                                            # (B, N, d) f32

    # ---- attention: heads-batched, batch dim g = b*heads + h ----
    tok_g = jnp.broadcast_to(tok.astype(bf16)[:, None],
                             (B, heads, N, d)).reshape(G, N, d)
    wqkv = jnp.broadcast_to(wqkv_ref[0][None],
                            (B, heads, d, 3 * dh)).reshape(G, d, 3 * dh)
    qkv = jnp.einsum('gnd,gde->gne', tok_g, wqkv,
                     preferred_element_type=jnp.float32)          # (G, N, 3*dh)
    q = qkv[..., :dh]
    k = qkv[..., dh:2 * dh]
    v = qkv[..., 2 * dh:]

    qs = jnp.broadcast_to(qs_ref[0][None, :, None, :],
                          (B, heads, 1, dh)).reshape(G, 1, dh)
    ks = jnp.broadcast_to(ks_ref[0][None, :, None, :],
                          (B, heads, 1, dh)).reshape(G, 1, dh)
    q = _l2n(q) * qs
    k = _l2n(k) * ks

    s = jnp.einsum('gnd,gmd->gnm', q.astype(bf16), k.astype(bf16),
                   preferred_element_type=jnp.float32)            # (G, N, N)
    s = s - jnp.max(s, axis=-1, keepdims=True)
    p = jnp.exp(s)
    p = p / jnp.sum(p, axis=-1, keepdims=True)        # exact divide (parity)
    o = jnp.einsum('gnm,gmd->gnd', p.astype(bf16), v.astype(bf16),
                   preferred_element_type=jnp.float32)            # (G, N, dh)

    wo = jnp.broadcast_to(wo_ref[0][None],
                          (B, heads, dh, d)).reshape(G, dh, d)
    attn_g = jnp.einsum('gne,ged->gnd', o.astype(bf16), wo,
                        preferred_element_type=jnp.float32)       # (G, N, d)
    attn = jnp.sum(attn_g.reshape(B, heads, N, d), axis=1)        # merge heads
    tok = _nres(tok, attn, aa_ref[0])

    # ---- feed forward: fused hidden/gate projection + SiLU-GLU ----
    hg = jnp.dot(tok.reshape(B * N, d).astype(bf16), whg_ref[0],
                 preferred_element_type=jnp.float32)              # (B*N, 2*ffi)
    h_part = hg[:, :ffi] * hs_ref[0]
    g_part = hg[:, ffi:] * gs_ref[0]                  # gate_scale has sqrt(d) folded
    hidden = g_part * jax.nn.sigmoid(g_part) * h_part
    ff = jnp.dot(hidden.astype(bf16), wffo_ref[0],
                 preferred_element_type=jnp.float32).reshape(B, N, d)
    tok = _nres(tok, ff, fa_ref[0])

    tok_ref[...] = tok


def pallas_encoder(xp, params, cfg):
    B, N, _ = xp.shape
    d = cfg['dim']
    heads, dh = cfg['heads'], cfg['dim_head']
    ffi = int(cfg['mlp_dim'] * 2 / 3)
    depth = cfg['depth']
    enc = params['encoder']

    kern = functools.partial(_encoder_kernel, B=B, N=N, d=d,
                             heads=heads, dh=dh, ffi=ffi)
    stacked = [enc['wqkv'], enc['q_scale'], enc['k_scale'], enc['wo'],
               enc['attn_alpha'], enc['whg'], enc['hidden_scale'],
               enc['gate_scale'], enc['wff_o'], enc['ff_alpha']]
    in_specs = ([_full_spec(xp.shape),
                 _full_spec(params['patch_w'].shape),
                 _full_spec(params['pos_emb'].shape)]
                + [_stacked_spec(a.shape) for a in stacked])
    # NOTE(v7x): the depth axis is inherently sequential; B is folded into the
    # block for occupancy, so this call has no parallel axis (acceptable at
    # this size; split B back into the grid for larger per-step work).
    return pl.pallas_call(
        kern,
        grid=(depth,),
        in_specs=in_specs,
        out_specs=pl.BlockSpec((B, N, d), lambda l: (0, 0, 0)),
        out_shape=jax.ShapeDtypeStruct((B, N, d), jnp.float32),
        compiler_params=pltpu.CompilerParams(
            dimension_semantics=("arbitrary",)),
    )(xp, params['patch_w'], params['pos_emb'], *stacked)


# ----------------------------- decoder kernel -----------------------------

def _decoder_kernel(t_ref, w1, a1, b1, w2, a2, b2, w3, a3, b3, w4, a4, b4,
                    o_ref):
    """Four fused ConvTranspose2d(k=2,s=2)[+BN+ReLU] stages for one batch.

    Block-diagonal weights keep the nested (kh,kw) factors in the column index,
    so every intermediate is a lane-dense (N, G*C) VMEM value and no in-kernel
    spatial interleave is needed.
    """
    bf16 = jnp.bfloat16

    def stage(x, w_ref, sc_ref, sh_ref, relu):
        y = jnp.dot(x.astype(bf16), w_ref[...],
                    preferred_element_type=jnp.float32)
        y = y * sc_ref[...] + sh_ref[...]
        return jnp.maximum(y, 0.0) if relu else y

    x = t_ref[0]                                  # (N, dim) f32 encoder tokens
    x = stage(x, w1, a1, b1, True)
    x = stage(x, w2, a2, b2, True)
    x = stage(x, w3, a3, b3, True)
    x = stage(x, w4, a4, b4, False)
    o_ref[0] = x                                  # (N, 256*num_classes), lane-dense


def pallas_decoder(tokens, dec):
    B, N, d = tokens.shape
    l_out = dec[3]['w'].shape[1]
    flat = []
    in_specs = [pl.BlockSpec((1, N, d), lambda b: (b, 0, 0))]
    for st in dec:
        flat += [st['w'], st['scale'], st['shift']]
        in_specs += [_full_spec(st['w'].shape),
                     _full_spec(st['scale'].shape),
                     _full_spec(st['shift'].shape)]
    return pl.pallas_call(
        _decoder_kernel,
        grid=(B,),
        in_specs=in_specs,
        out_specs=pl.BlockSpec((1, N, l_out), lambda b: (b, 0, 0)),
        out_shape=jax.ShapeDtypeStruct((B, N, l_out), jnp.float32),
        compiler_params=pltpu.CompilerParams(
            dimension_semantics=("parallel",)),
    )(tokens, *flat)


# ----------------------------- parameters -----------------------------

def init_params(key, cfg):
    d = cfg['dim']
    p = cfg['patch_size']
    C = cfg['in_channels']
    heads, dh = cfg['heads'], cfg['dim_head']
    di = heads * dh
    ffi = int(cfg['mlp_dim'] * 2 / 3)
    hp = cfg['image_size'] // p
    n_patches = hp * hp
    depth = cfg['depth']
    scale = d ** 0.5
    lerp_init = (1.0 / depth) / scale

    keys = jax.random.split(key, 64)
    kit = iter(range(64))

    def nrm(shape, s=0.02):
        return jax.random.normal(keys[next(kit)], shape, jnp.float32) * s

    params = {}
    patch_dim = C * p * p
    # NormLinear(patch_dim, dim, norm_dim_in=False): weight (dim, patch_dim),
    # normalized over dim 0; store effective W^T (bf16) for x @ W^T on the MXU.
    params['patch_w'] = _normalize_cols(nrm((d, patch_dim))).T.astype(jnp.bfloat16)
    params['pos_emb'] = nrm((n_patches, d), s=1.0)

    wqkv_l, wo_l, whg_l, wffo_l = [], [], [], []
    for _ in range(depth):
        wq = _normalize_rows(nrm((di, d))).T    # (d, di) norm_dim_in=True (rows), then T
        wk = _normalize_rows(nrm((di, d))).T
        wv = _normalize_rows(nrm((di, d))).T
        # per-head slabs (heads, d, 3*dh): [q | k | v] per head (lane-offset free)
        wq_h = wq.reshape(d, heads, dh).transpose(1, 0, 2)
        wk_h = wk.reshape(d, heads, dh).transpose(1, 0, 2)
        wv_h = wv.reshape(d, heads, dh).transpose(1, 0, 2)
        wqkv_l.append(jnp.concatenate([wq_h, wk_h, wv_h], axis=2))
        wo = _normalize_cols(nrm((d, di))).T    # (di, d) norm_dim_in=False (cols)
        wo_l.append(wo.reshape(heads, dh, d))
        wh = _normalize_rows(nrm((ffi, d))).T
        wg = _normalize_rows(nrm((ffi, d))).T
        whg_l.append(jnp.concatenate([wh, wg], axis=1))          # (d, 2*ffi)
        wffo_l.append(_normalize_cols(nrm((d, ffi))).T)          # (ffi, d)

    params['encoder'] = dict(
        wqkv=jnp.stack(wqkv_l).astype(jnp.bfloat16),             # (depth, heads, d, 3*dh)
        wo=jnp.stack(wo_l).astype(jnp.bfloat16),                 # (depth, heads, dh, d)
        whg=jnp.stack(whg_l).astype(jnp.bfloat16),               # (depth, d, 2*ffi)
        wff_o=jnp.stack(wffo_l).astype(jnp.bfloat16),            # (depth, ffi, d)
        q_scale=jnp.full((depth, heads, dh), dh ** 0.25, jnp.float32),
        k_scale=jnp.full((depth, heads, dh), dh ** 0.25, jnp.float32),
        hidden_scale=jnp.ones((depth, 1, ffi), jnp.float32),
        gate_scale=jnp.full((depth, 1, ffi), scale, jnp.float32),      # * sqrt(dim) folded
        attn_alpha=jnp.full((depth, 1, d), lerp_init * scale, jnp.float32),  # * sqrt(dim)
        ff_alpha=jnp.full((depth, 1, d), lerp_init * scale, jnp.float32),
    )

    # decoder: 3 x (ConvTranspose2d(2,2) + BN + ReLU) + final ConvTranspose2d.
    # Stage i operates on columns grouped as (g, cin) with g = 4**i sub-pixels
    # per original patch; block-diagonal weight appends (kh,kw) to the column
    # index so no spatial interleave is needed until the final XLA gather.
    chans = [d] + list(cfg['dec_channels']) + [cfg['num_classes']]
    dec = []
    g_in = 1
    for i in range(4):
        cin, cout = chans[i], chans[i + 1]
        w = nrm((cin, cout, 2, 2), s=0.1)        # torch ConvTranspose2d weight layout
        wd = jnp.transpose(w, (0, 2, 3, 1)).reshape(cin, 4 * cout)   # cols (kh, kw, cout)
        wb = jnp.kron(jnp.eye(g_in, dtype=jnp.float32), wd)          # block-diagonal
        bias = nrm((cout,), s=0.1)
        if i < 3:
            gamma = jnp.ones((cout,), jnp.float32)
            beta = jnp.zeros((cout,), jnp.float32)
            rmean = jnp.zeros((cout,), jnp.float32)
            rvar = jnp.ones((cout,), jnp.float32)
            bn_scale = gamma / jnp.sqrt(rvar + 1e-5)
            sc, sh = bn_scale, (bias - rmean) * bn_scale + beta
        else:
            sc, sh = jnp.ones((cout,), jnp.float32), bias
        g_out = 4 * g_in
        dec.append(dict(
            w=wb.astype(jnp.bfloat16),                  # (g_in*cin, g_out*cout)
            scale=jnp.tile(sc, g_out)[None, :],         # (1, g_out*cout)
            shift=jnp.tile(sh, g_out)[None, :],
        ))
        g_in = g_out
    params['decoder'] = dec
    return params


# ----------------------------- forward -----------------------------

def _decoder_output_perm(hp, wp, nc):
    """Static gather indices mapping decoder columns (n, g4, c) to NCHW."""
    c = np.arange(nc)[:, None, None]
    hc = np.arange(16 * hp)[None, :, None]
    wc = np.arange(16 * wp)[None, None, :]
    h0, w0 = hc // 16, wc // 16
    kh = [(hc >> b) & 1 for b in (3, 2, 1, 0)]   # kh1..kh4
    kw = [(wc >> b) & 1 for b in (3, 2, 1, 0)]   # kw1..kw4
    g4 = np.zeros_like(hc + wc)
    for i in range(4):
        g4 = ((g4 * 2 + kh[i]) * 2) + kw[i]
    n = h0 * wp + w0
    src = (n * 256 + g4) * nc + c                # (nc, 16hp, 16wp)
    return src.reshape(-1).astype(np.int32)


def segmentation_vit_forward(x, params, cfg):
    B, C, H, W = x.shape
    p = cfg['patch_size']
    nc = cfg['num_classes']
    hp, wp = H // p, W // p
    N = hp * wp

    # b c (h p1) (w p2) -> b (h w) (c p1 p2)
    xp = (x.reshape(B, C, hp, p, wp, p)
           .transpose(0, 2, 4, 1, 3, 5)
           .reshape(B, N, C * p * p)).astype(jnp.bfloat16)

    # one fused pallas_call: patch embed + all transformer layers
    tokens = pallas_encoder(xp, params, cfg)                 # (B, N, dim) f32
    # one fused pallas_call: all four decoder stages, lane-dense output
    dec_out = pallas_decoder(tokens, params['decoder'])      # (B, N, 256*nc) f32

    # single XLA gather: un-nest the (kh,kw) digits and emit NCHW
    perm = _decoder_output_perm(hp, wp, nc)
    out = dec_out.reshape(B, -1)[:, perm]
    return out.reshape(B, nc, 16 * hp, 16 * wp)


# ----------------------------- main -----------------------------

if __name__ == "__main__":
    cfg = dict(image_size=32, patch_size=8, in_channels=3, num_classes=5,
               dim=64, depth=2, heads=2, mlp_dim=96, dim_head=16,
               dec_channels=(32, 16, 8))
    key = jax.random.PRNGKey(0)
    pkey, xkey = jax.random.split(key)
    params = init_params(pkey, cfg)
    x = jax.random.normal(
        xkey, (2, cfg['in_channels'], cfg['image_size'], cfg['image_size']),
        jnp.float32)

    fwd = jax.jit(functools.partial(segmentation_vit_forward, cfg=cfg))
    out = fwd(x, params)
    out = jax.block_until_ready(out)

    hp = cfg['image_size'] // cfg['patch_size']
    expected = (2, cfg['num_classes'], hp * 16, hp * 16)   # four 2x upsamplings
    assert out.shape == expected, (out.shape, expected)
    assert bool(jnp.all(jnp.isfinite(out)))
    print("KERNEL_OK")
</pallas_src>

<mosaic_0001>
module attributes {stable_mosaic.version = 11 : i64} {
  func.func private @main(%arg0: i32) attributes {dimension_semantics = [#tpu.dimension_semantics<core_parallel>], iteration_bounds = array<i64: 2>, tpu.core_type = #tpu.core_type<sc_scalar_subcore>, window_params = []} {
    return
  }
}

module attributes {stable_mosaic.version = 11 : i64} {
  func.func private @main(%arg0: i32) attributes {dimension_semantics = [#tpu.dimension_semantics<core_parallel>], iteration_bounds = array<i64: 2>, tpu.core_type = #tpu.core_type<sc_scalar_subcore>, window_params = []} {
    return
  }
}

module attributes {stable_mosaic.version = 11 : i64} {
  func.func @_encoder_kernel(%arg0: i32, %arg1: memref<2x16x192xbf16, #tpu.memory_space<vmem>>, %arg2: memref<192x64xbf16, #tpu.memory_space<vmem>>, %arg3: memref<16x64xf32, #tpu.memory_space<vmem>>, %arg4: memref<1x2x64x48xbf16, #tpu.memory_space<vmem>>, %arg5: memref<1x2x16xf32, #tpu.memory_space<vmem>>, %arg6: memref<1x2x16xf32, #tpu.memory_space<vmem>>, %arg7: memref<1x2x16x64xbf16, #tpu.memory_space<vmem>>, %arg8: memref<1x1x64xf32, #tpu.memory_space<vmem>>, %arg9: memref<1x64x128xbf16, #tpu.memory_space<vmem>>, %arg10: memref<1x1x64xf32, #tpu.memory_space<vmem>>, %arg11: memref<1x1x64xf32, #tpu.memory_space<vmem>>, %arg12: memref<1x64x64xbf16, #tpu.memory_space<vmem>>, %arg13: memref<1x1x64xf32, #tpu.memory_space<vmem>>, %arg14: memref<2x16x64xf32, #tpu.memory_space<vmem>>) attributes {dimension_semantics = [#tpu.dimension_semantics<arbitrary>], iteration_bounds = array<i64: 2>, scalar_prefetch = 0 : i64, scratch_operands = 0 : i64, tpu.core_type = #tpu.core_type<tc>, window_params = [{pipeline_mode = #tpu.pipeline_mode<synchronous>, transform_indices = @transform_0, window_bounds = array<i64: 2, 16, 192>}, {pipeline_mode = #tpu.pipeline_mode<synchronous>, transform_indices = @transform_1, window_bounds = array<i64: 192, 64>}, {pipeline_mode = #tpu.pipeline_mode<synchronous>, transform_indices = @transform_2, window_bounds = array<i64: 16, 64>}, {transform_indices = @transform_3, window_bounds = array<i64: 1, 2, 64, 48>}, {transform_indices = @transform_4, window_bounds = array<i64: 1, 2, 16>}, {transform_indices = @transform_5, window_bounds = array<i64: 1, 2, 16>}, {transform_indices = @transform_6, window_bounds = array<i64: 1, 2, 16, 64>}, {transform_indices = @transform_7, window_bounds = array<i64: 1, 1, 64>}, {transform_indices = @transform_8, window_bounds = array<i64: 1, 64, 128>}, {transform_indices = @transform_9, window_bounds = array<i64: 1, 1, 64>}, {transform_indices = @transform_10, window_bounds = array<i64: 1, 1, 64>}, {transform_indices = @transform_11, window_bounds = array<i64: 1, 64, 64>}, {transform_indices = @transform_12, window_bounds = array<i64: 1, 1, 64>}, {pipeline_mode = #tpu.pipeline_mode<synchronous>, transform_indices = @transform_13, window_bounds = array<i64: 2, 16, 64>}]} {
    %c0_i32 = arith.constant 0 : i32
    %0 = arith.cmpi eq, %arg0, %c0_i32 : i32
    %1 = arith.extui %0 : i1 to i32
    %c0_i32_0 = arith.constant 0 : i32
    %2 = arith.cmpi ne, %1, %c0_i32_0 : i32
    scf.if %2 {
      %c0_59 = arith.constant 0 : index
      %c0_60 = arith.constant 0 : index
      %c0_61 = arith.constant 0 : index
      %150 = vector.load %arg1[%c0_59, %c0_60, %c0_61] : memref<2x16x192xbf16, #tpu.memory_space<vmem>>, vector<2x16x192xbf16>
      %151 = vector.shape_cast %150 : vector<2x16x192xbf16> to vector<32x192xbf16>
      %c0_62 = arith.constant 0 : index
      %c0_63 = arith.constant 0 : index
      %152 = vector.load %arg2[%c0_62, %c0_63] : memref<192x64xbf16, #tpu.memory_space<vmem>>, vector<192x64xbf16>
      %cst_64 = arith.constant dense<0.000000e+00> : vector<32x64xf32>
      %153 = tpu.matmul %151, %152, %cst_64 {dimension_numbers = #tpu.dot_dimension_numbers<[1], [0], [0], [1], [0, 0, 1, 1], [], []>} : vector<32x192xbf16>, vector<192x64xbf16>, vector<32x64xf32> -> vector<32x64xf32>
      %154 = vector.shape_cast %153 : vector<32x64xf32> to vector<2x16x64xf32>
      %c0_65 = arith.constant 0 : index
      %c0_66 = arith.constant 0 : index
      %155 = vector.load %arg3[%c0_65, %c0_66] : memref<16x64xf32, #tpu.memory_space<vmem>>, vector<16x64xf32>
      %156 = vector.shape_cast %155 : vector<16x64xf32> to vector<1x16x64xf32>
      %157 = vector.broadcast %156 : vector<1x16x64xf32> to vector<2x16x64xf32>
      %158 = arith.addf %154, %157 : vector<2x16x64xf32>
      %159 = arith.mulf %158, %158 : vector<2x16x64xf32>
      %cst_67 = arith.constant dense<0.000000e+00> : vector<2x16xf32>
      %160 = vector.multi_reduction <add>, %159, %cst_67 [2] : vector<2x16x64xf32> to vector<2x16xf32>
      %161 = vector.shape_cast %160 : vector<2x16xf32> to vector<2x16x1xf32>
      %cst_68 = arith.constant 1.000000e-24 : f32
      %162 = vector.broadcast %cst_68 : f32 to vector<2x16x1xf32>
      %163 = arith.maximumf %161, %162 : vector<2x16x1xf32>
      %164 = math.rsqrt %163 : vector<2x16x1xf32>
      %165 = vector.broadcast %164 : vector<2x16x1xf32> to vector<2x16x64xf32>
      %166 = arith.mulf %158, %165 : vector<2x16x64xf32>
      %c0_69 = arith.constant 0 : index
      %c0_70 = arith.constant 0 : index
      %c0_71 = arith.constant 0 : index
      %167 = vector.load %arg14[%c0_69, %c0_70, %c0_71] : memref<2x16x64xf32, #tpu.memory_space<vmem>>, vector<2x16x64xf32>
      tpu.vector_store %arg14[%c0_69, %c0_70, %c0_71], %166 {strides = array<i32>} : memref<2x16x64xf32, #tpu.memory_space<vmem>>, vector<2x16x64xf32>,
    } else {
    }
    %c0 = arith.constant 0 : index
    %c0_1 = arith.constant 0 : index
    %c0_2 = arith.constant 0 : index
    %3 = vector.load %arg14[%c0, %c0_1, %c0_2] : memref<2x16x64xf32, #tpu.memory_space<vmem>>, vector<2x16x64xf32>
    %4 = arith.truncf %3 : vector<2x16x64xf32> to vector<2x16x64xbf16>
    %5 = vector.shape_cast %4 : vector<2x16x64xbf16> to vector<2x1x16x64xbf16>
    %6 = vector.shape_cast %5 : vector<2x1x16x64xbf16> to vector<2x1x16x64xbf16>
    %7 = vector.broadcast %6 : vector<2x1x16x64xbf16> to vector<2x2x16x64xbf16>
    %8 = vector.shape_cast %7 : vector<2x2x16x64xbf16> to vector<4x16x64xbf16>
    %c0_3 = arith.constant 0 : index
    %c0_4 = arith.constant 0 : index
    %c0_5 = arith.constant 0 : index
    %c0_6 = arith.constant 0 : index
    %9 = vector.load %arg4[%c0_3, %c0_4, %c0_5, %c0_6] : memref<1x2x64x48xbf16, #tpu.memory_space<vmem>>, vector<1x2x64x48xbf16>
    %10 = vector.shape_cast %9 : vector<1x2x64x48xbf16> to vector<2x64x48xbf16>
    %11 = vector.shape_cast %10 : vector<2x64x48xbf16> to vector<1x2x64x48xbf16>
    %12 = vector.shape_cast %11 : vector<1x2x64x48xbf16> to vector<1x2x64x48xbf16>
    %13 = vector.broadcast %12 : vector<1x2x64x48xbf16> to vector<2x2x64x48xbf16>
    %14 = vector.shape_cast %13 : vector<2x2x64x48xbf16> to vector<4x64x48xbf16>
    "tpu.trace_start"() <{level = 10 : i32, message = "gnd,gde->gne"}> : () -> ()
    %cst = arith.constant dense<0.000000e+00> : vector<4x16x48xf32>
    %15 = tpu.matmul %8, %14, %cst {dimension_numbers = #tpu.dot_dimension_numbers<[2], [1], [1], [2], [0, 0, 0, 1, 1, 2], [0], [0]>} : vector<4x16x64xbf16>, vector<4x64x48xbf16>, vector<4x16x48xf32> -> vector<4x16x48xf32>
    "tpu.trace_stop"() : () -> ()
    %16 = vector.extract_strided_slice %15 {offsets = [0, 0, 0], sizes = [4, 16, 16], strides = [1, 1, 1]} : vector<4x16x48xf32> to vector<4x16x16xf32>
    %17 = vector.extract_strided_slice %15 {offsets = [0, 0, 16], sizes = [4, 16, 16], strides = [1, 1, 1]} : vector<4x16x48xf32> to vector<4x16x16xf32>
    %18 = vector.extract_strided_slice %15 {offsets = [0, 0, 32], sizes = [4, 16, 16], strides = [1, 1, 1]} : vector<4x16x48xf32> to vector<4x16x16xf32>
    %c0_7 = arith.constant 0 : index
    %c0_8 = arith.constant 0 : index
    %c0_9 = arith.constant 0 : index
    %19 = vector.load %arg5[%c0_7, %c0_8, %c0_9] : memref<1x2x16xf32, #tpu.memory_space<vmem>>, vector<1x2x16xf32>
    %20 = vector.shape_cast %19 : vector<1x2x16xf32> to vector<2x16xf32>
    %21 = vector.shape_cast %20 : vector<2x16xf32> to vector<1x2x1x16xf32>
    %22 = vector.shape_cast %21 : vector<1x2x1x16xf32> to vector<1x2x1x16xf32>
    %23 = vector.broadcast %22 : vector<1x2x1x16xf32> to vector<2x2x1x16xf32>
    %24 = vector.shape_cast %23 : vector<2x2x1x16xf32> to vector<4x1x16xf32>
    %c0_10 = arith.constant 0 : index
    %c0_11 = arith.constant 0 : index
    %c0_12 = arith.constant 0 : index
    %25 = vector.load %arg6[%c0_10, %c0_11, %c0_12] : memref<1x2x16xf32, #tpu.memory_space<vmem>>, vector<1x2x16xf32>
    %26 = vector.shape_cast %25 : vector<1x2x16xf32> to vector<2x16xf32>
    %27 = vector.shape_cast %26 : vector<2x16xf32> to vector<1x2x1x16xf32>
    %28 = vector.shape_cast %27 : vector<1x2x1x16xf32> to vector<1x2x1x16xf32>
    %29 = vector.broadcast %28 : vector<1x2x1x16xf32> to vector<2x2x1x16xf32>
    %30 = vector.shape_cast %29 : vector<2x2x1x16xf32> to vector<4x1x16xf32>
    %31 = arith.mulf %16, %16 : vector<4x16x16xf32>
    %cst_13 = arith.constant dense<0.000000e+00> : vector<4x16xf32>
    %32 = vector.multi_reduction <add>, %31, %cst_13 [2] : vector<4x16x16xf32> to vector<4x16xf32>
    %33 = vector.shape_cast %32 : vector<4x16xf32> to vector<4x16x1xf32>
    %cst_14 = arith.constant 1.000000e-24 : f32
    %34 = vector.broadcast %cst_14 : f32 to vector<4x16x1xf32>
    %35 = arith.maximumf %33, %34 : vector<4x16x1xf32>
    %36 = math.rsqrt %35 : vector<4x16x1xf32>
    %37 = vector.broadcast %36 : vector<4x16x1xf32> to vector<4x16x16xf32>
    %38 = arith.mulf %16, %37 : vector<4x16x16xf32>
    %39 = vector.broadcast %24 : vector<4x1x16xf32> to vector<4x16x16xf32>
    %40 = arith.mulf %38, %39 : vector<4x16x16xf32>
    %41 = arith.mulf %17, %17 : vector<4x16x16xf32>
    %cst_15 = arith.constant dense<0.000000e+00> : vector<4x16xf32>
    %42 = vector.multi_reduction <add>, %41, %cst_15 [2] : vector<4x16x16xf32> to vector<4x16xf32>
    %43 = vector.shape_cast %42 : vector<4x16xf32> to vector<4x16x1xf32>
    %cst_16 = arith.constant 1.000000e-24 : f32
    %44 = vector.broadcast %cst_16 : f32 to vector<4x16x1xf32>
    %45 = arith.maximumf %43, %44 : vector<4x16x1xf32>
    %46 = math.rsqrt %45 : vector<4x16x1xf32>
    %47 = vector.broadcast %46 : vector<4x16x1xf32> to vector<4x16x16xf32>
    %48 = arith.mulf %17, %47 : vector<4x16x16xf32>
    %49 = vector.broadcast %30 : vector<4x1x16xf32> to vector<4x16x16xf32>
    %50 = arith.mulf %48, %49 : vector<4x16x16xf32>
    %51 = arith.truncf %40 : vector<4x16x16xf32> to vector<4x16x16xbf16>
    %52 = arith.truncf %50 : vector<4x16x16xf32> to vector<4x16x16xbf16>
    "tpu.trace_start"() <{level = 10 : i32, message = "gnd,gmd->gnm"}> : () -> ()
    %cst_17 = arith.constant dense<0.000000e+00> : vector<4x16x16xf32>
    %53 = tpu.matmul %51, %52, %cst_17 {dimension_numbers = #tpu.dot_dimension_numbers<[2], [2], [1], [1], [0, 0, 0, 1, 1, 1], [0], [0]>} : vector<4x16x16xbf16>, vector<4x16x16xbf16>, vector<4x16x16xf32> -> vector<4x16x16xf32>
    "tpu.trace_stop"() : () -> ()
    %cst_18 = arith.constant dense<0xFF800000> : vector<4x16xf32>
    %54 = vector.multi_reduction <maximumf>, %53, %cst_18 [2] : vector<4x16x16xf32> to vector<4x16xf32>
    %55 = vector.shape_cast %54 : vector<4x16xf32> to vector<4x16x1xf32>
    %56 = vector.broadcast %55 : vector<4x16x1xf32> to vector<4x16x16xf32>
    %57 = arith.subf %53, %56 : vector<4x16x16xf32>
    %58 = math.exp %57 : vector<4x16x16xf32>
    %cst_19 = arith.constant dense<0.000000e+00> : vector<4x16xf32>
    %59 = vector.multi_reduction <add>, %58, %cst_19 [2] : vector<4x16x16xf32> to vector<4x16xf32>
    %60 = vector.shape_cast %59 : vector<4x16xf32> to vector<4x16x1xf32>
    %61 = vector.broadcast %60 : vector<4x16x1xf32> to vector<4x16x16xf32>
    %62 = arith.divf %58, %61 : vector<4x16x16xf32>
    %63 = arith.truncf %62 : vector<4x16x16xf32> to vector<4x16x16xbf16>
    %64 = arith.truncf %18 : vector<4x16x16xf32> to vector<4x16x16xbf16>
    "tpu.trace_start"() <{level = 10 : i32, message = "gnm,gmd->gnd"}> : () -> ()
    %cst_20 = arith.constant dense<0.000000e+00> : vector<4x16x16xf32>
    %65 = tpu.matmul %63, %64, %cst_20 {dimension_numbers = #tpu.dot_dimension_numbers<[2], [1], [1], [2], [0, 0, 0, 1, 1, 2], [0], [0]>} : vector<4x16x16xbf16>, vector<4x16x16xbf16>, vector<4x16x16xf32> -> vector<4x16x16xf32>
    "tpu.trace_stop"() : () -> ()
    %c0_21 = arith.constant 0 : index
    %c0_22 = arith.constant 0 : index
    %c0_23 = arith.constant 0 : index
    %c0_24 = arith.constant 0 : index
    %66 = vector.load %arg7[%c0_21, %c0_22, %c0_23, %c0_24] : memref<1x2x16x64xbf16, #tpu.memory_space<vmem>>, vector<1x2x16x64xbf16>
    %67 = vector.shape_cast %66 : vector<1x2x16x64xbf16> to vector<2x16x64xbf16>
    %68 = vector.shape_cast %67 : vector<2x16x64xbf16> to vector<1x2x16x64xbf16>
    %69 = vector.shape_cast %68 : vector<1x2x16x64xbf16> to vector<1x2x16x64xbf16>
    %70 = vector.broadcast %69 : vector<1x2x16x64xbf16> to vector<2x2x16x64xbf16>
    %71 = vector.shape_cast %70 : vector<2x2x16x64xbf16> to vector<4x16x64xbf16>
    %72 = arith.truncf %65 : vector<4x16x16xf32> to vector<4x16x16xbf16>
    "tpu.trace_start"() <{level = 10 : i32, message = "gne,ged->gnd"}> : () -> ()
    %cst_25 = arith.constant dense<0.000000e+00> : vector<4x16x64xf32>
    %73 = tpu.matmul %72, %71, %cst_25 {dimension_numbers = #tpu.dot_dimension_numbers<[2], [1], [1], [2], [0, 0, 0, 1, 1, 2], [0], [0]>} : vector<4x16x16xbf16>, vector<4x16x64xbf16>, vector<4x16x64xf32> -> vector<4x16x64xf32>
    "tpu.trace_stop"() : () -> ()
    %74 = vector.shape_cast %73 : vector<4x16x64xf32> to vector<2x2x16x64xf32>
    %cst_26 = arith.constant dense<0.000000e+00> : vector<2x16x64xf32>
    %75 = vector.multi_reduction <add>, %74, %cst_26 [1] : vector<2x2x16x64xf32> to vector<2x16x64xf32>
    %c0_27 = arith.constant 0 : index
    %c0_28 = arith.constant 0 : index
    %c0_29 = arith.constant 0 : index
    %76 = vector.load %arg8[%c0_27, %c0_28, %c0_29] : memref<1x1x64xf32, #tpu.memory_space<vmem>>, vector<1x1x64xf32>
    %77 = vector.shape_cast %76 : vector<1x1x64xf32> to vector<1x64xf32>
    %78 = arith.mulf %75, %75 : vector<2x16x64xf32>
    %cst_30 = arith.constant dense<0.000000e+00> : vector<2x16xf32>
    %79 = vector.multi_reduction <add>, %78, %cst_30 [2] : vector<2x16x64xf32> to vector<2x16xf32>
    %80 = vector.shape_cast %79 : vector<2x16xf32> to vector<2x16x1xf32>
    %cst_31 = arith.constant 1.000000e-24 : f32
    %81 = vector.broadcast %cst_31 : f32 to vector<2x16x1xf32>
    %82 = arith.maximumf %80, %81 : vector<2x16x1xf32>
    %83 = math.rsqrt %82 : vector<2x16x1xf32>
    %84 = vector.broadcast %83 : vector<2x16x1xf32> to vector<2x16x64xf32>
    %85 = arith.mulf %75, %84 : vector<2x16x64xf32>
    %86 = arith.subf %85, %3 : vector<2x16x64xf32>
    %87 = vector.shape_cast %77 : vector<1x64xf32> to vector<1x1x64xf32>
    %88 = vector.broadcast %87 : vector<1x1x64xf32> to vector<2x16x64xf32>
    %89 = arith.mulf %86, %88 : vector<2x16x64xf32>
    %90 = arith.addf %3, %89 : vector<2x16x64xf32>
    %91 = arith.mulf %90, %90 : vector<2x16x64xf32>
    %cst_32 = arith.constant dense<0.000000e+00> : vector<2x16xf32>
    %92 = vector.multi_reduction <add>, %91, %cst_32 [2] : vector<2x16x64xf32> to vector<2x16xf32>
    %93 = vector.shape_cast %92 : vector<2x16xf32> to vector<2x16x1xf32>
    %cst_33 = arith.constant 1.000000e-24 : f32
    %94 = vector.broadcast %cst_33 : f32 to vector<2x16x1xf32>
    %95 = arith.maximumf %93, %94 : vector<2x16x1xf32>
    %96 = math.rsqrt %95 : vector<2x16x1xf32>
    %97 = vector.broadcast %96 : vector<2x16x1xf32> to vector<2x16x64xf32>
    %98 = arith.mulf %90, %97 : vector<2x16x64xf32>
    %99 = vector.shape_cast %98 : vector<2x16x64xf32> to vector<32x64xf32>
    %100 = arith.truncf %99 : vector<32x64xf32> to vector<32x64xbf16>
    %c0_34 = arith.constant 0 : index
    %c0_35 = arith.constant 0 : index
    %c0_36 = arith.constant 0 : index
    %101 = vector.load %arg9[%c0_34, %c0_35, %c0_36] : memref<1x64x128xbf16, #tpu.memory_space<vmem>>, vector<1x64x128xbf16>
    %102 = vector.shape_cast %101 : vector<1x64x128xbf16> to vector<64x128xbf16>
    %cst_37 = arith.constant dense<0.000000e+00> : vector<32x128xf32>
    %103 = tpu.matmul %100, %102, %cst_37 {dimension_numbers = #tpu.dot_dimension_numbers<[1], [0], [0], [1], [0, 0, 1, 1], [], []>} : vector<32x64xbf16>, vector<64x128xbf16>, vector<32x128xf32> -> vector<32x128xf32>
    %104 = vector.extract_strided_slice %103 {offsets = [0, 0], sizes = [32, 64], strides = [1, 1]} : vector<32x128xf32> to vector<32x64xf32>
    %c0_38 = arith.constant 0 : index
    %c0_39 = arith.constant 0 : index
    %c0_40 = arith.constant 0 : index
    %105 = vector.load %arg10[%c0_38, %c0_39, %c0_40] : memref<1x1x64xf32, #tpu.memory_space<vmem>>, vector<1x1x64xf32>
    %106 = vector.shape_cast %105 : vector<1x1x64xf32> to vector<1x64xf32>
    %107 = vector.broadcast %106 : vector<1x64xf32> to vector<32x64xf32>
    %108 = arith.mulf %104, %107 : vector<32x64xf32>
    %109 = vector.extract_strided_slice %103 {offsets = [0, 64], sizes = [32, 64], strides = [1, 1]} : vector<32x128xf32> to vector<32x64xf32>
    %c0_41 = arith.constant 0 : index
    %c0_42 = arith.constant 0 : index
    %c0_43 = arith.constant 0 : index
    %110 = vector.load %arg11[%c0_41, %c0_42, %c0_43] : memref<1x1x64xf32, #tpu.memory_space<vmem>>, vector<1x1x64xf32>
    %111 = vector.shape_cast %110 : vector<1x1x64xf32> to vector<1x64xf32>
    %112 = vector.broadcast %111 : vector<1x64xf32> to vector<32x64xf32>
    %113 = arith.mulf %109, %112 : vector<32x64xf32>
    %114 = arith.negf %113 : vector<32x64xf32>
    %115 = math.exp %114 : vector<32x64xf32>
    %cst_44 = arith.constant 1.000000e+00 : f32
    %116 = vector.broadcast %cst_44 : f32 to vector<32x64xf32>
    %117 = arith.addf %116, %115 : vector<32x64xf32>
    %118 = arith.divf %116, %117 : vector<32x64xf32>
    %119 = arith.mulf %113, %118 : vector<32x64xf32>
    %120 = arith.mulf %119, %108 : vector<32x64xf32>
    %121 = arith.truncf %120 : vector<32x64xf32> to vector<32x64xbf16>
    %c0_45 = arith.constant 0 : index
    %c0_46 = arith.constant 0 : index
    %c0_47 = arith.constant 0 : index
    %122 = vector.load %arg12[%c0_45, %c0_46, %c0_47] : memref<1x64x64xbf16, #tpu.memory_space<vmem>>, vector<1x64x64xbf16>
    %123 = vector.shape_cast %122 : vector<1x64x64xbf16> to vector<64x64xbf16>
    %cst_48 = arith.constant dense<0.000000e+00> : vector<32x64xf32>
    %124 = tpu.matmul %121, %123, %cst_48 {dimension_numbers = #tpu.dot_dimension_numbers<[1], [0], [0], [1], [0, 0, 1, 1], [], []>} : vector<32x64xbf16>, vector<64x64xbf16>, vector<32x64xf32> -> vector<32x64xf32>
    %125 = vector.shape_cast %124 : vector<32x64xf32> to vector<2x16x64xf32>
    %c0_49 = arith.constant 0 : index
    %c0_50 = arith.constant 0 : index
    %c0_51 = arith.constant 0 : index
    %126 = vector.load %arg13[%c0_49, %c0_50, %c0_51] : memref<1x1x64xf32, #tpu.memory_space<vmem>>, vector<1x1x64xf32>
    %127 = vector.shape_cast %126 : vector<1x1x64xf32> to vector<1x64xf32>
    %128 = arith.mulf %125, %125 : vector<2x16x64xf32>
    %cst_52 = arith.constant dense<0.000000e+00> : vector<2x16xf32>
    %129 = vector.multi_reduction <add>, %128, %cst_52 [2] : vector<2x16x64xf32> to vector<2x16xf32>
    %130 = vector.shape_cast %129 : vector<2x16xf32> to vector<2x16x1xf32>
    %cst_53 = arith.constant 1.000000e-24 : f32
    %131 = vector.broadcast %cst_53 : f32 to vector<2x16x1xf32>
    %132 = arith.maximumf %130, %131 : vector<2x16x1xf32>
    %133 = math.rsqrt %132 : vector<2x16x1xf32>
    %134 = vector.broadcast %133 : vector<2x16x1xf32> to vector<2x16x64xf32>
    %135 = arith.mulf %125, %134 : vector<2x16x64xf32>
    %136 = arith.subf %135, %98 : vector<2x16x64xf32>
    %137 = vector.shape_cast %127 : vector<1x64xf32> to vector<1x1x64xf32>
    %138 = vector.broadcast %137 : vector<1x1x64xf32> to vector<2x16x64xf32>
    %139 = arith.mulf %136, %138 : vector<2x16x64xf32>
    %140 = arith.addf %98, %139 : vector<2x16x64xf32>
    %141 = arith.mulf %140, %140 : vector<2x16x64xf32>
    %cst_54 = arith.constant dense<0.000000e+00> : vector<2x16xf32>
    %142 = vector.multi_reduction <add>, %141, %cst_54 [2] : vector<2x16x64xf32> to vector<2x16xf32>
    %143 = vector.shape_cast %142 : vector<2x16xf32> to vector<2x16x1xf32>
    %cst_55 = arith.constant 1.000000e-24 : f32
    %144 = vector.broadcast %cst_55 : f32 to vector<2x16x1xf32>
    %145 = arith.maximumf %143, %144 : vector<2x16x1xf32>
    %146 = math.rsqrt %145 : vector<2x16x1xf32>
    %147 = vector.broadcast %146 : vector<2x16x1xf32> to vector<2x16x64xf32>
    %148 = arith.mulf %140, %147 : vector<2x16x64xf32>
    %c0_56 = arith.constant 0 : index
    %c0_57 = arith.constant 0 : index
    %c0_58 = arith.constant 0 : index
    %149 = vector.load %arg14[%c0_56, %c0_57, %c0_58] : memref<2x16x64xf32, #tpu.memory_space<vmem>>, vector<2x16x64xf32>
    tpu.vector_store %arg14[%c0_56, %c0_57, %c0_58], %148 {strides = array<i32>} : memref<2x16x64xf32, #tpu.memory_space<vmem>>, vector<2x16x64xf32>,
    return
  }
  func.func @transform_0(%arg0: i32) -> (i32, i32, i32) {
    %c0_i32 = arith.constant 0 : i32
    %c0_i32_0 = arith.constant 0 : i32
    %c0_i32_1 = arith.constant 0 : i32
    %c0_i32_2 = arith.constant 0 : i32
    return %c0_i32, %c0_i32_0, %c0_i32_1 : i32, i32, i32
  }
  func.func @transform_1(%arg0: i32) -> (i32, i32) {
    %c0_i32 = arith.constant 0 : i32
    %c0_i32_0 = arith.constant 0 : i32
    %c0_i32_1 = arith.constant 0 : i32
    return %c0_i32, %c0_i32_0 : i32, i32
  }
  func.func @transform_2(%arg0: i32) -> (i32, i32) {
    %c0_i32 = arith.constant 0 : i32
    %c0_i32_0 = arith.constant 0 : i32
    %c0_i32_1 = arith.constant 0 : i32
    return %c0_i32, %c0_i32_0 : i32, i32
  }
  func.func @transform_3(%arg0: i32) -> (i32, i32, i32, i32) {
    %c0_i32 = arith.constant 0 : i32
    %c0_i32_0 = arith.constant 0 : i32
    %c0_i32_1 = arith.constant 0 : i32
    %c0_i32_2 = arith.constant 0 : i32
    return %arg0, %c0_i32, %c0_i32_0, %c0_i32_1 : i32, i32, i32, i32
  }
  func.func @transform_4(%arg0: i32) -> (i32, i32, i32) {
    %c0_i32 = arith.constant 0 : i32
    %c0_i32_0 = arith.constant 0 : i32
    %c0_i32_1 = arith.constant 0 : i32
    return %arg0, %c0_i32, %c0_i32_0 : i32, i32, i32
  }
  func.func @transform_5(%arg0: i32) -> (i32, i32, i32) {
    %c0_i32 = arith.constant 0 : i32
    %c0_i32_0 = arith.constant 0 : i32
    %c0_i32_1 = arith.constant 0 : i32
    return %arg0, %c0_i32, %c0_i32_0 : i32, i32, i32
  }
  func.func @transform_6(%arg0: i32) -> (i32, i32, i32, i32) {
    %c0_i32 = arith.constant 0 : i32
    %c0_i32_0 = arith.constant 0 : i32
    %c0_i32_1 = arith.constant 0 : i32
    %c0_i32_2 = arith.constant 0 : i32
    return %arg0, %c0_i32, %c0_i32_0, %c0_i32_1 : i32, i32, i32, i32
  }
  func.func @transform_7(%arg0: i32) -> (i32, i32, i32) {
    %c0_i32 = arith.constant 0 : i32
    %c0_i32_0 = arith.constant 0 : i32
    %c0_i32_1 = arith.constant 0 : i32
    return %arg0, %c0_i32, %c0_i32_0 : i32, i32, i32
  }
  func.func @transform_8(%arg0: i32) -> (i32, i32, i32) {
    %c0_i32 = arith.constant 0 : i32
    %c0_i32_0 = arith.constant 0 : i32
    %c0_i32_1 = arith.constant 0 : i32
    return %arg0, %c0_i32, %c0_i32_0 : i32, i32, i32
  }
  func.func @transform_9(%arg0: i32) -> (i32, i32, i32) {
    %c0_i32 = arith.constant 0 : i32
    %c0_i32_0 = arith.constant 0 : i32
    %c0_i32_1 = arith.constant 0 : i32
    return %arg0, %c0_i32, %c0_i32_0 : i32, i32, i32
  }
  func.func @transform_10(%arg0: i32) -> (i32, i32, i32) {
    %c0_i32 = arith.constant 0 : i32
    %c0_i32_0 = arith.constant 0 : i32
    %c0_i32_1 = arith.constant 0 : i32
    return %arg0, %c0_i32, %c0_i32_0 : i32, i32, i32
  }
  func.func @transform_11(%arg0: i32) -> (i32, i32, i32) {
    %c0_i32 = arith.constant 0 : i32
    %c0_i32_0 = arith.constant 0 : i32
    %c0_i32_1 = arith.constant 0 : i32
    return %arg0, %c0_i32, %c0_i32_0 : i32, i32, i32
  }
  func.func @transform_12(%arg0: i32) -> (i32, i32, i32) {
    %c0_i32 = arith.constant 0 : i32
    %c0_i32_0 = arith.constant 0 : i32
    %c0_i32_1 = arith.constant 0 : i32
    return %arg0, %c0_i32, %c0_i32_0 : i32, i32, i32
  }
  func.func @transform_13(%arg0: i32) -> (i32, i32, i32) {
    %c0_i32 = arith.constant 0 : i32
    %c0_i32_0 = arith.constant 0 : i32
    %c0_i32_1 = arith.constant 0 : i32
    %c0_i32_2 = arith.constant 0 : i32
    return %c0_i32, %c0_i32_0, %c0_i32_1 : i32, i32, i32
  }
}

module attributes {stable_mosaic.version = 11 : i64} {
  func.func @_decoder_kernel(%arg0: i32, %arg1: memref<1x16x64xf32, #tpu.memory_space<vmem>>, %arg2: memref<64x128xbf16, #tpu.memory_space<vmem>>, %arg3: memref<1x128xf32, #tpu.memory_space<vmem>>, %arg4: memref<1x128xf32, #tpu.memory_space<vmem>>, %arg5: memref<128x256xbf16, #tpu.memory_space<vmem>>, %arg6: memref<1x256xf32, #tpu.memory_space<vmem>>, %arg7: memref<1x256xf32, #tpu.memory_space<vmem>>, %arg8: memref<256x512xbf16, #tpu.memory_space<vmem>>, %arg9: memref<1x512xf32, #tpu.memory_space<vmem>>, %arg10: memref<1x512xf32, #tpu.memory_space<vmem>>, %arg11: memref<512x1280xbf16, #tpu.memory_space<vmem>>, %arg12: memref<1x1280xf32, #tpu.memory_space<vmem>>, %arg13: memref<1x1280xf32, #tpu.memory_space<vmem>>, %arg14: memref<1x16x1280xf32, #tpu.memory_space<vmem>>) attributes {dimension_semantics = [#tpu.dimension_semantics<parallel>], iteration_bounds = array<i64: 2>, scalar_prefetch = 0 : i64, scratch_operands = 0 : i64, tpu.core_type = #tpu.core_type<tc>, window_params = [{transform_indices = @transform_0, window_bounds = array<i64: 1, 16, 64>}, {pipeline_mode = #tpu.pipeline_mode<synchronous>, transform_indices = @transform_1, window_bounds = array<i64: 64, 128>}, {pipeline_mode = #tpu.pipeline_mode<synchronous>, transform_indices = @transform_2, window_bounds = array<i64: 1, 128>}, {pipeline_mode = #tpu.pipeline_mode<synchronous>, transform_indices = @transform_3, window_bounds = array<i64: 1, 128>}, {pipeline_mode = #tpu.pipeline_mode<synchronous>, transform_indices = @transform_4, window_bounds = array<i64: 128, 256>}, {pipeline_mode = #tpu.pipeline_mode<synchronous>, transform_indices = @transform_5, window_bounds = array<i64: 1, 256>}, {pipeline_mode = #tpu.pipeline_mode<synchronous>, transform_indices = @transform_6, window_bounds = array<i64: 1, 256>}, {pipeline_mode = #tpu.pipeline_mode<synchronous>, transform_indices = @transform_7, window_bounds = array<i64: 256, 512>}, {pipeline_mode = #tpu.pipeline_mode<synchronous>, transform_indices = @transform_8, window_bounds = array<i64: 1, 512>}, {pipeline_mode = #tpu.pipeline_mode<synchronous>, transform_indices = @transform_9, window_bounds = array<i64: 1, 512>}, {pipeline_mode = #tpu.pipeline_mode<synchronous>, transform_indices = @transform_10, window_bounds = array<i64: 512, 1280>}, {pipeline_mode = #tpu.pipeline_mode<synchronous>, transform_indices = @transform_11, window_bounds = array<i64: 1, 1280>}, {pipeline_mode = #tpu.pipeline_mode<synchronous>, transform_indices = @transform_12, window_bounds = array<i64: 1, 1280>}, {transform_indices = @transform_13, window_bounds = array<i64: 1, 16, 1280>}]} {
    %c0 = arith.constant 0 : index
    %c0_0 = arith.constant 0 : index
    %c0_1 = arith.constant 0 : index
    %0 = vector.load %arg1[%c0, %c0_0, %c0_1] : memref<1x16x64xf32, #tpu.memory_space<vmem>>, vector<1x16x64xf32>
    %1 = vector.shape_cast %0 : vector<1x16x64xf32> to vector<16x64xf32>
    %2 = arith.truncf %1 : vector<16x64xf32> to vector<16x64xbf16>
    %c0_2 = arith.constant 0 : index
    %c0_3 = arith.constant 0 : index
    %3 = vector.load %arg2[%c0_2, %c0_3] : memref<64x128xbf16, #tpu.memory_space<vmem>>, vector<64x128xbf16>
    %cst = arith.constant dense<0.000000e+00> : vector<16x128xf32>
    %4 = tpu.matmul %2, %3, %cst {dimension_numbers = #tpu.dot_dimension_numbers<[1], [0], [0], [1], [0, 0, 1, 1], [], []>} : vector<16x64xbf16>, vector<64x128xbf16>, vector<16x128xf32> -> vector<16x128xf32>
    %c0_4 = arith.constant 0 : index
    %c0_5 = arith.constant 0 : index
    %5 = vector.load %arg3[%c0_4, %c0_5] : memref<1x128xf32, #tpu.memory_space<vmem>>, vector<1x128xf32>
    %6 = vector.broadcast %5 : vector<1x128xf32> to vector<16x128xf32>
    %7 = arith.mulf %4, %6 : vector<16x128xf32>
    %c0_6 = arith.constant 0 : index
    %c0_7 = arith.constant 0 : index
    %8 = vector.load %arg4[%c0_6, %c0_7] : memref<1x128xf32, #tpu.memory_space<vmem>>, vector<1x128xf32>
    %9 = vector.broadcast %8 : vector<1x128xf32> to vector<16x128xf32>
    %10 = arith.addf %7, %9 : vector<16x128xf32>
    %cst_8 = arith.constant 0.000000e+00 : f32
    %11 = vector.broadcast %cst_8 : f32 to vector<16x128xf32>
    %12 = arith.maximumf %10, %11 : vector<16x128xf32>
    %13 = arith.truncf %12 : vector<16x128xf32> to vector<16x128xbf16>
    %c0_9 = arith.constant 0 : index
    %c0_10 = arith.constant 0 : index
    %14 = vector.load %arg5[%c0_9, %c0_10] : memref<128x256xbf16, #tpu.memory_space<vmem>>, vector<128x256xbf16>
    %cst_11 = arith.constant dense<0.000000e+00> : vector<16x256xf32>
    %15 = tpu.matmul %13, %14, %cst_11 {dimension_numbers = #tpu.dot_dimension_numbers<[1], [0], [0], [1], [0, 0, 1, 1], [], []>} : vector<16x128xbf16>, vector<128x256xbf16>, vector<16x256xf32> -> vector<16x256xf32>
    %c0_12 = arith.constant 0 : index
    %c0_13 = arith.constant 0 : index
    %16 = vector.load %arg6[%c0_12, %c0_13] : memref<1x256xf32, #tpu.memory_space<vmem>>, vector<1x256xf32>
    %17 = vector.broadcast %16 : vector<1x256xf32> to vector<16x256xf32>
    %18 = arith.mulf %15, %17 : vector<16x256xf32>
    %c0_14 = arith.constant 0 : index
    %c0_15 = arith.constant 0 : index
    %19 = vector.load %arg7[%c0_14, %c0_15] : memref<1x256xf32, #tpu.memory_space<vmem>>, vector<1x256xf32>
    %20 = vector.broadcast %19 : vector<1x256xf32> to vector<16x256xf32>
    %21 = arith.addf %18, %20 : vector<16x256xf32>
    %cst_16 = arith.constant 0.000000e+00 : f32
    %22 = vector.broadcast %cst_16 : f32 to vector<16x256xf32>
    %23 = arith.maximumf %21, %22 : vector<16x256xf32>
    %24 = arith.truncf %23 : vector<16x256xf32> to vector<16x256xbf16>
    %c0_17 = arith.constant 0 : index
    %c0_18 = arith.constant 0 : index
    %25 = vector.load %arg8[%c0_17, %c0_18] : memref<256x512xbf16, #tpu.memory_space<vmem>>, vector<256x512xbf16>
    %cst_19 = arith.constant dense<0.000000e+00> : vector<16x512xf32>
    %26 = tpu.matmul %24, %25, %cst_19 {dimension_numbers = #tpu.dot_dimension_numbers<[1], [0], [0], [1], [0, 0, 1, 1], [], []>} : vector<16x256xbf16>, vector<256x512xbf16>, vector<16x512xf32> -> vector<16x512xf32>
    %c0_20 = arith.constant 0 : index
    %c0_21 = arith.constant 0 : index
    %27 = vector.load %arg9[%c0_20, %c0_21] : memref<1x512xf32, #tpu.memory_space<vmem>>, vector<1x512xf32>
    %28 = vector.broadcast %27 : vector<1x512xf32> to vector<16x512xf32>
    %29 = arith.mulf %26, %28 : vector<16x512xf32>
    %c0_22 = arith.constant 0 : index
    %c0_23 = arith.constant 0 : index
    %30 = vector.load %arg10[%c0_22, %c0_23] : memref<1x512xf32, #tpu.memory_space<vmem>>, vector<1x512xf32>
    %31 = vector.broadcast %30 : vector<1x512xf32> to vector<16x512xf32>
    %32 = arith.addf %29, %31 : vector<16x512xf32>
    %cst_24 = arith.constant 0.000000e+00 : f32
    %33 = vector.broadcast %cst_24 : f32 to vector<16x512xf32>
    %34 = arith.maximumf %32, %33 : vector<16x512xf32>
    %35 = arith.truncf %34 : vector<16x512xf32> to vector<16x512xbf16>
    %c0_25 = arith.constant 0 : index
    %c0_26 = arith.constant 0 : index
    %36 = vector.load %arg11[%c0_25, %c0_26] : memref<512x1280xbf16, #tpu.memory_space<vmem>>, vector<512x1280xbf16>
    %cst_27 = arith.constant dense<0.000000e+00> : vector<16x1280xf32>
    %37 = tpu.matmul %35, %36, %cst_27 {dimension_numbers = #tpu.dot_dimension_numbers<[1], [0], [0], [1], [0, 0, 1, 1], [], []>} : vector<16x512xbf16>, vector<512x1280xbf16>, vector<16x1280xf32> -> vector<16x1280xf32>
    %c0_28 = arith.constant 0 : index
    %c0_29 = arith.constant 0 : index
    %38 = vector.load %arg12[%c0_28, %c0_29] : memref<1x1280xf32, #tpu.memory_space<vmem>>, vector<1x1280xf32>
    %39 = vector.broadcast %38 : vector<1x1280xf32> to vector<16x1280xf32>
    %40 = arith.mulf %37, %39 : vector<16x1280xf32>
    %c0_30 = arith.constant 0 : index
    %c0_31 = arith.constant 0 : index
    %41 = vector.load %arg13[%c0_30, %c0_31] : memref<1x1280xf32, #tpu.memory_space<vmem>>, vector<1x1280xf32>
    %42 = vector.broadcast %41 : vector<1x1280xf32> to vector<16x1280xf32>
    %43 = arith.addf %40, %42 : vector<16x1280xf32>
    %c0_32 = arith.constant 0 : index
    %c0_33 = arith.constant 0 : index
    %c0_34 = arith.constant 0 : index
    %44 = vector.load %arg14[%c0_32, %c0_33, %c0_34] : memref<1x16x1280xf32, #tpu.memory_space<vmem>>, vector<1x16x1280xf32>
    %45 = vector.shape_cast %44 : vector<1x16x1280xf32> to vector<16x1280xf32>
    %46 = vector.shape_cast %43 : vector<16x1280xf32> to vector<1x16x1280xf32>
    tpu.vector_store %arg14[%c0_32, %c0_33, %c0_34], %46 {strides = array<i32>} : memref<1x16x1280xf32, #tpu.memory_space<vmem>>, vector<1x16x1280xf32>,
    return
  }
  func.func @transform_0(%arg0: i32) -> (i32, i32, i32) {
    %c0_i32 = arith.constant 0 : i32
    %c0_i32_0 = arith.constant 0 : i32
    %c0_i32_1 = arith.constant 0 : i32
    return %arg0, %c0_i32, %c0_i32_0 : i32, i32, i32
  }
  func.func @transform_1(%arg0: i32) -> (i32, i32) {
    %c0_i32 = arith.constant 0 : i32
    %c0_i32_0 = arith.constant 0 : i32
    %c0_i32_1 = arith.constant 0 : i32
    return %c0_i32, %c0_i32_0 : i32, i32
  }
  func.func @transform_2(%arg0: i32) -> (i32, i32) {
    %c0_i32 = arith.constant 0 : i32
    %c0_i32_0 = arith.constant 0 : i32
    %c0_i32_1 = arith.constant 0 : i32
    return %c0_i32, %c0_i32_0 : i32, i32
  }
  func.func @transform_3(%arg0: i32) -> (i32, i32) {
    %c0_i32 = arith.constant 0 : i32
    %c0_i32_0 = arith.constant 0 : i32
    %c0_i32_1 = arith.constant 0 : i32
    return %c0_i32, %c0_i32_0 : i32, i32
  }
  func.func @transform_4(%arg0: i32) -> (i32, i32) {
    %c0_i32 = arith.constant 0 : i32
    %c0_i32_0 = arith.constant 0 : i32
    %c0_i32_1 = arith.constant 0 : i32
    return %c0_i32, %c0_i32_0 : i32, i32
  }
  func.func @transform_5(%arg0: i32) -> (i32, i32) {
    %c0_i32 = arith.constant 0 : i32
    %c0_i32_0 = arith.constant 0 : i32
    %c0_i32_1 = arith.constant 0 : i32
    return %c0_i32, %c0_i32_0 : i32, i32
  }
  func.func @transform_6(%arg0: i32) -> (i32, i32) {
    %c0_i32 = arith.constant 0 : i32
    %c0_i32_0 = arith.constant 0 : i32
    %c0_i32_1 = arith.constant 0 : i32
    return %c0_i32, %c0_i32_0 : i32, i32
  }
  func.func @transform_7(%arg0: i32) -> (i32, i32) {
    %c0_i32 = arith.constant 0 : i32
    %c0_i32_0 = arith.constant 0 : i32
    %c0_i32_1 = arith.constant 0 : i32
    return %c0_i32, %c0_i32_0 : i32, i32
  }
  func.func @transform_8(%arg0: i32) -> (i32, i32) {
    %c0_i32 = arith.constant 0 : i32
    %c0_i32_0 = arith.constant 0 : i32
    %c0_i32_1 = arith.constant 0 : i32
    return %c0_i32, %c0_i32_0 : i32, i32
  }
  func.func @transform_9(%arg0: i32) -> (i32, i32) {
    %c0_i32 = arith.constant 0 : i32
    %c0_i32_0 = arith.constant 0 : i32
    %c0_i32_1 = arith.constant 0 : i32
    return %c0_i32, %c0_i32_0 : i32, i32
  }
  func.func @transform_10(%arg0: i32) -> (i32, i32) {
    %c0_i32 = arith.constant 0 : i32
    %c0_i32_0 = arith.constant 0 : i32
    %c0_i32_1 = arith.constant 0 : i32
    return %c0_i32, %c0_i32_0 : i32, i32
  }
  func.func @transform_11(%arg0: i32) -> (i32, i32) {
    %c0_i32 = arith.constant 0 : i32
    %c0_i32_0 = arith.constant 0 : i32
    %c0_i32_1 = arith.constant 0 : i32
    return %c0_i32, %c0_i32_0 : i32, i32
  }
  func.func @transform_12(%arg0: i32) -> (i32, i32) {
    %c0_i32 = arith.constant 0 : i32
    %c0_i32_0 = arith.constant 0 : i32
    %c0_i32_1 = arith.constant 0 : i32
    return %c0_i32, %c0_i32_0 : i32, i32
  }
  func.func @transform_13(%arg0: i32) -> (i32, i32, i32) {
    %c0_i32 = arith.constant 0 : i32
    %c0_i32_0 = arith.constant 0 : i32
    %c0_i32_1 = arith.constant 0 : i32
    return %arg0, %c0_i32, %c0_i32_0 : i32, i32, i32
  }
}

</mosaic_0001>

<llo_original>
// kernel: segmentation_vit_forward.2
$region0: #{segmentation_vit_forward.2}
  #allocation0 [shape = 'u32[]', space=smem, size = 0x4, offset = 0x4, fixed_abs, tag = 'smem constant byte address 0x4 - core index']
  #allocation1 [shape = 'u32[144,128]{1,0:T(1,128)}', space=vmem, size = 0x12000, scoped, tag = 'internal scratch']
  %s0 = inlined_call_operand.vmem [shape: bf16[2,16,192], index: 0, kind: input, shape index: {}]
  %s1 = inlined_call_operand.vmem [shape: bf16[192,64], index: 1, kind: input, shape index: {}]
  %s2 = inlined_call_operand.hbm [shape: f32[16,64], index: 2, kind: input, shape index: {}]
  %s3 = inlined_call_operand.vmem [shape: bf16[2,2,64,48], index: 3, kind: input, shape index: {}]
  %s4 = inlined_call_operand.hbm [shape: f32[2,2,16], index: 4, kind: input, shape index: {}]
  %s5 = inlined_call_operand.hbm [shape: f32[2,2,16], index: 5, kind: input, shape index: {}]
  %s6 = inlined_call_operand.hbm [shape: bf16[2,2,16,64], index: 6, kind: input, shape index: {}]
  %s7 = inlined_call_operand.hbm [shape: f32[2,1,64], index: 7, kind: input, shape index: {}]
  %s8 = inlined_call_operand.hbm [shape: bf16[2,64,128], index: 8, kind: input, shape index: {}]
  %s9 = inlined_call_operand.hbm [shape: f32[2,1,64], index: 9, kind: input, shape index: {}]
  %s10 = inlined_call_operand.hbm [shape: f32[2,1,64], index: 10, kind: input, shape index: {}]
  %s11 = inlined_call_operand.hbm [shape: bf16[2,64,64], index: 11, kind: input, shape index: {}]
  %s12 = inlined_call_operand.hbm [shape: f32[2,1,64], index: 12, kind: input, shape index: {}]
  %s13 = inlined_call_operand.vmem [shape: f32[2,16,64], index: 13, kind: output, shape index: {}]
  %s14 = sld [smem:[#allocation0]]
  $region129: #{segmentation_vit_forward.2} parent=0
    _
  %s16 = ssub.s32 1, %s14
  %s17 = scalar_select 0, %s16, %s14
  $region1: #{segmentation_vit_forward.2} parent=0
    #allocation2 [shape = 'u8[8192]{0}', space=vmem, size = 0x2000, scoped, tag = 'input window, operand 2, single buffered']
    #allocation3 [shape = 's32[2]{0}', space=sflag, size = 0x8, scoped, tag = 'scoped memory for segmentation_vit_forward.2']
    #allocation4 [shape = 'u8[2048]{0}', space=vmem, size = 0x800, scoped, tag = 'input window, operand 4']
    #allocation5 [shape = 's32[2]{0}', space=sflag, size = 0x8, scoped, tag = 'scoped memory for segmentation_vit_forward.2']
    #allocation6 [shape = 'u8[2048]{0}', space=vmem, size = 0x800, scoped, tag = 'input window, operand 5']
    #allocation7 [shape = 'u8[16384]{0}', space=vmem, size = 0x4000, scoped, tag = 'input window, operand 6']
    #allocation8 [shape = 's32[2]{0}', space=sflag, size = 0x8, scoped, tag = 'scoped memory for segmentation_vit_forward.2']
    #allocation9 [shape = 'u8[1024]{0}', space=vmem, size = 0x400, scoped, tag = 'input window, operand 7']
    #allocation10 [shape = 'u8[32768]{0}', space=vmem, size = 0x8000, scoped, tag = 'input window, operand 8']
    #allocation11 [shape = 's32[2]{0}', space=sflag, size = 0x8, scoped, tag = 'scoped memory for segmentation_vit_forward.2']
    #allocation12 [shape = 'u8[1024]{0}', space=vmem, size = 0x400, scoped, tag = 'input window, operand 9']
    #allocation13 [shape = 'u8[1024]{0}', space=vmem, size = 0x400, scoped, tag = 'input window, operand 10']
    #allocation14 [shape = 's32[2]{0}', space=sflag, size = 0x8, scoped, tag = 'scoped memory for segmentation_vit_forward.2']
    #allocation15 [shape = 'u8[32768]{0}', space=vmem, size = 0x8000, scoped, tag = 'input window, operand 11']
    #allocation16 [shape = 'u8[1024]{0}', space=vmem, size = 0x400, scoped, tag = 'input window, operand 12']
    #allocation17 [shape = 's32[2]{0}', space=sflag, size = 0x8, scoped, tag = 'scoped memory for segmentation_vit_forward.2']
    %18 = vsyncpa [#allocation3], 0
    %19 = vsyncpa [#allocation5], 0
    %s20 = scalar_lea.sflag [#allocation5], 1
    %21 = vsyncpa %s20, 0
    %22 = vsyncpa [#allocation8], 0
    %s23 = scalar_lea.sflag [#allocation8], 1
    %24 = vsyncpa %s23, 0
    %25 = vsyncpa [#allocation11], 0
    %s26 = scalar_lea.sflag [#allocation11], 1
    %27 = vsyncpa %s26, 0
    %28 = vsyncpa [#allocation14], 0
    %s29 = scalar_lea.sflag [#allocation14], 1
    %30 = vsyncpa %s29, 0
    %31 = vsyncpa [#allocation17], 0
    %s32 = scalar_lea.sflag [#allocation17], 1
    %33 = vsyncpa %s32, 0
    loop: start=0, step=1, limit=4
    $region2: #{segmentation_vit_forward.2} parent=1 // loop_pre_header
      _
    $region3: #{segmentation_vit_forward.2} parent=1 // loop_header
      %s35 = sphi 0, %s39
      %p36 = scmp.ge.s32.totalorder %s35, 4
      %s43 = sphi 0, %s43
      %s45 = sphi 0, %s43
      %s46 = sphi 0, %s45
      %s60 = sphi 0, %s46
      %s64 = sphi 0, %s64
      %s66 = sphi 0, %s64
      %s67 = sphi 0, %s66
      %s81 = sphi 0, %s67
      %s85 = sphi 0, %s85
      %s87 = sphi 0, %s85
      %s88 = sphi 0, %s87
      %s102 = sphi 0, %s88
      %s108 = sphi 0, %s110
      %s111 = sphi 0, %s108
      %s112 = sphi 0, %s111
      %s128 = sphi 0, %s112
      %s134 = sphi 0, %s136
      %s137 = sphi 0, %s134
      %s138 = sphi 0, %s137
      %s154 = sphi 0, %s138
      %s160 = sphi 0, %s162
      %s163 = sphi 0, %s160
      %s164 = sphi 0, %s163
      %s180 = sphi 0, %s164
      %s186 = sphi 0, %s188
      %s189 = sphi 0, %s186
      %s190 = sphi 0, %s189
      %s206 = sphi 0, %s190
      %s212 = sphi 0, %s214
      %s215 = sphi 0, %s212
      %s216 = sphi 0, %s215
      %s232 = sphi 0, %s216
      %s238 = sphi 0, %s240
      %s241 = sphi 0, %s238
      %s242 = sphi 0, %s241
      %s258 = sphi 0, %s242
      %s264 = sphi 0, %s266
      %s267 = sphi 0, %s264
      %s268 = sphi 0, %s267
      %s284 = sphi 0, %s268
      %s290 = sphi 0, %s292
      %s293 = sphi 0, %s290
      %s294 = sphi 0, %s293
      %s310 = sphi 0, %s294
      %s316 = sphi 0, %s318
      %s319 = sphi 0, %s316
      %s320 = sphi 0, %s319
      %s336 = sphi 0, %s320
      %s342 = sphi 0, %s344
      %s345 = sphi 0, %s342
      %s346 = sphi 0, %s345
      %s362 = sphi 0, %s346
      %s366 = sphi 0, %s366
      %s368 = sphi 0, %s366
      %s369 = sphi 0, %s368
      %s383 = sphi 0, %s369
    $region4: #{segmentation_vit_forward.2} parent=1 // loop_header_branch
      %38 = sbr.rel (%p36) target = $region8
    $region5: #{segmentation_vit_forward.2} parent=1 // loop_body
      %s40 = ssub.s32 %s35, 1
      %s41 = ssub.s32 %s35, 2
      %s42 = sadd.s32 %s35, 1
      %s44 = sadd.s32 %s43, 1
      %p47 = scmp.eq.s32.totalorder %s35, 1
      %p48 = scmp.ne.s32.totalorder %s43, %s45
      %p49 = scmp.eq.s32.totalorder %s35, 0
      %p50 = por %p48, %p49
      %p51 = scmp.ne.s32.totalorder %s43, %s45
      %p52 = scmp.eq.s32.totalorder %s40, 1
      %p53 = por %p51, %p52
      %p54 = scmp.ne.s32.totalorder %s45, %s46
      %p55 = scmp.eq.s32.totalorder %s40, 0
      %p56 = por %p54, %p55
      %p57 = scmp.ne.s32.totalorder %s45, %s46
      %p58 = scmp.eq.s32.totalorder %s41, 1
      %p59 = por %p57, %p58
      %p61 = scmp.ne.s32.totalorder %s46, %s60
      %p62 = scmp.eq.s32.totalorder %s41, 0
      %p63 = por %p61, %p62
      %s65 = sadd.s32 %s64, 1
      %p68 = scmp.eq.s32.totalorder %s35, 1
      %p69 = scmp.ne.s32.totalorder %s64, %s66
      %p70 = scmp.eq.s32.totalorder %s35, 0
      %p71 = por %p69, %p70
      %p72 = scmp.ne.s32.totalorder %s64, %s66
      %p73 = scmp.eq.s32.totalorder %s40, 1
      %p74 = por %p72, %p73
      %p75 = scmp.ne.s32.totalorder %s66, %s67
      %p76 = scmp.eq.s32.totalorder %s40, 0
      %p77 = por %p75, %p76
      %p78 = scmp.ne.s32.totalorder %s66, %s67
      %p79 = scmp.eq.s32.totalorder %s41, 1
      %p80 = por %p78, %p79
      %p82 = scmp.ne.s32.totalorder %s67, %s81
      %p83 = scmp.eq.s32.totalorder %s41, 0
      %p84 = por %p82, %p83
      %s86 = sadd.s32 %s85, 1
      %p89 = scmp.eq.s32.totalorder %s35, 1
      %p90 = scmp.ne.s32.totalorder %s85, %s87
      %p91 = scmp.eq.s32.totalorder %s35, 0
      %p92 = por %p90, %p91
      %p93 = scmp.ne.s32.totalorder %s85, %s87
      %p94 = scmp.eq.s32.totalorder %s40, 1
      %p95 = por %p93, %p94
      %p96 = scmp.ne.s32.totalorder %s87, %s88
      %p97 = scmp.eq.s32.totalorder %s40, 0
      %p98 = por %p96, %p97
      %p99 = scmp.ne.s32.totalorder %s87, %s88
      %p100 = scmp.eq.s32.totalorder %s41, 1
      %p101 = por %p99, %p100
      %p103 = scmp.ne.s32.totalorder %s88, %s102
      %p104 = scmp.eq.s32.totalorder %s41, 0
      %p105 = por %p103, %p104
      %s106 = ssub.s32 %s35, %s42
      %p107 = scmp.eq.s32.totalorder %s106, 0
      %s109 = sadd.s32 %s108, 1
      %s110 = scalar_select %p107, %s108, %s109
      %p113 = pneg %p107
      %p114 = scmp.eq.s32.totalorder %s35, 1
      %p115 = por %p113, %p114
      %p116 = scmp.ne.s32.totalorder %s108, %s111
      %p117 = scmp.eq.s32.totalorder %s35, 0
      %p118 = por %p116, %p117
      %p119 = scmp.ne.s32.totalorder %s108, %s111
      %p120 = scmp.eq.s32.totalorder %s40, 1
      %p121 = por %p119, %p120
      %p122 = scmp.ne.s32.totalorder %s111, %s112
      %p123 = scmp.eq.s32.totalorder %s40, 0
      %p124 = por %p122, %p123
      %p125 = scmp.ne.s32.totalorder %s111, %s112
      %p126 = scmp.eq.s32.totalorder %s41, 1
      %p127 = por %p125, %p126
      %p129 = scmp.ne.s32.totalorder %s112, %s128
      %p130 = scmp.eq.s32.totalorder %s41, 0
      %p131 = por %p129, %p130
      %s132 = ssub.s32 %s35, %s42
      %p133 = scmp.eq.s32.totalorder %s132, 0
      %s135 = sadd.s32 %s134, 1
      %s136 = scalar_select %p133, %s134, %s135
      %p139 = pneg %p133
      %p140 = scmp.eq.s32.totalorder %s35, 1
      %p141 = por %p139, %p140
      %p142 = scmp.ne.s32.totalorder %s134, %s137
      %p143 = scmp.eq.s32.totalorder %s35, 0
      %p144 = por %p142, %p143
      %p145 = scmp.ne.s32.totalorder %s134, %s137
      %p146 = scmp.eq.s32.totalorder %s40, 1
      %p147 = por %p145, %p146
      %p148 = scmp.ne.s32.totalorder %s137, %s138
      %p149 = scmp.eq.s32.totalorder %s40, 0
      %p150 = por %p148, %p149
      %p151 = scmp.ne.s32.totalorder %s137, %s138
      %p152 = scmp.eq.s32.totalorder %s41, 1
      %p153 = por %p151, %p152
      %p155 = scmp.ne.s32.totalorder %s138, %s154
      %p156 = scmp.eq.s32.totalorder %s41, 0
      %p157 = por %p155, %p156
      %s158 = ssub.s32 %s35, %s42
      %p159 = scmp.eq.s32.totalorder %s158, 0
      %s161 = sadd.s32 %s160, 1
      %s162 = scalar_select %p159, %s160, %s161
      %p165 = pneg %p159
      %p166 = scmp.eq.s32.totalorder %s35, 1
      %p167 = por %p165, %p166
      %p168 = scmp.ne.s32.totalorder %s160, %s163
      %p169 = scmp.eq.s32.totalorder %s35, 0
      %p170 = por %p168, %p169
      %p171 = scmp.ne.s32.totalorder %s160, %s163
      %p172 = scmp.eq.s32.totalorder %s40, 1
      %p173 = por %p171, %p172
      %p174 = scmp.ne.s32.totalorder %s163, %s164
      %p175 = scmp.eq.s32.totalorder %s40, 0
      %p176 = por %p174, %p175
      %p177 = scmp.ne.s32.totalorder %s163, %s164
      %p178 = scmp.eq.s32.totalorder %s41, 1
      %p179 = por %p177, %p178
      %p181 = scmp.ne.s32.totalorder %s164, %s180
      %p182 = scmp.eq.s32.totalorder %s41, 0
      %p183 = por %p181, %p182
      %s184 = ssub.s32 %s35, %s42
      %p185 = scmp.eq.s32.totalorder %s184, 0
      %s187 = sadd.s32 %s186, 1
      %s188 = scalar_select %p185, %s186, %s187
      %p191 = pneg %p185
      %p192 = scmp.eq.s32.totalorder %s35, 1
      %p193 = por %p191, %p192
      %p194 = scmp.ne.s32.totalorder %s186, %s189
      %p195 = scmp.eq.s32.totalorder %s35, 0
      %p196 = por %p194, %p195
      %p197 = scmp.ne.s32.totalorder %s186, %s189
      %p198 = scmp.eq.s32.totalorder %s40, 1
      %p199 = por %p197, %p198
      %p200 = scmp.ne.s32.totalorder %s189, %s190
      %p201 = scmp.eq.s32.totalorder %s40, 0
      %p202 = por %p200, %p201
      %p203 = scmp.ne.s32.totalorder %s189, %s190
      %p204 = scmp.eq.s32.totalorder %s41, 1
      %p205 = por %p203, %p204
      %p207 = scmp.ne.s32.totalorder %s190, %s206
      %p208 = scmp.eq.s32.totalorder %s41, 0
      %p209 = por %p207, %p208
      %s210 = ssub.s32 %s35, %s42
      %p211 = scmp.eq.s32.totalorder %s210, 0
      %s213 = sadd.s32 %s212, 1
      %s214 = scalar_select %p211, %s212, %s213
      %p217 = pneg %p211
      %p218 = scmp.eq.s32.totalorder %s35, 1
      %p219 = por %p217, %p218
      %p220 = scmp.ne.s32.totalorder %s212, %s215
      %p221 = scmp.eq.s32.totalorder %s35, 0
      %p222 = por %p220, %p221
      %p223 = scmp.ne.s32.totalorder %s212, %s215
      %p224 = scmp.eq.s32.totalorder %s40, 1
      %p225 = por %p223, %p224
      %p226 = scmp.ne.s32.totalorder %s215, %s216
      %p227 = scmp.eq.s32.totalorder %s40, 0
      %p228 = por %p226, %p227
      %p229 = scmp.ne.s32.totalorder %s215, %s216
      %p230 = scmp.eq.s32.totalorder %s41, 1
      %p231 = por %p229, %p230
      %p233 = scmp.ne.s32.totalorder %s216, %s232
      %p234 = scmp.eq.s32.totalorder %s41, 0
      %p235 = por %p233, %p234
      %s236 = ssub.s32 %s35, %s42
      %p237 = scmp.eq.s32.totalorder %s236, 0
      %s239 = sadd.s32 %s238, 1
      %s240 = scalar_select %p237, %s238, %s239
      %p243 = pneg %p237
      %p244 = scmp.eq.s32.totalorder %s35, 1
      %p245 = por %p243, %p244
      %p246 = scmp.ne.s32.totalorder %s238, %s241
      %p247 = scmp.eq.s32.totalorder %s35, 0
      %p248 = por %p246, %p247
      %p249 = scmp.ne.s32.totalorder %s238, %s241
      %p250 = scmp.eq.s32.totalorder %s40, 1
      %p251 = por %p249, %p250
      %p252 = scmp.ne.s32.totalorder %s241, %s242
      %p253 = scmp.eq.s32.totalorder %s40, 0
      %p254 = por %p252, %p253
      %p255 = scmp.ne.s32.totalorder %s241, %s242
      %p256 = scmp.eq.s32.totalorder %s41, 1
      %p257 = por %p255, %p256
      %p259 = scmp.ne.s32.totalorder %s242, %s258
      %p260 = scmp.eq.s32.totalorder %s41, 0
      %p261 = por %p259, %p260
      %s262 = ssub.s32 %s35, %s42
      %p263 = scmp.eq.s32.totalorder %s262, 0
      %s265 = sadd.s32 %s264, 1
      %s266 = scalar_select %p263, %s264, %s265
      %p269 = pneg %p263
      %p270 = scmp.eq.s32.totalorder %s35, 1
      %p271 = por %p269, %p270
      %p272 = scmp.ne.s32.totalorder %s264, %s267
      %p273 = scmp.eq.s32.totalorder %s35, 0
      %p274 = por %p272, %p273
      %p275 = scmp.ne.s32.totalorder %s264, %s267
      %p276 = scmp.eq.s32.totalorder %s40, 1
      %p277 = por %p275, %p276
      %p278 = scmp.ne.s32.totalorder %s267, %s268
      %p279 = scmp.eq.s32.totalorder %s40, 0
      %p280 = por %p278, %p279
      %p281 = scmp.ne.s32.totalorder %s267, %s268
      %p282 = scmp.eq.s32.totalorder %s41, 1
      %p283 = por %p281, %p282
      %p285 = scmp.ne.s32.totalorder %s268, %s284
      %p286 = scmp.eq.s32.totalorder %s41, 0
      %p287 = por %p285, %p286
      %s288 = ssub.s32 %s35, %s42
      %p289 = scmp.eq.s32.totalorder %s288, 0
      %s291 = sadd.s32 %s290, 1
      %s292 = scalar_select %p289, %s290, %s291
      %p295 = pneg %p289
      %p296 = scmp.eq.s32.totalorder %s35, 1
      %p297 = por %p295, %p296
      %p298 = scmp.ne.s32.totalorder %s290, %s293
      %p299 = scmp.eq.s32.totalorder %s35, 0
      %p300 = por %p298, %p299
      %p301 = scmp.ne.s32.totalorder %s290, %s293
      %p302 = scmp.eq.s32.totalorder %s40, 1
      %p303 = por %p301, %p302
      %p304 = scmp.ne.s32.totalorder %s293, %s294
      %p305 = scmp.eq.s32.totalorder %s40, 0
      %p306 = por %p304, %p305
      %p307 = scmp.ne.s32.totalorder %s293, %s294
      %p308 = scmp.eq.s32.totalorder %s41, 1
      %p309 = por %p307, %p308
      %p311 = scmp.ne.s32.totalorder %s294, %s310
      %p312 = scmp.eq.s32.totalorder %s41, 0
      %p313 = por %p311, %p312
      %s314 = ssub.s32 %s35, %s42
      %p315 = scmp.eq.s32.totalorder %s314, 0
      %s317 = sadd.s32 %s316, 1
      %s318 = scalar_select %p315, %s316, %s317
      %p321 = pneg %p315
      %p322 = scmp.eq.s32.totalorder %s35, 1
      %p323 = por %p321, %p322
      %p324 = scmp.ne.s32.totalorder %s316, %s319
      %p325 = scmp.eq.s32.totalorder %s35, 0
      %p326 = por %p324, %p325
      %p327 = scmp.ne.s32.totalorder %s316, %s319
      %p328 = scmp.eq.s32.totalorder %s40, 1
      %p329 = por %p327, %p328
      %p330 = scmp.ne.s32.totalorder %s319, %s320
      %p331 = scmp.eq.s32.totalorder %s40, 0
      %p332 = por %p330, %p331
      %p333 = scmp.ne.s32.totalorder %s319, %s320
      %p334 = scmp.eq.s32.totalorder %s41, 1
      %p335 = por %p333, %p334
      %p337 = scmp.ne.s32.totalorder %s320, %s336
      %p338 = scmp.eq.s32.totalorder %s41, 0
      %p339 = por %p337, %p338
      %s340 = ssub.s32 %s35, %s42
      %p341 = scmp.eq.s32.totalorder %s340, 0
      %s343 = sadd.s32 %s342, 1
      %s344 = scalar_select %p341, %s342, %s343
      %p347 = pneg %p341
      %p348 = scmp.eq.s32.totalorder %s35, 1
      %p349 = por %p347, %p348
      %p350 = scmp.ne.s32.totalorder %s342, %s345
      %p351 = scmp.eq.s32.totalorder %s35, 0
      %p352 = por %p350, %p351
      %p353 = scmp.ne.s32.totalorder %s342, %s345
      %p354 = scmp.eq.s32.totalorder %s40, 1
      %p355 = por %p353, %p354
      %p356 = scmp.ne.s32.totalorder %s345, %s346
      %p357 = scmp.eq.s32.totalorder %s40, 0
      %p358 = por %p356, %p357
      %p359 = scmp.ne.s32.totalorder %s345, %s346
      %p360 = scmp.eq.s32.totalorder %s41, 1
      %p361 = por %p359, %p360
      %p363 = scmp.ne.s32.totalorder %s346, %s362
      %p364 = scmp.eq.s32.totalorder %s41, 0
      %p365 = por %p363, %p364
      %s367 = sadd.s32 %s366, 1
      %p370 = scmp.eq.s32.totalorder %s35, 1
      %p371 = scmp.ne.s32.totalorder %s366, %s368
      %p372 = scmp.eq.s32.totalorder %s35, 0
      %p373 = por %p371, %p372
      %p374 = scmp.ne.s32.totalorder %s366, %s368
      %p375 = scmp.eq.s32.totalorder %s40, 1
      %p376 = por %p374, %p375
      %p377 = scmp.ne.s32.totalorder %s368, %s369
      %p378 = scmp.eq.s32.totalorder %s40, 0
      %p379 = por %p377, %p378
      %p380 = scmp.ne.s32.totalorder %s368, %s369
      %p381 = scmp.eq.s32.totalorder %s41, 1
      %p382 = por %p380, %p381
      %p384 = scmp.ne.s32.totalorder %s369, %s383
      %p385 = scmp.eq.s32.totalorder %s41, 0
      %p386 = por %p384, %p385
      %p387 = scmp.le.s32.totalorder 1, %s35
      %p388 = scmp.lt.s32.totalorder %s35, 3
      %p389 = pnand %p387, %p388
      %p390 = pneg %p389
      // Predicated region
      $region9: #{segmentation_vit_forward.2} parent=5 // pred_check
        _
      $region10: #{segmentation_vit_forward.2} parent=5 // pred_check_branch
        %392 = sbr.rel (%p389) target = $region12
      $region11: #{segmentation_vit_forward.2} parent=5 // pred_region
        %s393 = ssub.s32 %s35, 1
        // Predicated region
        $region13: #{segmentation_vit_forward.2} parent=11 // pred_check
          %p394 = pneg %p56
        $region14: #{segmentation_vit_forward.2} parent=11 // pred_check_branch
          %396 = sbr.rel (%p394) target = $region16
        $region15: #{segmentation_vit_forward.2} parent=11 // pred_region
          _
        $region16: #{segmentation_vit_forward.2} parent=11 // pred_fallthru
          _
        // Predicated region
        $region17: #{segmentation_vit_forward.2} parent=11 // pred_check
          %p397 = pneg %p77
        $region18: #{segmentation_vit_forward.2} parent=11 // pred_check_branch
          %399 = sbr.rel (%p397) target = $region20
        $region19: #{segmentation_vit_forward.2} parent=11 // pred_region
          _
        $region20: #{segmentation_vit_forward.2} parent=11 // pred_fallthru
          _
        // Predicated region
        $region21: #{segmentation_vit_forward.2} parent=11 // pred_check
          %p400 = pneg %p98
        $region22: #{segmentation_vit_forward.2} parent=11 // pred_check_branch
          %402 = sbr.rel (%p400) target = $region24
        $region23: #{segmentation_vit_forward.2} parent=11 // pred_region
          %s404 = ssub.s32 256, 256
          %405 = vsyncadd [#allocation3], %s404
          %s406 = sshll.u32 [#allocation2], 4
          %s407 = int_to_ptr.vmem [resolvable:$true] %s406
          %412 = dma.hbm_to_vmem [thread:$0]  %s2, 256, %s407, [#allocation3], 128, 128, 8
        $region24: #{segmentation_vit_forward.2} parent=11 // pred_fallthru
          _
      $region12: #{segmentation_vit_forward.2} parent=5 // pred_fallthru
        _
      %p413 = scmp.lt.s32.totalorder %s35, 2
      // Predicated region
      $region25: #{segmentation_vit_forward.2} parent=5 // pred_check
        %p414 = pneg %p413
      $region26: #{segmentation_vit_forward.2} parent=5 // pred_check_branch
        %416 = sbr.rel (%p414) target = $region28
      $region27: #{segmentation_vit_forward.2} parent=5 // pred_region
        // Predicated region
        $region29: #{segmentation_vit_forward.2} parent=27 // pred_check
          %p417 = pneg %p118
        $region30: #{segmentation_vit_forward.2} parent=27 // pred_check_branch
          %419 = sbr.rel (%p417) target = $region32
        $region31: #{segmentation_vit_forward.2} parent=27 // pred_region
          %p420 = scmp.lt.s32.totalorder %s35, 1
          %s421 = scalar_select %p420, %s35, 1
          %s422 = smul.addr %s421, 16
          %s423 = smul.addr %s422, 4
          %s424 = scalar_lea.vmem %s3, %s423
        $region32: #{segmentation_vit_forward.2} parent=27 // pred_fallthru
          _
        // Predicated region
        $region33: #{segmentation_vit_forward.2} parent=27 // pred_check
          %p425 = pneg %p144
        $region34: #{segmentation_vit_forward.2} parent=27 // pred_check_branch
          %427 = sbr.rel (%p425) target = $region36
        $region35: #{segmentation_vit_forward.2} parent=27 // pred_region
          %s428 = sand.u32 %s35, 1
          %s429 = scalar_lea.sflag [#allocation5], %s428
          %s430 = sand.u32 %s134, 1
          %s431 = smul.addr %s430, 2
          %s432 = scalar_lea.vmem [#allocation4], %s431
          %s434 = ssub.s32 32, 32
          %435 = vsyncadd %s429, %s434
          %s436 = smul.addr %s35, 32
          %s437 = scalar_lea.hbm %s4, %s436
          %s439 = sshll.u32 %s432, 4
          %s440 = int_to_ptr.vmem [resolvable:$true] %s439
          %442 = dma.hbm_to_vmem [thread:$0]  %s437, 32, %s440, %s429
        $region36: #{segmentation_vit_forward.2} parent=27 // pred_fallthru
          _
        // Predicated region
        $region37: #{segmentation_vit_forward.2} parent=27 // pred_check
          %p443 = pneg %p170
        $region38: #{segmentation_vit_forward.2} parent=27 // pred_check_branch
          %445 = sbr.rel (%p443) target = $region40
        $region39: #{segmentation_vit_forward.2} parent=27 // pred_region
          %s446 = sand.u32 %s35, 1
          %s447 = scalar_lea.sflag [#allocation5], %s446
          %s448 = sand.u32 %s160, 1
          %s449 = smul.addr %s448, 2
          %s450 = scalar_lea.vmem [#allocation6], %s449
          %s452 = ssub.s32 32, 32
          %453 = vsyncadd %s447, %s452
          %s454 = smul.addr %s35, 32
          %s455 = scalar_lea.hbm %s5, %s454
          %s457 = sshll.u32 %s450, 4
          %s458 = int_to_ptr.vmem [resolvable:$true] %s457
          %460 = dma.hbm_to_vmem [thread:$0]  %s455, 32, %s458, %s447
        $region40: #{segmentation_vit_forward.2} parent=27 // pred_fallthru
          _
        // Predicated region
        $region41: #{segmentation_vit_forward.2} parent=27 // pred_check
          %p461 = pneg %p196
        $region42: #{segmentation_vit_forward.2} parent=27 // pred_check_branch
          %463 = sbr.rel (%p461) target = $region44
        $region43: #{segmentation_vit_forward.2} parent=27 // pred_region
          %s464 = sand.u32 %s35, 1
          %s465 = scalar_lea.sflag [#allocation8], %s464
          %s466 = sand.u32 %s186, 1
          %s467 = smul.addr %s466, 16
          %s468 = scalar_lea.vmem [#allocation7], %s467
          %s470 = ssub.s32 256, 256
          %471 = vsyncadd %s465, %s470
          %s472 = smul.addr %s35, 4
          %s473 = smul.addr %s472, 64
          %s474 = scalar_lea.hbm %s6, %s473
          %s475 = sshll.u32 %s468, 4
          %s476 = int_to_ptr.vmem [resolvable:$true] %s475
          %481 = dma.hbm_to_vmem [thread:$0]  %s474, 256, %s476, %s465, 64, 64, 4
        $region44: #{segmentation_vit_forward.2} parent=27 // pred_fallthru
          _
        // Predicated region
        $region45: #{segmentation_vit_forward.2} parent=27 // pred_check
          %p482 = pneg %p222
        $region46: #{segmentation_vit_forward.2} parent=27 // pred_check_branch
          %484 = sbr.rel (%p482) target = $region48
        $region47: #{segmentation_vit_forward.2} parent=27 // pred_region
          %s485 = sand.u32 %s35, 1
          %s486 = scalar_lea.sflag [#allocation8], %s485
          %s487 = sand.u32 %s212, 1
          %s488 = scalar_lea.vmem [#allocation9], %s487
          %s490 = ssub.s32 16, 16
          %491 = vsyncadd %s486, %s490
          %s492 = smul.addr %s35, 16
          %s493 = scalar_lea.hbm %s7, %s492
          %s495 = sshll.u32 %s488, 4
          %s496 = int_to_ptr.vmem [resolvable:$true] %s495
          %498 = dma.hbm_to_vmem [thread:$0]  %s493, 16, %s496, %s486
        $region48: #{segmentation_vit_forward.2} parent=27 // pred_fallthru
          _
        // Predicated region
        $region49: #{segmentation_vit_forward.2} parent=27 // pred_check
          %p499 = pneg %p248
        $region50: #{segmentation_vit_forward.2} parent=27 // pred_check_branch
          %501 = sbr.rel (%p499) target = $region52
        $region51: #{segmentation_vit_forward.2} parent=27 // pred_region
          %s502 = sand.u32 %s35, 1
          %s503 = scalar_lea.sflag [#allocation11], %s502
          %s504 = sand.u32 %s238, 1
          %s505 = smul.addr %s504, 32
          %s506 = scalar_lea.vmem [#allocation10], %s505
          %s508 = ssub.s32 512, 512
          %509 = vsyncadd %s503, %s508
          %s510 = smul.addr %s35, 8
          %s511 = smul.addr %s510, 64
          %s512 = scalar_lea.hbm %s8, %s511
          %s513 = sshll.u32 %s506, 4
          %s514 = int_to_ptr.vmem [resolvable:$true] %s513
          %519 = dma.hbm_to_vmem [thread:$0]  %s512, 512, %s514, %s503, 64, 64, 4
        $region52: #{segmentation_vit_forward.2} parent=27 // pred_fallthru
          _
        // Predicated region
        $region53: #{segmentation_vit_forward.2} parent=27 // pred_check
          %p520 = pneg %p274
        $region54: #{segmentation_vit_forward.2} parent=27 // pred_check_branch
          %522 = sbr.rel (%p520) target = $region56
        $region55: #{segmentation_vit_forward.2} parent=27 // pred_region
          %s523 = sand.u32 %s35, 1
          %s524 = scalar_lea.sflag [#allocation11], %s523
          %s525 = sand.u32 %s264, 1
          %s526 = scalar_lea.vmem [#allocation12], %s525
          %s528 = ssub.s32 16, 16
          %529 = vsyncadd %s524, %s528
          %s530 = smul.addr %s35, 16
          %s531 = scalar_lea.hbm %s9, %s530
          %s533 = sshll.u32 %s526, 4
          %s534 = int_to_ptr.vmem [resolvable:$true] %s533
          %536 = dma.hbm_to_vmem [thread:$0]  %s531, 16, %s534, %s524
        $region56: #{segmentation_vit_forward.2} parent=27 // pred_fallthru
          _
        // Predicated region
        $region57: #{segmentation_vit_forward.2} parent=27 // pred_check
          %p537 = pneg %p300
        $region58: #{segmentation_vit_forward.2} parent=27 // pred_check_branch
          %539 = sbr.rel (%p537) target = $region60
        $region59: #{segmentation_vit_forward.2} parent=27 // pred_region
          %s540 = sand.u32 %s35, 1
          %s541 = scalar_lea.sflag [#allocation14], %s540
          %s542 = sand.u32 %s290, 1
          %s543 = scalar_lea.vmem [#allocation13], %s542
          %s545 = ssub.s32 16, 16
          %546 = vsyncadd %s541, %s545
          %s547 = smul.addr %s35, 16
          %s548 = scalar_lea.hbm %s10, %s547
          %s550 = sshll.u32 %s543, 4
          %s551 = int_to_ptr.vmem [resolvable:$true] %s550
          %553 = dma.hbm_to_vmem [thread:$0]  %s548, 16, %s551, %s541
        $region60: #{segmentation_vit_forward.2} parent=27 // pred_fallthru
          _
        // Predicated region
        $region61: #{segmentation_vit_forward.2} parent=27 // pred_check
          %p554 = pneg %p326
        $region62: #{segmentation_vit_forward.2} parent=27 // pred_check_branch
          %556 = sbr.rel (%p554) target = $region64
        $region63: #{segmentation_vit_forward.2} parent=27 // pred_region
          %s557 = sand.u32 %s35, 1
          %s558 = scalar_lea.sflag [#allocation14], %s557
          %s559 = sand.u32 %s316, 1
          %s560 = smul.addr %s559, 32
          %s561 = scalar_lea.vmem [#allocation15], %s560
          %s563 = ssub.s32 512, 512
          %564 = vsyncadd %s558, %s563
          %s565 = smul.addr %s35, 8
          %s566 = smul.addr %s565, 64
          %s567 = scalar_lea.hbm %s11, %s566
          %s568 = sshll.u32 %s561, 4
          %s569 = int_to_ptr.vmem [resolvable:$true] %s568
          %574 = dma.hbm_to_vmem [thread:$0]  %s567, 512, %s569, %s558, 64, 64, 4
        $region64: #{segmentation_vit_forward.2} parent=27 // pred_fallthru
          _
        // Predicated region
        $region65: #{segmentation_vit_forward.2} parent=27 // pred_check
          %p575 = pneg %p352
        $region66: #{segmentation_vit_forward.2} parent=27 // pred_check_branch
          %577 = sbr.rel (%p575) target = $region68
        $region67: #{segmentation_vit_forward.2} parent=27 // pred_region
          %s578 = sand.u32 %s342, 1
          %s579 = scalar_lea.sflag [#allocation17], %s578
          %s580 = sand.u32 %s342, 1
          %s581 = scalar_lea.vmem [#allocation16], %s580
          %s583 = ssub.s32 16, 16
          %584 = vsyncadd %s579, %s583
          %s585 = smul.addr %s35, 16
          %s586 = scalar_lea.hbm %s12, %s585
          %s588 = sshll.u32 %s581, 4
          %s589 = int_to_ptr.vmem [resolvable:$true] %s588
          %591 = dma.hbm_to_vmem [thread:$0]  %s586, 16, %s589, %s579
        $region68: #{segmentation_vit_forward.2} parent=27 // pred_fallthru
          _
      $region28: #{segmentation_vit_forward.2} parent=5 // pred_fallthru
        _
      %p592 = scmp.le.s32.totalorder 1, %s35
      %p593 = scmp.lt.s32.totalorder %s35, 3
      %p594 = pnand %p592, %p593
      %p595 = pneg %p594
      // Predicated region
      $region69: #{segmentation_vit_forward.2} parent=5 // pred_check
        _
      $region70: #{segmentation_vit_forward.2} parent=5 // pred_check_branch
        %597 = sbr.rel (%p594) target = $region72
      $region71: #{segmentation_vit_forward.2} parent=5 // pred_region
        %s598 = ssub.s32 %s35, 1
        // Predicated region
        $region73: #{segmentation_vit_forward.2} parent=71 // pred_check
          %p599 = pneg %p98
        $region74: #{segmentation_vit_forward.2} parent=71 // pred_check_branch
          %601 = sbr.rel (%p599) target = $region76
        $region75: #{segmentation_vit_forward.2} parent=71 // pred_region
          %602 = dma.done [#allocation3], 256
        $region76: #{segmentation_vit_forward.2} parent=71 // pred_fallthru
          _
        %s603 = sand.u32 %s40, 1
        %s604 = scalar_lea.sflag [#allocation5], %s603
        %s605 = sand.u32 %s137, 1
        %s606 = smul.addr %s605, 2
        %s607 = scalar_lea.vmem [#allocation4], %s606
        // Predicated region
        $region77: #{segmentation_vit_forward.2} parent=71 // pred_check
          %p608 = pneg %p150
        $region78: #{segmentation_vit_forward.2} parent=71 // pred_check_branch
          %610 = sbr.rel (%p608) target = $region80
        $region79: #{segmentation_vit_forward.2} parent=71 // pred_region
          %611 = dma.done %s604, 32
        $region80: #{segmentation_vit_forward.2} parent=71 // pred_fallthru
          _
        %s612 = sand.u32 %s40, 1
        %s613 = scalar_lea.sflag [#allocation5], %s612
        %s614 = sand.u32 %s163, 1
        %s615 = smul.addr %s614, 2
        %s616 = scalar_lea.vmem [#allocation6], %s615
        // Predicated region
        $region81: #{segmentation_vit_forward.2} parent=71 // pred_check
          %p617 = pneg %p176
        $region82: #{segmentation_vit_forward.2} parent=71 // pred_check_branch
          %619 = sbr.rel (%p617) target = $region84
        $region83: #{segmentation_vit_forward.2} parent=71 // pred_region
          %620 = dma.done %s613, 32
        $region84: #{segmentation_vit_forward.2} parent=71 // pred_fallthru
          _
        %s621 = sand.u32 %s40, 1
        %s622 = scalar_lea.sflag [#allocation8], %s621
        %s623 = sand.u32 %s189, 1
        %s624 = smul.addr %s623, 16
        %s625 = scalar_lea.vmem [#allocation7], %s624
        // Predicated region
        $region85: #{segmentation_vit_forward.2} parent=71 // pred_check
          %p626 = pneg %p202
        $region86: #{segmentation_vit_forward.2} parent=71 // pred_check_branch
          %628 = sbr.rel (%p626) target = $region88
        $region87: #{segmentation_vit_forward.2} parent=71 // pred_region
          %629 = dma.done %s622, 256
        $region88: #{segmentation_vit_forward.2} parent=71 // pred_fallthru
          _
        %s630 = sand.u32 %s40, 1
        %s631 = scalar_lea.sflag [#allocation8], %s630
        %s632 = sand.u32 %s215, 1
        %s633 = scalar_lea.vmem [#allocation9], %s632
        // Predicated region
        $region89: #{segmentation_vit_forward.2} parent=71 // pred_check
          %p634 = pneg %p228
        $region90: #{segmentation_vit_forward.2} parent=71 // pred_check_branch
          %636 = sbr.rel (%p634) target = $region92
        $region91: #{segmentation_vit_forward.2} parent=71 // pred_region
          %637 = dma.done %s631, 16
        $region92: #{segmentation_vit_forward.2} parent=71 // pred_fallthru
          _
        %s638 = sand.u32 %s40, 1
        %s639 = scalar_lea.sflag [#allocation11], %s638
        %s640 = sand.u32 %s241, 1
        %s641 = smul.addr %s640, 32
        %s642 = scalar_lea.vmem [#allocation10], %s641
        // Predicated region
        $region93: #{segmentation_vit_forward.2} parent=71 // pred_check
          %p643 = pneg %p254
        $region94: #{segmentation_vit_forward.2} parent=71 // pred_check_branch
          %645 = sbr.rel (%p643) target = $region96
        $region95: #{segmentation_vit_forward.2} parent=71 // pred_region
          %646 = dma.done %s639, 512
        $region96: #{segmentation_vit_forward.2} parent=71 // pred_fallthru
          _
        %s647 = sand.u32 %s40, 1
        %s648 = scalar_lea.sflag [#allocation11], %s647
        %s649 = sand.u32 %s267, 1
        %s650 = scalar_lea.vmem [#allocation12], %s649
        // Predicated region
        $region97: #{segmentation_vit_forward.2} parent=71 // pred_check
          %p651 = pneg %p280
        $region98: #{segmentation_vit_forward.2} parent=71 // pred_check_branch
          %653 = sbr.rel (%p651) target = $region100
        $region99: #{segmentation_vit_forward.2} parent=71 // pred_region
          %654 = dma.done %s648, 16
        $region100: #{segmentation_vit_forward.2} parent=71 // pred_fallthru
          _
        %s655 = sand.u32 %s40, 1
        %s656 = scalar_lea.sflag [#allocation14], %s655
        %s657 = sand.u32 %s293, 1
        %s658 = scalar_lea.vmem [#allocation13], %s657
        // Predicated region
        $region101: #{segmentation_vit_forward.2} parent=71 // pred_check
          %p659 = pneg %p306
        $region102: #{segmentation_vit_forward.2} parent=71 // pred_check_branch
          %661 = sbr.rel (%p659) target = $region104
        $region103: #{segmentation_vit_forward.2} parent=71 // pred_region
          %662 = dma.done %s656, 16
        $region104: #{segmentation_vit_forward.2} parent=71 // pred_fallthru
          _
        %s663 = sand.u32 %s40, 1
        %s664 = scalar_lea.sflag [#allocation14], %s663
        %s665 = sand.u32 %s319, 1
        %s666 = smul.addr %s665, 32
        %s667 = scalar_lea.vmem [#allocation15], %s666
        // Predicated region
        $region105: #{segmentation_vit_forward.2} parent=71 // pred_check
          %p668 = pneg %p332
        $region106: #{segmentation_vit_forward.2} parent=71 // pred_check_branch
          %670 = sbr.rel (%p668) target = $region108
        $region107: #{segmentation_vit_forward.2} parent=71 // pred_region
          %671 = dma.done %s664, 512
        $region108: #{segmentation_vit_forward.2} parent=71 // pred_fallthru
          _
        %s672 = sand.u32 %s345, 1
        %s673 = scalar_lea.sflag [#allocation17], %s672
        %s674 = sand.u32 %s345, 1
        %s675 = scalar_lea.vmem [#allocation16], %s674
        // Predicated region
        $region109: #{segmentation_vit_forward.2} parent=71 // pred_check
          %p676 = pneg %p358
        $region110: #{segmentation_vit_forward.2} parent=71 // pred_check_branch
          %678 = sbr.rel (%p676) target = $region112
        $region111: #{segmentation_vit_forward.2} parent=71 // pred_region
          %679 = dma.done %s673, 16
        $region112: #{segmentation_vit_forward.2} parent=71 // pred_fallthru
          _
        %p680 = pneg %p56
        %p681 = pneg %p53
        %p682 = pneg %p77
        %p683 = pneg %p74
        %p684 = pneg %p98
        %p685 = pneg %p95
        %p686 = scmp.lt.s32.totalorder %s40, 1
        %s687 = scalar_select %p686, %s40, 1
        %s688 = smul.addr %s687, 16
        %s689 = smul.addr %s688, 4
        %s690 = scalar_lea.vmem %s3, %s689
        %p691 = pneg %p124
        %p692 = pneg %p121
        %s693 = sand.u32 %s40, 1
        %s694 = scalar_lea.sflag [#allocation5], %s693
        %s695 = sand.u32 %s137, 1
        %s696 = smul.addr %s695, 2
        %s697 = scalar_lea.vmem [#allocation4], %s696
        %p698 = pneg %p150
        %p699 = pneg %p147
        %s700 = sand.u32 %s40, 1
        %s701 = scalar_lea.sflag [#allocation5], %s700
        %s702 = sand.u32 %s163, 1
        %s703 = smul.addr %s702, 2
        %s704 = scalar_lea.vmem [#allocation6], %s703
        %p705 = pneg %p176
        %p706 = pneg %p173
        %s707 = sand.u32 %s40, 1
        %s708 = scalar_lea.sflag [#allocation8], %s707
        %s709 = sand.u32 %s189, 1
        %s710 = smul.addr %s709, 16
        %s711 = scalar_lea.vmem [#allocation7], %s710
        %p712 = pneg %p202
        %p713 = pneg %p199
        %s714 = sand.u32 %s40, 1
        %s715 = scalar_lea.sflag [#allocation8], %s714
        %s716 = sand.u32 %s215, 1
        %s717 = scalar_lea.vmem [#allocation9], %s716
        %p718 = pneg %p228
        %p719 = pneg %p225
        %s720 = sand.u32 %s40, 1
        %s721 = scalar_lea.sflag [#allocation11], %s720
        %s722 = sand.u32 %s241, 1
        %s723 = smul.addr %s722, 32
        %s724 = scalar_lea.vmem [#allocation10], %s723
        %p725 = pneg %p254
        %p726 = pneg %p251
        %s727 = sand.u32 %s40, 1
        %s728 = scalar_lea.sflag [#allocation11], %s727
        %s729 = sand.u32 %s267, 1
        %s730 = scalar_lea.vmem [#allocation12], %s729
        %p731 = pneg %p280
        %p732 = pneg %p277
        %s733 = sand.u32 %s40, 1
        %s734 = scalar_lea.sflag [#allocation14], %s733
        %s735 = sand.u32 %s293, 1
        %s736 = scalar_lea.vmem [#allocation13], %s735
        %p737 = pneg %p306
        %p738 = pneg %p303
        %s739 = sand.u32 %s40, 1
        %s740 = scalar_lea.sflag [#allocation14], %s739
        %s741 = sand.u32 %s319, 1
        %s742 = smul.addr %s741, 32
        %s743 = scalar_lea.vmem [#allocation15], %s742
        %p744 = pneg %p332
        %p745 = pneg %p329
        %s746 = sand.u32 %s345, 1
        %s747 = scalar_lea.sflag [#allocation17], %s746
        %s748 = sand.u32 %s345, 1
        %s749 = scalar_lea.vmem [#allocation16], %s748
        %p750 = pneg %p358
        %p751 = pneg %p355
        %p752 = pneg %p379
        %p753 = pneg %p376
        %p754 = scmp.lt.s32.totalorder %s40, 1
        %s755 = scalar_select %p754, %s40, 1
        %s756 = smul.addr %s755, 16
        %s757 = smul.addr %s756, 4
        %s758 = scalar_lea.vmem %s3, %s757
        %p760 = scmp.eq.s32.totalorder %s40, 0
        // Predicated region
        $region113: #{segmentation_vit_forward.2} parent=71 // pred_check
          %p761 = pneg %p760
        $region114: #{segmentation_vit_forward.2} parent=71 // pred_check_branch
          %763 = sbr.rel (%p761) target = $region116
        $region115: #{segmentation_vit_forward.2} parent=71 // pred_region
          %v764 = vld [vmem:[%s0] sm:$0xff]
          %v765 = vld [vmem:[%s0 + $0x8] sm:$0xff]
          %v766 = vld [vmem:[%s0 + $0x10] sm:$0xff]
          %v767 = vld [vmem:[%s0 + $0x18] sm:$0xff]
          %v768 = vld [vmem:[%s1] sm:$0xf]
          %v769 = vld [vmem:[%s1 + $0x4] sm:$0xf]
          %v770 = vld [vmem:[%s1 + $0x8] sm:$0xf]
          %v771 = vld [vmem:[%s1 + $0xc] sm:$0xf]
          %v772 = vld [vmem:[%s1 + $0x10] sm:$0xf]
          %v773 = vld [vmem:[%s1 + $0x14] sm:$0xf]
          %v774 = vld [vmem:[%s1 + $0x18] sm:$0xf]
          %v775 = vld [vmem:[%s1 + $0x1c] sm:$0xf]
          %v776 = vld [vmem:[%s1 + $0x20] sm:$0xf]
          %v777 = vld [vmem:[%s1 + $0x24] sm:$0xf]
          %v778 = vld [vmem:[%s1 + $0x28] sm:$0xf]
          %v779 = vld [vmem:[%s1 + $0x2c] sm:$0xf]
          %v780 = vld [vmem:[%s1 + $0x30] sm:$0xf]
          %v781 = vld [vmem:[%s1 + $0x34] sm:$0xf]
          %v782 = vld [vmem:[%s1 + $0x38] sm:$0xf]
          %v783 = vld [vmem:[%s1 + $0x3c] sm:$0xf]
          %v784 = vld [vmem:[%s1 + $0x40] sm:$0xf]
          %v785 = vld [vmem:[%s1 + $0x44] sm:$0xf]
          %v786 = vld [vmem:[%s1 + $0x48] sm:$0xf]
          %v787 = vld [vmem:[%s1 + $0x4c] sm:$0xf]
          %v788 = vld [vmem:[%s1 + $0x50] sm:$0xf]
          %v789 = vld [vmem:[%s1 + $0x54] sm:$0xf]
          %v790 = vld [vmem:[%s1 + $0x58] sm:$0xf]
          %v791 = vld [vmem:[%s1 + $0x5c] sm:$0xf]
          %v796 = vunpack.c.l.b16 %v764
          %v797 = vunpack.c.h.b16 %v764
          %v798 = vunpack.c.l.b16 %v765
          %v799 = vunpack.c.h.b16 %v765
          %v800 = vunpack.c.l.b16 %v766
          %v801 = vunpack.c.h.b16 %v766
          %v802 = vunpack.c.l.b16 %v767
          %v803 = vunpack.c.h.b16 %v767
          %v804 = vpack.c.b16 %v798, %v796
          %v805 = vpack.c.b16 %v799, %v797
          %v806 = vpack.c.b16 %v802, %v800
          %v807 = vpack.c.b16 %v803, %v801
          %v834 = vunpack.c.l.b16 %v768
          %v835 = vunpack.c.l.b16 %v769
          %v836 = vunpack.c.l.b16 %v770
          %v837 = vunpack.c.l.b16 %v771
          %v838 = vunpack.c.l.b16 %v772
          %v839 = vunpack.c.l.b16 %v773
          %v840 = vunpack.c.l.b16 %v774
          %v841 = vunpack.c.l.b16 %v775
          %v842 = vunpack.c.l.b16 %v776
          %v843 = vunpack.c.l.b16 %v777
          %v844 = vunpack.c.l.b16 %v778
          %v845 = vunpack.c.l.b16 %v779
          %v846 = vunpack.c.l.b16 %v780
          %v847 = vunpack.c.l.b16 %v781
          %v848 = vunpack.c.l.b16 %v782
          %v849 = vunpack.c.l.b16 %v783
          %v850 = vunpack.c.l.b16 %v784
          %v851 = vunpack.c.l.b16 %v785
          %v852 = vunpack.c.l.b16 %v786
          %v853 = vunpack.c.l.b16 %v787
          %v854 = vunpack.c.l.b16 %v788
          %v855 = vunpack.c.l.b16 %v789
          %v856 = vunpack.c.l.b16 %v790
          %v857 = vunpack.c.l.b16 %v791
          %v858 = vpack.c.b16 %v835, %v834
          %v859 = vpack.c.b16 %v837, %v836
          %v860 = vpack.c.b16 %v839, %v838
          %v861 = vpack.c.b16 %v841, %v840
          %v862 = vpack.c.b16 %v843, %v842
          %v863 = vpack.c.b16 %v845, %v844
          %v864 = vpack.c.b16 %v847, %v846
          %v865 = vpack.c.b16 %v849, %v848
          %v866 = vpack.c.b16 %v851, %v850
          %v867 = vpack.c.b16 %v853, %v852
          %v868 = vpack.c.b16 %v855, %v854
          %v869 = vpack.c.b16 %v857, %v856
          %vm882 = vcmask 523264
          %v884 = vsel %vm882, %v805, 0
          %v887 = vsel %vm882, %v807, 0
          %889 = vmatprep.subr.bf16.mxu0 0
          %890 = vmatpush1.bf16.msra.mxu0 %v858
          %891 = vmatprep.subr.bf16.mxu0 0
          %892 = vmatpush1.bf16.msra.mxu0 %v859
          %893 = vmatprep.subr.bf16.mxu0 0
          %894 = vmatpush1.bf16.msra.mxu0 %v860
          %895 = vmatprep.subr.bf16.mxu0 0
          %896 = vmatpush1.bf16.msra.mxu0 %v861
          %897 = vmatprep.subr.bf16.mxu0 0
          %898 = vmatpush1.bf16.msra.mxu0 %v862
          %899 = vmatprep.subr.bf16.mxu0 0
          %900 = vmatpush1.bf16.msra.mxu0 %v863
          %901 = vmatprep.subr.bf16.mxu0 0
          %902 = vmatpush1.bf16.msra.mxu0 %v864
          %903 = vmatprep.subr.bf16.mxu0 0
          %904 = vmatpush1.bf16.msra.mxu0 %v865
          %905 = vmatprep.subr.bf16.mxu0 0
          %906 = vmatpush1.bf16.msra.mxu0 %v866
          %907 = vmatprep.subr.bf16.mxu0 0
          %908 = vmatpush1.bf16.msra.mxu0 %v867
          %909 = vmatprep.subr.bf16.mxu0 0
          %910 = vmatpush1.bf16.msra.mxu0 %v868
          %911 = vmatprep.subr.bf16.mxu0 0
          %912 = vmatpush1.bf16.msra.mxu0 %v869
          %913 = vmatprep.subr.bf16.mxu0 0
          %914 = vmatpush1.bf16.msra.mxu0 0
          %915 = vmatprep.subr.bf16.mxu0 0
          %916 = vmatpush1.bf16.msra.mxu0 0
          %917 = vmatprep.subr.bf16.mxu0 0
          %918 = vmatpush1.bf16.msra.mxu0 0
          %919 = vmatprep.subr.bf16.mxu0 0
          %920 = vmatpush1.bf16.msra.mxu0 0
          %921 = vmatprep.mubr.bf16.mxu0 %v884
          %922 = vmatmul.mubr.bf16.gmra.mrb[0].mxu0 %v804
          %v923 = vpop.f32.mrb[0].mxu0
          %v924 = vadd.f32 0.0, %v923
          %v925 = vpop.f32.mrb[0].mxu0
          %v926 = vpop.f32.mrb[0].mxu0
          %v927 = vadd.f32 0.0, %v926
          %v928 = vpop.f32.mrb[0].mxu0
          %929 = vmatprep.mubr.bf16.mxu0 %v887
          %930 = vmatmul.mubr.bf16.gmra.mrb[0].mxu0 %v806
          %v931 = vpop.f32.mrb[0].mxu0
          %v932 = vadd.f32 0.0, %v931
          %v933 = vpop.f32.mrb[0].mxu0
          %v934 = vpop.f32.mrb[0].mxu0
          %v935 = vadd.f32 0.0, %v934
          %v936 = vpop.f32.mrb[0].mxu0
          %937 = vdwg.mxu0
          %v938 = vld [vmem:[#allocation2] sm:$0xff]
          %v939 = vld [vmem:[#allocation2 + $0x8] sm:$0xff]
          %v940 = vadd.f32 %v924, %v938
          %v941 = vadd.f32 %v927, %v939
          %v942 = vadd.f32 %v932, %v938
          %v943 = vadd.f32 %v935, %v939
          %v944 = vmul.f32 %v940, %v940
          %v945 = vmul.f32 %v941, %v941
          %v946 = vmul.f32 %v942, %v942
          %v947 = vmul.f32 %v943, %v943
          %v948 = vsel %vm882, %v944, 0.0
          %949 = vadd.xlane.f32.xlu0 %v948
          %v950 = vpop.xlane.xlu0 %949
          %v951 = vsel %vm882, %v945, 0.0
          %952 = vadd.xlane.f32.xlu0 %v951
          %v953 = vpop.xlane.xlu0 %952
          %v954 = vsel %vm882, %v946, 0.0
          %955 = vadd.xlane.f32.xlu0 %v954
          %v956 = vpop.xlane.xlu0 %955
          %v957 = vsel %vm882, %v947, 0.0
          %958 = vadd.xlane.f32.xlu0 %v957
          %v959 = vpop.xlane.xlu0 %958
          %v960 = vmax.f32 %v950, 1e-24
          %v961 = vmax.f32 %v953, 1e-24
          %v962 = vmax.f32 %v956, 1e-24
          %v963 = vmax.f32 %v959, 1e-24
          %v964 = vrsqrt.pop %v960
          %v965 = vrsqrt.pop %v961
          %v966 = vrsqrt.pop %v962
          %v967 = vrsqrt.pop %v963
          %v968 = vmul.f32 %v940, %v964
          %v969 = vmul.f32 %v941, %v965
          %v970 = vmul.f32 %v942, %v966
          %v971 = vmul.f32 %v943, %v967
          %972 = vst.msk [vmem:[%s13] sm:$0xff] %vm882, %v968
          %973 = vst.msk [vmem:[%s13 + $0x8] sm:$0xff] %vm882, %v969
          %974 = vst.msk [vmem:[%s13 + $0x10] sm:$0xff] %vm882, %v970
          %975 = vst.msk [vmem:[%s13 + $0x18] sm:$0xff] %vm882, %v971
        $region116: #{segmentation_vit_forward.2} parent=71 // pred_fallthru
          _
        %v976 = vld [vmem:[%s13] sm:$0xff]
        %v977 = vld [vmem:[%s13 + $0x8] sm:$0xff]
        %v978 = vld [vmem:[%s13 + $0x10] sm:$0xff]
        %v979 = vld [vmem:[%s13 + $0x18] sm:$0xff]
        %v980 = vpack.c.bf16 %v977, %v976
        %v981 = vpack.c.bf16 %v979, %v978
        %v982 = vld [vmem:[%s758] sm:$0xf]
        %v983 = vld [vmem:[%s758 + $0x4] sm:$0xf]
        %v984 = vld [vmem:[%s758 + $0x8] sm:$0xf]
        %v985 = vld [vmem:[%s758 + $0xc] sm:$0xf]
        %v986 = vld [vmem:[%s758 + $0x10] sm:$0xf]
        %v987 = vld [vmem:[%s758 + $0x14] sm:$0xf]
        %v988 = vld [vmem:[%s758 + $0x18] sm:$0xf]
        %v989 = vld [vmem:[%s758 + $0x1c] sm:$0xf]
        %v990 = vld [vmem:[%s758 + $0x20] sm:$0xf]
        %v991 = vld [vmem:[%s758 + $0x24] sm:$0xf]
        %v992 = vld [vmem:[%s758 + $0x28] sm:$0xf]
        %v993 = vld [vmem:[%s758 + $0x2c] sm:$0xf]
        %v994 = vld [vmem:[%s758 + $0x30] sm:$0xf]
        %v995 = vld [vmem:[%s758 + $0x34] sm:$0xf]
        %v996 = vld [vmem:[%s758 + $0x38] sm:$0xf]
        %v997 = vld [vmem:[%s758 + $0x3c] sm:$0xf]
        %v1006 = vunpack.c.l.b16 %v982
        %v1007 = vunpack.c.l.b16 %v983
        %v1008 = vunpack.c.l.b16 %v984
        %v1009 = vunpack.c.l.b16 %v985
        %v1010 = vunpack.c.l.b16 %v986
        %v1011 = vunpack.c.l.b16 %v987
        %v1012 = vunpack.c.l.b16 %v988
        %v1013 = vunpack.c.l.b16 %v989
        %v1014 = vpack.c.b16 %v1007, %v1006
        %v1015 = vpack.c.b16 %v1009, %v1008
        %v1016 = vpack.c.b16 %v1011, %v1010
        %v1017 = vpack.c.b16 %v1013, %v1012
        %vm1022 = vcmask 523264
        %v1024 = vsel %vm1022, %v980, 0
        %1026 = vmatprep.subr.bf16.mxu0 0
        %1027 = vmatpush1.bf16.msra.mxu0 %v1014
        %1028 = vmatprep.subr.bf16.mxu0 0
        %1029 = vmatpush1.bf16.msra.mxu0 %v1015
        %1030 = vmatprep.subr.bf16.mxu0 0
        %1031 = vmatpush1.bf16.msra.mxu0 %v1016
        %1032 = vmatprep.subr.bf16.mxu0 0
        %1033 = vmatpush1.bf16.msra.mxu0 %v1017
        %1034 = vmatprep.subr.bf16.mxu0 0
        %1035 = vmatpush1.bf16.msra.mxu0 0
        %1036 = vmatprep.subr.bf16.mxu0 0
        %1037 = vmatpush1.bf16.msra.mxu0 0
        %1038 = vmatprep.subr.bf16.mxu0 0
        %1039 = vmatpush1.bf16.msra.mxu0 0
        %1040 = vmatprep.subr.bf16.mxu0 0
        %1041 = vmatpush1.bf16.msra.mxu0 0
        %1042 = vmatprep.subr.bf16.mxu0 0
        %1043 = vmatpush1.bf16.msra.mxu0 0
        %1044 = vmatprep.subr.bf16.mxu0 0
        %1045 = vmatpush1.bf16.msra.mxu0 0
        %1046 = vmatprep.subr.bf16.mxu0 0
        %1047 = vmatpush1.bf16.msra.mxu0 0
        %1048 = vmatprep.subr.bf16.mxu0 0
        %1049 = vmatpush1.bf16.msra.mxu0 0
        %1050 = vmatprep.subr.bf16.mxu0 0
        %1051 = vmatpush1.bf16.msra.mxu0 0
        %1052 = vmatprep.subr.bf16.mxu0 0
        %1053 = vmatpush1.bf16.msra.mxu0 0
        %1054 = vmatprep.subr.bf16.mxu0 0
        %1055 = vmatpush1.bf16.msra.mxu0 0
        %1056 = vmatprep.subr.bf16.mxu0 0
        %1057 = vmatpush1.bf16.msra.mxu0 0
        %1058 = vmatprep.mubr.bf16.mxu0 0
        %1059 = vmatmul.mubr.bf16.gmra.mrb[0].mxu0 %v1024
        %v1060 = vpop.f32.mrb[0].mxu0
        %v1061 = vadd.f32 0.0, %v1060
        %v1062 = vpop.f32.mrb[0].mxu0
        %v1063 = vpop.f32.mrb[0].mxu0
        %v1064 = vadd.f32 0.0, %v1063
        %v1065 = vpop.f32.mrb[0].mxu0
        %1066 = vdwg.mxu0
        %v1075 = vunpack.c.l.b16 %v990
        %v1076 = vunpack.c.l.b16 %v991
        %v1077 = vunpack.c.l.b16 %v992
        %v1078 = vunpack.c.l.b16 %v993
        %v1079 = vunpack.c.l.b16 %v994
        %v1080 = vunpack.c.l.b16 %v995
        %v1081 = vunpack.c.l.b16 %v996
        %v1082 = vunpack.c.l.b16 %v997
        %v1083 = vpack.c.b16 %v1076, %v1075
        %v1084 = vpack.c.b16 %v1078, %v1077
        %v1085 = vpack.c.b16 %v1080, %v1079
        %v1086 = vpack.c.b16 %v1082, %v1081
        %1091 = vmatprep.subr.bf16.mxu0 0
        %1092 = vmatpush1.bf16.msra.mxu0 %v1083
        %1093 = vmatprep.subr.bf16.mxu0 0
        %1094 = vmatpush1.bf16.msra.mxu0 %v1084
        %1095 = vmatprep.subr.bf16.mxu0 0
        %1096 = vmatpush1.bf16.msra.mxu0 %v1085
        %1097 = vmatprep.subr.bf16.mxu0 0
        %1098 = vmatpush1.bf16.msra.mxu0 %v1086
        %1099 = vmatprep.subr.bf16.mxu0 0
        %1100 = vmatpush1.bf16.msra.mxu0 0
        %1101 = vmatprep.subr.bf16.mxu0 0
        %1102 = vmatpush1.bf16.msra.mxu0 0
        %1103 = vmatprep.subr.bf16.mxu0 0
        %1104 = vmatpush1.bf16.msra.mxu0 0
        %1105 = vmatprep.subr.bf16.mxu0 0
        %1106 = vmatpush1.bf16.msra.mxu0 0
        %1107 = vmatprep.subr.bf16.mxu0 0
        %1108 = vmatpush1.bf16.msra.mxu0 0
        %1109 = vmatprep.subr.bf16.mxu0 0
        %1110 = vmatpush1.bf16.msra.mxu0 0
        %1111 = vmatprep.subr.bf16.mxu0 0
        %1112 = vmatpush1.bf16.msra.mxu0 0
        %1113 = vmatprep.subr.bf16.mxu0 0
        %1114 = vmatpush1.bf16.msra.mxu0 0
        %1115 = vmatprep.subr.bf16.mxu0 0
        %1116 = vmatpush1.bf16.msra.mxu0 0
        %1117 = vmatprep.subr.bf16.mxu0 0
        %1118 = vmatpush1.bf16.msra.mxu0 0
        %1119 = vmatprep.subr.bf16.mxu0 0
        %1120 = vmatpush1.bf16.msra.mxu0 0
        %1121 = vmatprep.subr.bf16.mxu0 0
        %1122 = vmatpush1.bf16.msra.mxu0 0
        %1123 = vmatprep.mubr.bf16.mxu0 0
        %1124 = vmatmul.mubr.bf16.gmra.mrb[0].mxu0 %v1024
        %v1125 = vpop.f32.mrb[0].mxu0
        %v1126 = vadd.f32 0.0, %v1125
        %v1127 = vpop.f32.mrb[0].mxu0
        %v1128 = vpop.f32.mrb[0].mxu0
        %v1129 = vadd.f32 0.0, %v1128
        %v1130 = vpop.f32.mrb[0].mxu0
        %1131 = vdwg.mxu0
        %v1133 = vsel %vm1022, %v981, 0
        %1135 = vmatprep.subr.bf16.mxu0 0
        %1136 = vmatpush1.bf16.msra.mxu0 %v1014
        %1137 = vmatprep.subr.bf16.mxu0 0
        %1138 = vmatpush1.bf16.msra.mxu0 %v1015
        %1139 = vmatprep.subr.bf16.mxu0 0
        %1140 = vmatpush1.bf16.msra.mxu0 %v1016
        %1141 = vmatprep.subr.bf16.mxu0 0
        %1142 = vmatpush1.bf16.msra.mxu0 %v1017
        %1143 = vmatprep.subr.bf16.mxu0 0
        %1144 = vmatpush1.bf16.msra.mxu0 0
        %1145 = vmatprep.subr.bf16.mxu0 0
        %1146 = vmatpush1.bf16.msra.mxu0 0
        %1147 = vmatprep.subr.bf16.mxu0 0
        %1148 = vmatpush1.bf16.msra.mxu0 0
        %1149 = vmatprep.subr.bf16.mxu0 0
        %1150 = vmatpush1.bf16.msra.mxu0 0
        %1151 = vmatprep.subr.bf16.mxu0 0
        %1152 = vmatpush1.bf16.msra.mxu0 0
        %1153 = vmatprep.subr.bf16.mxu0 0
        %1154 = vmatpush1.bf16.msra.mxu0 0
        %1155 = vmatprep.subr.bf16.mxu0 0
        %1156 = vmatpush1.bf16.msra.mxu0 0
        %1157 = vmatprep.subr.bf16.mxu0 0
        %1158 = vmatpush1.bf16.msra.mxu0 0
        %1159 = vmatprep.subr.bf16.mxu0 0
        %1160 = vmatpush1.bf16.msra.mxu0 0
        %1161 = vmatprep.subr.bf16.mxu0 0
        %1162 = vmatpush1.bf16.msra.mxu0 0
        %1163 = vmatprep.subr.bf16.mxu0 0
        %1164 = vmatpush1.bf16.msra.mxu0 0
        %1165 = vmatprep.subr.bf16.mxu0 0
        %1166 = vmatpush1.bf16.msra.mxu0 0
        %1167 = vmatprep.mubr.bf16.mxu0 0
        %1168 = vmatmul.mubr.bf16.gmra.mrb[0].mxu0 %v1133
        %v1169 = vpop.f32.mrb[0].mxu0
        %v1170 = vadd.f32 0.0, %v1169
        %v1171 = vpop.f32.mrb[0].mxu0
        %v1172 = vpop.f32.mrb[0].mxu0
        %v1173 = vadd.f32 0.0, %v1172
        %v1174 = vpop.f32.mrb[0].mxu0
        %1175 = vdwg.mxu0
        %1176 = vmatprep.subr.bf16.mxu0 0
        %1177 = vmatpush1.bf16.msra.mxu0 %v1083
        %1178 = vmatprep.subr.bf16.mxu0 0
        %1179 = vmatpush1.bf16.msra.mxu0 %v1084
        %1180 = vmatprep.subr.bf16.mxu0 0
        %1181 = vmatpush1.bf16.msra.mxu0 %v1085
        %1182 = vmatprep.subr.bf16.mxu0 0
        %1183 = vmatpush1.bf16.msra.mxu0 %v1086
        %1184 = vmatprep.subr.bf16.mxu0 0
        %1185 = vmatpush1.bf16.msra.mxu0 0
        %1186 = vmatprep.subr.bf16.mxu0 0
        %1187 = vmatpush1.bf16.msra.mxu0 0
        %1188 = vmatprep.subr.bf16.mxu0 0
        %1189 = vmatpush1.bf16.msra.mxu0 0
        %1190 = vmatprep.subr.bf16.mxu0 0
        %1191 = vmatpush1.bf16.msra.mxu0 0
        %1192 = vmatprep.subr.bf16.mxu0 0
        %1193 = vmatpush1.bf16.msra.mxu0 0
        %1194 = vmatprep.subr.bf16.mxu0 0
        %1195 = vmatpush1.bf16.msra.mxu0 0
        %1196 = vmatprep.subr.bf16.mxu0 0
        %1197 = vmatpush1.bf16.msra.mxu0 0
        %1198 = vmatprep.subr.bf16.mxu0 0
        %1199 = vmatpush1.bf16.msra.mxu0 0
        %1200 = vmatprep.subr.bf16.mxu0 0
        %1201 = vmatpush1.bf16.msra.mxu0 0
        %1202 = vmatprep.subr.bf16.mxu0 0
        %1203 = vmatpush1.bf16.msra.mxu0 0
        %1204 = vmatprep.subr.bf16.mxu0 0
        %1205 = vmatpush1.bf16.msra.mxu0 0
        %1206 = vmatprep.subr.bf16.mxu0 0
        %1207 = vmatpush1.bf16.msra.mxu0 0
        %1208 = vmatprep.mubr.bf16.mxu0 0
        %1209 = vmatmul.mubr.bf16.gmra.mrb[0].mxu0 %v1133
        %v1210 = vpop.f32.mrb[0].mxu0
        %v1211 = vadd.f32 0.0, %v1210
        %v1212 = vpop.f32.mrb[0].mxu0
        %v1213 = vpop.f32.mrb[0].mxu0
        %v1214 = vadd.f32 0.0, %v1213
        %v1215 = vpop.f32.mrb[0].mxu0
        %1216 = vdwg.mxu0
        %v1217 = vld [vmem:[%s607] sm:$0x3]
        %v1220 = vunpack.c.l.s4 1966171168
        %v1221 = vunpack.c.0.s8 %v1220
        %v1222 = vlaneseq
        %v1223 = vshrl.u32 %v1222, 7
        %v1224 = vsub.s32 %v1221, %v1223
        %v1225 = vrot.slane %v1217, %v1224
        %v1226 = vcombine.high %v1225, %v1225
        %v1228 = vunpack.c.l.s4 1966171168
        %v1229 = vunpack.c.0.s8 %v1228
        %v1230 = vlaneseq
        %v1231 = vshrl.u32 %v1230, 7
        %v1232 = vsub.s32 %v1229, %v1231
        %v1233 = vrot.slane %v1225, %v1232
        %v1235 = vunpack.c.l.s4 1966171168
        %v1236 = vunpack.c.0.s8 %v1235
        %v1237 = vlaneseq
        %v1238 = vshrl.u32 %v1237, 7
        %v1239 = vsub.s32 %v1236, %v1238
        %v1240 = vrot.slane %v1226, %v1239
        %v1241 = vld [vmem:[%s616] sm:$0x3]
        %v1244 = vunpack.c.l.s4 1966171168
        %v1245 = vunpack.c.0.s8 %v1244
        %v1246 = vlaneseq
        %v1247 = vshrl.u32 %v1246, 7
        %v1248 = vsub.s32 %v1245, %v1247
        %v1249 = vrot.slane %v1241, %v1248
        %v1250 = vcombine.high %v1249, %v1249
        %v1252 = vunpack.c.l.s4 1966171168
        %v1253 = vunpack.c.0.s8 %v1252
        %v1254 = vlaneseq
        %v1255 = vshrl.u32 %v1254, 7
        %v1256 = vsub.s32 %v1253, %v1255
        %v1257 = vrot.slane %v1249, %v1256
        %v1259 = vunpack.c.l.s4 1966171168
        %v1260 = vunpack.c.0.s8 %v1259
        %v1261 = vlaneseq
        %v1262 = vshrl.u32 %v1261, 7
        %v1263 = vsub.s32 %v1260, %v1262
        %v1264 = vrot.slane %v1250, %v1263
        %v1265 = vmul.f32 %v1061, %v1061
        %v1266 = vmul.f32 %v1064, %v1064
        %v1267 = vmul.f32 %v1126, %v1126
        %v1268 = vmul.f32 %v1129, %v1129
        %v1269 = vmul.f32 %v1170, %v1170
        %v1270 = vmul.f32 %v1173, %v1173
        %v1271 = vmul.f32 %v1211, %v1211
        %v1272 = vmul.f32 %v1214, %v1214
        %vm1273 = vcmask 130048
        %v1274 = vsel %vm1273, %v1265, 0.0
        %1275 = vadd.xlane.f32.xlu0 %v1274
        %v1276 = vpop.xlane.xlu0 %1275
        %v1277 = vsel %vm1273, %v1266, 0.0
        %1278 = vadd.xlane.f32.xlu0 %v1277
        %v1279 = vpop.xlane.xlu0 %1278
        %v1280 = vsel %vm1273, %v1267, 0.0
        %1281 = vadd.xlane.f32.xlu0 %v1280
        %v1282 = vpop.xlane.xlu0 %1281
        %v1283 = vsel %vm1273, %v1268, 0.0
        %1284 = vadd.xlane.f32.xlu0 %v1283
        %v1285 = vpop.xlane.xlu0 %1284
        %v1286 = vsel %vm1273, %v1269, 0.0
        %1287 = vadd.xlane.f32.xlu0 %v1286
        %v1288 = vpop.xlane.xlu0 %1287
        %v1289 = vsel %vm1273, %v1270, 0.0
        %1290 = vadd.xlane.f32.xlu0 %v1289
        %v1291 = vpop.xlane.xlu0 %1290
        %v1292 = vsel %vm1273, %v1271, 0.0
        %1293 = vadd.xlane.f32.xlu0 %v1292
        %v1294 = vpop.xlane.xlu0 %1293
        %v1295 = vsel %vm1273, %v1272, 0.0
        %1296 = vadd.xlane.f32.xlu0 %v1295
        %v1297 = vpop.xlane.xlu0 %1296
        %v1298 = vmax.f32 %v1276, 1e-24
        %v1299 = vmax.f32 %v1279, 1e-24
        %v1300 = vmax.f32 %v1282, 1e-24
        %v1301 = vmax.f32 %v1285, 1e-24
        %v1302 = vmax.f32 %v1288, 1e-24
        %v1303 = vmax.f32 %v1291, 1e-24
        %v1304 = vmax.f32 %v1294, 1e-24
        %v1305 = vmax.f32 %v1297, 1e-24
        %v1306 = vrsqrt.pop %v1298
        %v1307 = vrsqrt.pop %v1299
        %v1308 = vrsqrt.pop %v1300
        %v1309 = vrsqrt.pop %v1301
        %v1310 = vrsqrt.pop %v1302
        %v1311 = vrsqrt.pop %v1303
        %v1312 = vrsqrt.pop %v1304
        %v1313 = vrsqrt.pop %v1305
        %v1314 = vmul.f32 %v1061, %v1306
        %v1315 = vmul.f32 %v1064, %v1307
        %v1316 = vmul.f32 %v1126, %v1308
        %v1317 = vmul.f32 %v1129, %v1309
        %v1318 = vmul.f32 %v1170, %v1310
        %v1319 = vmul.f32 %v1173, %v1311
        %v1320 = vmul.f32 %v1211, %v1312
        %v1321 = vmul.f32 %v1214, %v1313
        %v1322 = vlaneseq
        %v1323 = vshrl.u32 %v1322, 7
        %v1324 = vsub.s32 0, %v1323
        %v1325 = vrot.slane %v1233, %v1324
        %v1326 = vlaneseq
        %v1327 = vshrl.u32 %v1326, 7
        %v1328 = vsub.s32 0, %v1327
        %v1329 = vrot.slane %v1240, %v1328
        %v1332 = vmul.f32 %v1314, %v1325
        %v1333 = vmul.f32 %v1315, %v1325
        %v1334 = vmul.f32 %v1316, %v1329
        %v1335 = vmul.f32 %v1317, %v1329
        %v1336 = vmul.f32 %v1318, %v1325
        %v1337 = vmul.f32 %v1319, %v1325
        %v1338 = vmul.f32 %v1320, %v1329
        %v1339 = vmul.f32 %v1321, %v1329
        %1348 = vrot.lane.b32.xlu0 %v1265, 112
        %v1349 = vpop.permute.xlu0 %1348
        %1350 = vrot.lane.b32.xlu0 %v1266, 112
        %v1351 = vpop.permute.xlu0 %1350
        %1352 = vrot.lane.b32.xlu0 %v1267, 112
        %v1353 = vpop.permute.xlu0 %1352
        %1354 = vrot.lane.b32.xlu0 %v1268, 112
        %v1355 = vpop.permute.xlu0 %1354
        %1356 = vrot.lane.b32.xlu0 %v1269, 112
        %v1357 = vpop.permute.xlu0 %1356
        %1358 = vrot.lane.b32.xlu0 %v1270, 112
        %v1359 = vpop.permute.xlu0 %1358
        %1360 = vrot.lane.b32.xlu0 %v1271, 112
        %v1361 = vpop.permute.xlu0 %1360
        %1362 = vrot.lane.b32.xlu0 %v1272, 112
        %v1363 = vpop.permute.xlu0 %1362
        %v1372 = vsel %vm1273, %v1349, 0.0
        %1373 = vadd.xlane.f32.xlu0 %v1372
        %v1374 = vpop.xlane.xlu0 %1373
        %v1375 = vsel %vm1273, %v1351, 0.0
        %1376 = vadd.xlane.f32.xlu0 %v1375
        %v1377 = vpop.xlane.xlu0 %1376
        %v1378 = vsel %vm1273, %v1353, 0.0
        %1379 = vadd.xlane.f32.xlu0 %v1378
        %v1380 = vpop.xlane.xlu0 %1379
        %v1381 = vsel %vm1273, %v1355, 0.0
        %1382 = vadd.xlane.f32.xlu0 %v1381
        %v1383 = vpop.xlane.xlu0 %1382
        %v1384 = vsel %vm1273, %v1357, 0.0
        %1385 = vadd.xlane.f32.xlu0 %v1384
        %v1386 = vpop.xlane.xlu0 %1385
        %v1387 = vsel %vm1273, %v1359, 0.0
        %1388 = vadd.xlane.f32.xlu0 %v1387
        %v1389 = vpop.xlane.xlu0 %1388
        %v1390 = vsel %vm1273, %v1361, 0.0
        %1391 = vadd.xlane.f32.xlu0 %v1390
        %v1392 = vpop.xlane.xlu0 %1391
        %v1393 = vsel %vm1273, %v1363, 0.0
        %1394 = vadd.xlane.f32.xlu0 %v1393
        %v1395 = vpop.xlane.xlu0 %1394
        %v1396 = vmax.f32 %v1374, 1e-24
        %v1397 = vmax.f32 %v1377, 1e-24
        %v1398 = vmax.f32 %v1380, 1e-24
        %v1399 = vmax.f32 %v1383, 1e-24
        %v1400 = vmax.f32 %v1386, 1e-24
        %v1401 = vmax.f32 %v1389, 1e-24
        %v1402 = vmax.f32 %v1392, 1e-24
        %v1403 = vmax.f32 %v1395, 1e-24
        %v1404 = vrsqrt.pop %v1396
        %v1405 = vrsqrt.pop %v1397
        %v1406 = vrsqrt.pop %v1398
        %v1407 = vrsqrt.pop %v1399
        %v1408 = vrsqrt.pop %v1400
        %v1409 = vrsqrt.pop %v1401
        %v1410 = vrsqrt.pop %v1402
        %v1411 = vrsqrt.pop %v1403
        %v1412 = vmul.f32 %v1061, %v1404
        %v1413 = vmul.f32 %v1064, %v1405
        %v1414 = vmul.f32 %v1126, %v1406
        %v1415 = vmul.f32 %v1129, %v1407
        %v1416 = vmul.f32 %v1170, %v1408
        %v1417 = vmul.f32 %v1173, %v1409
        %v1418 = vmul.f32 %v1211, %v1410
        %v1419 = vmul.f32 %v1214, %v1411
        %v1420 = vlaneseq
        %v1421 = vshrl.u32 %v1420, 7
        %v1422 = vsub.s32 0, %v1421
        %v1423 = vrot.slane %v1257, %v1422
        %v1424 = vlaneseq
        %v1425 = vshrl.u32 %v1424, 7
        %v1426 = vsub.s32 0, %v1425
        %v1427 = vrot.slane %v1264, %v1426
        %1428 = vrot.lane.b32.xlu0 %v1423, 16
        %v1429 = vpop.permute.xlu0 %1428
        %1430 = vrot.lane.b32.xlu0 %v1427, 16
        %v1431 = vpop.permute.xlu0 %1430
        %v1434 = vmul.f32 %v1412, %v1429
        %v1435 = vmul.f32 %v1413, %v1429
        %v1436 = vmul.f32 %v1414, %v1431
        %v1437 = vmul.f32 %v1415, %v1431
        %v1438 = vmul.f32 %v1416, %v1429
        %v1439 = vmul.f32 %v1417, %v1429
        %v1440 = vmul.f32 %v1418, %v1431
        %v1441 = vmul.f32 %v1419, %v1431
        %v1442 = vpack.c.bf16 %v1333, %v1332
        %v1443 = vpack.c.bf16 %v1335, %v1334
        %v1444 = vpack.c.bf16 %v1337, %v1336
        %v1445 = vpack.c.bf16 %v1339, %v1338
        %v1446 = vpack.c.bf16 %v1435, %v1434
        %v1447 = vpack.c.bf16 %v1437, %v1436
        %v1448 = vpack.c.bf16 %v1439, %v1438
        %v1449 = vpack.c.bf16 %v1441, %v1440
        %1451 = vrot.lane.b32.xlu0 %v1446, 112
        %v1452 = vpop.permute.xlu0 %1451
        %v1454 = vsel %vm1273, %v1442, 0
        %v1457 = vsel %vm1273, %v1452, 0
        %1459 = vmatprep.subr.bf16.mxu0 0
        %1460 = vmatpush1.bf16.xpose.msra.mxu0 %v1457
        %1461 = vmatprep.subr.bf16.mxu0 0
        %1462 = vmatpush1.bf16.xpose.msra.mxu0 0
        %1463 = vmatprep.subr.bf16.mxu0 0
        %1464 = vmatpush1.bf16.xpose.msra.mxu0 0
        %1465 = vmatprep.subr.bf16.mxu0 0
        %1466 = vmatpush1.bf16.xpose.msra.mxu0 0
        %1467 = vmatprep.subr.bf16.mxu0 0
        %1468 = vmatpush1.bf16.xpose.msra.mxu0 0
        %1469 = vmatprep.subr.bf16.mxu0 0
        %1470 = vmatpush1.bf16.xpose.msra.mxu0 0
        %1471 = vmatprep.subr.bf16.mxu0 0
        %1472 = vmatpush1.bf16.xpose.msra.mxu0 0
        %1473 = vmatprep.subr.bf16.mxu0 0
        %1474 = vmatpush1.bf16.xpose.msra.mxu0 0
        %1475 = vmatprep.subr.bf16.mxu0 0
        %1476 = vmatpush1.bf16.xpose.msra.mxu0 0
        %1477 = vmatprep.subr.bf16.mxu0 0
        %1478 = vmatpush1.bf16.xpose.msra.mxu0 0
        %1479 = vmatprep.subr.bf16.mxu0 0
        %1480 = vmatpush1.bf16.xpose.msra.mxu0 0
        %1481 = vmatprep.subr.bf16.mxu0 0
        %1482 = vmatpush1.bf16.xpose.msra.mxu0 0
        %1483 = vmatprep.subr.bf16.mxu0 0
        %1484 = vmatpush1.bf16.xpose.msra.mxu0 0
        %1485 = vmatprep.subr.bf16.mxu0 0
        %1486 = vmatpush1.bf16.xpose.msra.mxu0 0
        %1487 = vmatprep.subr.bf16.mxu0 0
        %1488 = vmatpush1.bf16.xpose.msra.mxu0 0
        %1489 = vmatprep.subr.bf16.mxu0 0
        %1490 = vmatpush1.bf16.xpose.msra.mxu0 0
        %1491 = vmatprep.mubr.bf16.mxu0 0
        %1492 = vmatmul.mubr.bf16.gmra.mrb[0].mxu0 %v1454
        %v1493 = vpop.f32.mrb[0].mxu0
        %v1494 = vadd.f32 0.0, %v1493
        %v1495 = vpop.f32.mrb[0].mxu0
        %v1496 = vpop.f32.mrb[0].mxu0
        %v1497 = vadd.f32 0.0, %v1496
        %v1498 = vpop.f32.mrb[0].mxu0
        %1499 = vdwg.mxu0
        %1501 = vrot.lane.b32.xlu0 %v1447, 112
        %v1502 = vpop.permute.xlu0 %1501
        %v1504 = vsel %vm1273, %v1443, 0
        %v1507 = vsel %vm1273, %v1502, 0
        %1509 = vmatprep.subr.bf16.mxu0 0
        %1510 = vmatpush1.bf16.xpose.msra.mxu0 %v1507
        %1511 = vmatprep.subr.bf16.mxu0 0
        %1512 = vmatpush1.bf16.xpose.msra.mxu0 0
        %1513 = vmatprep.subr.bf16.mxu0 0
        %1514 = vmatpush1.bf16.xpose.msra.mxu0 0
        %1515 = vmatprep.subr.bf16.mxu0 0
        %1516 = vmatpush1.bf16.xpose.msra.mxu0 0
        %1517 = vmatprep.subr.bf16.mxu0 0
        %1518 = vmatpush1.bf16.xpose.msra.mxu0 0
        %1519 = vmatprep.subr.bf16.mxu0 0
        %1520 = vmatpush1.bf16.xpose.msra.mxu0 0
        %1521 = vmatprep.subr.bf16.mxu0 0
        %1522 = vmatpush1.bf16.xpose.msra.mxu0 0
        %1523 = vmatprep.subr.bf16.mxu0 0
        %1524 = vmatpush1.bf16.xpose.msra.mxu0 0
        %1525 = vmatprep.subr.bf16.mxu0 0
        %1526 = vmatpush1.bf16.xpose.msra.mxu0 0
        %1527 = vmatprep.subr.bf16.mxu0 0
        %1528 = vmatpush1.bf16.xpose.msra.mxu0 0
        %1529 = vmatprep.subr.bf16.mxu0 0
        %1530 = vmatpush1.bf16.xpose.msra.mxu0 0
        %1531 = vmatprep.subr.bf16.mxu0 0
        %1532 = vmatpush1.bf16.xpose.msra.mxu0 0
        %1533 = vmatprep.subr.bf16.mxu0 0
        %1534 = vmatpush1.bf16.xpose.msra.mxu0 0
        %1535 = vmatprep.subr.bf16.mxu0 0
        %1536 = vmatpush1.bf16.xpose.msra.mxu0 0
        %1537 = vmatprep.subr.bf16.mxu0 0
        %1538 = vmatpush1.bf16.xpose.msra.mxu0 0
        %1539 = vmatprep.subr.bf16.mxu0 0
        %1540 = vmatpush1.bf16.xpose.msra.mxu0 0
        %1541 = vmatprep.mubr.bf16.mxu0 0
        %1542 = vmatmul.mubr.bf16.gmra.mrb[0].mxu0 %v1504
        %v1543 = vpop.f32.mrb[0].mxu0
        %v1544 = vadd.f32 0.0, %v1543
        %v1545 = vpop.f32.mrb[0].mxu0
        %v1546 = vpop.f32.mrb[0].mxu0
        %v1547 = vadd.f32 0.0, %v1546
        %v1548 = vpop.f32.mrb[0].mxu0
        %1549 = vdwg.mxu0
        %1551 = vrot.lane.b32.xlu0 %v1448, 112
        %v1552 = vpop.permute.xlu0 %1551
        %v1554 = vsel %vm1273, %v1444, 0
        %v1557 = vsel %vm1273, %v1552, 0
        %1559 = vmatprep.subr.bf16.mxu0 0
        %1560 = vmatpush1.bf16.xpose.msra.mxu0 %v1557
        %1561 = vmatprep.subr.bf16.mxu0 0
        %1562 = vmatpush1.bf16.xpose.msra.mxu0 0
        %1563 = vmatprep.subr.bf16.mxu0 0
        %1564 = vmatpush1.bf16.xpose.msra.mxu0 0
        %1565 = vmatprep.subr.bf16.mxu0 0
        %1566 = vmatpush1.bf16.xpose.msra.mxu0 0
        %1567 = vmatprep.subr.bf16.mxu0 0
        %1568 = vmatpush1.bf16.xpose.msra.mxu0 0
        %1569 = vmatprep.subr.bf16.mxu0 0
        %1570 = vmatpush1.bf16.xpose.msra.mxu0 0
        %1571 = vmatprep.subr.bf16.mxu0 0
        %1572 = vmatpush1.bf16.xpose.msra.mxu0 0
        %1573 = vmatprep.subr.bf16.mxu0 0
        %1574 = vmatpush1.bf16.xpose.msra.mxu0 0
        %1575 = vmatprep.subr.bf16.mxu0 0
        %1576 = vmatpush1.bf16.xpose.msra.mxu0 0
        %1577 = vmatprep.subr.bf16.mxu0 0
        %1578 = vmatpush1.bf16.xpose.msra.mxu0 0
        %1579 = vmatprep.subr.bf16.mxu0 0
        %1580 = vmatpush1.bf16.xpose.msra.mxu0 0
        %1581 = vmatprep.subr.bf16.mxu0 0
        %1582 = vmatpush1.bf16.xpose.msra.mxu0 0
        %1583 = vmatprep.subr.bf16.mxu0 0
        %1584 = vmatpush1.bf16.xpose.msra.mxu0 0
        %1585 = vmatprep.subr.bf16.mxu0 0
        %1586 = vmatpush1.bf16.xpose.msra.mxu0 0
        %1587 = vmatprep.subr.bf16.mxu0 0
        %1588 = vmatpush1.bf16.xpose.msra.mxu0 0
        %1589 = vmatprep.subr.bf16.mxu0 0
        %1590 = vmatpush1.bf16.xpose.msra.mxu0 0
        %1591 = vmatprep.mubr.bf16.mxu0 0
        %1592 = vmatmul.mubr.bf16.gmra.mrb[0].mxu0 %v1554
        %v1593 = vpop.f32.mrb[0].mxu0
        %v1594 = vadd.f32 0.0, %v1593
        %v1595 = vpop.f32.mrb[0].mxu0
        %v1596 = vpop.f32.mrb[0].mxu0
        %v1597 = vadd.f32 0.0, %v1596
        %v1598 = vpop.f32.mrb[0].mxu0
        %1599 = vdwg.mxu0
        %1601 = vrot.lane.b32.xlu0 %v1449, 112
        %v1602 = vpop.permute.xlu0 %1601
        %v1604 = vsel %vm1273, %v1445, 0
        %v1607 = vsel %vm1273, %v1602, 0
        %1609 = vmatprep.subr.bf16.mxu0 0
        %1610 = vmatpush1.bf16.xpose.msra.mxu0 %v1607
        %1611 = vmatprep.subr.bf16.mxu0 0
        %1612 = vmatpush1.bf16.xpose.msra.mxu0 0
        %1613 = vmatprep.subr.bf16.mxu0 0
        %1614 = vmatpush1.bf16.xpose.msra.mxu0 0
        %1615 = vmatprep.subr.bf16.mxu0 0
        %1616 = vmatpush1.bf16.xpose.msra.mxu0 0
        %1617 = vmatprep.subr.bf16.mxu0 0
        %1618 = vmatpush1.bf16.xpose.msra.mxu0 0
        %1619 = vmatprep.subr.bf16.mxu0 0
        %1620 = vmatpush1.bf16.xpose.msra.mxu0 0
        %1621 = vmatprep.subr.bf16.mxu0 0
        %1622 = vmatpush1.bf16.xpose.msra.mxu0 0
        %1623 = vmatprep.subr.bf16.mxu0 0
        %1624 = vmatpush1.bf16.xpose.msra.mxu0 0
        %1625 = vmatprep.subr.bf16.mxu0 0
        %1626 = vmatpush1.bf16.xpose.msra.mxu0 0
        %1627 = vmatprep.subr.bf16.mxu0 0
        %1628 = vmatpush1.bf16.xpose.msra.mxu0 0
        %1629 = vmatprep.subr.bf16.mxu0 0
        %1630 = vmatpush1.bf16.xpose.msra.mxu0 0
        %1631 = vmatprep.subr.bf16.mxu0 0
        %1632 = vmatpush1.bf16.xpose.msra.mxu0 0
        %1633 = vmatprep.subr.bf16.mxu0 0
        %1634 = vmatpush1.bf16.xpose.msra.mxu0 0
        %1635 = vmatprep.subr.bf16.mxu0 0
        %1636 = vmatpush1.bf16.xpose.msra.mxu0 0
        %1637 = vmatprep.subr.bf16.mxu0 0
        %1638 = vmatpush1.bf16.xpose.msra.mxu0 0
        %1639 = vmatprep.subr.bf16.mxu0 0
        %1640 = vmatpush1.bf16.xpose.msra.mxu0 0
        %1641 = vmatprep.mubr.bf16.mxu0 0
        %1642 = vmatmul.mubr.bf16.gmra.mrb[0].mxu0 %v1604
        %v1643 = vpop.f32.mrb[0].mxu0
        %v1644 = vadd.f32 0.0, %v1643
        %v1645 = vpop.f32.mrb[0].mxu0
        %v1646 = vpop.f32.mrb[0].mxu0
        %v1647 = vadd.f32 0.0, %v1646
        %v1648 = vpop.f32.mrb[0].mxu0
        %1649 = vdwg.mxu0
        %v1650 = vsel %vm1273, %v1494, -inf
        %1651 = vmax.xlane.f32.xlu0 %v1650
        %v1652 = vpop.xlane.xlu0 %1651
        %v1653 = vsel %vm1273, %v1497, -inf
        %1654 = vmax.xlane.f32.xlu0 %v1653
        %v1655 = vpop.xlane.xlu0 %1654
        %v1656 = vsel %vm1273, %v1544, -inf
        %1657 = vmax.xlane.f32.xlu0 %v1656
        %v1658 = vpop.xlane.xlu0 %1657
        %v1659 = vsel %vm1273, %v1547, -inf
        %1660 = vmax.xlane.f32.xlu0 %v1659
        %v1661 = vpop.xlane.xlu0 %1660
        %v1662 = vsel %vm1273, %v1594, -inf
        %1663 = vmax.xlane.f32.xlu0 %v1662
        %v1664 = vpop.xlane.xlu0 %1663
        %v1665 = vsel %vm1273, %v1597, -inf
        %1666 = vmax.xlane.f32.xlu0 %v1665
        %v1667 = vpop.xlane.xlu0 %1666
        %v1668 = vsel %vm1273, %v1644, -inf
        %1669 = vmax.xlane.f32.xlu0 %v1668
        %v1670 = vpop.xlane.xlu0 %1669
        %v1671 = vsel %vm1273, %v1647, -inf
        %1672 = vmax.xlane.f32.xlu0 %v1671
        %v1673 = vpop.xlane.xlu0 %1672
        %v1674 = vsub.f32 %v1494, %v1652
        %v1675 = vsub.f32 %v1497, %v1655
        %v1676 = vsub.f32 %v1544, %v1658
        %v1677 = vsub.f32 %v1547, %v1661
        %v1678 = vsub.f32 %v1594, %v1664
        %v1679 = vsub.f32 %v1597, %v1667
        %v1680 = vsub.f32 %v1644, %v1670
        %v1681 = vsub.f32 %v1647, %v1673
        %v1682 = vmul.f32 %v1674, 1.442695
        %v1683 = vpow.pop %v1682
        %v1684 = vmul.f32 %v1675, 1.442695
        %v1685 = vpow.pop %v1684
        %v1686 = vmul.f32 %v1676, 1.442695
        %v1687 = vpow.pop %v1686
        %v1688 = vmul.f32 %v1677, 1.442695
        %v1689 = vpow.pop %v1688
        %v1690 = vmul.f32 %v1678, 1.442695
        %v1691 = vpow.pop %v1690
        %v1692 = vmul.f32 %v1679, 1.442695
        %v1693 = vpow.pop %v1692
        %v1694 = vmul.f32 %v1680, 1.442695
        %v1695 = vpow.pop %v1694
        %v1696 = vmul.f32 %v1681, 1.442695
        %v1697 = vpow.pop %v1696
        %v1698 = vsel %vm1273, %v1683, 0.0
        %1699 = vadd.xlane.f32.xlu0 %v1698
        %v1700 = vpop.xlane.xlu0 %1699
        %v1701 = vsel %vm1273, %v1685, 0.0
        %1702 = vadd.xlane.f32.xlu0 %v1701
        %v1703 = vpop.xlane.xlu0 %1702
        %v1704 = vsel %vm1273, %v1687, 0.0
        %1705 = vadd.xlane.f32.xlu0 %v1704
        %v1706 = vpop.xlane.xlu0 %1705
        %v1707 = vsel %vm1273, %v1689, 0.0
        %1708 = vadd.xlane.f32.xlu0 %v1707
        %v1709 = vpop.xlane.xlu0 %1708
        %v1710 = vsel %vm1273, %v1691, 0.0
        %1711 = vadd.xlane.f32.xlu0 %v1710
        %v1712 = vpop.xlane.xlu0 %1711
        %v1713 = vsel %vm1273, %v1693, 0.0
        %1714 = vadd.xlane.f32.xlu0 %v1713
        %v1715 = vpop.xlane.xlu0 %1714
        %v1716 = vsel %vm1273, %v1695, 0.0
        %1717 = vadd.xlane.f32.xlu0 %v1716
        %v1718 = vpop.xlane.xlu0 %1717
        %v1719 = vsel %vm1273, %v1697, 0.0
        %1720 = vadd.xlane.f32.xlu0 %v1719
        %v1721 = vpop.xlane.xlu0 %1720
        %v1722 = vrcp.pop %v1700
        %v1723 = vmul.f32 %v1683, %v1722
        %v1724 = vrcp.pop %v1703
        %v1725 = vmul.f32 %v1685, %v1724
        %v1726 = vrcp.pop %v1706
        %v1727 = vmul.f32 %v1687, %v1726
        %v1728 = vrcp.pop %v1709
        %v1729 = vmul.f32 %v1689, %v1728
        %v1730 = vrcp.pop %v1712
        %v1731 = vmul.f32 %v1691, %v1730
        %v1732 = vrcp.pop %v1715
        %v1733 = vmul.f32 %v1693, %v1732
        %v1734 = vrcp.pop %v1718
        %v1735 = vmul.f32 %v1695, %v1734
        %v1736 = vrcp.pop %v1721
        %v1737 = vmul.f32 %v1697, %v1736
        %v1738 = vpack.c.bf16 %v1725, %v1723
        %v1739 = vpack.c.bf16 %v1729, %v1727
        %v1740 = vpack.c.bf16 %v1733, %v1731
        %v1741 = vpack.c.bf16 %v1737, %v1735
        %v1742 = vpack.c.bf16 %v1064, %v1061
        %v1743 = vpack.c.bf16 %v1129, %v1126
        %v1744 = vpack.c.bf16 %v1173, %v1170
        %v1745 = vpack.c.bf16 %v1214, %v1211
        %1747 = vrot.lane.b32.xlu0 %v1742, 96
        %v1748 = vpop.permute.xlu0 %1747
        %v1751 = vsel %vm1273, %v1738, 0
        %1753 = vmatprep.subr.bf16.mxu0 0
        %1754 = vmatpush1.bf16.msra.mxu0 %v1748
        %1755 = vmatprep.subr.bf16.mxu0 0
        %1756 = vmatpush1.bf16.msra.mxu0 0
        %1757 = vmatprep.subr.bf16.mxu0 0
        %1758 = vmatpush1.bf16.msra.mxu0 0
        %1759 = vmatprep.subr.bf16.mxu0 0
        %1760 = vmatpush1.bf16.msra.mxu0 0
        %1761 = vmatprep.subr.bf16.mxu0 0
        %1762 = vmatpush1.bf16.msra.mxu0 0
        %1763 = vmatprep.subr.bf16.mxu0 0
        %1764 = vmatpush1.bf16.msra.mxu0 0
        %1765 = vmatprep.subr.bf16.mxu0 0
        %1766 = vmatpush1.bf16.msra.mxu0 0
        %1767 = vmatprep.subr.bf16.mxu0 0
        %1768 = vmatpush1.bf16.msra.mxu0 0
        %1769 = vmatprep.subr.bf16.mxu0 0
        %1770 = vmatpush1.bf16.msra.mxu0 0
        %1771 = vmatprep.subr.bf16.mxu0 0
        %1772 = vmatpush1.bf16.msra.mxu0 0
        %1773 = vmatprep.subr.bf16.mxu0 0
        %1774 = vmatpush1.bf16.msra.mxu0 0
        %1775 = vmatprep.subr.bf16.mxu0 0
        %1776 = vmatpush1.bf16.msra.mxu0 0
        %1777 = vmatprep.subr.bf16.mxu0 0
        %1778 = vmatpush1.bf16.msra.mxu0 0
        %1779 = vmatprep.subr.bf16.mxu0 0
        %1780 = vmatpush1.bf16.msra.mxu0 0
        %1781 = vmatprep.subr.bf16.mxu0 0
        %1782 = vmatpush1.bf16.msra.mxu0 0
        %1783 = vmatprep.subr.bf16.mxu0 0
        %1784 = vmatpush1.bf16.msra.mxu0 0
        %1785 = vmatprep.mubr.bf16.mxu0 0
        %1786 = vmatmul.mubr.bf16.gmra.mrb[0].mxu0 %v1751
        %v1787 = vpop.f32.mrb[0].mxu0
        %v1788 = vadd.f32 0.0, %v1787
        %v1789 = vpop.f32.mrb[0].mxu0
        %v1790 = vpop.f32.mrb[0].mxu0
        %v1791 = vadd.f32 0.0, %v1790
        %v1792 = vpop.f32.mrb[0].mxu0
        %1793 = vdwg.mxu0
        %1795 = vrot.lane.b32.xlu0 %v1743, 96
        %v1796 = vpop.permute.xlu0 %1795
        %v1799 = vsel %vm1273, %v1739, 0
        %1801 = vmatprep.subr.bf16.mxu0 0
        %1802 = vmatpush1.bf16.msra.mxu0 %v1796
        %1803 = vmatprep.subr.bf16.mxu0 0
        %1804 = vmatpush1.bf16.msra.mxu0 0
        %1805 = vmatprep.subr.bf16.mxu0 0
        %1806 = vmatpush1.bf16.msra.mxu0 0
        %1807 = vmatprep.subr.bf16.mxu0 0
        %1808 = vmatpush1.bf16.msra.mxu0 0
        %1809 = vmatprep.subr.bf16.mxu0 0
        %1810 = vmatpush1.bf16.msra.mxu0 0
        %1811 = vmatprep.subr.bf16.mxu0 0
        %1812 = vmatpush1.bf16.msra.mxu0 0
        %1813 = vmatprep.subr.bf16.mxu0 0
        %1814 = vmatpush1.bf16.msra.mxu0 0
        %1815 = vmatprep.subr.bf16.mxu0 0
        %1816 = vmatpush1.bf16.msra.mxu0 0
        %1817 = vmatprep.subr.bf16.mxu0 0
        %1818 = vmatpush1.bf16.msra.mxu0 0
        %1819 = vmatprep.subr.bf16.mxu0 0
        %1820 = vmatpush1.bf16.msra.mxu0 0
        %1821 = vmatprep.subr.bf16.mxu0 0
        %1822 = vmatpush1.bf16.msra.mxu0 0
        %1823 = vmatprep.subr.bf16.mxu0 0
        %1824 = vmatpush1.bf16.msra.mxu0 0
        %1825 = vmatprep.subr.bf16.mxu0 0
        %1826 = vmatpush1.bf16.msra.mxu0 0
        %1827 = vmatprep.subr.bf16.mxu0 0
        %1828 = vmatpush1.bf16.msra.mxu0 0
        %1829 = vmatprep.subr.bf16.mxu0 0
        %1830 = vmatpush1.bf16.msra.mxu0 0
        %1831 = vmatprep.subr.bf16.mxu0 0
        %1832 = vmatpush1.bf16.msra.mxu0 0
        %1833 = vmatprep.mubr.bf16.mxu0 0
        %1834 = vmatmul.mubr.bf16.gmra.mrb[0].mxu0 %v1799
        %v1835 = vpop.f32.mrb[0].mxu0
        %v1836 = vadd.f32 0.0, %v1835
        %v1837 = vpop.f32.mrb[0].mxu0
        %v1838 = vpop.f32.mrb[0].mxu0
        %v1839 = vadd.f32 0.0, %v1838
        %v1840 = vpop.f32.mrb[0].mxu0
        %1841 = vdwg.mxu0
        %1843 = vrot.lane.b32.xlu0 %v1744, 96
        %v1844 = vpop.permute.xlu0 %1843
        %v1847 = vsel %vm1273, %v1740, 0
        %1849 = vmatprep.subr.bf16.mxu0 0
        %1850 = vmatpush1.bf16.msra.mxu0 %v1844
        %1851 = vmatprep.subr.bf16.mxu0 0
        %1852 = vmatpush1.bf16.msra.mxu0 0
        %1853 = vmatprep.subr.bf16.mxu0 0
        %1854 = vmatpush1.bf16.msra.mxu0 0
        %1855 = vmatprep.subr.bf16.mxu0 0
        %1856 = vmatpush1.bf16.msra.mxu0 0
        %1857 = vmatprep.subr.bf16.mxu0 0
        %1858 = vmatpush1.bf16.msra.mxu0 0
        %1859 = vmatprep.subr.bf16.mxu0 0
        %1860 = vmatpush1.bf16.msra.mxu0 0
        %1861 = vmatprep.subr.bf16.mxu0 0
        %1862 = vmatpush1.bf16.msra.mxu0 0
        %1863 = vmatprep.subr.bf16.mxu0 0
        %1864 = vmatpush1.bf16.msra.mxu0 0
        %1865 = vmatprep.subr.bf16.mxu0 0
        %1866 = vmatpush1.bf16.msra.mxu0 0
        %1867 = vmatprep.subr.bf16.mxu0 0
        %1868 = vmatpush1.bf16.msra.mxu0 0
        %1869 = vmatprep.subr.bf16.mxu0 0
        %1870 = vmatpush1.bf16.msra.mxu0 0
        %1871 = vmatprep.subr.bf16.mxu0 0
        %1872 = vmatpush1.bf16.msra.mxu0 0
        %1873 = vmatprep.subr.bf16.mxu0 0
        %1874 = vmatpush1.bf16.msra.mxu0 0
        %1875 = vmatprep.subr.bf16.mxu0 0
        %1876 = vmatpush1.bf16.msra.mxu0 0
        %1877 = vmatprep.subr.bf16.mxu0 0
        %1878 = vmatpush1.bf16.msra.mxu0 0
        %1879 = vmatprep.subr.bf16.mxu0 0
        %1880 = vmatpush1.bf16.msra.mxu0 0
        %1881 = vmatprep.mubr.bf16.mxu0 0
        %1882 = vmatmul.mubr.bf16.gmra.mrb[0].mxu0 %v1847
        %v1883 = vpop.f32.mrb[0].mxu0
        %v1884 = vadd.f32 0.0, %v1883
        %v1885 = vpop.f32.mrb[0].mxu0
        %v1886 = vpop.f32.mrb[0].mxu0
        %v1887 = vadd.f32 0.0, %v1886
        %v1888 = vpop.f32.mrb[0].mxu0
        %1889 = vdwg.mxu0
        %1891 = vrot.lane.b32.xlu0 %v1745, 96
        %v1892 = vpop.permute.xlu0 %1891
        %v1895 = vsel %vm1273, %v1741, 0
        %1897 = vmatprep.subr.bf16.mxu0 0
        %1898 = vmatpush1.bf16.msra.mxu0 %v1892
        %1899 = vmatprep.subr.bf16.mxu0 0
        %1900 = vmatpush1.bf16.msra.mxu0 0
        %1901 = vmatprep.subr.bf16.mxu0 0
        %1902 = vmatpush1.bf16.msra.mxu0 0
        %1903 = vmatprep.subr.bf16.mxu0 0
        %1904 = vmatpush1.bf16.msra.mxu0 0
        %1905 = vmatprep.subr.bf16.mxu0 0
        %1906 = vmatpush1.bf16.msra.mxu0 0
        %1907 = vmatprep.subr.bf16.mxu0 0
        %1908 = vmatpush1.bf16.msra.mxu0 0
        %1909 = vmatprep.subr.bf16.mxu0 0
        %1910 = vmatpush1.bf16.msra.mxu0 0
        %1911 = vmatprep.subr.bf16.mxu0 0
        %1912 = vmatpush1.bf16.msra.mxu0 0
        %1913 = vmatprep.subr.bf16.mxu0 0
        %1914 = vmatpush1.bf16.msra.mxu0 0
        %1915 = vmatprep.subr.bf16.mxu0 0
        %1916 = vmatpush1.bf16.msra.mxu0 0
        %1917 = vmatprep.subr.bf16.mxu0 0
        %1918 = vmatpush1.bf16.msra.mxu0 0
        %1919 = vmatprep.subr.bf16.mxu0 0
        %1920 = vmatpush1.bf16.msra.mxu0 0
        %1921 = vmatprep.subr.bf16.mxu0 0
        %1922 = vmatpush1.bf16.msra.mxu0 0
        %1923 = vmatprep.subr.bf16.mxu0 0
        %1924 = vmatpush1.bf16.msra.mxu0 0
        %1925 = vmatprep.subr.bf16.mxu0 0
        %1926 = vmatpush1.bf16.msra.mxu0 0
        %1927 = vmatprep.subr.bf16.mxu0 0
        %1928 = vmatpush1.bf16.msra.mxu0 0
        %1929 = vmatprep.mubr.bf16.mxu0 0
        %1930 = vmatmul.mubr.bf16.gmra.mrb[0].mxu0 %v1895
        %v1931 = vpop.f32.mrb[0].mxu0
        %v1932 = vadd.f32 0.0, %v1931
        %v1933 = vpop.f32.mrb[0].mxu0
        %v1934 = vpop.f32.mrb[0].mxu0
        %v1935 = vadd.f32 0.0, %v1934
        %v1936 = vpop.f32.mrb[0].mxu0
        %1937 = vdwg.mxu0
        %v1938 = vld [vmem:[%s625] sm:$0xf]
        %v1939 = vld [vmem:[%s625 + $0x4] sm:$0xf]
        %v1940 = vld [vmem:[%s625 + $0x8] sm:$0xf]
        %v1941 = vld [vmem:[%s625 + $0xc] sm:$0xf]
        %v1942 = vpack.c.bf16 %v1791, %v1788
        %v1943 = vpack.c.bf16 %v1839, %v1836
        %v1944 = vpack.c.bf16 %v1887, %v1884
        %v1945 = vpack.c.bf16 %v1935, %v1932
        %v1948 = vunpack.c.l.b16 %v1938
        %v1949 = vunpack.c.l.b16 %v1939
        %v1950 = vpack.c.b16 %v1949, %v1948
        %v1953 = vsel %vm1273, %v1942, 0
        %1955 = vmatprep.subr.bf16.mxu0 0
        %1956 = vmatpush1.bf16.msra.mxu0 %v1950
        %1957 = vmatprep.subr.bf16.mxu0 0
        %1958 = vmatpush1.bf16.msra.mxu0 0
        %1959 = vmatprep.subr.bf16.mxu0 0
        %1960 = vmatpush1.bf16.msra.mxu0 0
        %1961 = vmatprep.subr.bf16.mxu0 0
        %1962 = vmatpush1.bf16.msra.mxu0 0
        %1963 = vmatprep.subr.bf16.mxu0 0
        %1964 = vmatpush1.bf16.msra.mxu0 0
        %1965 = vmatprep.subr.bf16.mxu0 0
        %1966 = vmatpush1.bf16.msra.mxu0 0
        %1967 = vmatprep.subr.bf16.mxu0 0
        %1968 = vmatpush1.bf16.msra.mxu0 0
        %1969 = vmatprep.subr.bf16.mxu0 0
        %1970 = vmatpush1.bf16.msra.mxu0 0
        %1971 = vmatprep.subr.bf16.mxu0 0
        %1972 = vmatpush1.bf16.msra.mxu0 0
        %1973 = vmatprep.subr.bf16.mxu0 0
        %1974 = vmatpush1.bf16.msra.mxu0 0
        %1975 = vmatprep.subr.bf16.mxu0 0
        %1976 = vmatpush1.bf16.msra.mxu0 0
        %1977 = vmatprep.subr.bf16.mxu0 0
        %1978 = vmatpush1.bf16.msra.mxu0 0
        %1979 = vmatprep.subr.bf16.mxu0 0
        %1980 = vmatpush1.bf16.msra.mxu0 0
        %1981 = vmatprep.subr.bf16.mxu0 0
        %1982 = vmatpush1.bf16.msra.mxu0 0
        %1983 = vmatprep.subr.bf16.mxu0 0
        %1984 = vmatpush1.bf16.msra.mxu0 0
        %1985 = vmatprep.subr.bf16.mxu0 0
        %1986 = vmatpush1.bf16.msra.mxu0 0
        %1987 = vmatprep.mubr.bf16.mxu0 0
        %1988 = vmatmul.mubr.bf16.gmra.mrb[0].mxu0 %v1953
        %v1989 = vpop.f32.mrb[0].mxu0
        %v1990 = vadd.f32 0.0, %v1989
        %v1991 = vpop.f32.mrb[0].mxu0
        %v1992 = vpop.f32.mrb[0].mxu0
        %v1993 = vadd.f32 0.0, %v1992
        %v1994 = vpop.f32.mrb[0].mxu0
        %1995 = vdwg.mxu0
        %v1998 = vunpack.c.l.b16 %v1940
        %v1999 = vunpack.c.l.b16 %v1941
        %v2000 = vpack.c.b16 %v1999, %v1998
        %v2003 = vsel %vm1273, %v1943, 0
        %2005 = vmatprep.subr.bf16.mxu0 0
        %2006 = vmatpush1.bf16.msra.mxu0 %v2000
        %2007 = vmatprep.subr.bf16.mxu0 0
        %2008 = vmatpush1.bf16.msra.mxu0 0
        %2009 = vmatprep.subr.bf16.mxu0 0
        %2010 = vmatpush1.bf16.msra.mxu0 0
        %2011 = vmatprep.subr.bf16.mxu0 0
        %2012 = vmatpush1.bf16.msra.mxu0 0
        %2013 = vmatprep.subr.bf16.mxu0 0
        %2014 = vmatpush1.bf16.msra.mxu0 0
        %2015 = vmatprep.subr.bf16.mxu0 0
        %2016 = vmatpush1.bf16.msra.mxu0 0
        %2017 = vmatprep.subr.bf16.mxu0 0
        %2018 = vmatpush1.bf16.msra.mxu0 0
        %2019 = vmatprep.subr.bf16.mxu0 0
        %2020 = vmatpush1.bf16.msra.mxu0 0
        %2021 = vmatprep.subr.bf16.mxu0 0
        %2022 = vmatpush1.bf16.msra.mxu0 0
        %2023 = vmatprep.subr.bf16.mxu0 0
        %2024 = vmatpush1.bf16.msra.mxu0 0
        %2025 = vmatprep.subr.bf16.mxu0 0
        %2026 = vmatpush1.bf16.msra.mxu0 0
        %2027 = vmatprep.subr.bf16.mxu0 0
        %2028 = vmatpush1.bf16.msra.mxu0 0
        %2029 = vmatprep.subr.bf16.mxu0 0
        %2030 = vmatpush1.bf16.msra.mxu0 0
        %2031 = vmatprep.subr.bf16.mxu0 0
        %2032 = vmatpush1.bf16.msra.mxu0 0
        %2033 = vmatprep.subr.bf16.mxu0 0
        %2034 = vmatpush1.bf16.msra.mxu0 0
        %2035 = vmatprep.subr.bf16.mxu0 0
        %2036 = vmatpush1.bf16.msra.mxu0 0
        %2037 = vmatprep.mubr.bf16.mxu0 0
        %2038 = vmatmul.mubr.bf16.gmra.mrb[0].mxu0 %v2003
        %v2039 = vpop.f32.mrb[0].mxu0
        %v2040 = vadd.f32 0.0, %v2039
        %v2041 = vpop.f32.mrb[0].mxu0
        %v2042 = vpop.f32.mrb[0].mxu0
        %v2043 = vadd.f32 0.0, %v2042
        %v2044 = vpop.f32.mrb[0].mxu0
        %2045 = vdwg.mxu0
        %v2047 = vsel %vm1273, %v1944, 0
        %2049 = vmatprep.subr.bf16.mxu0 0
        %2050 = vmatpush1.bf16.msra.mxu0 %v1950
        %2051 = vmatprep.subr.bf16.mxu0 0
        %2052 = vmatpush1.bf16.msra.mxu0 0
        %2053 = vmatprep.subr.bf16.mxu0 0
        %2054 = vmatpush1.bf16.msra.mxu0 0
        %2055 = vmatprep.subr.bf16.mxu0 0
        %2056 = vmatpush1.bf16.msra.mxu0 0
        %2057 = vmatprep.subr.bf16.mxu0 0
        %2058 = vmatpush1.bf16.msra.mxu0 0
        %2059 = vmatprep.subr.bf16.mxu0 0
        %2060 = vmatpush1.bf16.msra.mxu0 0
        %2061 = vmatprep.subr.bf16.mxu0 0
        %2062 = vmatpush1.bf16.msra.mxu0 0
        %2063 = vmatprep.subr.bf16.mxu0 0
        %2064 = vmatpush1.bf16.msra.mxu0 0
        %2065 = vmatprep.subr.bf16.mxu0 0
        %2066 = vmatpush1.bf16.msra.mxu0 0
        %2067 = vmatprep.subr.bf16.mxu0 0
        %2068 = vmatpush1.bf16.msra.mxu0 0
        %2069 = vmatprep.subr.bf16.mxu0 0
        %2070 = vmatpush1.bf16.msra.mxu0 0
        %2071 = vmatprep.subr.bf16.mxu0 0
        %2072 = vmatpush1.bf16.msra.mxu0 0
        %2073 = vmatprep.subr.bf16.mxu0 0
        %2074 = vmatpush1.bf16.msra.mxu0 0
        %2075 = vmatprep.subr.bf16.mxu0 0
        %2076 = vmatpush1.bf16.msra.mxu0 0
        %2077 = vmatprep.subr.bf16.mxu0 0
        %2078 = vmatpush1.bf16.msra.mxu0 0
        %2079 = vmatprep.subr.bf16.mxu0 0
        %2080 = vmatpush1.bf16.msra.mxu0 0
        %2081 = vmatprep.mubr.bf16.mxu0 0
        %2082 = vmatmul.mubr.bf16.gmra.mrb[0].mxu0 %v2047
        %v2083 = vpop.f32.mrb[0].mxu0
        %v2084 = vadd.f32 0.0, %v2083
        %v2085 = vpop.f32.mrb[0].mxu0
        %v2086 = vpop.f32.mrb[0].mxu0
        %v2087 = vadd.f32 0.0, %v2086
        %v2088 = vpop.f32.mrb[0].mxu0
        %2089 = vdwg.mxu0
        %v2091 = vsel %vm1273, %v1945, 0
        %2093 = vmatprep.subr.bf16.mxu0 0
        %2094 = vmatpush1.bf16.msra.mxu0 %v2000
        %2095 = vmatprep.subr.bf16.mxu0 0
        %2096 = vmatpush1.bf16.msra.mxu0 0
        %2097 = vmatprep.subr.bf16.mxu0 0
        %2098 = vmatpush1.bf16.msra.mxu0 0
        %2099 = vmatprep.subr.bf16.mxu0 0
        %2100 = vmatpush1.bf16.msra.mxu0 0
        %2101 = vmatprep.subr.bf16.mxu0 0
        %2102 = vmatpush1.bf16.msra.mxu0 0
        %2103 = vmatprep.subr.bf16.mxu0 0
        %2104 = vmatpush1.bf16.msra.mxu0 0
        %2105 = vmatprep.subr.bf16.mxu0 0
        %2106 = vmatpush1.bf16.msra.mxu0 0
        %2107 = vmatprep.subr.bf16.mxu0 0
        %2108 = vmatpush1.bf16.msra.mxu0 0
        %2109 = vmatprep.subr.bf16.mxu0 0
        %2110 = vmatpush1.bf16.msra.mxu0 0
        %2111 = vmatprep.subr.bf16.mxu0 0
        %2112 = vmatpush1.bf16.msra.mxu0 0
        %2113 = vmatprep.subr.bf16.mxu0 0
        %2114 = vmatpush1.bf16.msra.mxu0 0
        %2115 = vmatprep.subr.bf16.mxu0 0
        %2116 = vmatpush1.bf16.msra.mxu0 0
        %2117 = vmatprep.subr.bf16.mxu0 0
        %2118 = vmatpush1.bf16.msra.mxu0 0
        %2119 = vmatprep.subr.bf16.mxu0 0
        %2120 = vmatpush1.bf16.msra.mxu0 0
        %2121 = vmatprep.subr.bf16.mxu0 0
        %2122 = vmatpush1.bf16.msra.mxu0 0
        %2123 = vmatprep.subr.bf16.mxu0 0
        %2124 = vmatpush1.bf16.msra.mxu0 0
        %2125 = vmatprep.mubr.bf16.mxu0 0
        %2126 = vmatmul.mubr.bf16.gmra.mrb[0].mxu0 %v2091
        %v2127 = vpop.f32.mrb[0].mxu0
        %v2128 = vadd.f32 0.0, %v2127
        %v2129 = vpop.f32.mrb[0].mxu0
        %v2130 = vpop.f32.mrb[0].mxu0
        %v2131 = vadd.f32 0.0, %v2130
        %v2132 = vpop.f32.mrb[0].mxu0
        %2133 = vdwg.mxu0
        %v2134 = vsel %vm1022, %v1990, 0.0
        %v2135 = vsel %vm1022, %v2040, 0.0
        %v2136 = vadd.f32 %v2134, %v2135
        %v2137 = vsel %vm1022, %v1993, 0.0
        %v2138 = vsel %vm1022, %v2043, 0.0
        %v2139 = vadd.f32 %v2137, %v2138
        %v2140 = vsel %vm1022, %v2084, 0.0
        %v2141 = vsel %vm1022, %v2128, 0.0
        %v2142 = vadd.f32 %v2140, %v2141
        %v2143 = vsel %vm1022, %v2087, 0.0
        %v2144 = vsel %vm1022, %v2131, 0.0
        %v2145 = vadd.f32 %v2143, %v2144
        %v2146 = vld [vmem:[%s633] sm:$0x1]
        %v2147 = vmul.f32 %v2136, %v2136
        %v2148 = vmul.f32 %v2139, %v2139
        %v2149 = vmul.f32 %v2142, %v2142
        %v2150 = vmul.f32 %v2145, %v2145
        %v2151 = vsel %vm1022, %v2147, 0.0
        %2152 = vadd.xlane.f32.xlu0 %v2151
        %v2153 = vpop.xlane.xlu0 %2152
        %v2154 = vsel %vm1022, %v2148, 0.0
        %2155 = vadd.xlane.f32.xlu0 %v2154
        %v2156 = vpop.xlane.xlu0 %2155
        %v2157 = vsel %vm1022, %v2149, 0.0
        %2158 = vadd.xlane.f32.xlu0 %v2157
        %v2159 = vpop.xlane.xlu0 %2158
        %v2160 = vsel %vm1022, %v2150, 0.0
        %2161 = vadd.xlane.f32.xlu0 %v2160
        %v2162 = vpop.xlane.xlu0 %2161
        %v2163 = vmax.f32 %v2153, 1e-24
        %v2164 = vmax.f32 %v2156, 1e-24
        %v2165 = vmax.f32 %v2159, 1e-24
        %v2166 = vmax.f32 %v2162, 1e-24
        %v2167 = vrsqrt.pop %v2163
        %v2168 = vrsqrt.pop %v2164
        %v2169 = vrsqrt.pop %v2165
        %v2170 = vrsqrt.pop %v2166
        %v2171 = vmul.f32 %v2136, %v2167
        %v2172 = vmul.f32 %v2139, %v2168
        %v2173 = vmul.f32 %v2142, %v2169
        %v2174 = vmul.f32 %v2145, %v2170
        %v2175 = vsub.f32 %v2171, %v976
        %v2176 = vsub.f32 %v2172, %v977
        %v2177 = vsub.f32 %v2173, %v978
        %v2178 = vsub.f32 %v2174, %v979
        %v2180 = vlaneseq
        %v2181 = vshrl.u32 %v2180, 7
        %v2182 = vsub.s32 0, %v2181
        %v2183 = vrot.slane %v2146, %v2182
        %v2185 = vmul.f32 %v2175, %v2183
        %v2186 = vmul.f32 %v2176, %v2183
        %v2187 = vmul.f32 %v2177, %v2183
        %v2188 = vmul.f32 %v2178, %v2183
        %v2189 = vadd.f32 %v976, %v2185
        %v2190 = vadd.f32 %v977, %v2186
        %v2191 = vadd.f32 %v978, %v2187
        %v2192 = vadd.f32 %v979, %v2188
        %v2193 = vmul.f32 %v2189, %v2189
        %v2194 = vmul.f32 %v2190, %v2190
        %v2195 = vmul.f32 %v2191, %v2191
        %v2196 = vmul.f32 %v2192, %v2192
        %v2197 = vsel %vm1022, %v2193, 0.0
        %2198 = vadd.xlane.f32.xlu0 %v2197
        %v2199 = vpop.xlane.xlu0 %2198
        %v2200 = vsel %vm1022, %v2194, 0.0
        %2201 = vadd.xlane.f32.xlu0 %v2200
        %v2202 = vpop.xlane.xlu0 %2201
        %v2203 = vsel %vm1022, %v2195, 0.0
        %2204 = vadd.xlane.f32.xlu0 %v2203
        %v2205 = vpop.xlane.xlu0 %2204
        %v2206 = vsel %vm1022, %v2196, 0.0
        %2207 = vadd.xlane.f32.xlu0 %v2206
        %v2208 = vpop.xlane.xlu0 %2207
        %v2209 = vmax.f32 %v2199, 1e-24
        %v2210 = vmax.f32 %v2202, 1e-24
        %v2211 = vmax.f32 %v2205, 1e-24
        %v2212 = vmax.f32 %v2208, 1e-24
        %v2213 = vrsqrt.pop %v2209
        %v2214 = vrsqrt.pop %v2210
        %v2215 = vrsqrt.pop %v2211
        %v2216 = vrsqrt.pop %v2212
        %v2217 = vmul.f32 %v2189, %v2213
        %v2218 = vmul.f32 %v2190, %v2214
        %v2219 = vmul.f32 %v2191, %v2215
        %v2220 = vmul.f32 %v2192, %v2216
        %v2221 = vpack.c.bf16 %v2218, %v2217
        %v2222 = vpack.c.bf16 %v2220, %v2219
        %v2223 = vld [vmem:[%s642] sm:$0xf]
        %v2224 = vld [vmem:[%s642 + $0x4] sm:$0xf]
        %v2225 = vld [vmem:[%s642 + $0x8] sm:$0xf]
        %v2226 = vld [vmem:[%s642 + $0xc] sm:$0xf]
        %v2227 = vld [vmem:[%s642 + $0x10] sm:$0xf]
        %v2228 = vld [vmem:[%s642 + $0x14] sm:$0xf]
        %v2229 = vld [vmem:[%s642 + $0x18] sm:$0xf]
        %v2230 = vld [vmem:[%s642 + $0x1c] sm:$0xf]
        %v2239 = vunpack.c.l.b16 %v2223
        %v2240 = vunpack.c.l.b16 %v2224
        %v2241 = vunpack.c.l.b16 %v2225
        %v2242 = vunpack.c.l.b16 %v2226
        %v2243 = vunpack.c.l.b16 %v2227
        %v2244 = vunpack.c.l.b16 %v2228
        %v2245 = vunpack.c.l.b16 %v2229
        %v2246 = vunpack.c.l.b16 %v2230
        %v2247 = vpack.c.b16 %v2240, %v2239
        %v2248 = vpack.c.b16 %v2242, %v2241
        %v2249 = vpack.c.b16 %v2244, %v2243
        %v2250 = vpack.c.b16 %v2246, %v2245
        %v2256 = vsel %vm1022, %v2221, 0
        %v2259 = vsel %vm1022, %v2222, 0
        %2261 = vmatprep.subr.bf16.mxu0 0
        %2262 = vmatpush1.bf16.msra.mxu0 %v2247
        %2263 = vmatprep.subr.bf16.mxu0 0
        %2264 = vmatpush1.bf16.msra.mxu0 %v2248
        %2265 = vmatprep.subr.bf16.mxu0 0
        %2266 = vmatpush1.bf16.msra.mxu0 %v2249
        %2267 = vmatprep.subr.bf16.mxu0 0
        %2268 = vmatpush1.bf16.msra.mxu0 %v2250
        %2269 = vmatprep.subr.bf16.mxu0 0
        %2270 = vmatpush1.bf16.msra.mxu0 0
        %2271 = vmatprep.subr.bf16.mxu0 0
        %2272 = vmatpush1.bf16.msra.mxu0 0
        %2273 = vmatprep.subr.bf16.mxu0 0
        %2274 = vmatpush1.bf16.msra.mxu0 0
        %2275 = vmatprep.subr.bf16.mxu0 0
        %2276 = vmatpush1.bf16.msra.mxu0 0
        %2277 = vmatprep.subr.bf16.mxu0 0
        %2278 = vmatpush1.bf16.msra.mxu0 0
        %2279 = vmatprep.subr.bf16.mxu0 0
        %2280 = vmatpush1.bf16.msra.mxu0 0
        %2281 = vmatprep.subr.bf16.mxu0 0
        %2282 = vmatpush1.bf16.msra.mxu0 0
        %2283 = vmatprep.subr.bf16.mxu0 0
        %2284 = vmatpush1.bf16.msra.mxu0 0
        %2285 = vmatprep.subr.bf16.mxu0 0
        %2286 = vmatpush1.bf16.msra.mxu0 0
        %2287 = vmatprep.subr.bf16.mxu0 0
        %2288 = vmatpush1.bf16.msra.mxu0 0
        %2289 = vmatprep.subr.bf16.mxu0 0
        %2290 = vmatpush1.bf16.msra.mxu0 0
        %2291 = vmatprep.subr.bf16.mxu0 0
        %2292 = vmatpush1.bf16.msra.mxu0 0
        %2293 = vmatprep.mubr.bf16.mxu0 0
        %2294 = vmatmul.mubr.bf16.gmra.mrb[0].mxu0 %v2256
        %v2295 = vpop.f32.mrb[0].mxu0
        %v2296 = vadd.f32 0.0, %v2295
        %v2297 = vpop.f32.mrb[0].mxu0
        %v2298 = vpop.f32.mrb[0].mxu0
        %v2299 = vadd.f32 0.0, %v2298
        %v2300 = vpop.f32.mrb[0].mxu0
        %2301 = vmatprep.mubr.bf16.mxu0 0
        %2302 = vmatmul.mubr.bf16.gmra.mrb[0].mxu0 %v2259
        %v2303 = vpop.f32.mrb[0].mxu0
        %v2304 = vadd.f32 0.0, %v2303
        %v2305 = vpop.f32.mrb[0].mxu0
        %v2306 = vpop.f32.mrb[0].mxu0
        %v2307 = vadd.f32 0.0, %v2306
        %v2308 = vpop.f32.mrb[0].mxu0
        %2309 = vdwg.mxu0
        %v2310 = vld [vmem:[%s650] sm:$0x1]
        %v2312 = vlaneseq
        %v2313 = vshrl.u32 %v2312, 7
        %v2314 = vsub.s32 0, %v2313
        %v2315 = vrot.slane %v2310, %v2314
        %v2317 = vmul.f32 %v2296, %v2315
        %v2318 = vmul.f32 %v2299, %v2315
        %v2319 = vmul.f32 %v2304, %v2315
        %v2320 = vmul.f32 %v2307, %v2315
        %v2321 = vld [vmem:[%s658] sm:$0x1]
        %v2323 = vlaneseq
        %v2324 = vshrl.u32 %v2323, 7
        %v2325 = vsub.s32 0, %v2324
        %v2326 = vrot.slane %v2321, %v2325
        %2327 = vrot.lane.b32.xlu0 %v2326, 64
        %v2328 = vpop.permute.xlu0 %2327
        %v2330 = vmul.f32 %v2296, %v2328
        %v2331 = vmul.f32 %v2299, %v2328
        %v2332 = vmul.f32 %v2304, %v2328
        %v2333 = vmul.f32 %v2307, %v2328
        %v2334 = vxor.u32 %v2330, 2147483648
        %v2335 = vxor.u32 %v2331, 2147483648
        %v2336 = vxor.u32 %v2332, 2147483648
        %v2337 = vxor.u32 %v2333, 2147483648
        %v2338 = vmul.f32 %v2334, 1.442695
        %v2339 = vpow.pop %v2338
        %v2340 = vmul.f32 %v2335, 1.442695
        %v2341 = vpow.pop %v2340
        %v2342 = vmul.f32 %v2336, 1.442695
        %v2343 = vpow.pop %v2342
        %v2344 = vmul.f32 %v2337, 1.442695
        %v2345 = vpow.pop %v2344
        %v2346 = vadd.f32 %v2339, 1.0
        %v2347 = vadd.f32 %v2341, 1.0
        %v2348 = vadd.f32 %v2343, 1.0
        %v2349 = vadd.f32 %v2345, 1.0
        %v2350 = vrcp.pop %v2346
        %v2351 = vmul.f32 1.0, %v2350
        %v2352 = vrcp.pop %v2347
        %v2353 = vmul.f32 1.0, %v2352
        %v2354 = vrcp.pop %v2348
        %v2355 = vmul.f32 1.0, %v2354
        %v2356 = vrcp.pop %v2349
        %v2357 = vmul.f32 1.0, %v2356
        %v2358 = vmul.f32 %v2330, %v2351
        %v2359 = vmul.f32 %v2331, %v2353
        %v2360 = vmul.f32 %v2332, %v2355
        %v2361 = vmul.f32 %v2333, %v2357
        %2366 = vrot.lane.b32.xlu0 %v2317, 64
        %v2367 = vpop.permute.xlu0 %2366
        %2368 = vrot.lane.b32.xlu0 %v2318, 64
        %v2369 = vpop.permute.xlu0 %2368
        %2370 = vrot.lane.b32.xlu0 %v2319, 64
        %v2371 = vpop.permute.xlu0 %2370
        %2372 = vrot.lane.b32.xlu0 %v2320, 64
        %v2373 = vpop.permute.xlu0 %2372
        %v2378 = vmul.f32 %v2358, %v2367
        %v2379 = vmul.f32 %v2359, %v2369
        %v2380 = vmul.f32 %v2360, %v2371
        %v2381 = vmul.f32 %v2361, %v2373
        %v2382 = vpack.c.bf16 %v2379, %v2378
        %v2383 = vpack.c.bf16 %v2381, %v2380
        %v2384 = vld [vmem:[%s667] sm:$0xf]
        %v2385 = vld [vmem:[%s667 + $0x4] sm:$0xf]
        %v2386 = vld [vmem:[%s667 + $0x8] sm:$0xf]
        %v2387 = vld [vmem:[%s667 + $0xc] sm:$0xf]
        %v2388 = vld [vmem:[%s667 + $0x10] sm:$0xf]
        %v2389 = vld [vmem:[%s667 + $0x14] sm:$0xf]
        %v2390 = vld [vmem:[%s667 + $0x18] sm:$0xf]
        %v2391 = vld [vmem:[%s667 + $0x1c] sm:$0xf]
        %2394 = vrot.lane.b32.xlu0 %v2382, 64
        %v2395 = vpop.permute.xlu0 %2394
        %2396 = vrot.lane.b32.xlu0 %v2383, 64
        %v2397 = vpop.permute.xlu0 %2396
        %v2406 = vunpack.c.l.b16 %v2384
        %v2407 = vunpack.c.l.b16 %v2385
        %v2408 = vunpack.c.l.b16 %v2386
        %v2409 = vunpack.c.l.b16 %v2387
        %v2410 = vunpack.c.l.b16 %v2388
        %v2411 = vunpack.c.l.b16 %v2389
        %v2412 = vunpack.c.l.b16 %v2390
        %v2413 = vunpack.c.l.b16 %v2391
        %v2414 = vpack.c.b16 %v2407, %v2406
        %v2415 = vpack.c.b16 %v2409, %v2408
        %v2416 = vpack.c.b16 %v2411, %v2410
        %v2417 = vpack.c.b16 %v2413, %v2412
        %v2423 = vsel %vm1022, %v2395, 0
        %v2426 = vsel %vm1022, %v2397, 0
        %2428 = vmatprep.subr.bf16.mxu0 0
        %2429 = vmatpush1.bf16.msra.mxu0 %v2414
        %2430 = vmatprep.subr.bf16.mxu0 0
        %2431 = vmatpush1.bf16.msra.mxu0 %v2415
        %2432 = vmatprep.subr.bf16.mxu0 0
        %2433 = vmatpush1.bf16.msra.mxu0 %v2416
        %2434 = vmatprep.subr.bf16.mxu0 0
        %2435 = vmatpush1.bf16.msra.mxu0 %v2417
        %2436 = vmatprep.subr.bf16.mxu0 0
        %2437 = vmatpush1.bf16.msra.mxu0 0
        %2438 = vmatprep.subr.bf16.mxu0 0
        %2439 = vmatpush1.bf16.msra.mxu0 0
        %2440 = vmatprep.subr.bf16.mxu0 0
        %2441 = vmatpush1.bf16.msra.mxu0 0
        %2442 = vmatprep.subr.bf16.mxu0 0
        %2443 = vmatpush1.bf16.msra.mxu0 0
        %2444 = vmatprep.subr.bf16.mxu0 0
        %2445 = vmatpush1.bf16.msra.mxu0 0
        %2446 = vmatprep.subr.bf16.mxu0 0
        %2447 = vmatpush1.bf16.msra.mxu0 0
        %2448 = vmatprep.subr.bf16.mxu0 0
        %2449 = vmatpush1.bf16.msra.mxu0 0
        %2450 = vmatprep.subr.bf16.mxu0 0
        %2451 = vmatpush1.bf16.msra.mxu0 0
        %2452 = vmatprep.subr.bf16.mxu0 0
        %2453 = vmatpush1.bf16.msra.mxu0 0
        %2454 = vmatprep.subr.bf16.mxu0 0
        %2455 = vmatpush1.bf16.msra.mxu0 0
        %2456 = vmatprep.subr.bf16.mxu0 0
        %2457 = vmatpush1.bf16.msra.mxu0 0
        %2458 = vmatprep.subr.bf16.mxu0 0
        %2459 = vmatpush1.bf16.msra.mxu0 0
        %2460 = vmatprep.mubr.bf16.mxu0 0
        %2461 = vmatmul.mubr.bf16.gmra.mrb[0].mxu0 %v2423
        %v2462 = vpop.f32.mrb[0].mxu0
        %v2463 = vadd.f32 0.0, %v2462
        %v2464 = vpop.f32.mrb[0].mxu0
        %v2465 = vpop.f32.mrb[0].mxu0
        %v2466 = vadd.f32 0.0, %v2465
        %v2467 = vpop.f32.mrb[0].mxu0
        %2468 = vmatprep.mubr.bf16.mxu0 0
        %2469 = vmatmul.mubr.bf16.gmra.mrb[0].mxu0 %v2426
        %v2470 = vpop.f32.mrb[0].mxu0
        %v2471 = vadd.f32 0.0, %v2470
        %v2472 = vpop.f32.mrb[0].mxu0
        %v2473 = vpop.f32.mrb[0].mxu0
        %v2474 = vadd.f32 0.0, %v2473
        %v2475 = vpop.f32.mrb[0].mxu0
        %2476 = vdwg.mxu0
        %v2477 = vld [vmem:[%s675] sm:$0x1]
        %v2478 = vmul.f32 %v2463, %v2463
        %v2479 = vmul.f32 %v2466, %v2466
        %v2480 = vmul.f32 %v2471, %v2471
        %v2481 = vmul.f32 %v2474, %v2474
        %v2482 = vsel %vm1022, %v2478, 0.0
        %2483 = vadd.xlane.f32.xlu0 %v2482
        %v2484 = vpop.xlane.xlu0 %2483
        %v2485 = vsel %vm1022, %v2479, 0.0
        %2486 = vadd.xlane.f32.xlu0 %v2485
        %v2487 = vpop.xlane.xlu0 %2486
        %v2488 = vsel %vm1022, %v2480, 0.0
        %2489 = vadd.xlane.f32.xlu0 %v2488
        %v2490 = vpop.xlane.xlu0 %2489
        %v2491 = vsel %vm1022, %v2481, 0.0
        %2492 = vadd.xlane.f32.xlu0 %v2491
        %v2493 = vpop.xlane.xlu0 %2492
        %v2494 = vmax.f32 %v2484, 1e-24
        %v2495 = vmax.f32 %v2487, 1e-24
        %v2496 = vmax.f32 %v2490, 1e-24
        %v2497 = vmax.f32 %v2493, 1e-24
        %v2498 = vrsqrt.pop %v2494
        %v2499 = vrsqrt.pop %v2495
        %v2500 = vrsqrt.pop %v2496
        %v2501 = vrsqrt.pop %v2497
        %v2502 = vmul.f32 %v2463, %v2498
        %v2503 = vmul.f32 %v2466, %v2499
        %v2504 = vmul.f32 %v2471, %v2500
        %v2505 = vmul.f32 %v2474, %v2501
        %v2506 = vsub.f32 %v2502, %v2217
        %v2507 = vsub.f32 %v2503, %v2218
        %v2508 = vsub.f32 %v2504, %v2219
        %v2509 = vsub.f32 %v2505, %v2220
        %v2511 = vlaneseq
        %v2512 = vshrl.u32 %v2511, 7
        %v2513 = vsub.s32 0, %v2512
        %v2514 = vrot.slane %v2477, %v2513
        %v2516 = vmul.f32 %v2506, %v2514
        %v2517 = vmul.f32 %v2507, %v2514
        %v2518 = vmul.f32 %v2508, %v2514
        %v2519 = vmul.f32 %v2509, %v2514
        %v2520 = vadd.f32 %v2217, %v2516
        %v2521 = vadd.f32 %v2218, %v2517
        %v2522 = vadd.f32 %v2219, %v2518
        %v2523 = vadd.f32 %v2220, %v2519
        %v2524 = vmul.f32 %v2520, %v2520
        %v2525 = vmul.f32 %v2521, %v2521
        %v2526 = vmul.f32 %v2522, %v2522
        %v2527 = vmul.f32 %v2523, %v2523
        %v2528 = vsel %vm1022, %v2524, 0.0
        %2529 = vadd.xlane.f32.xlu0 %v2528
        %v2530 = vpop.xlane.xlu0 %2529
        %v2531 = vsel %vm1022, %v2525, 0.0
        %2532 = vadd.xlane.f32.xlu0 %v2531
        %v2533 = vpop.xlane.xlu0 %2532
        %v2534 = vsel %vm1022, %v2526, 0.0
        %2535 = vadd.xlane.f32.xlu0 %v2534
        %v2536 = vpop.xlane.xlu0 %2535
        %v2537 = vsel %vm1022, %v2527, 0.0
        %2538 = vadd.xlane.f32.xlu0 %v2537
        %v2539 = vpop.xlane.xlu0 %2538
        %v2540 = vmax.f32 %v2530, 1e-24
        %v2541 = vmax.f32 %v2533, 1e-24
        %v2542 = vmax.f32 %v2536, 1e-24
        %v2543 = vmax.f32 %v2539, 1e-24
        %v2544 = vrsqrt.pop %v2540
        %v2545 = vrsqrt.pop %v2541
        %v2546 = vrsqrt.pop %v2542
        %v2547 = vrsqrt.pop %v2543
        %v2548 = vmul.f32 %v2520, %v2544
        %v2549 = vmul.f32 %v2521, %v2545
        %v2550 = vmul.f32 %v2522, %v2546
        %v2551 = vmul.f32 %v2523, %v2547
        %2552 = vst.msk [vmem:[%s13] sm:$0xff] %vm1022, %v2548
        %2553 = vst.msk [vmem:[%s13 + $0x8] sm:$0xff] %vm1022, %v2549
        %2554 = vst.msk [vmem:[%s13 + $0x10] sm:$0xff] %vm1022, %v2550
        %2555 = vst.msk [vmem:[%s13 + $0x18] sm:$0xff] %vm1022, %v2551
        // Predicated region
        $region117: #{segmentation_vit_forward.2} parent=71 // pred_check
          %p2556 = pneg %p376
        $region118: #{segmentation_vit_forward.2} parent=71 // pred_check_branch
          %2558 = sbr.rel (%p2556) target = $region120
        $region119: #{segmentation_vit_forward.2} parent=71 // pred_region
          _
        $region120: #{segmentation_vit_forward.2} parent=71 // pred_fallthru
          _
        // Predicated region
        $region121: #{segmentation_vit_forward.2} parent=71 // pred_check
          %p2559 = pneg %p376
        $region122: #{segmentation_vit_forward.2} parent=71 // pred_check_branch
          %2561 = sbr.rel (%p2559) target = $region124
        $region123: #{segmentation_vit_forward.2} parent=71 // pred_region
          _
        $region124: #{segmentation_vit_forward.2} parent=71 // pred_fallthru
          _
      $region72: #{segmentation_vit_forward.2} parent=5 // pred_fallthru
        _
      %p2562 = scmp.le.s32.totalorder 2, %s35
      // Predicated region
      $region125: #{segmentation_vit_forward.2} parent=5 // pred_check
        %p2563 = pneg %p2562
      $region126: #{segmentation_vit_forward.2} parent=5 // pred_check_branch
        %2565 = sbr.rel (%p2563) target = $region128
      $region127: #{segmentation_vit_forward.2} parent=5 // pred_region
        %s2566 = ssub.s32 %s35, 2
      $region128: #{segmentation_vit_forward.2} parent=5 // pred_fallthru
        _
    $region6: #{segmentation_vit_forward.2} parent=1 // loop_footer
      %s39 = sadd.s32 1, %s35
    $region7: #{segmentation_vit_forward.2} parent=1 // loop_footer_branch
      %34 = sbr.rel target = $region3
    $region8: #{segmentation_vit_forward.2} parent=1 // loop_exit
      _
    %2567 = vsyncpa [#allocation3], 1
    %s2568 = scalar_lea.sflag [#allocation3], 1
    %2569 = vsyncpa %s2568, 1
    %2570 = vsyncpa [#allocation5], 1
    %s2571 = scalar_lea.sflag [#allocation5], 1
    %2572 = vsyncpa %s2571, 1
    %2573 = vsyncpa [#allocation8], 1
    %s2574 = scalar_lea.sflag [#allocation8], 1
    %2575 = vsyncpa %s2574, 1
    %2576 = vsyncpa [#allocation11], 1
    %s2577 = scalar_lea.sflag [#allocation11], 1
    %2578 = vsyncpa %s2577, 1
    %2579 = vsyncpa [#allocation14], 1
    %s2580 = scalar_lea.sflag [#allocation14], 1
    %2581 = vsyncpa %s2580, 1
    %2582 = vsyncpa [#allocation17], 1
    %s2583 = scalar_lea.sflag [#allocation17], 1
    %2584 = vsyncpa %s2583, 1

// kernel: segmentation_vit_forward.3
$region0: #{segmentation_vit_forward.3}
  #allocation0 [shape = 'u32[]', space=smem, size = 0x4, offset = 0x4, fixed_abs, tag = 'smem constant byte address 0x4 - core index']
  #allocation1 [shape = 'u32[144,128]{1,0:T(1,128)}', space=vmem, size = 0x12000, scoped, tag = 'internal scratch']
  %s0 = inlined_call_operand.vmem [shape: f32[2,16,64], index: 0, kind: input, shape index: {}]
  %s1 = inlined_call_operand.hbm [shape: bf16[64,128], index: 1, kind: input, shape index: {}]
  %s2 = inlined_call_operand.hbm [shape: f32[1,128], index: 2, kind: input, shape index: {}]
  %s3 = inlined_call_operand.hbm [shape: f32[1,128], index: 3, kind: input, shape index: {}]
  %s4 = inlined_call_operand.hbm [shape: bf16[128,256], index: 4, kind: input, shape index: {}]
  %s5 = inlined_call_operand.hbm [shape: f32[1,256], index: 5, kind: input, shape index: {}]
  %s6 = inlined_call_operand.hbm [shape: f32[1,256], index: 6, kind: input, shape index: {}]
  %s7 = inlined_call_operand.hbm [shape: bf16[256,512], index: 7, kind: input, shape index: {}]
  %s8 = inlined_call_operand.hbm [shape: f32[1,512], index: 8, kind: input, shape index: {}]
  %s9 = inlined_call_operand.hbm [shape: f32[1,512], index: 9, kind: input, shape index: {}]
  %s10 = inlined_call_operand.hbm [shape: bf16[512,1280], index: 10, kind: input, shape index: {}]
  %s11 = inlined_call_operand.hbm [shape: f32[1,1280], index: 11, kind: input, shape index: {}]
  %s12 = inlined_call_operand.hbm [shape: f32[1,1280], index: 12, kind: input, shape index: {}]
  %s13 = inlined_call_operand.vmem [shape: f32[2,16,1280], index: 13, kind: output, shape index: {}]
  %s14 = sld [smem:[#allocation0]]
  $region133: #{segmentation_vit_forward.3} parent=0
    _
  %s16 = ssub.s32 1, %s14
  %s17 = scalar_select 0, %s16, %s14
  $region1: #{segmentation_vit_forward.3} parent=0
    #allocation2 [shape = 'u8[16384]{0}', space=vmem, size = 0x4000, scoped, tag = 'input window, operand 1, single buffered']
    #allocation3 [shape = 's32[2]{0}', space=sflag, size = 0x8, scoped, tag = 'scoped memory for segmentation_vit_forward.3']
    #allocation4 [shape = 'u8[512]{0}', space=vmem, size = 0x400, scoped, tag = 'input window, operand 2, single buffered']
    #allocation5 [shape = 's32[1]{0}', space=sflag, size = 0x4, scoped, tag = 'scoped memory for segmentation_vit_forward.3']
    #allocation6 [shape = 'u8[512]{0}', space=vmem, size = 0x400, scoped, tag = 'input window, operand 3, single buffered']
    #allocation7 [shape = 'u8[65536]{0}', space=vmem, size = 0x10000, scoped, tag = 'input window, operand 4, single buffered']
    #allocation8 [shape = 's32[1]{0}', space=sflag, size = 0x4, scoped, tag = 'scoped memory for segmentation_vit_forward.3']
    #allocation9 [shape = 'u8[1024]{0}', space=vmem, size = 0x400, scoped, tag = 'input window, operand 5, single buffered']
    #allocation10 [shape = 'u8[1024]{0}', space=vmem, size = 0x400, scoped, tag = 'input window, operand 6, single buffered']
    #allocation11 [shape = 's32[1]{0}', space=sflag, size = 0x4, scoped, tag = 'scoped memory for segmentation_vit_forward.3']
    #allocation12 [shape = 'u8[262144]{0}', space=vmem, size = 0x40000, scoped, tag = 'input window, operand 7, single buffered']
    #allocation13 [shape = 'u8[2048]{0}', space=vmem, size = 0x800, scoped, tag = 'input window, operand 8, single buffered']
    #allocation14 [shape = 's32[1]{0}', space=sflag, size = 0x4, scoped, tag = 'scoped memory for segmentation_vit_forward.3']
    #allocation15 [shape = 'u8[2048]{0}', space=vmem, size = 0x800, scoped, tag = 'input window, operand 9, single buffered']
    #allocation16 [shape = 'u8[1310720]{0}', space=vmem, size = 0x140000, scoped, tag = 'input window, operand 10, single buffered']
    #allocation17 [shape = 's32[1]{0}', space=sflag, size = 0x4, scoped, tag = 'scoped memory for segmentation_vit_forward.3']
    #allocation18 [shape = 'u8[5120]{0}', space=vmem, size = 0x1400, scoped, tag = 'input window, operand 11, single buffered']
    #allocation19 [shape = 'u8[5120]{0}', space=vmem, size = 0x1400, scoped, tag = 'input window, operand 12, single buffered']
    #allocation20 [shape = 's32[1]{0}', space=sflag, size = 0x4, scoped, tag = 'scoped memory for segmentation_vit_forward.3']
    %18 = vsyncpa [#allocation3], 0
    %19 = vsyncpa [#allocation5], 0
    %20 = vsyncpa [#allocation8], 0
    %21 = vsyncpa [#allocation11], 0
    %22 = vsyncpa [#allocation14], 0
    %23 = vsyncpa [#allocation17], 0
    %24 = vsyncpa [#allocation20], 0
    loop: start=0, step=1, limit=4
    $region2: #{segmentation_vit_forward.3} parent=1 // loop_pre_header
      _
    $region3: #{segmentation_vit_forward.3} parent=1 // loop_header
      %s26 = sphi 0, %s30
      %p27 = scmp.ge.s32.totalorder %s26, 4
      %s36 = sphi 0, %s38
      %s39 = sphi 0, %s36
      %s40 = sphi 0, %s39
      %s56 = sphi 0, %s40
      %s60 = sphi 0, %s60
      %s62 = sphi 0, %s60
      %s63 = sphi 0, %s62
      %s77 = sphi 0, %s63
      %s81 = sphi 0, %s81
      %s83 = sphi 0, %s81
      %s84 = sphi 0, %s83
      %s98 = sphi 0, %s84
      %s102 = sphi 0, %s102
      %s104 = sphi 0, %s102
      %s105 = sphi 0, %s104
      %s119 = sphi 0, %s105
      %s123 = sphi 0, %s123
      %s125 = sphi 0, %s123
      %s126 = sphi 0, %s125
      %s140 = sphi 0, %s126
      %s144 = sphi 0, %s144
      %s146 = sphi 0, %s144
      %s147 = sphi 0, %s146
      %s161 = sphi 0, %s147
      %s165 = sphi 0, %s165
      %s167 = sphi 0, %s165
      %s168 = sphi 0, %s167
      %s182 = sphi 0, %s168
      %s186 = sphi 0, %s186
      %s188 = sphi 0, %s186
      %s189 = sphi 0, %s188
      %s203 = sphi 0, %s189
      %s207 = sphi 0, %s207
      %s209 = sphi 0, %s207
      %s210 = sphi 0, %s209
      %s224 = sphi 0, %s210
      %s228 = sphi 0, %s228
      %s230 = sphi 0, %s228
      %s231 = sphi 0, %s230
      %s245 = sphi 0, %s231
      %s249 = sphi 0, %s249
      %s251 = sphi 0, %s249
      %s252 = sphi 0, %s251
      %s266 = sphi 0, %s252
      %s270 = sphi 0, %s270
      %s272 = sphi 0, %s270
      %s273 = sphi 0, %s272
      %s287 = sphi 0, %s273
      %s291 = sphi 0, %s291
      %s293 = sphi 0, %s291
      %s294 = sphi 0, %s293
      %s308 = sphi 0, %s294
      %s314 = sphi 0, %s316
      %s317 = sphi 0, %s314
      %s318 = sphi 0, %s317
      %s334 = sphi 0, %s318
    $region4: #{segmentation_vit_forward.3} parent=1 // loop_header_branch
      %29 = sbr.rel (%p27) target = $region8
    $region5: #{segmentation_vit_forward.3} parent=1 // loop_body
      %s31 = ssub.s32 %s26, 1
      %s32 = ssub.s32 %s26, 2
      %s33 = sadd.s32 %s26, 1
      %s34 = ssub.s32 %s26, %s33
      %p35 = scmp.eq.s32.totalorder %s34, 0
      %s37 = sadd.s32 %s36, 1
      %s38 = scalar_select %p35, %s36, %s37
      %p41 = pneg %p35
      %p42 = scmp.eq.s32.totalorder %s26, 1
      %p43 = por %p41, %p42
      %p44 = scmp.ne.s32.totalorder %s36, %s39
      %p45 = scmp.eq.s32.totalorder %s26, 0
      %p46 = por %p44, %p45
      %p47 = scmp.ne.s32.totalorder %s36, %s39
      %p48 = scmp.eq.s32.totalorder %s31, 1
      %p49 = por %p47, %p48
      %p50 = scmp.ne.s32.totalorder %s39, %s40
      %p51 = scmp.eq.s32.totalorder %s31, 0
      %p52 = por %p50, %p51
      %p53 = scmp.ne.s32.totalorder %s39, %s40
      %p54 = scmp.eq.s32.totalorder %s32, 1
      %p55 = por %p53, %p54
      %p57 = scmp.ne.s32.totalorder %s40, %s56
      %p58 = scmp.eq.s32.totalorder %s32, 0
      %p59 = por %p57, %p58
      %s61 = sadd.s32 %s60, 1
      %p64 = scmp.eq.s32.totalorder %s26, 1
      %p65 = scmp.ne.s32.totalorder %s60, %s62
      %p66 = scmp.eq.s32.totalorder %s26, 0
      %p67 = por %p65, %p66
      %p68 = scmp.ne.s32.totalorder %s60, %s62
      %p69 = scmp.eq.s32.totalorder %s31, 1
      %p70 = por %p68, %p69
      %p71 = scmp.ne.s32.totalorder %s62, %s63
      %p72 = scmp.eq.s32.totalorder %s31, 0
      %p73 = por %p71, %p72
      %p74 = scmp.ne.s32.totalorder %s62, %s63
      %p75 = scmp.eq.s32.totalorder %s32, 1
      %p76 = por %p74, %p75
      %p78 = scmp.ne.s32.totalorder %s63, %s77
      %p79 = scmp.eq.s32.totalorder %s32, 0
      %p80 = por %p78, %p79
      %s82 = sadd.s32 %s81, 1
      %p85 = scmp.eq.s32.totalorder %s26, 1
      %p86 = scmp.ne.s32.totalorder %s81, %s83
      %p87 = scmp.eq.s32.totalorder %s26, 0
      %p88 = por %p86, %p87
      %p89 = scmp.ne.s32.totalorder %s81, %s83
      %p90 = scmp.eq.s32.totalorder %s31, 1
      %p91 = por %p89, %p90
      %p92 = scmp.ne.s32.totalorder %s83, %s84
      %p93 = scmp.eq.s32.totalorder %s31, 0
      %p94 = por %p92, %p93
      %p95 = scmp.ne.s32.totalorder %s83, %s84
      %p96 = scmp.eq.s32.totalorder %s32, 1
      %p97 = por %p95, %p96
      %p99 = scmp.ne.s32.totalorder %s84, %s98
      %p100 = scmp.eq.s32.totalorder %s32, 0
      %p101 = por %p99, %p100
      %s103 = sadd.s32 %s102, 1
      %p106 = scmp.eq.s32.totalorder %s26, 1
      %p107 = scmp.ne.s32.totalorder %s102, %s104
      %p108 = scmp.eq.s32.totalorder %s26, 0
      %p109 = por %p107, %p108
      %p110 = scmp.ne.s32.totalorder %s102, %s104
      %p111 = scmp.eq.s32.totalorder %s31, 1
      %p112 = por %p110, %p111
      %p113 = scmp.ne.s32.totalorder %s104, %s105
      %p114 = scmp.eq.s32.totalorder %s31, 0
      %p115 = por %p113, %p114
      %p116 = scmp.ne.s32.totalorder %s104, %s105
      %p117 = scmp.eq.s32.totalorder %s32, 1
      %p118 = por %p116, %p117
      %p120 = scmp.ne.s32.totalorder %s105, %s119
      %p121 = scmp.eq.s32.totalorder %s32, 0
      %p122 = por %p120, %p121
      %s124 = sadd.s32 %s123, 1
      %p127 = scmp.eq.s32.totalorder %s26, 1
      %p128 = scmp.ne.s32.totalorder %s123, %s125
      %p129 = scmp.eq.s32.totalorder %s26, 0
      %p130 = por %p128, %p129
      %p131 = scmp.ne.s32.totalorder %s123, %s125
      %p132 = scmp.eq.s32.totalorder %s31, 1
      %p133 = por %p131, %p132
      %p134 = scmp.ne.s32.totalorder %s125, %s126
      %p135 = scmp.eq.s32.totalorder %s31, 0
      %p136 = por %p134, %p135
      %p137 = scmp.ne.s32.totalorder %s125, %s126
      %p138 = scmp.eq.s32.totalorder %s32, 1
      %p139 = por %p137, %p138
      %p141 = scmp.ne.s32.totalorder %s126, %s140
      %p142 = scmp.eq.s32.totalorder %s32, 0
      %p143 = por %p141, %p142
      %s145 = sadd.s32 %s144, 1
      %p148 = scmp.eq.s32.totalorder %s26, 1
      %p149 = scmp.ne.s32.totalorder %s144, %s146
      %p150 = scmp.eq.s32.totalorder %s26, 0
      %p151 = por %p149, %p150
      %p152 = scmp.ne.s32.totalorder %s144, %s146
      %p153 = scmp.eq.s32.totalorder %s31, 1
      %p154 = por %p152, %p153
      %p155 = scmp.ne.s32.totalorder %s146, %s147
      %p156 = scmp.eq.s32.totalorder %s31, 0
      %p157 = por %p155, %p156
      %p158 = scmp.ne.s32.totalorder %s146, %s147
      %p159 = scmp.eq.s32.totalorder %s32, 1
      %p160 = por %p158, %p159
      %p162 = scmp.ne.s32.totalorder %s147, %s161
      %p163 = scmp.eq.s32.totalorder %s32, 0
      %p164 = por %p162, %p163
      %s166 = sadd.s32 %s165, 1
      %p169 = scmp.eq.s32.totalorder %s26, 1
      %p170 = scmp.ne.s32.totalorder %s165, %s167
      %p171 = scmp.eq.s32.totalorder %s26, 0
      %p172 = por %p170, %p171
      %p173 = scmp.ne.s32.totalorder %s165, %s167
      %p174 = scmp.eq.s32.totalorder %s31, 1
      %p175 = por %p173, %p174
      %p176 = scmp.ne.s32.totalorder %s167, %s168
      %p177 = scmp.eq.s32.totalorder %s31, 0
      %p178 = por %p176, %p177
      %p179 = scmp.ne.s32.totalorder %s167, %s168
      %p180 = scmp.eq.s32.totalorder %s32, 1
      %p181 = por %p179, %p180
      %p183 = scmp.ne.s32.totalorder %s168, %s182
      %p184 = scmp.eq.s32.totalorder %s32, 0
      %p185 = por %p183, %p184
      %s187 = sadd.s32 %s186, 1
      %p190 = scmp.eq.s32.totalorder %s26, 1
      %p191 = scmp.ne.s32.totalorder %s186, %s188
      %p192 = scmp.eq.s32.totalorder %s26, 0
      %p193 = por %p191, %p192
      %p194 = scmp.ne.s32.totalorder %s186, %s188
      %p195 = scmp.eq.s32.totalorder %s31, 1
      %p196 = por %p194, %p195
      %p197 = scmp.ne.s32.totalorder %s188, %s189
      %p198 = scmp.eq.s32.totalorder %s31, 0
      %p199 = por %p197, %p198
      %p200 = scmp.ne.s32.totalorder %s188, %s189
      %p201 = scmp.eq.s32.totalorder %s32, 1
      %p202 = por %p200, %p201
      %p204 = scmp.ne.s32.totalorder %s189, %s203
      %p205 = scmp.eq.s32.totalorder %s32, 0
      %p206 = por %p204, %p205
      %s208 = sadd.s32 %s207, 1
      %p211 = scmp.eq.s32.totalorder %s26, 1
      %p212 = scmp.ne.s32.totalorder %s207, %s209
      %p213 = scmp.eq.s32.totalorder %s26, 0
      %p214 = por %p212, %p213
      %p215 = scmp.ne.s32.totalorder %s207, %s209
      %p216 = scmp.eq.s32.totalorder %s31, 1
      %p217 = por %p215, %p216
      %p218 = scmp.ne.s32.totalorder %s209, %s210
      %p219 = scmp.eq.s32.totalorder %s31, 0
      %p220 = por %p218, %p219
      %p221 = scmp.ne.s32.totalorder %s209, %s210
      %p222 = scmp.eq.s32.totalorder %s32, 1
      %p223 = por %p221, %p222
      %p225 = scmp.ne.s32.totalorder %s210, %s224
      %p226 = scmp.eq.s32.totalorder %s32, 0
      %p227 = por %p225, %p226
      %s229 = sadd.s32 %s228, 1
      %p232 = scmp.eq.s32.totalorder %s26, 1
      %p233 = scmp.ne.s32.totalorder %s228, %s230
      %p234 = scmp.eq.s32.totalorder %s26, 0
      %p235 = por %p233, %p234
      %p236 = scmp.ne.s32.totalorder %s228, %s230
      %p237 = scmp.eq.s32.totalorder %s31, 1
      %p238 = por %p236, %p237
      %p239 = scmp.ne.s32.totalorder %s230, %s231
      %p240 = scmp.eq.s32.totalorder %s31, 0
      %p241 = por %p239, %p240
      %p242 = scmp.ne.s32.totalorder %s230, %s231
      %p243 = scmp.eq.s32.totalorder %s32, 1
      %p244 = por %p242, %p243
      %p246 = scmp.ne.s32.totalorder %s231, %s245
      %p247 = scmp.eq.s32.totalorder %s32, 0
      %p248 = por %p246, %p247
      %s250 = sadd.s32 %s249, 1
      %p253 = scmp.eq.s32.totalorder %s26, 1
      %p254 = scmp.ne.s32.totalorder %s249, %s251
      %p255 = scmp.eq.s32.totalorder %s26, 0
      %p256 = por %p254, %p255
      %p257 = scmp.ne.s32.totalorder %s249, %s251
      %p258 = scmp.eq.s32.totalorder %s31, 1
      %p259 = por %p257, %p258
      %p260 = scmp.ne.s32.totalorder %s251, %s252
      %p261 = scmp.eq.s32.totalorder %s31, 0
      %p262 = por %p260, %p261
      %p263 = scmp.ne.s32.totalorder %s251, %s252
      %p264 = scmp.eq.s32.totalorder %s32, 1
      %p265 = por %p263, %p264
      %p267 = scmp.ne.s32.totalorder %s252, %s266
      %p268 = scmp.eq.s32.totalorder %s32, 0
      %p269 = por %p267, %p268
      %s271 = sadd.s32 %s270, 1
      %p274 = scmp.eq.s32.totalorder %s26, 1
      %p275 = scmp.ne.s32.totalorder %s270, %s272
      %p276 = scmp.eq.s32.totalorder %s26, 0
      %p277 = por %p275, %p276
      %p278 = scmp.ne.s32.totalorder %s270, %s272
      %p279 = scmp.eq.s32.totalorder %s31, 1
      %p280 = por %p278, %p279
      %p281 = scmp.ne.s32.totalorder %s272, %s273
      %p282 = scmp.eq.s32.totalorder %s31, 0
      %p283 = por %p281, %p282
      %p284 = scmp.ne.s32.totalorder %s272, %s273
      %p285 = scmp.eq.s32.totalorder %s32, 1
      %p286 = por %p284, %p285
      %p288 = scmp.ne.s32.totalorder %s273, %s287
      %p289 = scmp.eq.s32.totalorder %s32, 0
      %p290 = por %p288, %p289
      %s292 = sadd.s32 %s291, 1
      %p295 = scmp.eq.s32.totalorder %s26, 1
      %p296 = scmp.ne.s32.totalorder %s291, %s293
      %p297 = scmp.eq.s32.totalorder %s26, 0
      %p298 = por %p296, %p297
      %p299 = scmp.ne.s32.totalorder %s291, %s293
      %p300 = scmp.eq.s32.totalorder %s31, 1
      %p301 = por %p299, %p300
      %p302 = scmp.ne.s32.totalorder %s293, %s294
      %p303 = scmp.eq.s32.totalorder %s31, 0
      %p304 = por %p302, %p303
      %p305 = scmp.ne.s32.totalorder %s293, %s294
      %p306 = scmp.eq.s32.totalorder %s32, 1
      %p307 = por %p305, %p306
      %p309 = scmp.ne.s32.totalorder %s294, %s308
      %p310 = scmp.eq.s32.totalorder %s32, 0
      %p311 = por %p309, %p310
      %s312 = ssub.s32 %s26, %s33
      %p313 = scmp.eq.s32.totalorder %s312, 0
      %s315 = sadd.s32 %s314, 1
      %s316 = scalar_select %p313, %s314, %s315
      %p319 = pneg %p313
      %p320 = scmp.eq.s32.totalorder %s26, 1
      %p321 = por %p319, %p320
      %p322 = scmp.ne.s32.totalorder %s314, %s317
      %p323 = scmp.eq.s32.totalorder %s26, 0
      %p324 = por %p322, %p323
      %p325 = scmp.ne.s32.totalorder %s314, %s317
      %p326 = scmp.eq.s32.totalorder %s31, 1
      %p327 = por %p325, %p326
      %p328 = scmp.ne.s32.totalorder %s317, %s318
      %p329 = scmp.eq.s32.totalorder %s31, 0
      %p330 = por %p328, %p329
      %p331 = scmp.ne.s32.totalorder %s317, %s318
      %p332 = scmp.eq.s32.totalorder %s32, 1
      %p333 = por %p331, %p332
      %p335 = scmp.ne.s32.totalorder %s318, %s334
      %p336 = scmp.eq.s32.totalorder %s32, 0
      %p337 = por %p335, %p336
      %p338 = scmp.le.s32.totalorder 1, %s26
      %p339 = scmp.lt.s32.totalorder %s26, 3
      %p340 = pnand %p338, %p339
      %p341 = pneg %p340
      // Predicated region
      $region9: #{segmentation_vit_forward.3} parent=5 // pred_check
        _
      $region10: #{segmentation_vit_forward.3} parent=5 // pred_check_branch
        %343 = sbr.rel (%p340) target = $region12
      $region11: #{segmentation_vit_forward.3} parent=5 // pred_region
        %s344 = ssub.s32 %s26, 1
        // Predicated region
        $region13: #{segmentation_vit_forward.3} parent=11 // pred_check
          %p345 = pneg %p73
        $region14: #{segmentation_vit_forward.3} parent=11 // pred_check_branch
          %347 = sbr.rel (%p345) target = $region16
        $region15: #{segmentation_vit_forward.3} parent=11 // pred_region
          %s349 = ssub.s32 512, 512
          %350 = vsyncadd [#allocation3], %s349
          %s351 = sshll.u32 [#allocation2], 4
          %s352 = int_to_ptr.vmem [resolvable:$true] %s351
          %357 = dma.hbm_to_vmem [thread:$0]  %s1, 512, %s352, [#allocation3], 64, 64, 4
        $region16: #{segmentation_vit_forward.3} parent=11 // pred_fallthru
          _
        // Predicated region
        $region17: #{segmentation_vit_forward.3} parent=11 // pred_check
          %p358 = pneg %p94
        $region18: #{segmentation_vit_forward.3} parent=11 // pred_check_branch
          %360 = sbr.rel (%p358) target = $region20
        $region19: #{segmentation_vit_forward.3} parent=11 // pred_region
          %s362 = ssub.s32 16, 16
          %363 = vsyncadd [#allocation5], %s362
          %s365 = sshll.u32 [#allocation4], 4
          %s366 = int_to_ptr.vmem [resolvable:$true] %s365
          %368 = dma.hbm_to_vmem [thread:$0]  %s2, 16, %s366, [#allocation5]
        $region20: #{segmentation_vit_forward.3} parent=11 // pred_fallthru
          _
        // Predicated region
        $region21: #{segmentation_vit_forward.3} parent=11 // pred_check
          %p369 = pneg %p115
        $region22: #{segmentation_vit_forward.3} parent=11 // pred_check_branch
          %371 = sbr.rel (%p369) target = $region24
        $region23: #{segmentation_vit_forward.3} parent=11 // pred_region
          %s373 = ssub.s32 16, 16
          %374 = vsyncadd [#allocation5], %s373
          %s376 = sshll.u32 [#allocation6], 4
          %s377 = int_to_ptr.vmem [resolvable:$true] %s376
          %379 = dma.hbm_to_vmem [thread:$0]  %s3, 16, %s377, [#allocation5]
        $region24: #{segmentation_vit_forward.3} parent=11 // pred_fallthru
          _
        // Predicated region
        $region25: #{segmentation_vit_forward.3} parent=11 // pred_check
          %p380 = pneg %p136
        $region26: #{segmentation_vit_forward.3} parent=11 // pred_check_branch
          %382 = sbr.rel (%p380) target = $region28
        $region27: #{segmentation_vit_forward.3} parent=11 // pred_region
          %s384 = ssub.s32 2048, 2048
          %385 = vsyncadd [#allocation8], %s384
          %s386 = sshll.u32 [#allocation7], 4
          %s387 = int_to_ptr.vmem [resolvable:$true] %s386
          %392 = dma.hbm_to_vmem [thread:$0]  %s4, 2048, %s387, [#allocation8], 128, 128, 8
        $region28: #{segmentation_vit_forward.3} parent=11 // pred_fallthru
          _
        // Predicated region
        $region29: #{segmentation_vit_forward.3} parent=11 // pred_check
          %p393 = pneg %p157
        $region30: #{segmentation_vit_forward.3} parent=11 // pred_check_branch
          %395 = sbr.rel (%p393) target = $region32
        $region31: #{segmentation_vit_forward.3} parent=11 // pred_region
          %s397 = ssub.s32 32, 32
          %398 = vsyncadd [#allocation8], %s397
          %s400 = sshll.u32 [#allocation9], 4
          %s401 = int_to_ptr.vmem [resolvable:$true] %s400
          %403 = dma.hbm_to_vmem [thread:$0]  %s5, 32, %s401, [#allocation8]
        $region32: #{segmentation_vit_forward.3} parent=11 // pred_fallthru
          _
        // Predicated region
        $region33: #{segmentation_vit_forward.3} parent=11 // pred_check
          %p404 = pneg %p178
        $region34: #{segmentation_vit_forward.3} parent=11 // pred_check_branch
          %406 = sbr.rel (%p404) target = $region36
        $region35: #{segmentation_vit_forward.3} parent=11 // pred_region
          %s408 = ssub.s32 32, 32
          %409 = vsyncadd [#allocation11], %s408
          %s411 = sshll.u32 [#allocation10], 4
          %s412 = int_to_ptr.vmem [resolvable:$true] %s411
          %414 = dma.hbm_to_vmem [thread:$0]  %s6, 32, %s412, [#allocation11]
        $region36: #{segmentation_vit_forward.3} parent=11 // pred_fallthru
          _
        // Predicated region
        $region37: #{segmentation_vit_forward.3} parent=11 // pred_check
          %p415 = pneg %p199
        $region38: #{segmentation_vit_forward.3} parent=11 // pred_check_branch
          %417 = sbr.rel (%p415) target = $region40
        $region39: #{segmentation_vit_forward.3} parent=11 // pred_region
          %s419 = ssub.s32 8192, 8192
          %420 = vsyncadd [#allocation11], %s419
          %s421 = sshll.u32 [#allocation12], 4
          %s422 = int_to_ptr.vmem [resolvable:$true] %s421
          %427 = dma.hbm_to_vmem [thread:$0]  %s7, 8192, %s422, [#allocation11], 256, 256, 16
        $region40: #{segmentation_vit_forward.3} parent=11 // pred_fallthru
          _
        // Predicated region
        $region41: #{segmentation_vit_forward.3} parent=11 // pred_check
          %p428 = pneg %p220
        $region42: #{segmentation_vit_forward.3} parent=11 // pred_check_branch
          %430 = sbr.rel (%p428) target = $region44
        $region43: #{segmentation_vit_forward.3} parent=11 // pred_region
          %s432 = ssub.s32 64, 64
          %433 = vsyncadd [#allocation14], %s432
          %s435 = sshll.u32 [#allocation13], 4
          %s436 = int_to_ptr.vmem [resolvable:$true] %s435
          %438 = dma.hbm_to_vmem [thread:$0]  %s8, 64, %s436, [#allocation14]
        $region44: #{segmentation_vit_forward.3} parent=11 // pred_fallthru
          _
        // Predicated region
        $region45: #{segmentation_vit_forward.3} parent=11 // pred_check
          %p439 = pneg %p241
        $region46: #{segmentation_vit_forward.3} parent=11 // pred_check_branch
          %441 = sbr.rel (%p439) target = $region48
        $region47: #{segmentation_vit_forward.3} parent=11 // pred_region
          %s443 = ssub.s32 64, 64
          %444 = vsyncadd [#allocation14], %s443
          %s446 = sshll.u32 [#allocation15], 4
          %s447 = int_to_ptr.vmem [resolvable:$true] %s446
          %449 = dma.hbm_to_vmem [thread:$0]  %s9, 64, %s447, [#allocation14]
        $region48: #{segmentation_vit_forward.3} parent=11 // pred_fallthru
          _
        // Predicated region
        $region49: #{segmentation_vit_forward.3} parent=11 // pred_check
          %p450 = pneg %p262
        $region50: #{segmentation_vit_forward.3} parent=11 // pred_check_branch
          %452 = sbr.rel (%p450) target = $region52
        $region51: #{segmentation_vit_forward.3} parent=11 // pred_region
          %s454 = ssub.s32 40960, 40960
          %455 = vsyncadd [#allocation17], %s454
          %s456 = sshll.u32 [#allocation16], 4
          %s457 = int_to_ptr.vmem [resolvable:$true] %s456
          %462 = dma.hbm_to_vmem [thread:$0]  %s10, 40960, %s457, [#allocation17], 640, 640, 40
        $region52: #{segmentation_vit_forward.3} parent=11 // pred_fallthru
          _
        // Predicated region
        $region53: #{segmentation_vit_forward.3} parent=11 // pred_check
          %p463 = pneg %p283
        $region54: #{segmentation_vit_forward.3} parent=11 // pred_check_branch
          %465 = sbr.rel (%p463) target = $region56
        $region55: #{segmentation_vit_forward.3} parent=11 // pred_region
          %s467 = ssub.s32 160, 160
          %468 = vsyncadd [#allocation17], %s467
          %s470 = sshll.u32 [#allocation18], 4
          %s471 = int_to_ptr.vmem [resolvable:$true] %s470
          %473 = dma.hbm_to_vmem [thread:$0]  %s11, 160, %s471, [#allocation17]
        $region56: #{segmentation_vit_forward.3} parent=11 // pred_fallthru
          _
        // Predicated region
        $region57: #{segmentation_vit_forward.3} parent=11 // pred_check
          %p474 = pneg %p304
        $region58: #{segmentation_vit_forward.3} parent=11 // pred_check_branch
          %476 = sbr.rel (%p474) target = $region60
        $region59: #{segmentation_vit_forward.3} parent=11 // pred_region
          %s478 = ssub.s32 160, 160
          %479 = vsyncadd [#allocation20], %s478
          %s481 = sshll.u32 [#allocation19], 4
          %s482 = int_to_ptr.vmem [resolvable:$true] %s481
          %484 = dma.hbm_to_vmem [thread:$0]  %s12, 160, %s482, [#allocation20]
        $region60: #{segmentation_vit_forward.3} parent=11 // pred_fallthru
          _
      $region12: #{segmentation_vit_forward.3} parent=5 // pred_fallthru
        _
      %p485 = scmp.lt.s32.totalorder %s26, 2
      // Predicated region
      $region61: #{segmentation_vit_forward.3} parent=5 // pred_check
        %p486 = pneg %p485
      $region62: #{segmentation_vit_forward.3} parent=5 // pred_check_branch
        %488 = sbr.rel (%p486) target = $region64
      $region63: #{segmentation_vit_forward.3} parent=5 // pred_region
        // Predicated region
        $region65: #{segmentation_vit_forward.3} parent=63 // pred_check
          %p489 = pneg %p46
        $region66: #{segmentation_vit_forward.3} parent=63 // pred_check_branch
          %491 = sbr.rel (%p489) target = $region68
        $region67: #{segmentation_vit_forward.3} parent=63 // pred_region
          %p492 = scmp.lt.s32.totalorder %s26, 1
          %s493 = scalar_select %p492, %s26, 1
          %s494 = smul.addr %s493, 2
          %s495 = smul.addr %s494, 8
          %s496 = scalar_lea.vmem %s0, %s495
        $region68: #{segmentation_vit_forward.3} parent=63 // pred_fallthru
          _
      $region64: #{segmentation_vit_forward.3} parent=5 // pred_fallthru
        _
      %p497 = scmp.le.s32.totalorder 1, %s26
      %p498 = scmp.lt.s32.totalorder %s26, 3
      %p499 = pnand %p497, %p498
      %p500 = pneg %p499
      // Predicated region
      $region69: #{segmentation_vit_forward.3} parent=5 // pred_check
        _
      $region70: #{segmentation_vit_forward.3} parent=5 // pred_check_branch
        %502 = sbr.rel (%p499) target = $region72
      $region71: #{segmentation_vit_forward.3} parent=5 // pred_region
        %s503 = ssub.s32 %s26, 1
        // Predicated region
        $region73: #{segmentation_vit_forward.3} parent=71 // pred_check
          %p504 = pneg %p73
        $region74: #{segmentation_vit_forward.3} parent=71 // pred_check_branch
          %506 = sbr.rel (%p504) target = $region76
        $region75: #{segmentation_vit_forward.3} parent=71 // pred_region
          %507 = dma.done [#allocation3], 512
        $region76: #{segmentation_vit_forward.3} parent=71 // pred_fallthru
          _
        // Predicated region
        $region77: #{segmentation_vit_forward.3} parent=71 // pred_check
          %p508 = pneg %p94
        $region78: #{segmentation_vit_forward.3} parent=71 // pred_check_branch
          %510 = sbr.rel (%p508) target = $region80
        $region79: #{segmentation_vit_forward.3} parent=71 // pred_region
          %511 = dma.done [#allocation5], 16
        $region80: #{segmentation_vit_forward.3} parent=71 // pred_fallthru
          _
        // Predicated region
        $region81: #{segmentation_vit_forward.3} parent=71 // pred_check
          %p512 = pneg %p115
        $region82: #{segmentation_vit_forward.3} parent=71 // pred_check_branch
          %514 = sbr.rel (%p512) target = $region84
        $region83: #{segmentation_vit_forward.3} parent=71 // pred_region
          %515 = dma.done [#allocation5], 16
        $region84: #{segmentation_vit_forward.3} parent=71 // pred_fallthru
          _
        // Predicated region
        $region85: #{segmentation_vit_forward.3} parent=71 // pred_check
          %p516 = pneg %p136
        $region86: #{segmentation_vit_forward.3} parent=71 // pred_check_branch
          %518 = sbr.rel (%p516) target = $region88
        $region87: #{segmentation_vit_forward.3} parent=71 // pred_region
          %519 = dma.done [#allocation8], 2048
        $region88: #{segmentation_vit_forward.3} parent=71 // pred_fallthru
          _
        // Predicated region
        $region89: #{segmentation_vit_forward.3} parent=71 // pred_check
          %p520 = pneg %p157
        $region90: #{segmentation_vit_forward.3} parent=71 // pred_check_branch
          %522 = sbr.rel (%p520) target = $region92
        $region91: #{segmentation_vit_forward.3} parent=71 // pred_region
          %523 = dma.done [#allocation8], 32
        $region92: #{segmentation_vit_forward.3} parent=71 // pred_fallthru
          _
        // Predicated region
        $region93: #{segmentation_vit_forward.3} parent=71 // pred_check
          %p524 = pneg %p178
        $region94: #{segmentation_vit_forward.3} parent=71 // pred_check_branch
          %526 = sbr.rel (%p524) target = $region96
        $region95: #{segmentation_vit_forward.3} parent=71 // pred_region
          %527 = dma.done [#allocation11], 32
        $region96: #{segmentation_vit_forward.3} parent=71 // pred_fallthru
          _
        // Predicated region
        $region97: #{segmentation_vit_forward.3} parent=71 // pred_check
          %p528 = pneg %p199
        $region98: #{segmentation_vit_forward.3} parent=71 // pred_check_branch
          %530 = sbr.rel (%p528) target = $region100
        $region99: #{segmentation_vit_forward.3} parent=71 // pred_region
          %531 = dma.done [#allocation11], 8192
        $region100: #{segmentation_vit_forward.3} parent=71 // pred_fallthru
          _
        // Predicated region
        $region101: #{segmentation_vit_forward.3} parent=71 // pred_check
          %p532 = pneg %p220
        $region102: #{segmentation_vit_forward.3} parent=71 // pred_check_branch
          %534 = sbr.rel (%p532) target = $region104
        $region103: #{segmentation_vit_forward.3} parent=71 // pred_region
          %535 = dma.done [#allocation14], 64
        $region104: #{segmentation_vit_forward.3} parent=71 // pred_fallthru
          _
        // Predicated region
        $region105: #{segmentation_vit_forward.3} parent=71 // pred_check
          %p536 = pneg %p241
        $region106: #{segmentation_vit_forward.3} parent=71 // pred_check_branch
          %538 = sbr.rel (%p536) target = $region108
        $region107: #{segmentation_vit_forward.3} parent=71 // pred_region
          %539 = dma.done [#allocation14], 64
        $region108: #{segmentation_vit_forward.3} parent=71 // pred_fallthru
          _
        // Predicated region
        $region109: #{segmentation_vit_forward.3} parent=71 // pred_check
          %p540 = pneg %p262
        $region110: #{segmentation_vit_forward.3} parent=71 // pred_check_branch
          %542 = sbr.rel (%p540) target = $region112
        $region111: #{segmentation_vit_forward.3} parent=71 // pred_region
          %543 = dma.done [#allocation17], 40960
        $region112: #{segmentation_vit_forward.3} parent=71 // pred_fallthru
          _
        // Predicated region
        $region113: #{segmentation_vit_forward.3} parent=71 // pred_check
          %p544 = pneg %p283
        $region114: #{segmentation_vit_forward.3} parent=71 // pred_check_branch
          %546 = sbr.rel (%p544) target = $region116
        $region115: #{segmentation_vit_forward.3} parent=71 // pred_region
          %547 = dma.done [#allocation17], 160
        $region116: #{segmentation_vit_forward.3} parent=71 // pred_fallthru
          _
        // Predicated region
        $region117: #{segmentation_vit_forward.3} parent=71 // pred_check
          %p548 = pneg %p304
        $region118: #{segmentation_vit_forward.3} parent=71 // pred_check_branch
          %550 = sbr.rel (%p548) target = $region120
        $region119: #{segmentation_vit_forward.3} parent=71 // pred_region
          %551 = dma.done [#allocation20], 160
        $region120: #{segmentation_vit_forward.3} parent=71 // pred_fallthru
          _
        %p552 = scmp.lt.s32.totalorder %s31, 1
        %s553 = scalar_select %p552, %s31, 1
        %s554 = smul.addr %s553, 2
        %s555 = smul.addr %s554, 8
        %s556 = scalar_lea.vmem %s0, %s555
        %p557 = pneg %p52
        %p558 = pneg %p49
        %p559 = pneg %p73
        %p560 = pneg %p70
        %p561 = pneg %p94
        %p562 = pneg %p91
        %p563 = pneg %p115
        %p564 = pneg %p112
        %p565 = pneg %p136
        %p566 = pneg %p133
        %p567 = pneg %p157
        %p568 = pneg %p154
        %p569 = pneg %p178
        %p570 = pneg %p175
        %p571 = pneg %p199
        %p572 = pneg %p196
        %p573 = pneg %p220
        %p574 = pneg %p217
        %p575 = pneg %p241
        %p576 = pneg %p238
        %p577 = pneg %p262
        %p578 = pneg %p259
        %p579 = pneg %p283
        %p580 = pneg %p280
        %p581 = pneg %p304
        %p582 = pneg %p301
        %p583 = pneg %p330
        %p584 = pneg %p327
        %p585 = scmp.lt.s32.totalorder %s31, 1
        %s586 = scalar_select %p585, %s31, 1
        %s587 = smul.addr %s586, 20
        %s588 = smul.addr %s587, 8
        %s589 = scalar_lea.vmem %s13, %s588
        %p590 = scmp.lt.s32.totalorder %s31, 1
        %s591 = scalar_select %p590, %s31, 1
        %s592 = smul.addr %s591, 2
        %s593 = smul.addr %s592, 8
        %s594 = scalar_lea.vmem %s0, %s593
        %p595 = scmp.lt.s32.totalorder %s31, 1
        %s596 = scalar_select %p595, %s31, 1
        %s597 = smul.addr %s596, 20
        %s598 = smul.addr %s597, 8
        %s599 = scalar_lea.vmem %s13, %s598
        %v601 = vld [vmem:[%s594] sm:$0xff]
        %v602 = vld [vmem:[%s594 + $0x8] sm:$0xff]
        %v603 = vpack.c.bf16 %v602, %v601
        %v604 = vld [vmem:[#allocation2] sm:$0xf]
        %v605 = vld [vmem:[#allocation2 + $0x4] sm:$0xf]
        %v606 = vld [vmem:[#allocation2 + $0x8] sm:$0xf]
        %v607 = vld [vmem:[#allocation2 + $0xc] sm:$0xf]
        %v608 = vld [vmem:[#allocation2 + $0x10] sm:$0xf]
        %v609 = vld [vmem:[#allocation2 + $0x14] sm:$0xf]
        %v610 = vld [vmem:[#allocation2 + $0x18] sm:$0xf]
        %v611 = vld [vmem:[#allocation2 + $0x1c] sm:$0xf]
        %v620 = vunpack.c.l.b16 %v604
        %v621 = vunpack.c.l.b16 %v605
        %v622 = vunpack.c.l.b16 %v606
        %v623 = vunpack.c.l.b16 %v607
        %v624 = vunpack.c.l.b16 %v608
        %v625 = vunpack.c.l.b16 %v609
        %v626 = vunpack.c.l.b16 %v610
        %v627 = vunpack.c.l.b16 %v611
        %v628 = vpack.c.b16 %v621, %v620
        %v629 = vpack.c.b16 %v623, %v622
        %v630 = vpack.c.b16 %v625, %v624
        %v631 = vpack.c.b16 %v627, %v626
        %vm636 = vcmask 523264
        %v638 = vsel %vm636, %v603, 0
        %640 = vmatprep.subr.bf16.mxu0 0
        %641 = vmatpush1.bf16.msra.mxu0 %v628
        %642 = vmatprep.subr.bf16.mxu0 0
        %643 = vmatpush1.bf16.msra.mxu0 %v629
        %644 = vmatprep.subr.bf16.mxu0 0
        %645 = vmatpush1.bf16.msra.mxu0 %v630
        %646 = vmatprep.subr.bf16.mxu0 0
        %647 = vmatpush1.bf16.msra.mxu0 %v631
        %648 = vmatprep.subr.bf16.mxu0 0
        %649 = vmatpush1.bf16.msra.mxu0 0
        %650 = vmatprep.subr.bf16.mxu0 0
        %651 = vmatpush1.bf16.msra.mxu0 0
        %652 = vmatprep.subr.bf16.mxu0 0
        %653 = vmatpush1.bf16.msra.mxu0 0
        %654 = vmatprep.subr.bf16.mxu0 0
        %655 = vmatpush1.bf16.msra.mxu0 0
        %656 = vmatprep.subr.bf16.mxu0 0
        %657 = vmatpush1.bf16.msra.mxu0 0
        %658 = vmatprep.subr.bf16.mxu0 0
        %659 = vmatpush1.bf16.msra.mxu0 0
        %660 = vmatprep.subr.bf16.mxu0 0
        %661 = vmatpush1.bf16.msra.mxu0 0
        %662 = vmatprep.subr.bf16.mxu0 0
        %663 = vmatpush1.bf16.msra.mxu0 0
        %664 = vmatprep.subr.bf16.mxu0 0
        %665 = vmatpush1.bf16.msra.mxu0 0
        %666 = vmatprep.subr.bf16.mxu0 0
        %667 = vmatpush1.bf16.msra.mxu0 0
        %668 = vmatprep.subr.bf16.mxu0 0
        %669 = vmatpush1.bf16.msra.mxu0 0
        %670 = vmatprep.subr.bf16.mxu0 0
        %671 = vmatpush1.bf16.msra.mxu0 0
        %672 = vmatprep.mubr.bf16.mxu0 0
        %673 = vmatmul.mubr.bf16.gmra.mrb[0].mxu0 %v638
        %v674 = vpop.f32.mrb[0].mxu0
        %v675 = vadd.f32 0.0, %v674
        %v676 = vpop.f32.mrb[0].mxu0
        %v677 = vpop.f32.mrb[0].mxu0
        %v678 = vadd.f32 0.0, %v677
        %v679 = vpop.f32.mrb[0].mxu0
        %680 = vdwg.mxu0
        %v681 = vld [vmem:[#allocation4] sm:$0x1]
        %v683 = vlaneseq
        %v684 = vshrl.u32 %v683, 7
        %v685 = vsub.s32 0, %v684
        %v686 = vrot.slane %v681, %v685
        %v688 = vmul.f32 %v675, %v686
        %v689 = vmul.f32 %v678, %v686
        %v690 = vld [vmem:[#allocation6] sm:$0x1]
        %v692 = vlaneseq
        %v693 = vshrl.u32 %v692, 7
        %v694 = vsub.s32 0, %v693
        %v695 = vrot.slane %v690, %v694
        %v697 = vadd.f32 %v688, %v695
        %v698 = vadd.f32 %v689, %v695
        %v699 = vmax.f32 %v697, 0.0
        %v700 = vmax.f32 %v698, 0.0
        %v701 = vpack.c.bf16 %v700, %v699
        %v702 = vld [vmem:[#allocation7] sm:$0xff]
        %v703 = vld [vmem:[#allocation7 + $0x8] sm:$0xff]
        %v704 = vld [vmem:[#allocation7 + $0x10] sm:$0xff]
        %v705 = vld [vmem:[#allocation7 + $0x18] sm:$0xff]
        %v706 = vld [vmem:[#allocation7 + $0x20] sm:$0xff]
        %v707 = vld [vmem:[#allocation7 + $0x28] sm:$0xff]
        %v708 = vld [vmem:[#allocation7 + $0x30] sm:$0xff]
        %v709 = vld [vmem:[#allocation7 + $0x38] sm:$0xff]
        %v710 = vld [vmem:[#allocation7 + $0x40] sm:$0xff]
        %v711 = vld [vmem:[#allocation7 + $0x48] sm:$0xff]
        %v712 = vld [vmem:[#allocation7 + $0x50] sm:$0xff]
        %v713 = vld [vmem:[#allocation7 + $0x58] sm:$0xff]
        %v714 = vld [vmem:[#allocation7 + $0x60] sm:$0xff]
        %v715 = vld [vmem:[#allocation7 + $0x68] sm:$0xff]
        %v716 = vld [vmem:[#allocation7 + $0x70] sm:$0xff]
        %v717 = vld [vmem:[#allocation7 + $0x78] sm:$0xff]
        %v734 = vunpack.c.l.b16 %v702
        %v735 = vunpack.c.h.b16 %v702
        %v736 = vunpack.c.l.b16 %v703
        %v737 = vunpack.c.h.b16 %v703
        %v738 = vunpack.c.l.b16 %v704
        %v739 = vunpack.c.h.b16 %v704
        %v740 = vunpack.c.l.b16 %v705
        %v741 = vunpack.c.h.b16 %v705
        %v742 = vunpack.c.l.b16 %v706
        %v743 = vunpack.c.h.b16 %v706
        %v744 = vunpack.c.l.b16 %v707
        %v745 = vunpack.c.h.b16 %v707
        %v746 = vunpack.c.l.b16 %v708
        %v747 = vunpack.c.h.b16 %v708
        %v748 = vunpack.c.l.b16 %v709
        %v749 = vunpack.c.h.b16 %v709
        %v750 = vunpack.c.l.b16 %v710
        %v751 = vunpack.c.h.b16 %v710
        %v752 = vunpack.c.l.b16 %v711
        %v753 = vunpack.c.h.b16 %v711
        %v754 = vunpack.c.l.b16 %v712
        %v755 = vunpack.c.h.b16 %v712
        %v756 = vunpack.c.l.b16 %v713
        %v757 = vunpack.c.h.b16 %v713
        %v758 = vunpack.c.l.b16 %v714
        %v759 = vunpack.c.h.b16 %v714
        %v760 = vunpack.c.l.b16 %v715
        %v761 = vunpack.c.h.b16 %v715
        %v762 = vunpack.c.l.b16 %v716
        %v763 = vunpack.c.h.b16 %v716
        %v764 = vunpack.c.l.b16 %v717
        %v765 = vunpack.c.h.b16 %v717
        %v766 = vpack.c.b16 %v736, %v734
        %v767 = vpack.c.b16 %v737, %v735
        %v768 = vpack.c.b16 %v740, %v738
        %v769 = vpack.c.b16 %v741, %v739
        %v770 = vpack.c.b16 %v744, %v742
        %v771 = vpack.c.b16 %v745, %v743
        %v772 = vpack.c.b16 %v748, %v746
        %v773 = vpack.c.b16 %v749, %v747
        %v774 = vpack.c.b16 %v752, %v750
        %v775 = vpack.c.b16 %v753, %v751
        %v776 = vpack.c.b16 %v756, %v754
        %v777 = vpack.c.b16 %v757, %v755
        %v778 = vpack.c.b16 %v760, %v758
        %v779 = vpack.c.b16 %v761, %v759
        %v780 = vpack.c.b16 %v764, %v762
        %v781 = vpack.c.b16 %v765, %v763
        %798 = vmatprep.subr.bf16.mxu0 %v767
        %799 = vmatpush1.bf16.msra.mxu0 %v766
        %800 = vmatprep.subr.bf16.mxu0 %v769
        %801 = vmatpush1.bf16.msra.mxu0 %v768
        %802 = vmatprep.subr.bf16.mxu0 %v771
        %803 = vmatpush1.bf16.msra.mxu0 %v770
        %804 = vmatprep.subr.bf16.mxu0 %v773
        %805 = vmatpush1.bf16.msra.mxu0 %v772
        %806 = vmatprep.subr.bf16.mxu0 %v775
        %807 = vmatpush1.bf16.msra.mxu0 %v774
        %808 = vmatprep.subr.bf16.mxu0 %v777
        %809 = vmatpush1.bf16.msra.mxu0 %v776
        %810 = vmatprep.subr.bf16.mxu0 %v779
        %811 = vmatpush1.bf16.msra.mxu0 %v778
        %812 = vmatprep.subr.bf16.mxu0 %v781
        %813 = vmatpush1.bf16.msra.mxu0 %v780
        %814 = vmatprep.subr.bf16.mxu0 0
        %815 = vmatpush1.bf16.msra.mxu0 0
        %816 = vmatprep.subr.bf16.mxu0 0
        %817 = vmatpush1.bf16.msra.mxu0 0
        %818 = vmatprep.subr.bf16.mxu0 0
        %819 = vmatpush1.bf16.msra.mxu0 0
        %820 = vmatprep.subr.bf16.mxu0 0
        %821 = vmatpush1.bf16.msra.mxu0 0
        %822 = vmatprep.subr.bf16.mxu0 0
        %823 = vmatpush1.bf16.msra.mxu0 0
        %824 = vmatprep.subr.bf16.mxu0 0
        %825 = vmatpush1.bf16.msra.mxu0 0
        %826 = vmatprep.subr.bf16.mxu0 0
        %827 = vmatpush1.bf16.msra.mxu0 0
        %828 = vmatprep.subr.bf16.mxu0 0
        %829 = vmatpush1.bf16.msra.mxu0 0
        %830 = vmatprep.mubr.bf16.mxu0 0
        %831 = vmatmul.mubr.bf16.gmra.mrb[0].mxu0 %v701
        %v832 = vpop.f32.mrb[0].mxu0
        %v833 = vadd.f32 0.0, %v832
        %v834 = vpop.f32.mrb[0].mxu0
        %v835 = vadd.f32 0.0, %v834
        %v836 = vpop.f32.mrb[0].mxu0
        %v837 = vadd.f32 0.0, %v836
        %v838 = vpop.f32.mrb[0].mxu0
        %v839 = vadd.f32 0.0, %v838
        %840 = vdwg.mxu0
        %v841 = vld [vmem:[#allocation9] sm:$0x3]
        %v843 = vlaneseq
        %v844 = vshrl.u32 %v843, 7
        %v845 = vsub.s32 0, %v844
        %v846 = vrot.slane %v841, %v845
        %v847 = vlaneseq
        %v848 = vshrl.u32 %v847, 7
        %v849 = vsub.s32 1, %v848
        %v850 = vrot.slane %v841, %v849
        %v853 = vmul.f32 %v833, %v846
        %v854 = vmul.f32 %v835, %v850
        %v855 = vmul.f32 %v837, %v846
        %v856 = vmul.f32 %v839, %v850
        %v857 = vld [vmem:[#allocation10] sm:$0x3]
        %v859 = vlaneseq
        %v860 = vshrl.u32 %v859, 7
        %v861 = vsub.s32 0, %v860
        %v862 = vrot.slane %v857, %v861
        %v863 = vlaneseq
        %v864 = vshrl.u32 %v863, 7
        %v865 = vsub.s32 1, %v864
        %v866 = vrot.slane %v857, %v865
        %v869 = vadd.f32 %v853, %v862
        %v870 = vadd.f32 %v854, %v866
        %v871 = vadd.f32 %v855, %v862
        %v872 = vadd.f32 %v856, %v866
        %v873 = vmax.f32 %v869, 0.0
        %v874 = vmax.f32 %v870, 0.0
        %v875 = vmax.f32 %v871, 0.0
        %v876 = vmax.f32 %v872, 0.0
        %v877 = vpack.c.bf16 %v875, %v873
        %v878 = vpack.c.bf16 %v876, %v874
        %v879 = vld [vmem:[#allocation12] sm:$0xff]
        %v880 = vld [vmem:[#allocation12 + $0x8] sm:$0xff]
        %v881 = vld [vmem:[#allocation12 + $0x10] sm:$0xff]
        %v882 = vld [vmem:[#allocation12 + $0x18] sm:$0xff]
        %v883 = vld [vmem:[#allocation12 + $0x20] sm:$0xff]
        %v884 = vld [vmem:[#allocation12 + $0x28] sm:$0xff]
        %v885 = vld [vmem:[#allocation12 + $0x30] sm:$0xff]
        %v886 = vld [vmem:[#allocation12 + $0x38] sm:$0xff]
        %v887 = vld [vmem:[#allocation12 + $0x40] sm:$0xff]
        %v888 = vld [vmem:[#allocation12 + $0x48] sm:$0xff]
        %v889 = vld [vmem:[#allocation12 + $0x50] sm:$0xff]
        %v890 = vld [vmem:[#allocation12 + $0x58] sm:$0xff]
        %v891 = vld [vmem:[#allocation12 + $0x60] sm:$0xff]
        %v892 = vld [vmem:[#allocation12 + $0x68] sm:$0xff]
        %v893 = vld [vmem:[#allocation12 + $0x70] sm:$0xff]
        %v894 = vld [vmem:[#allocation12 + $0x78] sm:$0xff]
        %v895 = vld [vmem:[#allocation12 + $0x80] sm:$0xff]
        %v896 = vld [vmem:[#allocation12 + $0x88] sm:$0xff]
        %v897 = vld [vmem:[#allocation12 + $0x90] sm:$0xff]
        %v898 = vld [vmem:[#allocation12 + $0x98] sm:$0xff]
        %v899 = vld [vmem:[#allocation12 + $0xa0] sm:$0xff]
        %v900 = vld [vmem:[#allocation12 + $0xa8] sm:$0xff]
        %v901 = vld [vmem:[#allocation12 + $0xb0] sm:$0xff]
        %v902 = vld [vmem:[#allocation12 + $0xb8] sm:$0xff]
        %v903 = vld [vmem:[#allocation12 + $0xc0] sm:$0xff]
        %v904 = vld [vmem:[#allocation12 + $0xc8] sm:$0xff]
        %v905 = vld [vmem:[#allocation12 + $0xd0] sm:$0xff]
        %v906 = vld [vmem:[#allocation12 + $0xd8] sm:$0xff]
        %v907 = vld [vmem:[#allocation12 + $0xe0] sm:$0xff]
        %v908 = vld [vmem:[#allocation12 + $0xe8] sm:$0xff]
        %v909 = vld [vmem:[#allocation12 + $0xf0] sm:$0xff]
        %v910 = vld [vmem:[#allocation12 + $0xf8] sm:$0xff]
        %v911 = vld [vmem:[#allocation12 + $0x100] sm:$0xff]
        %v912 = vld [vmem:[#allocation12 + $0x108] sm:$0xff]
        %v913 = vld [vmem:[#allocation12 + $0x110] sm:$0xff]
        %v914 = vld [vmem:[#allocation12 + $0x118] sm:$0xff]
        %v915 = vld [vmem:[#allocation12 + $0x120] sm:$0xff]
        %v916 = vld [vmem:[#allocation12 + $0x128] sm:$0xff]
        %v917 = vld [vmem:[#allocation12 + $0x130] sm:$0xff]
        %v918 = vld [vmem:[#allocation12 + $0x138] sm:$0xff]
        %v919 = vld [vmem:[#allocation12 + $0x140] sm:$0xff]
        %v920 = vld [vmem:[#allocation12 + $0x148] sm:$0xff]
        %v921 = vld [vmem:[#allocation12 + $0x150] sm:$0xff]
        %v922 = vld [vmem:[#allocation12 + $0x158] sm:$0xff]
        %v923 = vld [vmem:[#allocation12 + $0x160] sm:$0xff]
        %v924 = vld [vmem:[#allocation12 + $0x168] sm:$0xff]
        %v925 = vld [vmem:[#allocation12 + $0x170] sm:$0xff]
        %v926 = vld [vmem:[#allocation12 + $0x178] sm:$0xff]
        %v927 = vld [vmem:[#allocation12 + $0x180] sm:$0xff]
        %v928 = vld [vmem:[#allocation12 + $0x188] sm:$0xff]
        %v929 = vld [vmem:[#allocation12 + $0x190] sm:$0xff]
        %v930 = vld [vmem:[#allocation12 + $0x198] sm:$0xff]
        %v931 = vld [vmem:[#allocation12 + $0x1a0] sm:$0xff]
        %v932 = vld [vmem:[#allocation12 + $0x1a8] sm:$0xff]
        %v933 = vld [vmem:[#allocation12 + $0x1b0] sm:$0xff]
        %v934 = vld [vmem:[#allocation12 + $0x1b8] sm:$0xff]
        %v935 = vld [vmem:[#allocation12 + $0x1c0] sm:$0xff]
        %v936 = vld [vmem:[#allocation12 + $0x1c8] sm:$0xff]
        %v937 = vld [vmem:[#allocation12 + $0x1d0] sm:$0xff]
        %v938 = vld [vmem:[#allocation12 + $0x1d8] sm:$0xff]
        %v939 = vld [vmem:[#allocation12 + $0x1e0] sm:$0xff]
        %v940 = vld [vmem:[#allocation12 + $0x1e8] sm:$0xff]
        %v941 = vld [vmem:[#allocation12 + $0x1f0] sm:$0xff]
        %v942 = vld [vmem:[#allocation12 + $0x1f8] sm:$0xff]
        %v1007 = vunpack.c.l.b16 %v879
        %v1008 = vunpack.c.h.b16 %v879
        %v1009 = vunpack.c.l.b16 %v880
        %v1010 = vunpack.c.h.b16 %v880
        %v1011 = vunpack.c.l.b16 %v881
        %v1012 = vunpack.c.h.b16 %v881
        %v1013 = vunpack.c.l.b16 %v882
        %v1014 = vunpack.c.h.b16 %v882
        %v1015 = vunpack.c.l.b16 %v883
        %v1016 = vunpack.c.h.b16 %v883
        %v1017 = vunpack.c.l.b16 %v884
        %v1018 = vunpack.c.h.b16 %v884
        %v1019 = vunpack.c.l.b16 %v885
        %v1020 = vunpack.c.h.b16 %v885
        %v1021 = vunpack.c.l.b16 %v886
        %v1022 = vunpack.c.h.b16 %v886
        %v1023 = vunpack.c.l.b16 %v887
        %v1024 = vunpack.c.h.b16 %v887
        %v1025 = vunpack.c.l.b16 %v888
        %v1026 = vunpack.c.h.b16 %v888
        %v1027 = vunpack.c.l.b16 %v889
        %v1028 = vunpack.c.h.b16 %v889
        %v1029 = vunpack.c.l.b16 %v890
        %v1030 = vunpack.c.h.b16 %v890
        %v1031 = vunpack.c.l.b16 %v891
        %v1032 = vunpack.c.h.b16 %v891
        %v1033 = vunpack.c.l.b16 %v892
        %v1034 = vunpack.c.h.b16 %v892
        %v1035 = vunpack.c.l.b16 %v893
        %v1036 = vunpack.c.h.b16 %v893
        %v1037 = vunpack.c.l.b16 %v894
        %v1038 = vunpack.c.h.b16 %v894
        %v1039 = vunpack.c.l.b16 %v895
        %v1040 = vunpack.c.h.b16 %v895
        %v1041 = vunpack.c.l.b16 %v896
        %v1042 = vunpack.c.h.b16 %v896
        %v1043 = vunpack.c.l.b16 %v897
        %v1044 = vunpack.c.h.b16 %v897
        %v1045 = vunpack.c.l.b16 %v898
        %v1046 = vunpack.c.h.b16 %v898
        %v1047 = vunpack.c.l.b16 %v899
        %v1048 = vunpack.c.h.b16 %v899
        %v1049 = vunpack.c.l.b16 %v900
        %v1050 = vunpack.c.h.b16 %v900
        %v1051 = vunpack.c.l.b16 %v901
        %v1052 = vunpack.c.h.b16 %v901
        %v1053 = vunpack.c.l.b16 %v902
        %v1054 = vunpack.c.h.b16 %v902
        %v1055 = vunpack.c.l.b16 %v903
        %v1056 = vunpack.c.h.b16 %v903
        %v1057 = vunpack.c.l.b16 %v904
        %v1058 = vunpack.c.h.b16 %v904
        %v1059 = vunpack.c.l.b16 %v905
        %v1060 = vunpack.c.h.b16 %v905
        %v1061 = vunpack.c.l.b16 %v906
        %v1062 = vunpack.c.h.b16 %v906
        %v1063 = vunpack.c.l.b16 %v907
        %v1064 = vunpack.c.h.b16 %v907
        %v1065 = vunpack.c.l.b16 %v908
        %v1066 = vunpack.c.h.b16 %v908
        %v1067 = vunpack.c.l.b16 %v909
        %v1068 = vunpack.c.h.b16 %v909
        %v1069 = vunpack.c.l.b16 %v910
        %v1070 = vunpack.c.h.b16 %v910
        %v1071 = vunpack.c.l.b16 %v911
        %v1072 = vunpack.c.h.b16 %v911
        %v1073 = vunpack.c.l.b16 %v912
        %v1074 = vunpack.c.h.b16 %v912
        %v1075 = vunpack.c.l.b16 %v913
        %v1076 = vunpack.c.h.b16 %v913
        %v1077 = vunpack.c.l.b16 %v914
        %v1078 = vunpack.c.h.b16 %v914
        %v1079 = vunpack.c.l.b16 %v915
        %v1080 = vunpack.c.h.b16 %v915
        %v1081 = vunpack.c.l.b16 %v916
        %v1082 = vunpack.c.h.b16 %v916
        %v1083 = vunpack.c.l.b16 %v917
        %v1084 = vunpack.c.h.b16 %v917
        %v1085 = vunpack.c.l.b16 %v918
        %v1086 = vunpack.c.h.b16 %v918
        %v1087 = vunpack.c.l.b16 %v919
        %v1088 = vunpack.c.h.b16 %v919
        %v1089 = vunpack.c.l.b16 %v920
        %v1090 = vunpack.c.h.b16 %v920
        %v1091 = vunpack.c.l.b16 %v921
        %v1092 = vunpack.c.h.b16 %v921
        %v1093 = vunpack.c.l.b16 %v922
        %v1094 = vunpack.c.h.b16 %v922
        %v1095 = vunpack.c.l.b16 %v923
        %v1096 = vunpack.c.h.b16 %v923
        %v1097 = vunpack.c.l.b16 %v924
        %v1098 = vunpack.c.h.b16 %v924
        %v1099 = vunpack.c.l.b16 %v925
        %v1100 = vunpack.c.h.b16 %v925
        %v1101 = vunpack.c.l.b16 %v926
        %v1102 = vunpack.c.h.b16 %v926
        %v1103 = vunpack.c.l.b16 %v927
        %v1104 = vunpack.c.h.b16 %v927
        %v1105 = vunpack.c.l.b16 %v928
        %v1106 = vunpack.c.h.b16 %v928
        %v1107 = vunpack.c.l.b16 %v929
        %v1108 = vunpack.c.h.b16 %v929
        %v1109 = vunpack.c.l.b16 %v930
        %v1110 = vunpack.c.h.b16 %v930
        %v1111 = vunpack.c.l.b16 %v931
        %v1112 = vunpack.c.h.b16 %v931
        %v1113 = vunpack.c.l.b16 %v932
        %v1114 = vunpack.c.h.b16 %v932
        %v1115 = vunpack.c.l.b16 %v933
        %v1116 = vunpack.c.h.b16 %v933
        %v1117 = vunpack.c.l.b16 %v934
        %v1118 = vunpack.c.h.b16 %v934
        %v1119 = vunpack.c.l.b16 %v935
        %v1120 = vunpack.c.h.b16 %v935
        %v1121 = vunpack.c.l.b16 %v936
        %v1122 = vunpack.c.h.b16 %v936
        %v1123 = vunpack.c.l.b16 %v937
        %v1124 = vunpack.c.h.b16 %v937
        %v1125 = vunpack.c.l.b16 %v938
        %v1126 = vunpack.c.h.b16 %v938
        %v1127 = vunpack.c.l.b16 %v939
        %v1128 = vunpack.c.h.b16 %v939
        %v1129 = vunpack.c.l.b16 %v940
        %v1130 = vunpack.c.h.b16 %v940
        %v1131 = vunpack.c.l.b16 %v941
        %v1132 = vunpack.c.h.b16 %v941
        %v1133 = vunpack.c.l.b16 %v942
        %v1134 = vunpack.c.h.b16 %v942
        %v1135 = vpack.c.b16 %v1011, %v1007
        %v1136 = vpack.c.b16 %v1012, %v1008
        %v1137 = vpack.c.b16 %v1013, %v1009
        %v1138 = vpack.c.b16 %v1014, %v1010
        %v1139 = vpack.c.b16 %v1019, %v1015
        %v1140 = vpack.c.b16 %v1020, %v1016
        %v1141 = vpack.c.b16 %v1021, %v1017
        %v1142 = vpack.c.b16 %v1022, %v1018
        %v1143 = vpack.c.b16 %v1027, %v1023
        %v1144 = vpack.c.b16 %v1028, %v1024
        %v1145 = vpack.c.b16 %v1029, %v1025
        %v1146 = vpack.c.b16 %v1030, %v1026
        %v1147 = vpack.c.b16 %v1035, %v1031
        %v1148 = vpack.c.b16 %v1036, %v1032
        %v1149 = vpack.c.b16 %v1037, %v1033
        %v1150 = vpack.c.b16 %v1038, %v1034
        %v1151 = vpack.c.b16 %v1043, %v1039
        %v1152 = vpack.c.b16 %v1044, %v1040
        %v1153 = vpack.c.b16 %v1045, %v1041
        %v1154 = vpack.c.b16 %v1046, %v1042
        %v1155 = vpack.c.b16 %v1051, %v1047
        %v1156 = vpack.c.b16 %v1052, %v1048
        %v1157 = vpack.c.b16 %v1053, %v1049
        %v1158 = vpack.c.b16 %v1054, %v1050
        %v1159 = vpack.c.b16 %v1059, %v1055
        %v1160 = vpack.c.b16 %v1060, %v1056
        %v1161 = vpack.c.b16 %v1061, %v1057
        %v1162 = vpack.c.b16 %v1062, %v1058
        %v1163 = vpack.c.b16 %v1067, %v1063
        %v1164 = vpack.c.b16 %v1068, %v1064
        %v1165 = vpack.c.b16 %v1069, %v1065
        %v1166 = vpack.c.b16 %v1070, %v1066
        %v1167 = vpack.c.b16 %v1075, %v1071
        %v1168 = vpack.c.b16 %v1076, %v1072
        %v1169 = vpack.c.b16 %v1077, %v1073
        %v1170 = vpack.c.b16 %v1078, %v1074
        %v1171 = vpack.c.b16 %v1083, %v1079
        %v1172 = vpack.c.b16 %v1084, %v1080
        %v1173 = vpack.c.b16 %v1085, %v1081
        %v1174 = vpack.c.b16 %v1086, %v1082
        %v1175 = vpack.c.b16 %v1091, %v1087
        %v1176 = vpack.c.b16 %v1092, %v1088
        %v1177 = vpack.c.b16 %v1093, %v1089
        %v1178 = vpack.c.b16 %v1094, %v1090
        %v1179 = vpack.c.b16 %v1099, %v1095
        %v1180 = vpack.c.b16 %v1100, %v1096
        %v1181 = vpack.c.b16 %v1101, %v1097
        %v1182 = vpack.c.b16 %v1102, %v1098
        %v1183 = vpack.c.b16 %v1107, %v1103
        %v1184 = vpack.c.b16 %v1108, %v1104
        %v1185 = vpack.c.b16 %v1109, %v1105
        %v1186 = vpack.c.b16 %v1110, %v1106
        %v1187 = vpack.c.b16 %v1115, %v1111
        %v1188 = vpack.c.b16 %v1116, %v1112
        %v1189 = vpack.c.b16 %v1117, %v1113
        %v1190 = vpack.c.b16 %v1118, %v1114
        %v1191 = vpack.c.b16 %v1123, %v1119
        %v1192 = vpack.c.b16 %v1124, %v1120
        %v1193 = vpack.c.b16 %v1125, %v1121
        %v1194 = vpack.c.b16 %v1126, %v1122
        %v1195 = vpack.c.b16 %v1131, %v1127
        %v1196 = vpack.c.b16 %v1132, %v1128
        %v1197 = vpack.c.b16 %v1133, %v1129
        %v1198 = vpack.c.b16 %v1134, %v1130
        %1263 = vmatprep.subr.bf16.mxu0 %v1136
        %1264 = vmatpush1.bf16.msra.mxu0 %v1135
        %1265 = vmatprep.subr.bf16.mxu0 %v1140
        %1266 = vmatpush1.bf16.msra.mxu0 %v1139
        %1267 = vmatprep.subr.bf16.mxu0 %v1144
        %1268 = vmatpush1.bf16.msra.mxu0 %v1143
        %1269 = vmatprep.subr.bf16.mxu0 %v1148
        %1270 = vmatpush1.bf16.msra.mxu0 %v1147
        %1271 = vmatprep.subr.bf16.mxu0 %v1152
        %1272 = vmatpush1.bf16.msra.mxu0 %v1151
        %1273 = vmatprep.subr.bf16.mxu0 %v1156
        %1274 = vmatpush1.bf16.msra.mxu0 %v1155
        %1275 = vmatprep.subr.bf16.mxu0 %v1160
        %1276 = vmatpush1.bf16.msra.mxu0 %v1159
        %1277 = vmatprep.subr.bf16.mxu0 %v1164
        %1278 = vmatpush1.bf16.msra.mxu0 %v1163
        %1279 = vmatprep.subr.bf16.mxu0 %v1168
        %1280 = vmatpush1.bf16.msra.mxu0 %v1167
        %1281 = vmatprep.subr.bf16.mxu0 %v1172
        %1282 = vmatpush1.bf16.msra.mxu0 %v1171
        %1283 = vmatprep.subr.bf16.mxu0 %v1176
        %1284 = vmatpush1.bf16.msra.mxu0 %v1175
        %1285 = vmatprep.subr.bf16.mxu0 %v1180
        %1286 = vmatpush1.bf16.msra.mxu0 %v1179
        %1287 = vmatprep.subr.bf16.mxu0 %v1184
        %1288 = vmatpush1.bf16.msra.mxu0 %v1183
        %1289 = vmatprep.subr.bf16.mxu0 %v1188
        %1290 = vmatpush1.bf16.msra.mxu0 %v1187
        %1291 = vmatprep.subr.bf16.mxu0 %v1192
        %1292 = vmatpush1.bf16.msra.mxu0 %v1191
        %1293 = vmatprep.subr.bf16.mxu0 %v1196
        %1294 = vmatpush1.bf16.msra.mxu0 %v1195
        %1295 = vmatprep.mubr.bf16.mxu0 %v878
        %1296 = vmatmul.mubr.bf16.gmra.mrb[0].mxu0 %v877
        %v1297 = vpop.f32.mrb[0].mxu0
        %v1298 = vadd.f32 0.0, %v1297
        %v1299 = vpop.f32.mrb[0].mxu0
        %v1300 = vadd.f32 0.0, %v1299
        %v1301 = vpop.f32.mrb[0].mxu0
        %v1302 = vadd.f32 0.0, %v1301
        %v1303 = vpop.f32.mrb[0].mxu0
        %v1304 = vadd.f32 0.0, %v1303
        %1305 = vdwg.mxu0
        %1306 = vmatprep.subr.bf16.mxu0 %v1138
        %1307 = vmatpush1.bf16.msra.mxu0 %v1137
        %1308 = vmatprep.subr.bf16.mxu0 %v1142
        %1309 = vmatpush1.bf16.msra.mxu0 %v1141
        %1310 = vmatprep.subr.bf16.mxu0 %v1146
        %1311 = vmatpush1.bf16.msra.mxu0 %v1145
        %1312 = vmatprep.subr.bf16.mxu0 %v1150
        %1313 = vmatpush1.bf16.msra.mxu0 %v1149
        %1314 = vmatprep.subr.bf16.mxu0 %v1154
        %1315 = vmatpush1.bf16.msra.mxu0 %v1153
        %1316 = vmatprep.subr.bf16.mxu0 %v1158
        %1317 = vmatpush1.bf16.msra.mxu0 %v1157
        %1318 = vmatprep.subr.bf16.mxu0 %v1162
        %1319 = vmatpush1.bf16.msra.mxu0 %v1161
        %1320 = vmatprep.subr.bf16.mxu0 %v1166
        %1321 = vmatpush1.bf16.msra.mxu0 %v1165
        %1322 = vmatprep.subr.bf16.mxu0 %v1170
        %1323 = vmatpush1.bf16.msra.mxu0 %v1169
        %1324 = vmatprep.subr.bf16.mxu0 %v1174
        %1325 = vmatpush1.bf16.msra.mxu0 %v1173
        %1326 = vmatprep.subr.bf16.mxu0 %v1178
        %1327 = vmatpush1.bf16.msra.mxu0 %v1177
        %1328 = vmatprep.subr.bf16.mxu0 %v1182
        %1329 = vmatpush1.bf16.msra.mxu0 %v1181
        %1330 = vmatprep.subr.bf16.mxu0 %v1186
        %1331 = vmatpush1.bf16.msra.mxu0 %v1185
        %1332 = vmatprep.subr.bf16.mxu0 %v1190
        %1333 = vmatpush1.bf16.msra.mxu0 %v1189
        %1334 = vmatprep.subr.bf16.mxu0 %v1194
        %1335 = vmatpush1.bf16.msra.mxu0 %v1193
        %1336 = vmatprep.subr.bf16.mxu0 %v1198
        %1337 = vmatpush1.bf16.msra.mxu0 %v1197
        %1338 = vmatprep.mubr.bf16.mxu0 %v878
        %1339 = vmatmul.mubr.bf16.gmra.mrb[0].mxu0 %v877
        %v1340 = vpop.f32.mrb[0].mxu0
        %v1341 = vadd.f32 0.0, %v1340
        %v1342 = vpop.f32.mrb[0].mxu0
        %v1343 = vadd.f32 0.0, %v1342
        %v1344 = vpop.f32.mrb[0].mxu0
        %v1345 = vadd.f32 0.0, %v1344
        %v1346 = vpop.f32.mrb[0].mxu0
        %v1347 = vadd.f32 0.0, %v1346
        %1348 = vdwg.mxu0
        %v1349 = vld [vmem:[#allocation13] sm:$0xf]
        %v1351 = vlaneseq
        %v1352 = vshrl.u32 %v1351, 7
        %v1353 = vsub.s32 0, %v1352
        %v1354 = vrot.slane %v1349, %v1353
        %v1355 = vlaneseq
        %v1356 = vshrl.u32 %v1355, 7
        %v1357 = vsub.s32 1, %v1356
        %v1358 = vrot.slane %v1349, %v1357
        %v1359 = vlaneseq
        %v1360 = vshrl.u32 %v1359, 7
        %v1361 = vsub.s32 2, %v1360
        %v1362 = vrot.slane %v1349, %v1361
        %v1363 = vlaneseq
        %v1364 = vshrl.u32 %v1363, 7
        %v1365 = vsub.s32 3, %v1364
        %v1366 = vrot.slane %v1349, %v1365
        %v1371 = vmul.f32 %v1298, %v1354
        %v1372 = vmul.f32 %v1300, %v1358
        %v1373 = vmul.f32 %v1341, %v1362
        %v1374 = vmul.f32 %v1343, %v1366
        %v1375 = vmul.f32 %v1302, %v1354
        %v1376 = vmul.f32 %v1304, %v1358
        %v1377 = vmul.f32 %v1345, %v1362
        %v1378 = vmul.f32 %v1347, %v1366
        %v1379 = vld [vmem:[#allocation15] sm:$0xf]
        %v1381 = vlaneseq
        %v1382 = vshrl.u32 %v1381, 7
        %v1383 = vsub.s32 0, %v1382
        %v1384 = vrot.slane %v1379, %v1383
        %v1385 = vlaneseq
        %v1386 = vshrl.u32 %v1385, 7
        %v1387 = vsub.s32 1, %v1386
        %v1388 = vrot.slane %v1379, %v1387
        %v1389 = vlaneseq
        %v1390 = vshrl.u32 %v1389, 7
        %v1391 = vsub.s32 2, %v1390
        %v1392 = vrot.slane %v1379, %v1391
        %v1393 = vlaneseq
        %v1394 = vshrl.u32 %v1393, 7
        %v1395 = vsub.s32 3, %v1394
        %v1396 = vrot.slane %v1379, %v1395
        %v1401 = vadd.f32 %v1371, %v1384
        %v1402 = vadd.f32 %v1372, %v1388
        %v1403 = vadd.f32 %v1373, %v1392
        %v1404 = vadd.f32 %v1374, %v1396
        %v1405 = vadd.f32 %v1375, %v1384
        %v1406 = vadd.f32 %v1376, %v1388
        %v1407 = vadd.f32 %v1377, %v1392
        %v1408 = vadd.f32 %v1378, %v1396
        %v1409 = vmax.f32 %v1401, 0.0
        %v1410 = vmax.f32 %v1402, 0.0
        %v1411 = vmax.f32 %v1403, 0.0
        %v1412 = vmax.f32 %v1404, 0.0
        %v1413 = vmax.f32 %v1405, 0.0
        %v1414 = vmax.f32 %v1406, 0.0
        %v1415 = vmax.f32 %v1407, 0.0
        %v1416 = vmax.f32 %v1408, 0.0
        %v1417 = vpack.c.bf16 %v1413, %v1409
        %v1418 = vpack.c.bf16 %v1414, %v1410
        %v1419 = vpack.c.bf16 %v1415, %v1411
        %v1420 = vpack.c.bf16 %v1416, %v1412
        %v1421 = vld [vmem:[#allocation16] sm:$0xff]
        %v1422 = vld [vmem:[#allocation16 + $0x8] sm:$0xff]
        %v1423 = vld [vmem:[#allocation16 + $0x10] sm:$0xff]
        %v1424 = vld [vmem:[#allocation16 + $0x18] sm:$0xff]
        %v1425 = vld [vmem:[#allocation16 + $0x20] sm:$0xff]
        %v1426 = vld [vmem:[#allocation16 + $0x28] sm:$0xff]
        %v1427 = vld [vmem:[#allocation16 + $0x30] sm:$0xff]
        %v1428 = vld [vmem:[#allocation16 + $0x38] sm:$0xff]
        %v1429 = vld [vmem:[#allocation16 + $0x40] sm:$0xff]
        %v1430 = vld [vmem:[#allocation16 + $0x48] sm:$0xff]
        %v1431 = vld [vmem:[#allocation16 + $0x50] sm:$0xff]
        %v1432 = vld [vmem:[#allocation16 + $0x58] sm:$0xff]
        %v1433 = vld [vmem:[#allocation16 + $0x60] sm:$0xff]
        %v1434 = vld [vmem:[#allocation16 + $0x68] sm:$0xff]
        %v1435 = vld [vmem:[#allocation16 + $0x70] sm:$0xff]
        %v1436 = vld [vmem:[#allocation16 + $0x78] sm:$0xff]
        %v1437 = vld [vmem:[#allocation16 + $0x80] sm:$0xff]
        %v1438 = vld [vmem:[#allocation16 + $0x88] sm:$0xff]
        %v1439 = vld [vmem:[#allocation16 + $0x90] sm:$0xff]
        %v1440 = vld [vmem:[#allocation16 + $0x98] sm:$0xff]
        %v1441 = vld [vmem:[#allocation16 + $0xa0] sm:$0xff]
        %v1442 = vld [vmem:[#allocation16 + $0xa8] sm:$0xff]
        %v1443 = vld [vmem:[#allocation16 + $0xb0] sm:$0xff]
        %v1444 = vld [vmem:[#allocation16 + $0xb8] sm:$0xff]
        %v1445 = vld [vmem:[#allocation16 + $0xc0] sm:$0xff]
        %v1446 = vld [vmem:[#allocation16 + $0xc8] sm:$0xff]
        %v1447 = vld [vmem:[#allocation16 + $0xd0] sm:$0xff]
        %v1448 = vld [vmem:[#allocation16 + $0xd8] sm:$0xff]
        %v1449 = vld [vmem:[#allocation16 + $0xe0] sm:$0xff]
        %v1450 = vld [vmem:[#allocation16 + $0xe8] sm:$0xff]
        %v1451 = vld [vmem:[#allocation16 + $0xf0] sm:$0xff]
        %v1452 = vld [vmem:[#allocation16 + $0xf8] sm:$0xff]
        %v1453 = vld [vmem:[#allocation16 + $0x100] sm:$0xff]
        %v1454 = vld [vmem:[#allocation16 + $0x108] sm:$0xff]
        %v1455 = vld [vmem:[#allocation16 + $0x110] sm:$0xff]
        %v1456 = vld [vmem:[#allocation16 + $0x118] sm:$0xff]
        %v1457 = vld [vmem:[#allocation16 + $0x120] sm:$0xff]
        %v1458 = vld [vmem:[#allocation16 + $0x128] sm:$0xff]
        %v1459 = vld [vmem:[#allocation16 + $0x130] sm:$0xff]
        %v1460 = vld [vmem:[#allocation16 + $0x138] sm:$0xff]
        %v1461 = vld [vmem:[#allocation16 + $0x140] sm:$0xff]
        %v1462 = vld [vmem:[#allocation16 + $0x148] sm:$0xff]
        %v1463 = vld [vmem:[#allocation16 + $0x150] sm:$0xff]
        %v1464 = vld [vmem:[#allocation16 + $0x158] sm:$0xff]
        %v1465 = vld [vmem:[#allocation16 + $0x160] sm:$0xff]
        %v1466 = vld [vmem:[#allocation16 + $0x168] sm:$0xff]
        %v1467 = vld [vmem:[#allocation16 + $0x170] sm:$0xff]
        %v1468 = vld [vmem:[#allocation16 + $0x178] sm:$0xff]
        %v1469 = vld [vmem:[#allocation16 + $0x180] sm:$0xff]
        %v1470 = vld [vmem:[#allocation16 + $0x188] sm:$0xff]
        %v1471 = vld [vmem:[#allocation16 + $0x190] sm:$0xff]
        %v1472 = vld [vmem:[#allocation16 + $0x198] sm:$0xff]
        %v1473 = vld [vmem:[#allocation16 + $0x1a0] sm:$0xff]
        %v1474 = vld [vmem:[#allocation16 + $0x1a8] sm:$0xff]
        %v1475 = vld [vmem:[#allocation16 + $0x1b0] sm:$0xff]
        %v1476 = vld [vmem:[#allocation16 + $0x1b8] sm:$0xff]
        %v1477 = vld [vmem:[#allocation16 + $0x1c0] sm:$0xff]
        %v1478 = vld [vmem:[#allocation16 + $0x1c8] sm:$0xff]
        %v1479 = vld [vmem:[#allocation16 + $0x1d0] sm:$0xff]
        %v1480 = vld [vmem:[#allocation16 + $0x1d8] sm:$0xff]
        %v1481 = vld [vmem:[#allocation16 + $0x1e0] sm:$0xff]
        %v1482 = vld [vmem:[#allocation16 + $0x1e8] sm:$0xff]
        %v1483 = vld [vmem:[#allocation16 + $0x1f0] sm:$0xff]
        %v1484 = vld [vmem:[#allocation16 + $0x1f8] sm:$0xff]
        %v1485 = vld [vmem:[#allocation16 + $0x200] sm:$0xff]
        %v1486 = vld [vmem:[#allocation16 + $0x208] sm:$0xff]
        %v1487 = vld [vmem:[#allocation16 + $0x210] sm:$0xff]
        %v1488 = vld [vmem:[#allocation16 + $0x218] sm:$0xff]
        %v1489 = vld [vmem:[#allocation16 + $0x220] sm:$0xff]
        %v1490 = vld [vmem:[#allocation16 + $0x228] sm:$0xff]
        %v1491 = vld [vmem:[#allocation16 + $0x230] sm:$0xff]
        %v1492 = vld [vmem:[#allocation16 + $0x238] sm:$0xff]
        %v1493 = vld [vmem:[#allocation16 + $0x240] sm:$0xff]
        %v1494 = vld [vmem:[#allocation16 + $0x248] sm:$0xff]
        %v1495 = vld [vmem:[#allocation16 + $0x250] sm:$0xff]
        %v1496 = vld [vmem:[#allocation16 + $0x258] sm:$0xff]
        %v1497 = vld [vmem:[#allocation16 + $0x260] sm:$0xff]
        %v1498 = vld [vmem:[#allocation16 + $0x268] sm:$0xff]
        %v1499 = vld [vmem:[#allocation16 + $0x270] sm:$0xff]
        %v1500 = vld [vmem:[#allocation16 + $0x278] sm:$0xff]
        %v1501 = vld [vmem:[#allocation16 + $0x280] sm:$0xff]
        %v1502 = vld [vmem:[#allocation16 + $0x288] sm:$0xff]
        %v1503 = vld [vmem:[#allocation16 + $0x290] sm:$0xff]
        %v1504 = vld [vmem:[#allocation16 + $0x298] sm:$0xff]
        %v1505 = vld [vmem:[#allocation16 + $0x2a0] sm:$0xff]
        %v1506 = vld [vmem:[#allocation16 + $0x2a8] sm:$0xff]
        %v1507 = vld [vmem:[#allocation16 + $0x2b0] sm:$0xff]
        %v1508 = vld [vmem:[#allocation16 + $0x2b8] sm:$0xff]
        %v1509 = vld [vmem:[#allocation16 + $0x2c0] sm:$0xff]
        %v1510 = vld [vmem:[#allocation16 + $0x2c8] sm:$0xff]
        %v1511 = vld [vmem:[#allocation16 + $0x2d0] sm:$0xff]
        %v1512 = vld [vmem:[#allocation16 + $0x2d8] sm:$0xff]
        %v1513 = vld [vmem:[#allocation16 + $0x2e0] sm:$0xff]
        %v1514 = vld [vmem:[#allocation16 + $0x2e8] sm:$0xff]
        %v1515 = vld [vmem:[#allocation16 + $0x2f0] sm:$0xff]
        %v1516 = vld [vmem:[#allocation16 + $0x2f8] sm:$0xff]
        %v1517 = vld [vmem:[#allocation16 + $0x300] sm:$0xff]
        %v1518 = vld [vmem:[#allocation16 + $0x308] sm:$0xff]
        %v1519 = vld [vmem:[#allocation16 + $0x310] sm:$0xff]
        %v1520 = vld [vmem:[#allocation16 + $0x318] sm:$0xff]
        %v1521 = vld [vmem:[#allocation16 + $0x320] sm:$0xff]
        %v1522 = vld [vmem:[#allocation16 + $0x328] sm:$0xff]
        %v1523 = vld [vmem:[#allocation16 + $0x330] sm:$0xff]
        %v1524 = vld [vmem:[#allocation16 + $0x338] sm:$0xff]
        %v1525 = vld [vmem:[#allocation16 + $0x340] sm:$0xff]
        %v1526 = vld [vmem:[#allocation16 + $0x348] sm:$0xff]
        %v1527 = vld [vmem:[#allocation16 + $0x350] sm:$0xff]
        %v1528 = vld [vmem:[#allocation16 + $0x358] sm:$0xff]
        %v1529 = vld [vmem:[#allocation16 + $0x360] sm:$0xff]
        %v1530 = vld [vmem:[#allocation16 + $0x368] sm:$0xff]
        %v1531 = vld [vmem:[#allocation16 + $0x370] sm:$0xff]
        %v1532 = vld [vmem:[#allocation16 + $0x378] sm:$0xff]
        %v1533 = vld [vmem:[#allocation16 + $0x380] sm:$0xff]
        %v1534 = vld [vmem:[#allocation16 + $0x388] sm:$0xff]
        %v1535 = vld [vmem:[#allocation16 + $0x390] sm:$0xff]
        %v1536 = vld [vmem:[#allocation16 + $0x398] sm:$0xff]
        %v1537 = vld [vmem:[#allocation16 + $0x3a0] sm:$0xff]
        %v1538 = vld [vmem:[#allocation16 + $0x3a8] sm:$0xff]
        %v1539 = vld [vmem:[#allocation16 + $0x3b0] sm:$0xff]
        %v1540 = vld [vmem:[#allocation16 + $0x3b8] sm:$0xff]
        %v1541 = vld [vmem:[#allocation16 + $0x3c0] sm:$0xff]
        %v1542 = vld [vmem:[#allocation16 + $0x3c8] sm:$0xff]
        %v1543 = vld [vmem:[#allocation16 + $0x3d0] sm:$0xff]
        %v1544 = vld [vmem:[#allocation16 + $0x3d8] sm:$0xff]
        %v1545 = vld [vmem:[#allocation16 + $0x3e0] sm:$0xff]
        %v1546 = vld [vmem:[#allocation16 + $0x3e8] sm:$0xff]
        %v1547 = vld [vmem:[#allocation16 + $0x3f0] sm:$0xff]
        %v1548 = vld [vmem:[#allocation16 + $0x3f8] sm:$0xff]
        %v1549 = vld [vmem:[#allocation16 + $0x400] sm:$0xff]
        %v1550 = vld [vmem:[#allocation16 + $0x408] sm:$0xff]
        %v1551 = vld [vmem:[#allocation16 + $0x410] sm:$0xff]
        %v1552 = vld [vmem:[#allocation16 + $0x418] sm:$0xff]
        %v1553 = vld [vmem:[#allocation16 + $0x420] sm:$0xff]
        %v1554 = vld [vmem:[#allocation16 + $0x428] sm:$0xff]
        %v1555 = vld [vmem:[#allocation16 + $0x430] sm:$0xff]
        %v1556 = vld [vmem:[#allocation16 + $0x438] sm:$0xff]
        %v1557 = vld [vmem:[#allocation16 + $0x440] sm:$0xff]
        %v1558 = vld [vmem:[#allocation16 + $0x448] sm:$0xff]
        %v1559 = vld [vmem:[#allocation16 + $0x450] sm:$0xff]
        %v1560 = vld [vmem:[#allocation16 + $0x458] sm:$0xff]
        %v1561 = vld [vmem:[#allocation16 + $0x460] sm:$0xff]
        %v1562 = vld [vmem:[#allocation16 + $0x468] sm:$0xff]
        %v1563 = vld [vmem:[#allocation16 + $0x470] sm:$0xff]
        %v1564 = vld [vmem:[#allocation16 + $0x478] sm:$0xff]
        %v1565 = vld [vmem:[#allocation16 + $0x480] sm:$0xff]
        %v1566 = vld [vmem:[#allocation16 + $0x488] sm:$0xff]
        %v1567 = vld [vmem:[#allocation16 + $0x490] sm:$0xff]
        %v1568 = vld [vmem:[#allocation16 + $0x498] sm:$0xff]
        %v1569 = vld [vmem:[#allocation16 + $0x4a0] sm:$0xff]
        %v1570 = vld [vmem:[#allocation16 + $0x4a8] sm:$0xff]
        %v1571 = vld [vmem:[#allocation16 + $0x4b0] sm:$0xff]
        %v1572 = vld [vmem:[#allocation16 + $0x4b8] sm:$0xff]
        %v1573 = vld [vmem:[#allocation16 + $0x4c0] sm:$0xff]
        %v1574 = vld [vmem:[#allocation16 + $0x4c8] sm:$0xff]
        %v1575 = vld [vmem:[#allocation16 + $0x4d0] sm:$0xff]
        %v1576 = vld [vmem:[#allocation16 + $0x4d8] sm:$0xff]
        %v1577 = vld [vmem:[#allocation16 + $0x4e0] sm:$0xff]
        %v1578 = vld [vmem:[#allocation16 + $0x4e8] sm:$0xff]
        %v1579 = vld [vmem:[#allocation16 + $0x4f0] sm:$0xff]
        %v1580 = vld [vmem:[#allocation16 + $0x4f8] sm:$0xff]
        %v1581 = vld [vmem:[#allocation16 + $0x500] sm:$0xff]
        %v1582 = vld [vmem:[#allocation16 + $0x508] sm:$0xff]
        %v1583 = vld [vmem:[#allocation16 + $0x510] sm:$0xff]
        %v1584 = vld [vmem:[#allocation16 + $0x518] sm:$0xff]
        %v1585 = vld [vmem:[#allocation16 + $0x520] sm:$0xff]
        %v1586 = vld [vmem:[#allocation16 + $0x528] sm:$0xff]
        %v1587 = vld [vmem:[#allocation16 + $0x530] sm:$0xff]
        %v1588 = vld [vmem:[#allocation16 + $0x538] sm:$0xff]
        %v1589 = vld [vmem:[#allocation16 + $0x540] sm:$0xff]
        %v1590 = vld [vmem:[#allocation16 + $0x548] sm:$0xff]
        %v1591 = vld [vmem:[#allocation16 + $0x550] sm:$0xff]
        %v1592 = vld [vmem:[#allocation16 + $0x558] sm:$0xff]
        %v1593 = vld [vmem:[#allocation16 + $0x560] sm:$0xff]
        %v1594 = vld [vmem:[#allocation16 + $0x568] sm:$0xff]
        %v1595 = vld [vmem:[#allocation16 + $0x570] sm:$0xff]
        %v1596 = vld [vmem:[#allocation16 + $0x578] sm:$0xff]
        %v1597 = vld [vmem:[#allocation16 + $0x580] sm:$0xff]
        %v1598 = vld [vmem:[#allocation16 + $0x588] sm:$0xff]
        %v1599 = vld [vmem:[#allocation16 + $0x590] sm:$0xff]
        %v1600 = vld [vmem:[#allocation16 + $0x598] sm:$0xff]
        %v1601 = vld [vmem:[#allocation16 + $0x5a0] sm:$0xff]
        %v1602 = vld [vmem:[#allocation16 + $0x5a8] sm:$0xff]
        %v1603 = vld [vmem:[#allocation16 + $0x5b0] sm:$0xff]
        %v1604 = vld [vmem:[#allocation16 + $0x5b8] sm:$0xff]
        %v1605 = vld [vmem:[#allocation16 + $0x5c0] sm:$0xff]
        %v1606 = vld [vmem:[#allocation16 + $0x5c8] sm:$0xff]
        %v1607 = vld [vmem:[#allocation16 + $0x5d0] sm:$0xff]
        %v1608 = vld [vmem:[#allocation16 + $0x5d8] sm:$0xff]
        %v1609 = vld [vmem:[#allocation16 + $0x5e0] sm:$0xff]
        %v1610 = vld [vmem:[#allocation16 + $0x5e8] sm:$0xff]
        %v1611 = vld [vmem:[#allocation16 + $0x5f0] sm:$0xff]
        %v1612 = vld [vmem:[#allocation16 + $0x5f8] sm:$0xff]
        %v1613 = vld [vmem:[#allocation16 + $0x600] sm:$0xff]
        %v1614 = vld [vmem:[#allocation16 + $0x608] sm:$0xff]
        %v1615 = vld [vmem:[#allocation16 + $0x610] sm:$0xff]
        %v1616 = vld [vmem:[#allocation16 + $0x618] sm:$0xff]
        %v1617 = vld [vmem:[#allocation16 + $0x620] sm:$0xff]
        %v1618 = vld [vmem:[#allocation16 + $0x628] sm:$0xff]
        %v1619 = vld [vmem:[#allocation16 + $0x630] sm:$0xff]
        %v1620 = vld [vmem:[#allocation16 + $0x638] sm:$0xff]
        %v1621 = vld [vmem:[#allocation16 + $0x640] sm:$0xff]
        %v1622 = vld [vmem:[#allocation16 + $0x648] sm:$0xff]
        %v1623 = vld [vmem:[#allocation16 + $0x650] sm:$0xff]
        %v1624 = vld [vmem:[#allocation16 + $0x658] sm:$0xff]
        %v1625 = vld [vmem:[#allocation16 + $0x660] sm:$0xff]
        %v1626 = vld [vmem:[#allocation16 + $0x668] sm:$0xff]
        %v1627 = vld [vmem:[#allocation16 + $0x670] sm:$0xff]
        %v1628 = vld [vmem:[#allocation16 + $0x678] sm:$0xff]
        %v1629 = vld [vmem:[#allocation16 + $0x680] sm:$0xff]
        %v1630 = vld [vmem:[#allocation16 + $0x688] sm:$0xff]
        %v1631 = vld [vmem:[#allocation16 + $0x690] sm:$0xff]
        %v1632 = vld [vmem:[#allocation16 + $0x698] sm:$0xff]
        %v1633 = vld [vmem:[#allocation16 + $0x6a0] sm:$0xff]
        %v1634 = vld [vmem:[#allocation16 + $0x6a8] sm:$0xff]
        %v1635 = vld [vmem:[#allocation16 + $0x6b0] sm:$0xff]
        %v1636 = vld [vmem:[#allocation16 + $0x6b8] sm:$0xff]
        %v1637 = vld [vmem:[#allocation16 + $0x6c0] sm:$0xff]
        %v1638 = vld [vmem:[#allocation16 + $0x6c8] sm:$0xff]
        %v1639 = vld [vmem:[#allocation16 + $0x6d0] sm:$0xff]
        %v1640 = vld [vmem:[#allocation16 + $0x6d8] sm:$0xff]
        %v1641 = vld [vmem:[#allocation16 + $0x6e0] sm:$0xff]
        %v1642 = vld [vmem:[#allocation16 + $0x6e8] sm:$0xff]
        %v1643 = vld [vmem:[#allocation16 + $0x6f0] sm:$0xff]
        %v1644 = vld [vmem:[#allocation16 + $0x6f8] sm:$0xff]
        %v1645 = vld [vmem:[#allocation16 + $0x700] sm:$0xff]
        %v1646 = vld [vmem:[#allocation16 + $0x708] sm:$0xff]
        %v1647 = vld [vmem:[#allocation16 + $0x710] sm:$0xff]
        %v1648 = vld [vmem:[#allocation16 + $0x718] sm:$0xff]
        %v1649 = vld [vmem:[#allocation16 + $0x720] sm:$0xff]
        %v1650 = vld [vmem:[#allocation16 + $0x728] sm:$0xff]
        %v1651 = vld [vmem:[#allocation16 + $0x730] sm:$0xff]
        %v1652 = vld [vmem:[#allocation16 + $0x738] sm:$0xff]
        %v1653 = vld [vmem:[#allocation16 + $0x740] sm:$0xff]
        %v1654 = vld [vmem:[#allocation16 + $0x748] sm:$0xff]
        %v1655 = vld [vmem:[#allocation16 + $0x750] sm:$0xff]
        %v1656 = vld [vmem:[#allocation16 + $0x758] sm:$0xff]
        %v1657 = vld [vmem:[#allocation16 + $0x760] sm:$0xff]
        %v1658 = vld [vmem:[#allocation16 + $0x768] sm:$0xff]
        %v1659 = vld [vmem:[#allocation16 + $0x770] sm:$0xff]
        %v1660 = vld [vmem:[#allocation16 + $0x778] sm:$0xff]
        %v1661 = vld [vmem:[#allocation16 + $0x780] sm:$0xff]
        %v1662 = vld [vmem:[#allocation16 + $0x788] sm:$0xff]
        %v1663 = vld [vmem:[#allocation16 + $0x790] sm:$0xff]
        %v1664 = vld [vmem:[#allocation16 + $0x798] sm:$0xff]
        %v1665 = vld [vmem:[#allocation16 + $0x7a0] sm:$0xff]
        %v1666 = vld [vmem:[#allocation16 + $0x7a8] sm:$0xff]
        %v1667 = vld [vmem:[#allocation16 + $0x7b0] sm:$0xff]
        %v1668 = vld [vmem:[#allocation16 + $0x7b8] sm:$0xff]
        %v1669 = vld [vmem:[#allocation16 + $0x7c0] sm:$0xff]
        %v1670 = vld [vmem:[#allocation16 + $0x7c8] sm:$0xff]
        %v1671 = vld [vmem:[#allocation16 + $0x7d0] sm:$0xff]
        %v1672 = vld [vmem:[#allocation16 + $0x7d8] sm:$0xff]
        %v1673 = vld [vmem:[#allocation16 + $0x7e0] sm:$0xff]
        %v1674 = vld [vmem:[#allocation16 + $0x7e8] sm:$0xff]
        %v1675 = vld [vmem:[#allocation16 + $0x7f0] sm:$0xff]
        %v1676 = vld [vmem:[#allocation16 + $0x7f8] sm:$0xff]
        %v1677 = vld [vmem:[#allocation16 + $0x800] sm:$0xff]
        %v1678 = vld [vmem:[#allocation16 + $0x808] sm:$0xff]
        %v1679 = vld [vmem:[#allocation16 + $0x810] sm:$0xff]
        %v1680 = vld [vmem:[#allocation16 + $0x818] sm:$0xff]
        %v1681 = vld [vmem:[#allocation16 + $0x820] sm:$0xff]
        %v1682 = vld [vmem:[#allocation16 + $0x828] sm:$0xff]
        %v1683 = vld [vmem:[#allocation16 + $0x830] sm:$0xff]
        %v1684 = vld [vmem:[#allocation16 + $0x838] sm:$0xff]
        %v1685 = vld [vmem:[#allocation16 + $0x840] sm:$0xff]
        %v1686 = vld [vmem:[#allocation16 + $0x848] sm:$0xff]
        %v1687 = vld [vmem:[#allocation16 + $0x850] sm:$0xff]
        %v1688 = vld [vmem:[#allocation16 + $0x858] sm:$0xff]
        %v1689 = vld [vmem:[#allocation16 + $0x860] sm:$0xff]
        %v1690 = vld [vmem:[#allocation16 + $0x868] sm:$0xff]
        %v1691 = vld [vmem:[#allocation16 + $0x870] sm:$0xff]
        %v1692 = vld [vmem:[#allocation16 + $0x878] sm:$0xff]
        %v1693 = vld [vmem:[#allocation16 + $0x880] sm:$0xff]
        %v1694 = vld [vmem:[#allocation16 + $0x888] sm:$0xff]
        %v1695 = vld [vmem:[#allocation16 + $0x890] sm:$0xff]
        %v1696 = vld [vmem:[#allocation16 + $0x898] sm:$0xff]
        %v1697 = vld [vmem:[#allocation16 + $0x8a0] sm:$0xff]
        %v1698 = vld [vmem:[#allocation16 + $0x8a8] sm:$0xff]
        %v1699 = vld [vmem:[#allocation16 + $0x8b0] sm:$0xff]
        %v1700 = vld [vmem:[#allocation16 + $0x8b8] sm:$0xff]
        %v1701 = vld [vmem:[#allocation16 + $0x8c0] sm:$0xff]
        %v1702 = vld [vmem:[#allocation16 + $0x8c8] sm:$0xff]
        %v1703 = vld [vmem:[#allocation16 + $0x8d0] sm:$0xff]
        %v1704 = vld [vmem:[#allocation16 + $0x8d8] sm:$0xff]
        %v1705 = vld [vmem:[#allocation16 + $0x8e0] sm:$0xff]
        %v1706 = vld [vmem:[#allocation16 + $0x8e8] sm:$0xff]
        %v1707 = vld [vmem:[#allocation16 + $0x8f0] sm:$0xff]
        %v1708 = vld [vmem:[#allocation16 + $0x8f8] sm:$0xff]
        %v1709 = vld [vmem:[#allocation16 + $0x900] sm:$0xff]
        %v1710 = vld [vmem:[#allocation16 + $0x908] sm:$0xff]
        %v1711 = vld [vmem:[#allocation16 + $0x910] sm:$0xff]
        %v1712 = vld [vmem:[#allocation16 + $0x918] sm:$0xff]
        %v1713 = vld [vmem:[#allocation16 + $0x920] sm:$0xff]
        %v1714 = vld [vmem:[#allocation16 + $0x928] sm:$0xff]
        %v1715 = vld [vmem:[#allocation16 + $0x930] sm:$0xff]
        %v1716 = vld [vmem:[#allocation16 + $0x938] sm:$0xff]
        %v1717 = vld [vmem:[#allocation16 + $0x940] sm:$0xff]
        %v1718 = vld [vmem:[#allocation16 + $0x948] sm:$0xff]
        %v1719 = vld [vmem:[#allocation16 + $0x950] sm:$0xff]
        %v1720 = vld [vmem:[#allocation16 + $0x958] sm:$0xff]
        %v1721 = vld [vmem:[#allocation16 + $0x960] sm:$0xff]
        %v1722 = vld [vmem:[#allocation16 + $0x968] sm:$0xff]
        %v1723 = vld [vmem:[#allocation16 + $0x970] sm:$0xff]
        %v1724 = vld [vmem:[#allocation16 + $0x978] sm:$0xff]
        %v1725 = vld [vmem:[#allocation16 + $0x980] sm:$0xff]
        %v1726 = vld [vmem:[#allocation16 + $0x988] sm:$0xff]
        %v1727 = vld [vmem:[#allocation16 + $0x990] sm:$0xff]
        %v1728 = vld [vmem:[#allocation16 + $0x998] sm:$0xff]
        %v1729 = vld [vmem:[#allocation16 + $0x9a0] sm:$0xff]
        %v1730 = vld [vmem:[#allocation16 + $0x9a8] sm:$0xff]
        %v1731 = vld [vmem:[#allocation16 + $0x9b0] sm:$0xff]
        %v1732 = vld [vmem:[#allocation16 + $0x9b8] sm:$0xff]
        %v1733 = vld [vmem:[#allocation16 + $0x9c0] sm:$0xff]
        %v1734 = vld [vmem:[#allocation16 + $0x9c8] sm:$0xff]
        %v1735 = vld [vmem:[#allocation16 + $0x9d0] sm:$0xff]
        %v1736 = vld [vmem:[#allocation16 + $0x9d8] sm:$0xff]
        %v1737 = vld [vmem:[#allocation16 + $0x9e0] sm:$0xff]
        %v1738 = vld [vmem:[#allocation16 + $0x9e8] sm:$0xff]
        %v1739 = vld [vmem:[#allocation16 + $0x9f0] sm:$0xff]
        %v1740 = vld [vmem:[#allocation16 + $0x9f8] sm:$0xff]
        %v2061 = vunpack.c.l.b16 %v1421
        %v2062 = vunpack.c.h.b16 %v1421
        %v2063 = vunpack.c.l.b16 %v1422
        %v2064 = vunpack.c.h.b16 %v1422
        %v2065 = vunpack.c.l.b16 %v1423
        %v2066 = vunpack.c.h.b16 %v1423
        %v2067 = vunpack.c.l.b16 %v1424
        %v2068 = vunpack.c.h.b16 %v1424
        %v2069 = vunpack.c.l.b16 %v1425
        %v2070 = vunpack.c.h.b16 %v1425
        %v2071 = vunpack.c.l.b16 %v1426
        %v2072 = vunpack.c.h.b16 %v1426
        %v2073 = vunpack.c.l.b16 %v1427
        %v2074 = vunpack.c.h.b16 %v1427
        %v2075 = vunpack.c.l.b16 %v1428
        %v2076 = vunpack.c.h.b16 %v1428
        %v2077 = vunpack.c.l.b16 %v1429
        %v2078 = vunpack.c.h.b16 %v1429
        %v2079 = vunpack.c.l.b16 %v1430
        %v2080 = vunpack.c.h.b16 %v1430
        %v2081 = vunpack.c.l.b16 %v1431
        %v2082 = vunpack.c.h.b16 %v1431
        %v2083 = vunpack.c.l.b16 %v1432
        %v2084 = vunpack.c.h.b16 %v1432
        %v2085 = vunpack.c.l.b16 %v1433
        %v2086 = vunpack.c.h.b16 %v1433
        %v2087 = vunpack.c.l.b16 %v1434
        %v2088 = vunpack.c.h.b16 %v1434
        %v2089 = vunpack.c.l.b16 %v1435
        %v2090 = vunpack.c.h.b16 %v1435
        %v2091 = vunpack.c.l.b16 %v1436
        %v2092 = vunpack.c.h.b16 %v1436
        %v2093 = vunpack.c.l.b16 %v1437
        %v2094 = vunpack.c.h.b16 %v1437
        %v2095 = vunpack.c.l.b16 %v1438
        %v2096 = vunpack.c.h.b16 %v1438
        %v2097 = vunpack.c.l.b16 %v1439
        %v2098 = vunpack.c.h.b16 %v1439
        %v2099 = vunpack.c.l.b16 %v1440
        %v2100 = vunpack.c.h.b16 %v1440
        %v2101 = vunpack.c.l.b16 %v1441
        %v2102 = vunpack.c.h.b16 %v1441
        %v2103 = vunpack.c.l.b16 %v1442
        %v2104 = vunpack.c.h.b16 %v1442
        %v2105 = vunpack.c.l.b16 %v1443
        %v2106 = vunpack.c.h.b16 %v1443
        %v2107 = vunpack.c.l.b16 %v1444
        %v2108 = vunpack.c.h.b16 %v1444
        %v2109 = vunpack.c.l.b16 %v1445
        %v2110 = vunpack.c.h.b16 %v1445
        %v2111 = vunpack.c.l.b16 %v1446
        %v2112 = vunpack.c.h.b16 %v1446
        %v2113 = vunpack.c.l.b16 %v1447
        %v2114 = vunpack.c.h.b16 %v1447
        %v2115 = vunpack.c.l.b16 %v1448
        %v2116 = vunpack.c.h.b16 %v1448
        %v2117 = vunpack.c.l.b16 %v1449
        %v2118 = vunpack.c.h.b16 %v1449
        %v2119 = vunpack.c.l.b16 %v1450
        %v2120 = vunpack.c.h.b16 %v1450
        %v2121 = vunpack.c.l.b16 %v1451
        %v2122 = vunpack.c.h.b16 %v1451
        %v2123 = vunpack.c.l.b16 %v1452
        %v2124 = vunpack.c.h.b16 %v1452
        %v2125 = vunpack.c.l.b16 %v1453
        %v2126 = vunpack.c.h.b16 %v1453
        %v2127 = vunpack.c.l.b16 %v1454
        %v2128 = vunpack.c.h.b16 %v1454
        %v2129 = vunpack.c.l.b16 %v1455
        %v2130 = vunpack.c.h.b16 %v1455
        %v2131 = vunpack.c.l.b16 %v1456
        %v2132 = vunpack.c.h.b16 %v1456
        %v2133 = vunpack.c.l.b16 %v1457
        %v2134 = vunpack.c.h.b16 %v1457
        %v2135 = vunpack.c.l.b16 %v1458
        %v2136 = vunpack.c.h.b16 %v1458
        %v2137 = vunpack.c.l.b16 %v1459
        %v2138 = vunpack.c.h.b16 %v1459
        %v2139 = vunpack.c.l.b16 %v1460
        %v2140 = vunpack.c.h.b16 %v1460
        %v2141 = vunpack.c.l.b16 %v1461
        %v2142 = vunpack.c.h.b16 %v1461
        %v2143 = vunpack.c.l.b16 %v1462
        %v2144 = vunpack.c.h.b16 %v1462
        %v2145 = vunpack.c.l.b16 %v1463
        %v2146 = vunpack.c.h.b16 %v1463
        %v2147 = vunpack.c.l.b16 %v1464
        %v2148 = vunpack.c.h.b16 %v1464
        %v2149 = vunpack.c.l.b16 %v1465
        %v2150 = vunpack.c.h.b16 %v1465
        %v2151 = vunpack.c.l.b16 %v1466
        %v2152 = vunpack.c.h.b16 %v1466
        %v2153 = vunpack.c.l.b16 %v1467
        %v2154 = vunpack.c.h.b16 %v1467
        %v2155 = vunpack.c.l.b16 %v1468
        %v2156 = vunpack.c.h.b16 %v1468
        %v2157 = vunpack.c.l.b16 %v1469
        %v2158 = vunpack.c.h.b16 %v1469
        %v2159 = vunpack.c.l.b16 %v1470
        %v2160 = vunpack.c.h.b16 %v1470
        %v2161 = vunpack.c.l.b16 %v1471
        %v2162 = vunpack.c.h.b16 %v1471
        %v2163 = vunpack.c.l.b16 %v1472
        %v2164 = vunpack.c.h.b16 %v1472
        %v2165 = vunpack.c.l.b16 %v1473
        %v2166 = vunpack.c.h.b16 %v1473
        %v2167 = vunpack.c.l.b16 %v1474
        %v2168 = vunpack.c.h.b16 %v1474
        %v2169 = vunpack.c.l.b16 %v1475
        %v2170 = vunpack.c.h.b16 %v1475
        %v2171 = vunpack.c.l.b16 %v1476
        %v2172 = vunpack.c.h.b16 %v1476
        %v2173 = vunpack.c.l.b16 %v1477
        %v2174 = vunpack.c.h.b16 %v1477
        %v2175 = vunpack.c.l.b16 %v1478
        %v2176 = vunpack.c.h.b16 %v1478
        %v2177 = vunpack.c.l.b16 %v1479
        %v2178 = vunpack.c.h.b16 %v1479
        %v2179 = vunpack.c.l.b16 %v1480
        %v2180 = vunpack.c.h.b16 %v1480
        %v2181 = vunpack.c.l.b16 %v1481
        %v2182 = vunpack.c.h.b16 %v1481
        %v2183 = vunpack.c.l.b16 %v1482
        %v2184 = vunpack.c.h.b16 %v1482
        %v2185 = vunpack.c.l.b16 %v1483
        %v2186 = vunpack.c.h.b16 %v1483
        %v2187 = vunpack.c.l.b16 %v1484
        %v2188 = vunpack.c.h.b16 %v1484
        %v2189 = vunpack.c.l.b16 %v1485
        %v2190 = vunpack.c.h.b16 %v1485
        %v2191 = vunpack.c.l.b16 %v1486
        %v2192 = vunpack.c.h.b16 %v1486
        %v2193 = vunpack.c.l.b16 %v1487
        %v2194 = vunpack.c.h.b16 %v1487
        %v2195 = vunpack.c.l.b16 %v1488
        %v2196 = vunpack.c.h.b16 %v1488
        %v2197 = vunpack.c.l.b16 %v1489
        %v2198 = vunpack.c.h.b16 %v1489
        %v2199 = vunpack.c.l.b16 %v1490
        %v2200 = vunpack.c.h.b16 %v1490
        %v2201 = vunpack.c.l.b16 %v1491
        %v2202 = vunpack.c.h.b16 %v1491
        %v2203 = vunpack.c.l.b16 %v1492
        %v2204 = vunpack.c.h.b16 %v1492
        %v2205 = vunpack.c.l.b16 %v1493
        %v2206 = vunpack.c.h.b16 %v1493
        %v2207 = vunpack.c.l.b16 %v1494
        %v2208 = vunpack.c.h.b16 %v1494
        %v2209 = vunpack.c.l.b16 %v1495
        %v2210 = vunpack.c.h.b16 %v1495
        %v2211 = vunpack.c.l.b16 %v1496
        %v2212 = vunpack.c.h.b16 %v1496
        %v2213 = vunpack.c.l.b16 %v1497
        %v2214 = vunpack.c.h.b16 %v1497
        %v2215 = vunpack.c.l.b16 %v1498
        %v2216 = vunpack.c.h.b16 %v1498
        %v2217 = vunpack.c.l.b16 %v1499
        %v2218 = vunpack.c.h.b16 %v1499
        %v2219 = vunpack.c.l.b16 %v1500
        %v2220 = vunpack.c.h.b16 %v1500
        %v2221 = vunpack.c.l.b16 %v1501
        %v2222 = vunpack.c.h.b16 %v1501
        %v2223 = vunpack.c.l.b16 %v1502
        %v2224 = vunpack.c.h.b16 %v1502
        %v2225 = vunpack.c.l.b16 %v1503
        %v2226 = vunpack.c.h.b16 %v1503
        %v2227 = vunpack.c.l.b16 %v1504
        %v2228 = vunpack.c.h.b16 %v1504
        %v2229 = vunpack.c.l.b16 %v1505
        %v2230 = vunpack.c.h.b16 %v1505
        %v2231 = vunpack.c.l.b16 %v1506
        %v2232 = vunpack.c.h.b16 %v1506
        %v2233 = vunpack.c.l.b16 %v1507
        %v2234 = vunpack.c.h.b16 %v1507
        %v2235 = vunpack.c.l.b16 %v1508
        %v2236 = vunpack.c.h.b16 %v1508
        %v2237 = vunpack.c.l.b16 %v1509
        %v2238 = vunpack.c.h.b16 %v1509
        %v2239 = vunpack.c.l.b16 %v1510
        %v2240 = vunpack.c.h.b16 %v1510
        %v2241 = vunpack.c.l.b16 %v1511
        %v2242 = vunpack.c.h.b16 %v1511
        %v2243 = vunpack.c.l.b16 %v1512
        %v2244 = vunpack.c.h.b16 %v1512
        %v2245 = vunpack.c.l.b16 %v1513
        %v2246 = vunpack.c.h.b16 %v1513
        %v2247 = vunpack.c.l.b16 %v1514
        %v2248 = vunpack.c.h.b16 %v1514
        %v2249 = vunpack.c.l.b16 %v1515
        %v2250 = vunpack.c.h.b16 %v1515
        %v2251 = vunpack.c.l.b16 %v1516
        %v2252 = vunpack.c.h.b16 %v1516
        %v2253 = vunpack.c.l.b16 %v1517
        %v2254 = vunpack.c.h.b16 %v1517
        %v2255 = vunpack.c.l.b16 %v1518
        %v2256 = vunpack.c.h.b16 %v1518
        %v2257 = vunpack.c.l.b16 %v1519
        %v2258 = vunpack.c.h.b16 %v1519
        %v2259 = vunpack.c.l.b16 %v1520
        %v2260 = vunpack.c.h.b16 %v1520
        %v2261 = vunpack.c.l.b16 %v1521
        %v2262 = vunpack.c.h.b16 %v1521
        %v2263 = vunpack.c.l.b16 %v1522
        %v2264 = vunpack.c.h.b16 %v1522
        %v2265 = vunpack.c.l.b16 %v1523
        %v2266 = vunpack.c.h.b16 %v1523
        %v2267 = vunpack.c.l.b16 %v1524
        %v2268 = vunpack.c.h.b16 %v1524
        %v2269 = vunpack.c.l.b16 %v1525
        %v2270 = vunpack.c.h.b16 %v1525
        %v2271 = vunpack.c.l.b16 %v1526
        %v2272 = vunpack.c.h.b16 %v1526
        %v2273 = vunpack.c.l.b16 %v1527
        %v2274 = vunpack.c.h.b16 %v1527
        %v2275 = vunpack.c.l.b16 %v1528
        %v2276 = vunpack.c.h.b16 %v1528
        %v2277 = vunpack.c.l.b16 %v1529
        %v2278 = vunpack.c.h.b16 %v1529
        %v2279 = vunpack.c.l.b16 %v1530
        %v2280 = vunpack.c.h.b16 %v1530
        %v2281 = vunpack.c.l.b16 %v1531
        %v2282 = vunpack.c.h.b16 %v1531
        %v2283 = vunpack.c.l.b16 %v1532
        %v2284 = vunpack.c.h.b16 %v1532
        %v2285 = vunpack.c.l.b16 %v1533
        %v2286 = vunpack.c.h.b16 %v1533
        %v2287 = vunpack.c.l.b16 %v1534
        %v2288 = vunpack.c.h.b16 %v1534
        %v2289 = vunpack.c.l.b16 %v1535
        %v2290 = vunpack.c.h.b16 %v1535
        %v2291 = vunpack.c.l.b16 %v1536
        %v2292 = vunpack.c.h.b16 %v1536
        %v2293 = vunpack.c.l.b16 %v1537
        %v2294 = vunpack.c.h.b16 %v1537
        %v2295 = vunpack.c.l.b16 %v1538
        %v2296 = vunpack.c.h.b16 %v1538
        %v2297 = vunpack.c.l.b16 %v1539
        %v2298 = vunpack.c.h.b16 %v1539
        %v2299 = vunpack.c.l.b16 %v1540
        %v2300 = vunpack.c.h.b16 %v1540
        %v2301 = vunpack.c.l.b16 %v1541
        %v2302 = vunpack.c.h.b16 %v1541
        %v2303 = vunpack.c.l.b16 %v1542
        %v2304 = vunpack.c.h.b16 %v1542
        %v2305 = vunpack.c.l.b16 %v1543
        %v2306 = vunpack.c.h.b16 %v1543
        %v2307 = vunpack.c.l.b16 %v1544
        %v2308 = vunpack.c.h.b16 %v1544
        %v2309 = vunpack.c.l.b16 %v1545
        %v2310 = vunpack.c.h.b16 %v1545
        %v2311 = vunpack.c.l.b16 %v1546
        %v2312 = vunpack.c.h.b16 %v1546
        %v2313 = vunpack.c.l.b16 %v1547
        %v2314 = vunpack.c.h.b16 %v1547
        %v2315 = vunpack.c.l.b16 %v1548
        %v2316 = vunpack.c.h.b16 %v1548
        %v2317 = vunpack.c.l.b16 %v1549
        %v2318 = vunpack.c.h.b16 %v1549
        %v2319 = vunpack.c.l.b16 %v1550
        %v2320 = vunpack.c.h.b16 %v1550
        %v2321 = vunpack.c.l.b16 %v1551
        %v2322 = vunpack.c.h.b16 %v1551
        %v2323 = vunpack.c.l.b16 %v1552
        %v2324 = vunpack.c.h.b16 %v1552
        %v2325 = vunpack.c.l.b16 %v1553
        %v2326 = vunpack.c.h.b16 %v1553
        %v2327 = vunpack.c.l.b16 %v1554
        %v2328 = vunpack.c.h.b16 %v1554
        %v2329 = vunpack.c.l.b16 %v1555
        %v2330 = vunpack.c.h.b16 %v1555
        %v2331 = vunpack.c.l.b16 %v1556
        %v2332 = vunpack.c.h.b16 %v1556
        %v2333 = vunpack.c.l.b16 %v1557
        %v2334 = vunpack.c.h.b16 %v1557
        %v2335 = vunpack.c.l.b16 %v1558
        %v2336 = vunpack.c.h.b16 %v1558
        %v2337 = vunpack.c.l.b16 %v1559
        %v2338 = vunpack.c.h.b16 %v1559
        %v2339 = vunpack.c.l.b16 %v1560
        %v2340 = vunpack.c.h.b16 %v1560
        %v2341 = vunpack.c.l.b16 %v1561
        %v2342 = vunpack.c.h.b16 %v1561
        %v2343 = vunpack.c.l.b16 %v1562
        %v2344 = vunpack.c.h.b16 %v1562
        %v2345 = vunpack.c.l.b16 %v1563
        %v2346 = vunpack.c.h.b16 %v1563
        %v2347 = vunpack.c.l.b16 %v1564
        %v2348 = vunpack.c.h.b16 %v1564
        %v2349 = vunpack.c.l.b16 %v1565
        %v2350 = vunpack.c.h.b16 %v1565
        %v2351 = vunpack.c.l.b16 %v1566
        %v2352 = vunpack.c.h.b16 %v1566
        %v2353 = vunpack.c.l.b16 %v1567
        %v2354 = vunpack.c.h.b16 %v1567
        %v2355 = vunpack.c.l.b16 %v1568
        %v2356 = vunpack.c.h.b16 %v1568
        %v2357 = vunpack.c.l.b16 %v1569
        %v2358 = vunpack.c.h.b16 %v1569
        %v2359 = vunpack.c.l.b16 %v1570
        %v2360 = vunpack.c.h.b16 %v1570
        %v2361 = vunpack.c.l.b16 %v1571
        %v2362 = vunpack.c.h.b16 %v1571
        %v2363 = vunpack.c.l.b16 %v1572
        %v2364 = vunpack.c.h.b16 %v1572
        %v2365 = vunpack.c.l.b16 %v1573
        %v2366 = vunpack.c.h.b16 %v1573
        %v2367 = vunpack.c.l.b16 %v1574
        %v2368 = vunpack.c.h.b16 %v1574
        %v2369 = vunpack.c.l.b16 %v1575
        %v2370 = vunpack.c.h.b16 %v1575
        %v2371 = vunpack.c.l.b16 %v1576
        %v2372 = vunpack.c.h.b16 %v1576
        %v2373 = vunpack.c.l.b16 %v1577
        %v2374 = vunpack.c.h.b16 %v1577
        %v2375 = vunpack.c.l.b16 %v1578
        %v2376 = vunpack.c.h.b16 %v1578
        %v2377 = vunpack.c.l.b16 %v1579
        %v2378 = vunpack.c.h.b16 %v1579
        %v2379 = vunpack.c.l.b16 %v1580
        %v2380 = vunpack.c.h.b16 %v1580
        %v2381 = vunpack.c.l.b16 %v1581
        %v2382 = vunpack.c.h.b16 %v1581
        %v2383 = vunpack.c.l.b16 %v1582
        %v2384 = vunpack.c.h.b16 %v1582
        %v2385 = vunpack.c.l.b16 %v1583
        %v2386 = vunpack.c.h.b16 %v1583
        %v2387 = vunpack.c.l.b16 %v1584
        %v2388 = vunpack.c.h.b16 %v1584
        %v2389 = vunpack.c.l.b16 %v1585
        %v2390 = vunpack.c.h.b16 %v1585
        %v2391 = vunpack.c.l.b16 %v1586
        %v2392 = vunpack.c.h.b16 %v1586
        %v2393 = vunpack.c.l.b16 %v1587
        %v2394 = vunpack.c.h.b16 %v1587
        %v2395 = vunpack.c.l.b16 %v1588
        %v2396 = vunpack.c.h.b16 %v1588
        %v2397 = vunpack.c.l.b16 %v1589
        %v2398 = vunpack.c.h.b16 %v1589
        %v2399 = vunpack.c.l.b16 %v1590
        %v2400 = vunpack.c.h.b16 %v1590
        %v2401 = vunpack.c.l.b16 %v1591
        %v2402 = vunpack.c.h.b16 %v1591
        %v2403 = vunpack.c.l.b16 %v1592
        %v2404 = vunpack.c.h.b16 %v1592
        %v2405 = vunpack.c.l.b16 %v1593
        %v2406 = vunpack.c.h.b16 %v1593
        %v2407 = vunpack.c.l.b16 %v1594
        %v2408 = vunpack.c.h.b16 %v1594
        %v2409 = vunpack.c.l.b16 %v1595
        %v2410 = vunpack.c.h.b16 %v1595
        %v2411 = vunpack.c.l.b16 %v1596
        %v2412 = vunpack.c.h.b16 %v1596
        %v2413 = vunpack.c.l.b16 %v1597
        %v2414 = vunpack.c.h.b16 %v1597
        %v2415 = vunpack.c.l.b16 %v1598
        %v2416 = vunpack.c.h.b16 %v1598
        %v2417 = vunpack.c.l.b16 %v1599
        %v2418 = vunpack.c.h.b16 %v1599
        %v2419 = vunpack.c.l.b16 %v1600
        %v2420 = vunpack.c.h.b16 %v1600
        %v2421 = vunpack.c.l.b16 %v1601
        %v2422 = vunpack.c.h.b16 %v1601
        %v2423 = vunpack.c.l.b16 %v1602
        %v2424 = vunpack.c.h.b16 %v1602
        %v2425 = vunpack.c.l.b16 %v1603
        %v2426 = vunpack.c.h.b16 %v1603
        %v2427 = vunpack.c.l.b16 %v1604
        %v2428 = vunpack.c.h.b16 %v1604
        %v2429 = vunpack.c.l.b16 %v1605
        %v2430 = vunpack.c.h.b16 %v1605
        %v2431 = vunpack.c.l.b16 %v1606
        %v2432 = vunpack.c.h.b16 %v1606
        %v2433 = vunpack.c.l.b16 %v1607
        %v2434 = vunpack.c.h.b16 %v1607
        %v2435 = vunpack.c.l.b16 %v1608
        %v2436 = vunpack.c.h.b16 %v1608
        %v2437 = vunpack.c.l.b16 %v1609
        %v2438 = vunpack.c.h.b16 %v1609
        %v2439 = vunpack.c.l.b16 %v1610
        %v2440 = vunpack.c.h.b16 %v1610
        %v2441 = vunpack.c.l.b16 %v1611
        %v2442 = vunpack.c.h.b16 %v1611
        %v2443 = vunpack.c.l.b16 %v1612
        %v2444 = vunpack.c.h.b16 %v1612
        %v2445 = vunpack.c.l.b16 %v1613
        %v2446 = vunpack.c.h.b16 %v1613
        %v2447 = vunpack.c.l.b16 %v1614
        %v2448 = vunpack.c.h.b16 %v1614
        %v2449 = vunpack.c.l.b16 %v1615
        %v2450 = vunpack.c.h.b16 %v1615
        %v2451 = vunpack.c.l.b16 %v1616
        %v2452 = vunpack.c.h.b16 %v1616
        %v2453 = vunpack.c.l.b16 %v1617
        %v2454 = vunpack.c.h.b16 %v1617
        %v2455 = vunpack.c.l.b16 %v1618
        %v2456 = vunpack.c.h.b16 %v1618
        %v2457 = vunpack.c.l.b16 %v1619
        %v2458 = vunpack.c.h.b16 %v1619
        %v2459 = vunpack.c.l.b16 %v1620
        %v2460 = vunpack.c.h.b16 %v1620
        %v2461 = vunpack.c.l.b16 %v1621
        %v2462 = vunpack.c.h.b16 %v1621
        %v2463 = vunpack.c.l.b16 %v1622
        %v2464 = vunpack.c.h.b16 %v1622
        %v2465 = vunpack.c.l.b16 %v1623
        %v2466 = vunpack.c.h.b16 %v1623
        %v2467 = vunpack.c.l.b16 %v1624
        %v2468 = vunpack.c.h.b16 %v1624
        %v2469 = vunpack.c.l.b16 %v1625
        %v2470 = vunpack.c.h.b16 %v1625
        %v2471 = vunpack.c.l.b16 %v1626
        %v2472 = vunpack.c.h.b16 %v1626
        %v2473 = vunpack.c.l.b16 %v1627
        %v2474 = vunpack.c.h.b16 %v1627
        %v2475 = vunpack.c.l.b16 %v1628
        %v2476 = vunpack.c.h.b16 %v1628
        %v2477 = vunpack.c.l.b16 %v1629
        %v2478 = vunpack.c.h.b16 %v1629
        %v2479 = vunpack.c.l.b16 %v1630
        %v2480 = vunpack.c.h.b16 %v1630
        %v2481 = vunpack.c.l.b16 %v1631
        %v2482 = vunpack.c.h.b16 %v1631
        %v2483 = vunpack.c.l.b16 %v1632
        %v2484 = vunpack.c.h.b16 %v1632
        %v2485 = vunpack.c.l.b16 %v1633
        %v2486 = vunpack.c.h.b16 %v1633
        %v2487 = vunpack.c.l.b16 %v1634
        %v2488 = vunpack.c.h.b16 %v1634
        %v2489 = vunpack.c.l.b16 %v1635
        %v2490 = vunpack.c.h.b16 %v1635
        %v2491 = vunpack.c.l.b16 %v1636
        %v2492 = vunpack.c.h.b16 %v1636
        %v2493 = vunpack.c.l.b16 %v1637
        %v2494 = vunpack.c.h.b16 %v1637
        %v2495 = vunpack.c.l.b16 %v1638
        %v2496 = vunpack.c.h.b16 %v1638
        %v2497 = vunpack.c.l.b16 %v1639
        %v2498 = vunpack.c.h.b16 %v1639
        %v2499 = vunpack.c.l.b16 %v1640
        %v2500 = vunpack.c.h.b16 %v1640
        %v2501 = vunpack.c.l.b16 %v1641
        %v2502 = vunpack.c.h.b16 %v1641
        %v2503 = vunpack.c.l.b16 %v1642
        %v2504 = vunpack.c.h.b16 %v1642
        %v2505 = vunpack.c.l.b16 %v1643
        %v2506 = vunpack.c.h.b16 %v1643
        %v2507 = vunpack.c.l.b16 %v1644
        %v2508 = vunpack.c.h.b16 %v1644
        %v2509 = vunpack.c.l.b16 %v1645
        %v2510 = vunpack.c.h.b16 %v1645
        %v2511 = vunpack.c.l.b16 %v1646
        %v2512 = vunpack.c.h.b16 %v1646
        %v2513 = vunpack.c.l.b16 %v1647
        %v2514 = vunpack.c.h.b16 %v1647
        %v2515 = vunpack.c.l.b16 %v1648
        %v2516 = vunpack.c.h.b16 %v1648
        %v2517 = vunpack.c.l.b16 %v1649
        %v2518 = vunpack.c.h.b16 %v1649
        %v2519 = vunpack.c.l.b16 %v1650
        %v2520 = vunpack.c.h.b16 %v1650
        %v2521 = vunpack.c.l.b16 %v1651
        %v2522 = vunpack.c.h.b16 %v1651
        %v2523 = vunpack.c.l.b16 %v1652
        %v2524 = vunpack.c.h.b16 %v1652
        %v2525 = vunpack.c.l.b16 %v1653
        %v2526 = vunpack.c.h.b16 %v1653
        %v2527 = vunpack.c.l.b16 %v1654
        %v2528 = vunpack.c.h.b16 %v1654
        %v2529 = vunpack.c.l.b16 %v1655
        %v2530 = vunpack.c.h.b16 %v1655
        %v2531 = vunpack.c.l.b16 %v1656
        %v2532 = vunpack.c.h.b16 %v1656
        %v2533 = vunpack.c.l.b16 %v1657
        %v2534 = vunpack.c.h.b16 %v1657
        %v2535 = vunpack.c.l.b16 %v1658
        %v2536 = vunpack.c.h.b16 %v1658
        %v2537 = vunpack.c.l.b16 %v1659
        %v2538 = vunpack.c.h.b16 %v1659
        %v2539 = vunpack.c.l.b16 %v1660
        %v2540 = vunpack.c.h.b16 %v1660
        %v2541 = vunpack.c.l.b16 %v1661
        %v2542 = vunpack.c.h.b16 %v1661
        %v2543 = vunpack.c.l.b16 %v1662
        %v2544 = vunpack.c.h.b16 %v1662
        %v2545 = vunpack.c.l.b16 %v1663
        %v2546 = vunpack.c.h.b16 %v1663
        %v2547 = vunpack.c.l.b16 %v1664
        %v2548 = vunpack.c.h.b16 %v1664
        %v2549 = vunpack.c.l.b16 %v1665
        %v2550 = vunpack.c.h.b16 %v1665
        %v2551 = vunpack.c.l.b16 %v1666
        %v2552 = vunpack.c.h.b16 %v1666
        %v2553 = vunpack.c.l.b16 %v1667
        %v2554 = vunpack.c.h.b16 %v1667
        %v2555 = vunpack.c.l.b16 %v1668
        %v2556 = vunpack.c.h.b16 %v1668
        %v2557 = vunpack.c.l.b16 %v1669
        %v2558 = vunpack.c.h.b16 %v1669
        %v2559 = vunpack.c.l.b16 %v1670
        %v2560 = vunpack.c.h.b16 %v1670
        %v2561 = vunpack.c.l.b16 %v1671
        %v2562 = vunpack.c.h.b16 %v1671
        %v2563 = vunpack.c.l.b16 %v1672
        %v2564 = vunpack.c.h.b16 %v1672
        %v2565 = vunpack.c.l.b16 %v1673
        %v2566 = vunpack.c.h.b16 %v1673
        %v2567 = vunpack.c.l.b16 %v1674
        %v2568 = vunpack.c.h.b16 %v1674
        %v2569 = vunpack.c.l.b16 %v1675
        %v2570 = vunpack.c.h.b16 %v1675
        %v2571 = vunpack.c.l.b16 %v1676
        %v2572 = vunpack.c.h.b16 %v1676
        %v2573 = vunpack.c.l.b16 %v1677
        %v2574 = vunpack.c.h.b16 %v1677
        %v2575 = vunpack.c.l.b16 %v1678
        %v2576 = vunpack.c.h.b16 %v1678
        %v2577 = vunpack.c.l.b16 %v1679
        %v2578 = vunpack.c.h.b16 %v1679
        %v2579 = vunpack.c.l.b16 %v1680
        %v2580 = vunpack.c.h.b16 %v1680
        %v2581 = vunpack.c.l.b16 %v1681
        %v2582 = vunpack.c.h.b16 %v1681
        %v2583 = vunpack.c.l.b16 %v1682
        %v2584 = vunpack.c.h.b16 %v1682
        %v2585 = vunpack.c.l.b16 %v1683
        %v2586 = vunpack.c.h.b16 %v1683
        %v2587 = vunpack.c.l.b16 %v1684
        %v2588 = vunpack.c.h.b16 %v1684
        %v2589 = vunpack.c.l.b16 %v1685
        %v2590 = vunpack.c.h.b16 %v1685
        %v2591 = vunpack.c.l.b16 %v1686
        %v2592 = vunpack.c.h.b16 %v1686
        %v2593 = vunpack.c.l.b16 %v1687
        %v2594 = vunpack.c.h.b16 %v1687
        %v2595 = vunpack.c.l.b16 %v1688
        %v2596 = vunpack.c.h.b16 %v1688
        %v2597 = vunpack.c.l.b16 %v1689
        %v2598 = vunpack.c.h.b16 %v1689
        %v2599 = vunpack.c.l.b16 %v1690
        %v2600 = vunpack.c.h.b16 %v1690
        %v2601 = vunpack.c.l.b16 %v1691
        %v2602 = vunpack.c.h.b16 %v1691
        %v2603 = vunpack.c.l.b16 %v1692
        %v2604 = vunpack.c.h.b16 %v1692
        %v2605 = vunpack.c.l.b16 %v1693
        %v2606 = vunpack.c.h.b16 %v1693
        %v2607 = vunpack.c.l.b16 %v1694
        %v2608 = vunpack.c.h.b16 %v1694
        %v2609 = vunpack.c.l.b16 %v1695
        %v2610 = vunpack.c.h.b16 %v1695
        %v2611 = vunpack.c.l.b16 %v1696
        %v2612 = vunpack.c.h.b16 %v1696
        %v2613 = vunpack.c.l.b16 %v1697
        %v2614 = vunpack.c.h.b16 %v1697
        %v2615 = vunpack.c.l.b16 %v1698
        %v2616 = vunpack.c.h.b16 %v1698
        %v2617 = vunpack.c.l.b16 %v1699
        %v2618 = vunpack.c.h.b16 %v1699
        %v2619 = vunpack.c.l.b16 %v1700
        %v2620 = vunpack.c.h.b16 %v1700
        %v2621 = vunpack.c.l.b16 %v1701
        %v2622 = vunpack.c.h.b16 %v1701
        %v2623 = vunpack.c.l.b16 %v1702
        %v2624 = vunpack.c.h.b16 %v1702
        %v2625 = vunpack.c.l.b16 %v1703
        %v2626 = vunpack.c.h.b16 %v1703
        %v2627 = vunpack.c.l.b16 %v1704
        %v2628 = vunpack.c.h.b16 %v1704
        %v2629 = vunpack.c.l.b16 %v1705
        %v2630 = vunpack.c.h.b16 %v1705
        %v2631 = vunpack.c.l.b16 %v1706
        %v2632 = vunpack.c.h.b16 %v1706
        %v2633 = vunpack.c.l.b16 %v1707
        %v2634 = vunpack.c.h.b16 %v1707
        %v2635 = vunpack.c.l.b16 %v1708
        %v2636 = vunpack.c.h.b16 %v1708
        %v2637 = vunpack.c.l.b16 %v1709
        %v2638 = vunpack.c.h.b16 %v1709
        %v2639 = vunpack.c.l.b16 %v1710
        %v2640 = vunpack.c.h.b16 %v1710
        %v2641 = vunpack.c.l.b16 %v1711
        %v2642 = vunpack.c.h.b16 %v1711
        %v2643 = vunpack.c.l.b16 %v1712
        %v2644 = vunpack.c.h.b16 %v1712
        %v2645 = vunpack.c.l.b16 %v1713
        %v2646 = vunpack.c.h.b16 %v1713
        %v2647 = vunpack.c.l.b16 %v1714
        %v2648 = vunpack.c.h.b16 %v1714
        %v2649 = vunpack.c.l.b16 %v1715
        %v2650 = vunpack.c.h.b16 %v1715
        %v2651 = vunpack.c.l.b16 %v1716
        %v2652 = vunpack.c.h.b16 %v1716
        %v2653 = vunpack.c.l.b16 %v1717
        %v2654 = vunpack.c.h.b16 %v1717
        %v2655 = vunpack.c.l.b16 %v1718
        %v2656 = vunpack.c.h.b16 %v1718
        %v2657 = vunpack.c.l.b16 %v1719
        %v2658 = vunpack.c.h.b16 %v1719
        %v2659 = vunpack.c.l.b16 %v1720
        %v2660 = vunpack.c.h.b16 %v1720
        %v2661 = vunpack.c.l.b16 %v1721
        %v2662 = vunpack.c.h.b16 %v1721
        %v2663 = vunpack.c.l.b16 %v1722
        %v2664 = vunpack.c.h.b16 %v1722
        %v2665 = vunpack.c.l.b16 %v1723
        %v2666 = vunpack.c.h.b16 %v1723
        %v2667 = vunpack.c.l.b16 %v1724
        %v2668 = vunpack.c.h.b16 %v1724
        %v2669 = vunpack.c.l.b16 %v1725
        %v2670 = vunpack.c.h.b16 %v1725
        %v2671 = vunpack.c.l.b16 %v1726
        %v2672 = vunpack.c.h.b16 %v1726
        %v2673 = vunpack.c.l.b16 %v1727
        %v2674 = vunpack.c.h.b16 %v1727
        %v2675 = vunpack.c.l.b16 %v1728
        %v2676 = vunpack.c.h.b16 %v1728
        %v2677 = vunpack.c.l.b16 %v1729
        %v2678 = vunpack.c.h.b16 %v1729
        %v2679 = vunpack.c.l.b16 %v1730
        %v2680 = vunpack.c.h.b16 %v1730
        %v2681 = vunpack.c.l.b16 %v1731
        %v2682 = vunpack.c.h.b16 %v1731
        %v2683 = vunpack.c.l.b16 %v1732
        %v2684 = vunpack.c.h.b16 %v1732
        %v2685 = vunpack.c.l.b16 %v1733
        %v2686 = vunpack.c.h.b16 %v1733
        %v2687 = vunpack.c.l.b16 %v1734
        %v2688 = vunpack.c.h.b16 %v1734
        %v2689 = vunpack.c.l.b16 %v1735
        %v2690 = vunpack.c.h.b16 %v1735
        %v2691 = vunpack.c.l.b16 %v1736
        %v2692 = vunpack.c.h.b16 %v1736
        %v2693 = vunpack.c.l.b16 %v1737
        %v2694 = vunpack.c.h.b16 %v1737
        %v2695 = vunpack.c.l.b16 %v1738
        %v2696 = vunpack.c.h.b16 %v1738
        %v2697 = vunpack.c.l.b16 %v1739
        %v2698 = vunpack.c.h.b16 %v1739
        %v2699 = vunpack.c.l.b16 %v1740
        %v2700 = vunpack.c.h.b16 %v1740
        %v2701 = vpack.c.b16 %v2071, %v2061
        %v2702 = vpack.c.b16 %v2072, %v2062
        %v2703 = vpack.c.b16 %v2073, %v2063
        %v2704 = vpack.c.b16 %v2074, %v2064
        %v2705 = vpack.c.b16 %v2075, %v2065
        %v2706 = vpack.c.b16 %v2076, %v2066
        %v2707 = vpack.c.b16 %v2077, %v2067
        %v2708 = vpack.c.b16 %v2078, %v2068
        %v2709 = vpack.c.b16 %v2079, %v2069
        %v2710 = vpack.c.b16 %v2080, %v2070
        %v2711 = vpack.c.b16 %v2091, %v2081
        %v2712 = vpack.c.b16 %v2092, %v2082
        %v2713 = vpack.c.b16 %v2093, %v2083
        %v2714 = vpack.c.b16 %v2094, %v2084
        %v2715 = vpack.c.b16 %v2095, %v2085
        %v2716 = vpack.c.b16 %v2096, %v2086
        %v2717 = vpack.c.b16 %v2097, %v2087
        %v2718 = vpack.c.b16 %v2098, %v2088
        %v2719 = vpack.c.b16 %v2099, %v2089
        %v2720 = vpack.c.b16 %v2100, %v2090
        %v2721 = vpack.c.b16 %v2111, %v2101
        %v2722 = vpack.c.b16 %v2112, %v2102
        %v2723 = vpack.c.b16 %v2113, %v2103
        %v2724 = vpack.c.b16 %v2114, %v2104
        %v2725 = vpack.c.b16 %v2115, %v2105
        %v2726 = vpack.c.b16 %v2116, %v2106
        %v2727 = vpack.c.b16 %v2117, %v2107
        %v2728 = vpack.c.b16 %v2118, %v2108
        %v2729 = vpack.c.b16 %v2119, %v2109
        %v2730 = vpack.c.b16 %v2120, %v2110
        %v2731 = vpack.c.b16 %v2131, %v2121
        %v2732 = vpack.c.b16 %v2132, %v2122
        %v2733 = vpack.c.b16 %v2133, %v2123
        %v2734 = vpack.c.b16 %v2134, %v2124
        %v2735 = vpack.c.b16 %v2135, %v2125
        %v2736 = vpack.c.b16 %v2136, %v2126
        %v2737 = vpack.c.b16 %v2137, %v2127
        %v2738 = vpack.c.b16 %v2138, %v2128
        %v2739 = vpack.c.b16 %v2139, %v2129
        %v2740 = vpack.c.b16 %v2140, %v2130
        %v2741 = vpack.c.b16 %v2151, %v2141
        %v2742 = vpack.c.b16 %v2152, %v2142
        %v2743 = vpack.c.b16 %v2153, %v2143
        %v2744 = vpack.c.b16 %v2154, %v2144
        %v2745 = vpack.c.b16 %v2155, %v2145
        %v2746 = vpack.c.b16 %v2156, %v2146
        %v2747 = vpack.c.b16 %v2157, %v2147
        %v2748 = vpack.c.b16 %v2158, %v2148
        %v2749 = vpack.c.b16 %v2159, %v2149
        %v2750 = vpack.c.b16 %v2160, %v2150
        %v2751 = vpack.c.b16 %v2171, %v2161
        %v2752 = vpack.c.b16 %v2172, %v2162
        %v2753 = vpack.c.b16 %v2173, %v2163
        %v2754 = vpack.c.b16 %v2174, %v2164
        %v2755 = vpack.c.b16 %v2175, %v2165
        %v2756 = vpack.c.b16 %v2176, %v2166
        %v2757 = vpack.c.b16 %v2177, %v2167
        %v2758 = vpack.c.b16 %v2178, %v2168
        %v2759 = vpack.c.b16 %v2179, %v2169
        %v2760 = vpack.c.b16 %v2180, %v2170
        %v2761 = vpack.c.b16 %v2191, %v2181
        %v2762 = vpack.c.b16 %v2192, %v2182
        %v2763 = vpack.c.b16 %v2193, %v2183
        %v2764 = vpack.c.b16 %v2194, %v2184
        %v2765 = vpack.c.b16 %v2195, %v2185
        %v2766 = vpack.c.b16 %v2196, %v2186
        %v2767 = vpack.c.b16 %v2197, %v2187
        %v2768 = vpack.c.b16 %v2198, %v2188
        %v2769 = vpack.c.b16 %v2199, %v2189
        %v2770 = vpack.c.b16 %v2200, %v2190
        %v2771 = vpack.c.b16 %v2211, %v2201
        %v2772 = vpack.c.b16 %v2212, %v2202
        %v2773 = vpack.c.b16 %v2213, %v2203
        %v2774 = vpack.c.b16 %v2214, %v2204
        %v2775 = vpack.c.b16 %v2215, %v2205
        %v2776 = vpack.c.b16 %v2216, %v2206
        %v2777 = vpack.c.b16 %v2217, %v2207
        %v2778 = vpack.c.b16 %v2218, %v2208
        %v2779 = vpack.c.b16 %v2219, %v2209
        %v2780 = vpack.c.b16 %v2220, %v2210
        %v2781 = vpack.c.b16 %v2231, %v2221
        %v2782 = vpack.c.b16 %v2232, %v2222
        %v2783 = vpack.c.b16 %v2233, %v2223
        %v2784 = vpack.c.b16 %v2234, %v2224
        %v2785 = vpack.c.b16 %v2235, %v2225
        %v2786 = vpack.c.b16 %v2236, %v2226
        %v2787 = vpack.c.b16 %v2237, %v2227
        %v2788 = vpack.c.b16 %v2238, %v2228
        %v2789 = vpack.c.b16 %v2239, %v2229
        %v2790 = vpack.c.b16 %v2240, %v2230
        %v2791 = vpack.c.b16 %v2251, %v2241
        %v2792 = vpack.c.b16 %v2252, %v2242
        %v2793 = vpack.c.b16 %v2253, %v2243
        %v2794 = vpack.c.b16 %v2254, %v2244
        %v2795 = vpack.c.b16 %v2255, %v2245
        %v2796 = vpack.c.b16 %v2256, %v2246
        %v2797 = vpack.c.b16 %v2257, %v2247
        %v2798 = vpack.c.b16 %v2258, %v2248
        %v2799 = vpack.c.b16 %v2259, %v2249
        %v2800 = vpack.c.b16 %v2260, %v2250
        %v2801 = vpack.c.b16 %v2271, %v2261
        %v2802 = vpack.c.b16 %v2272, %v2262
        %v2803 = vpack.c.b16 %v2273, %v2263
        %v2804 = vpack.c.b16 %v2274, %v2264
        %v2805 = vpack.c.b16 %v2275, %v2265
        %v2806 = vpack.c.b16 %v2276, %v2266
        %v2807 = vpack.c.b16 %v2277, %v2267
        %v2808 = vpack.c.b16 %v2278, %v2268
        %v2809 = vpack.c.b16 %v2279, %v2269
        %v2810 = vpack.c.b16 %v2280, %v2270
        %v2811 = vpack.c.b16 %v2291, %v2281
        %v2812 = vpack.c.b16 %v2292, %v2282
        %v2813 = vpack.c.b16 %v2293, %v2283
        %v2814 = vpack.c.b16 %v2294, %v2284
        %v2815 = vpack.c.b16 %v2295, %v2285
        %v2816 = vpack.c.b16 %v2296, %v2286
        %v2817 = vpack.c.b16 %v2297, %v2287
        %v2818 = vpack.c.b16 %v2298, %v2288
        %v2819 = vpack.c.b16 %v2299, %v2289
        %v2820 = vpack.c.b16 %v2300, %v2290
        %v2821 = vpack.c.b16 %v2311, %v2301
        %v2822 = vpack.c.b16 %v2312, %v2302
        %v2823 = vpack.c.b16 %v2313, %v2303
        %v2824 = vpack.c.b16 %v2314, %v2304
        %v2825 = vpack.c.b16 %v2315, %v2305
        %v2826 = vpack.c.b16 %v2316, %v2306
        %v2827 = vpack.c.b16 %v2317, %v2307
        %v2828 = vpack.c.b16 %v2318, %v2308
        %v2829 = vpack.c.b16 %v2319, %v2309
        %v2830 = vpack.c.b16 %v2320, %v2310
        %v2831 = vpack.c.b16 %v2331, %v2321
        %v2832 = vpack.c.b16 %v2332, %v2322
        %v2833 = vpack.c.b16 %v2333, %v2323
        %v2834 = vpack.c.b16 %v2334, %v2324
        %v2835 = vpack.c.b16 %v2335, %v2325
        %v2836 = vpack.c.b16 %v2336, %v2326
        %v2837 = vpack.c.b16 %v2337, %v2327
        %v2838 = vpack.c.b16 %v2338, %v2328
        %v2839 = vpack.c.b16 %v2339, %v2329
        %v2840 = vpack.c.b16 %v2340, %v2330
        %v2841 = vpack.c.b16 %v2351, %v2341
        %v2842 = vpack.c.b16 %v2352, %v2342
        %v2843 = vpack.c.b16 %v2353, %v2343
        %v2844 = vpack.c.b16 %v2354, %v2344
        %v2845 = vpack.c.b16 %v2355, %v2345
        %v2846 = vpack.c.b16 %v2356, %v2346
        %v2847 = vpack.c.b16 %v2357, %v2347
        %v2848 = vpack.c.b16 %v2358, %v2348
        %v2849 = vpack.c.b16 %v2359, %v2349
        %v2850 = vpack.c.b16 %v2360, %v2350
        %v2851 = vpack.c.b16 %v2371, %v2361
        %v2852 = vpack.c.b16 %v2372, %v2362
        %v2853 = vpack.c.b16 %v2373, %v2363
        %v2854 = vpack.c.b16 %v2374, %v2364
        %v2855 = vpack.c.b16 %v2375, %v2365
        %v2856 = vpack.c.b16 %v2376, %v2366
        %v2857 = vpack.c.b16 %v2377, %v2367
        %v2858 = vpack.c.b16 %v2378, %v2368
        %v2859 = vpack.c.b16 %v2379, %v2369
        %v2860 = vpack.c.b16 %v2380, %v2370
        %v2861 = vpack.c.b16 %v2391, %v2381
        %v2862 = vpack.c.b16 %v2392, %v2382
        %v2863 = vpack.c.b16 %v2393, %v2383
        %v2864 = vpack.c.b16 %v2394, %v2384
        %v2865 = vpack.c.b16 %v2395, %v2385
        %v2866 = vpack.c.b16 %v2396, %v2386
        %v2867 = vpack.c.b16 %v2397, %v2387
        %v2868 = vpack.c.b16 %v2398, %v2388
        %v2869 = vpack.c.b16 %v2399, %v2389
        %v2870 = vpack.c.b16 %v2400, %v2390
        %v2871 = vpack.c.b16 %v2411, %v2401
        %v2872 = vpack.c.b16 %v2412, %v2402
        %v2873 = vpack.c.b16 %v2413, %v2403
        %v2874 = vpack.c.b16 %v2414, %v2404
        %v2875 = vpack.c.b16 %v2415, %v2405
        %v2876 = vpack.c.b16 %v2416, %v2406
        %v2877 = vpack.c.b16 %v2417, %v2407
        %v2878 = vpack.c.b16 %v2418, %v2408
        %v2879 = vpack.c.b16 %v2419, %v2409
        %v2880 = vpack.c.b16 %v2420, %v2410
        %v2881 = vpack.c.b16 %v2431, %v2421
        %v2882 = vpack.c.b16 %v2432, %v2422
        %v2883 = vpack.c.b16 %v2433, %v2423
        %v2884 = vpack.c.b16 %v2434, %v2424
        %v2885 = vpack.c.b16 %v2435, %v2425
        %v2886 = vpack.c.b16 %v2436, %v2426
        %v2887 = vpack.c.b16 %v2437, %v2427
        %v2888 = vpack.c.b16 %v2438, %v2428
        %v2889 = vpack.c.b16 %v2439, %v2429
        %v2890 = vpack.c.b16 %v2440, %v2430
        %v2891 = vpack.c.b16 %v2451, %v2441
        %v2892 = vpack.c.b16 %v2452, %v2442
        %v2893 = vpack.c.b16 %v2453, %v2443
        %v2894 = vpack.c.b16 %v2454, %v2444
        %v2895 = vpack.c.b16 %v2455, %v2445
        %v2896 = vpack.c.b16 %v2456, %v2446
        %v2897 = vpack.c.b16 %v2457, %v2447
        %v2898 = vpack.c.b16 %v2458, %v2448
        %v2899 = vpack.c.b16 %v2459, %v2449
        %v2900 = vpack.c.b16 %v2460, %v2450
        %v2901 = vpack.c.b16 %v2471, %v2461
        %v2902 = vpack.c.b16 %v2472, %v2462
        %v2903 = vpack.c.b16 %v2473, %v2463
        %v2904 = vpack.c.b16 %v2474, %v2464
        %v2905 = vpack.c.b16 %v2475, %v2465
        %v2906 = vpack.c.b16 %v2476, %v2466
        %v2907 = vpack.c.b16 %v2477, %v2467
        %v2908 = vpack.c.b16 %v2478, %v2468
        %v2909 = vpack.c.b16 %v2479, %v2469
        %v2910 = vpack.c.b16 %v2480, %v2470
        %v2911 = vpack.c.b16 %v2491, %v2481
        %v2912 = vpack.c.b16 %v2492, %v2482
        %v2913 = vpack.c.b16 %v2493, %v2483
        %v2914 = vpack.c.b16 %v2494, %v2484
        %v2915 = vpack.c.b16 %v2495, %v2485
        %v2916 = vpack.c.b16 %v2496, %v2486
        %v2917 = vpack.c.b16 %v2497, %v2487
        %v2918 = vpack.c.b16 %v2498, %v2488
        %v2919 = vpack.c.b16 %v2499, %v2489
        %v2920 = vpack.c.b16 %v2500, %v2490
        %v2921 = vpack.c.b16 %v2511, %v2501
        %v2922 = vpack.c.b16 %v2512, %v2502
        %v2923 = vpack.c.b16 %v2513, %v2503
        %v2924 = vpack.c.b16 %v2514, %v2504
        %v2925 = vpack.c.b16 %v2515, %v2505
        %v2926 = vpack.c.b16 %v2516, %v2506
        %v2927 = vpack.c.b16 %v2517, %v2507
        %v2928 = vpack.c.b16 %v2518, %v2508
        %v2929 = vpack.c.b16 %v2519, %v2509
        %v2930 = vpack.c.b16 %v2520, %v2510
        %v2931 = vpack.c.b16 %v2531, %v2521
        %v2932 = vpack.c.b16 %v2532, %v2522
        %v2933 = vpack.c.b16 %v2533, %v2523
        %v2934 = vpack.c.b16 %v2534, %v2524
        %v2935 = vpack.c.b16 %v2535, %v2525
        %v2936 = vpack.c.b16 %v2536, %v2526
        %v2937 = vpack.c.b16 %v2537, %v2527
        %v2938 = vpack.c.b16 %v2538, %v2528
        %v2939 = vpack.c.b16 %v2539, %v2529
        %v2940 = vpack.c.b16 %v2540, %v2530
        %v2941 = vpack.c.b16 %v2551, %v2541
        %v2942 = vpack.c.b16 %v2552, %v2542
        %v2943 = vpack.c.b16 %v2553, %v2543
        %v2944 = vpack.c.b16 %v2554, %v2544
        %v2945 = vpack.c.b16 %v2555, %v2545
        %v2946 = vpack.c.b16 %v2556, %v2546
        %v2947 = vpack.c.b16 %v2557, %v2547
        %v2948 = vpack.c.b16 %v2558, %v2548
        %v2949 = vpack.c.b16 %v2559, %v2549
        %v2950 = vpack.c.b16 %v2560, %v2550
        %v2951 = vpack.c.b16 %v2571, %v2561
        %v2952 = vpack.c.b16 %v2572, %v2562
        %v2953 = vpack.c.b16 %v2573, %v2563
        %v2954 = vpack.c.b16 %v2574, %v2564
        %v2955 = vpack.c.b16 %v2575, %v2565
        %v2956 = vpack.c.b16 %v2576, %v2566
        %v2957 = vpack.c.b16 %v2577, %v2567
        %v2958 = vpack.c.b16 %v2578, %v2568
        %v2959 = vpack.c.b16 %v2579, %v2569
        %v2960 = vpack.c.b16 %v2580, %v2570
        %v2961 = vpack.c.b16 %v2591, %v2581
        %v2962 = vpack.c.b16 %v2592, %v2582
        %v2963 = vpack.c.b16 %v2593, %v2583
        %v2964 = vpack.c.b16 %v2594, %v2584
        %v2965 = vpack.c.b16 %v2595, %v2585
        %v2966 = vpack.c.b16 %v2596, %v2586
        %v2967 = vpack.c.b16 %v2597, %v2587
        %v2968 = vpack.c.b16 %v2598, %v2588
        %v2969 = vpack.c.b16 %v2599, %v2589
        %v2970 = vpack.c.b16 %v2600, %v2590
        %v2971 = vpack.c.b16 %v2611, %v2601
        %v2972 = vpack.c.b16 %v2612, %v2602
        %v2973 = vpack.c.b16 %v2613, %v2603
        %v2974 = vpack.c.b16 %v2614, %v2604
        %v2975 = vpack.c.b16 %v2615, %v2605
        %v2976 = vpack.c.b16 %v2616, %v2606
        %v2977 = vpack.c.b16 %v2617, %v2607
        %v2978 = vpack.c.b16 %v2618, %v2608
        %v2979 = vpack.c.b16 %v2619, %v2609
        %v2980 = vpack.c.b16 %v2620, %v2610
        %v2981 = vpack.c.b16 %v2631, %v2621
        %v2982 = vpack.c.b16 %v2632, %v2622
        %v2983 = vpack.c.b16 %v2633, %v2623
        %v2984 = vpack.c.b16 %v2634, %v2624
        %v2985 = vpack.c.b16 %v2635, %v2625
        %v2986 = vpack.c.b16 %v2636, %v2626
        %v2987 = vpack.c.b16 %v2637, %v2627
        %v2988 = vpack.c.b16 %v2638, %v2628
        %v2989 = vpack.c.b16 %v2639, %v2629
        %v2990 = vpack.c.b16 %v2640, %v2630
        %v2991 = vpack.c.b16 %v2651, %v2641
        %v2992 = vpack.c.b16 %v2652, %v2642
        %v2993 = vpack.c.b16 %v2653, %v2643
        %v2994 = vpack.c.b16 %v2654, %v2644
        %v2995 = vpack.c.b16 %v2655, %v2645
        %v2996 = vpack.c.b16 %v2656, %v2646
        %v2997 = vpack.c.b16 %v2657, %v2647
        %v2998 = vpack.c.b16 %v2658, %v2648
        %v2999 = vpack.c.b16 %v2659, %v2649
        %v3000 = vpack.c.b16 %v2660, %v2650
        %v3001 = vpack.c.b16 %v2671, %v2661
        %v3002 = vpack.c.b16 %v2672, %v2662
        %v3003 = vpack.c.b16 %v2673, %v2663
        %v3004 = vpack.c.b16 %v2674, %v2664
        %v3005 = vpack.c.b16 %v2675, %v2665
        %v3006 = vpack.c.b16 %v2676, %v2666
        %v3007 = vpack.c.b16 %v2677, %v2667
        %v3008 = vpack.c.b16 %v2678, %v2668
        %v3009 = vpack.c.b16 %v2679, %v2669
        %v3010 = vpack.c.b16 %v2680, %v2670
        %v3011 = vpack.c.b16 %v2691, %v2681
        %v3012 = vpack.c.b16 %v2692, %v2682
        %v3013 = vpack.c.b16 %v2693, %v2683
        %v3014 = vpack.c.b16 %v2694, %v2684
        %v3015 = vpack.c.b16 %v2695, %v2685
        %v3016 = vpack.c.b16 %v2696, %v2686
        %v3017 = vpack.c.b16 %v2697, %v2687
        %v3018 = vpack.c.b16 %v2698, %v2688
        %v3019 = vpack.c.b16 %v2699, %v2689
        %v3020 = vpack.c.b16 %v2700, %v2690
        %3341 = vmatprep.subr.bf16.mxu0 %v2702
        %3342 = vmatpush1.bf16.msra.mxu0 %v2701
        %3343 = vmatprep.subr.bf16.mxu0 %v2712
        %3344 = vmatpush1.bf16.msra.mxu0 %v2711
        %3345 = vmatprep.subr.bf16.mxu0 %v2722
        %3346 = vmatpush1.bf16.msra.mxu0 %v2721
        %3347 = vmatprep.subr.bf16.mxu0 %v2732
        %3348 = vmatpush1.bf16.msra.mxu0 %v2731
        %3349 = vmatprep.subr.bf16.mxu0 %v2742
        %3350 = vmatpush1.bf16.msra.mxu0 %v2741
        %3351 = vmatprep.subr.bf16.mxu0 %v2752
        %3352 = vmatpush1.bf16.msra.mxu0 %v2751
        %3353 = vmatprep.subr.bf16.mxu0 %v2762
        %3354 = vmatpush1.bf16.msra.mxu0 %v2761
        %3355 = vmatprep.subr.bf16.mxu0 %v2772
        %3356 = vmatpush1.bf16.msra.mxu0 %v2771
        %3357 = vmatprep.subr.bf16.mxu0 %v2782
        %3358 = vmatpush1.bf16.msra.mxu0 %v2781
        %3359 = vmatprep.subr.bf16.mxu0 %v2792
        %3360 = vmatpush1.bf16.msra.mxu0 %v2791
        %3361 = vmatprep.subr.bf16.mxu0 %v2802
        %3362 = vmatpush1.bf16.msra.mxu0 %v2801
        %3363 = vmatprep.subr.bf16.mxu0 %v2812
        %3364 = vmatpush1.bf16.msra.mxu0 %v2811
        %3365 = vmatprep.subr.bf16.mxu0 %v2822
        %3366 = vmatpush1.bf16.msra.mxu0 %v2821
        %3367 = vmatprep.subr.bf16.mxu0 %v2832
        %3368 = vmatpush1.bf16.msra.mxu0 %v2831
        %3369 = vmatprep.subr.bf16.mxu0 %v2842
        %3370 = vmatpush1.bf16.msra.mxu0 %v2841
        %3371 = vmatprep.subr.bf16.mxu0 %v2852
        %3372 = vmatpush1.bf16.msra.mxu0 %v2851
        %3373 = vmatprep.mubr.bf16.mxu0 %v1418
        %3374 = vmatmul.mubr.bf16.gmra.mrb[0].mxu0 %v1417
        %v3375 = vpop.f32.mrb[0].mxu0
        %v3376 = vadd.f32 0.0, %v3375
        %v3377 = vpop.f32.mrb[0].mxu0
        %v3378 = vadd.f32 0.0, %v3377
        %v3379 = vpop.f32.mrb[0].mxu0
        %v3380 = vadd.f32 0.0, %v3379
        %v3381 = vpop.f32.mrb[0].mxu0
        %v3382 = vadd.f32 0.0, %v3381
        %3383 = vdwg.mxu0
        %3384 = vmatprep.subr.bf16.mxu0 %v2862
        %3385 = vmatpush1.bf16.msra.mxu0 %v2861
        %3386 = vmatprep.subr.bf16.mxu0 %v2872
        %3387 = vmatpush1.bf16.msra.mxu0 %v2871
        %3388 = vmatprep.subr.bf16.mxu0 %v2882
        %3389 = vmatpush1.bf16.msra.mxu0 %v2881
        %3390 = vmatprep.subr.bf16.mxu0 %v2892
        %3391 = vmatpush1.bf16.msra.mxu0 %v2891
        %3392 = vmatprep.subr.bf16.mxu0 %v2902
        %3393 = vmatpush1.bf16.msra.mxu0 %v2901
        %3394 = vmatprep.subr.bf16.mxu0 %v2912
        %3395 = vmatpush1.bf16.msra.mxu0 %v2911
        %3396 = vmatprep.subr.bf16.mxu0 %v2922
        %3397 = vmatpush1.bf16.msra.mxu0 %v2921
        %3398 = vmatprep.subr.bf16.mxu0 %v2932
        %3399 = vmatpush1.bf16.msra.mxu0 %v2931
        %3400 = vmatprep.subr.bf16.mxu0 %v2942
        %3401 = vmatpush1.bf16.msra.mxu0 %v2941
        %3402 = vmatprep.subr.bf16.mxu0 %v2952
        %3403 = vmatpush1.bf16.msra.mxu0 %v2951
        %3404 = vmatprep.subr.bf16.mxu0 %v2962
        %3405 = vmatpush1.bf16.msra.mxu0 %v2961
        %3406 = vmatprep.subr.bf16.mxu0 %v2972
        %3407 = vmatpush1.bf16.msra.mxu0 %v2971
        %3408 = vmatprep.subr.bf16.mxu0 %v2982
        %3409 = vmatpush1.bf16.msra.mxu0 %v2981
        %3410 = vmatprep.subr.bf16.mxu0 %v2992
        %3411 = vmatpush1.bf16.msra.mxu0 %v2991
        %3412 = vmatprep.subr.bf16.mxu0 %v3002
        %3413 = vmatpush1.bf16.msra.mxu0 %v3001
        %3414 = vmatprep.subr.bf16.mxu0 %v3012
        %3415 = vmatpush1.bf16.msra.mxu0 %v3011
        %3416 = vmatprep.mubr.bf16.mxu0 %v1420
        %3417 = vmatmul.mubr.bf16.gmra.mrb[0].mxu0 %v1419
        %v3418 = vpop.f32.mrb[0].mxu0
        %v3419 = vadd.f32 %v3376, %v3418
        %v3420 = vpop.f32.mrb[0].mxu0
        %v3421 = vadd.f32 %v3378, %v3420
        %v3422 = vpop.f32.mrb[0].mxu0
        %v3423 = vadd.f32 %v3380, %v3422
        %v3424 = vpop.f32.mrb[0].mxu0
        %v3425 = vadd.f32 %v3382, %v3424
        %3426 = vdwg.mxu0
        %3427 = vmatprep.subr.bf16.mxu0 %v2704
        %3428 = vmatpush1.bf16.msra.mxu0 %v2703
        %3429 = vmatprep.subr.bf16.mxu0 %v2714
        %3430 = vmatpush1.bf16.msra.mxu0 %v2713
        %3431 = vmatprep.subr.bf16.mxu0 %v2724
        %3432 = vmatpush1.bf16.msra.mxu0 %v2723
        %3433 = vmatprep.subr.bf16.mxu0 %v2734
        %3434 = vmatpush1.bf16.msra.mxu0 %v2733
        %3435 = vmatprep.subr.bf16.mxu0 %v2744
        %3436 = vmatpush1.bf16.msra.mxu0 %v2743
        %3437 = vmatprep.subr.bf16.mxu0 %v2754
        %3438 = vmatpush1.bf16.msra.mxu0 %v2753
        %3439 = vmatprep.subr.bf16.mxu0 %v2764
        %3440 = vmatpush1.bf16.msra.mxu0 %v2763
        %3441 = vmatprep.subr.bf16.mxu0 %v2774
        %3442 = vmatpush1.bf16.msra.mxu0 %v2773
        %3443 = vmatprep.subr.bf16.mxu0 %v2784
        %3444 = vmatpush1.bf16.msra.mxu0 %v2783
        %3445 = vmatprep.subr.bf16.mxu0 %v2794
        %3446 = vmatpush1.bf16.msra.mxu0 %v2793
        %3447 = vmatprep.subr.bf16.mxu0 %v2804
        %3448 = vmatpush1.bf16.msra.mxu0 %v2803
        %3449 = vmatprep.subr.bf16.mxu0 %v2814
        %3450 = vmatpush1.bf16.msra.mxu0 %v2813
        %3451 = vmatprep.subr.bf16.mxu0 %v2824
        %3452 = vmatpush1.bf16.msra.mxu0 %v2823
        %3453 = vmatprep.subr.bf16.mxu0 %v2834
        %3454 = vmatpush1.bf16.msra.mxu0 %v2833
        %3455 = vmatprep.subr.bf16.mxu0 %v2844
        %3456 = vmatpush1.bf16.msra.mxu0 %v2843
        %3457 = vmatprep.subr.bf16.mxu0 %v2854
        %3458 = vmatpush1.bf16.msra.mxu0 %v2853
        %3459 = vmatprep.mubr.bf16.mxu0 %v1418
        %3460 = vmatmul.mubr.bf16.gmra.mrb[0].mxu0 %v1417
        %v3461 = vpop.f32.mrb[0].mxu0
        %v3462 = vadd.f32 0.0, %v3461
        %v3463 = vpop.f32.mrb[0].mxu0
        %v3464 = vadd.f32 0.0, %v3463
        %v3465 = vpop.f32.mrb[0].mxu0
        %v3466 = vadd.f32 0.0, %v3465
        %v3467 = vpop.f32.mrb[0].mxu0
        %v3468 = vadd.f32 0.0, %v3467
        %3469 = vdwg.mxu0
        %3470 = vmatprep.subr.bf16.mxu0 %v2864
        %3471 = vmatpush1.bf16.msra.mxu0 %v2863
        %3472 = vmatprep.subr.bf16.mxu0 %v2874
        %3473 = vmatpush1.bf16.msra.mxu0 %v2873
        %3474 = vmatprep.subr.bf16.mxu0 %v2884
        %3475 = vmatpush1.bf16.msra.mxu0 %v2883
        %3476 = vmatprep.subr.bf16.mxu0 %v2894
        %3477 = vmatpush1.bf16.msra.mxu0 %v2893
        %3478 = vmatprep.subr.bf16.mxu0 %v2904
        %3479 = vmatpush1.bf16.msra.mxu0 %v2903
        %3480 = vmatprep.subr.bf16.mxu0 %v2914
        %3481 = vmatpush1.bf16.msra.mxu0 %v2913
        %3482 = vmatprep.subr.bf16.mxu0 %v2924
        %3483 = vmatpush1.bf16.msra.mxu0 %v2923
        %3484 = vmatprep.subr.bf16.mxu0 %v2934
        %3485 = vmatpush1.bf16.msra.mxu0 %v2933
        %3486 = vmatprep.subr.bf16.mxu0 %v2944
        %3487 = vmatpush1.bf16.msra.mxu0 %v2943
        %3488 = vmatprep.subr.bf16.mxu0 %v2954
        %3489 = vmatpush1.bf16.msra.mxu0 %v2953
        %3490 = vmatprep.subr.bf16.mxu0 %v2964
        %3491 = vmatpush1.bf16.msra.mxu0 %v2963
        %3492 = vmatprep.subr.bf16.mxu0 %v2974
        %3493 = vmatpush1.bf16.msra.mxu0 %v2973
        %3494 = vmatprep.subr.bf16.mxu0 %v2984
        %3495 = vmatpush1.bf16.msra.mxu0 %v2983
        %3496 = vmatprep.subr.bf16.mxu0 %v2994
        %3497 = vmatpush1.bf16.msra.mxu0 %v2993
        %3498 = vmatprep.subr.bf16.mxu0 %v3004
        %3499 = vmatpush1.bf16.msra.mxu0 %v3003
        %3500 = vmatprep.subr.bf16.mxu0 %v3014
        %3501 = vmatpush1.bf16.msra.mxu0 %v3013
        %3502 = vmatprep.mubr.bf16.mxu0 %v1420
        %3503 = vmatmul.mubr.bf16.gmra.mrb[0].mxu0 %v1419
        %v3504 = vpop.f32.mrb[0].mxu0
        %v3505 = vadd.f32 %v3462, %v3504
        %v3506 = vpop.f32.mrb[0].mxu0
        %v3507 = vadd.f32 %v3464, %v3506
        %v3508 = vpop.f32.mrb[0].mxu0
        %v3509 = vadd.f32 %v3466, %v3508
        %v3510 = vpop.f32.mrb[0].mxu0
        %v3511 = vadd.f32 %v3468, %v3510
        %3512 = vdwg.mxu0
        %3513 = vmatprep.subr.bf16.mxu0 %v2706
        %3514 = vmatpush1.bf16.msra.mxu0 %v2705
        %3515 = vmatprep.subr.bf16.mxu0 %v2716
        %3516 = vmatpush1.bf16.msra.mxu0 %v2715
        %3517 = vmatprep.subr.bf16.mxu0 %v2726
        %3518 = vmatpush1.bf16.msra.mxu0 %v2725
        %3519 = vmatprep.subr.bf16.mxu0 %v2736
        %3520 = vmatpush1.bf16.msra.mxu0 %v2735
        %3521 = vmatprep.subr.bf16.mxu0 %v2746
        %3522 = vmatpush1.bf16.msra.mxu0 %v2745
        %3523 = vmatprep.subr.bf16.mxu0 %v2756
        %3524 = vmatpush1.bf16.msra.mxu0 %v2755
        %3525 = vmatprep.subr.bf16.mxu0 %v2766
        %3526 = vmatpush1.bf16.msra.mxu0 %v2765
        %3527 = vmatprep.subr.bf16.mxu0 %v2776
        %3528 = vmatpush1.bf16.msra.mxu0 %v2775
        %3529 = vmatprep.subr.bf16.mxu0 %v2786
        %3530 = vmatpush1.bf16.msra.mxu0 %v2785
        %3531 = vmatprep.subr.bf16.mxu0 %v2796
        %3532 = vmatpush1.bf16.msra.mxu0 %v2795
        %3533 = vmatprep.subr.bf16.mxu0 %v2806
        %3534 = vmatpush1.bf16.msra.mxu0 %v2805
        %3535 = vmatprep.subr.bf16.mxu0 %v2816
        %3536 = vmatpush1.bf16.msra.mxu0 %v2815
        %3537 = vmatprep.subr.bf16.mxu0 %v2826
        %3538 = vmatpush1.bf16.msra.mxu0 %v2825
        %3539 = vmatprep.subr.bf16.mxu0 %v2836
        %3540 = vmatpush1.bf16.msra.mxu0 %v2835
        %3541 = vmatprep.subr.bf16.mxu0 %v2846
        %3542 = vmatpush1.bf16.msra.mxu0 %v2845
        %3543 = vmatprep.subr.bf16.mxu0 %v2856
        %3544 = vmatpush1.bf16.msra.mxu0 %v2855
        %3545 = vmatprep.mubr.bf16.mxu0 %v1418
        %3546 = vmatmul.mubr.bf16.gmra.mrb[0].mxu0 %v1417
        %v3547 = vpop.f32.mrb[0].mxu0
        %v3548 = vadd.f32 0.0, %v3547
        %v3549 = vpop.f32.mrb[0].mxu0
        %v3550 = vadd.f32 0.0, %v3549
        %v3551 = vpop.f32.mrb[0].mxu0
        %v3552 = vadd.f32 0.0, %v3551
        %v3553 = vpop.f32.mrb[0].mxu0
        %v3554 = vadd.f32 0.0, %v3553
        %3555 = vdwg.mxu0
        %3556 = vmatprep.subr.bf16.mxu0 %v2866
        %3557 = vmatpush1.bf16.msra.mxu0 %v2865
        %3558 = vmatprep.subr.bf16.mxu0 %v2876
        %3559 = vmatpush1.bf16.msra.mxu0 %v2875
        %3560 = vmatprep.subr.bf16.mxu0 %v2886
        %3561 = vmatpush1.bf16.msra.mxu0 %v2885
        %3562 = vmatprep.subr.bf16.mxu0 %v2896
        %3563 = vmatpush1.bf16.msra.mxu0 %v2895
        %3564 = vmatprep.subr.bf16.mxu0 %v2906
        %3565 = vmatpush1.bf16.msra.mxu0 %v2905
        %3566 = vmatprep.subr.bf16.mxu0 %v2916
        %3567 = vmatpush1.bf16.msra.mxu0 %v2915
        %3568 = vmatprep.subr.bf16.mxu0 %v2926
        %3569 = vmatpush1.bf16.msra.mxu0 %v2925
        %3570 = vmatprep.subr.bf16.mxu0 %v2936
        %3571 = vmatpush1.bf16.msra.mxu0 %v2935
        %3572 = vmatprep.subr.bf16.mxu0 %v2946
        %3573 = vmatpush1.bf16.msra.mxu0 %v2945
        %3574 = vmatprep.subr.bf16.mxu0 %v2956
        %3575 = vmatpush1.bf16.msra.mxu0 %v2955
        %3576 = vmatprep.subr.bf16.mxu0 %v2966
        %3577 = vmatpush1.bf16.msra.mxu0 %v2965
        %3578 = vmatprep.subr.bf16.mxu0 %v2976
        %3579 = vmatpush1.bf16.msra.mxu0 %v2975
        %3580 = vmatprep.subr.bf16.mxu0 %v2986
        %3581 = vmatpush1.bf16.msra.mxu0 %v2985
        %3582 = vmatprep.subr.bf16.mxu0 %v2996
        %3583 = vmatpush1.bf16.msra.mxu0 %v2995
        %3584 = vmatprep.subr.bf16.mxu0 %v3006
        %3585 = vmatpush1.bf16.msra.mxu0 %v3005
        %3586 = vmatprep.subr.bf16.mxu0 %v3016
        %3587 = vmatpush1.bf16.msra.mxu0 %v3015
        %3588 = vmatprep.mubr.bf16.mxu0 %v1420
        %3589 = vmatmul.mubr.bf16.gmra.mrb[0].mxu0 %v1419
        %v3590 = vpop.f32.mrb[0].mxu0
        %v3591 = vadd.f32 %v3548, %v3590
        %v3592 = vpop.f32.mrb[0].mxu0
        %v3593 = vadd.f32 %v3550, %v3592
        %v3594 = vpop.f32.mrb[0].mxu0
        %v3595 = vadd.f32 %v3552, %v3594
        %v3596 = vpop.f32.mrb[0].mxu0
        %v3597 = vadd.f32 %v3554, %v3596
        %3598 = vdwg.mxu0
        %3599 = vmatprep.subr.bf16.mxu0 %v2708
        %3600 = vmatpush1.bf16.msra.mxu0 %v2707
        %3601 = vmatprep.subr.bf16.mxu0 %v2718
        %3602 = vmatpush1.bf16.msra.mxu0 %v2717
        %3603 = vmatprep.subr.bf16.mxu0 %v2728
        %3604 = vmatpush1.bf16.msra.mxu0 %v2727
        %3605 = vmatprep.subr.bf16.mxu0 %v2738
        %3606 = vmatpush1.bf16.msra.mxu0 %v2737
        %3607 = vmatprep.subr.bf16.mxu0 %v2748
        %3608 = vmatpush1.bf16.msra.mxu0 %v2747
        %3609 = vmatprep.subr.bf16.mxu0 %v2758
        %3610 = vmatpush1.bf16.msra.mxu0 %v2757
        %3611 = vmatprep.subr.bf16.mxu0 %v2768
        %3612 = vmatpush1.bf16.msra.mxu0 %v2767
        %3613 = vmatprep.subr.bf16.mxu0 %v2778
        %3614 = vmatpush1.bf16.msra.mxu0 %v2777
        %3615 = vmatprep.subr.bf16.mxu0 %v2788
        %3616 = vmatpush1.bf16.msra.mxu0 %v2787
        %3617 = vmatprep.subr.bf16.mxu0 %v2798
        %3618 = vmatpush1.bf16.msra.mxu0 %v2797
        %3619 = vmatprep.subr.bf16.mxu0 %v2808
        %3620 = vmatpush1.bf16.msra.mxu0 %v2807
        %3621 = vmatprep.subr.bf16.mxu0 %v2818
        %3622 = vmatpush1.bf16.msra.mxu0 %v2817
        %3623 = vmatprep.subr.bf16.mxu0 %v2828
        %3624 = vmatpush1.bf16.msra.mxu0 %v2827
        %3625 = vmatprep.subr.bf16.mxu0 %v2838
        %3626 = vmatpush1.bf16.msra.mxu0 %v2837
        %3627 = vmatprep.subr.bf16.mxu0 %v2848
        %3628 = vmatpush1.bf16.msra.mxu0 %v2847
        %3629 = vmatprep.subr.bf16.mxu0 %v2858
        %3630 = vmatpush1.bf16.msra.mxu0 %v2857
        %3631 = vmatprep.mubr.bf16.mxu0 %v1418
        %3632 = vmatmul.mubr.bf16.gmra.mrb[0].mxu0 %v1417
        %v3633 = vpop.f32.mrb[0].mxu0
        %v3634 = vadd.f32 0.0, %v3633
        %v3635 = vpop.f32.mrb[0].mxu0
        %v3636 = vadd.f32 0.0, %v3635
        %v3637 = vpop.f32.mrb[0].mxu0
        %v3638 = vadd.f32 0.0, %v3637
        %v3639 = vpop.f32.mrb[0].mxu0
        %v3640 = vadd.f32 0.0, %v3639
        %3641 = vdwg.mxu0
        %3642 = vmatprep.subr.bf16.mxu0 %v2868
        %3643 = vmatpush1.bf16.msra.mxu0 %v2867
        %3644 = vmatprep.subr.bf16.mxu0 %v2878
        %3645 = vmatpush1.bf16.msra.mxu0 %v2877
        %3646 = vmatprep.subr.bf16.mxu0 %v2888
        %3647 = vmatpush1.bf16.msra.mxu0 %v2887
        %3648 = vmatprep.subr.bf16.mxu0 %v2898
        %3649 = vmatpush1.bf16.msra.mxu0 %v2897
        %3650 = vmatprep.subr.bf16.mxu0 %v2908
        %3651 = vmatpush1.bf16.msra.mxu0 %v2907
        %3652 = vmatprep.subr.bf16.mxu0 %v2918
        %3653 = vmatpush1.bf16.msra.mxu0 %v2917
        %3654 = vmatprep.subr.bf16.mxu0 %v2928
        %3655 = vmatpush1.bf16.msra.mxu0 %v2927
        %3656 = vmatprep.subr.bf16.mxu0 %v2938
        %3657 = vmatpush1.bf16.msra.mxu0 %v2937
        %3658 = vmatprep.subr.bf16.mxu0 %v2948
        %3659 = vmatpush1.bf16.msra.mxu0 %v2947
        %3660 = vmatprep.subr.bf16.mxu0 %v2958
        %3661 = vmatpush1.bf16.msra.mxu0 %v2957
        %3662 = vmatprep.subr.bf16.mxu0 %v2968
        %3663 = vmatpush1.bf16.msra.mxu0 %v2967
        %3664 = vmatprep.subr.bf16.mxu0 %v2978
        %3665 = vmatpush1.bf16.msra.mxu0 %v2977
        %3666 = vmatprep.subr.bf16.mxu0 %v2988
        %3667 = vmatpush1.bf16.msra.mxu0 %v2987
        %3668 = vmatprep.subr.bf16.mxu0 %v2998
        %3669 = vmatpush1.bf16.msra.mxu0 %v2997
        %3670 = vmatprep.subr.bf16.mxu0 %v3008
        %3671 = vmatpush1.bf16.msra.mxu0 %v3007
        %3672 = vmatprep.subr.bf16.mxu0 %v3018
        %3673 = vmatpush1.bf16.msra.mxu0 %v3017
        %3674 = vmatprep.mubr.bf16.mxu0 %v1420
        %3675 = vmatmul.mubr.bf16.gmra.mrb[0].mxu0 %v1419
        %v3676 = vpop.f32.mrb[0].mxu0
        %v3677 = vadd.f32 %v3634, %v3676
        %v3678 = vpop.f32.mrb[0].mxu0
        %v3679 = vadd.f32 %v3636, %v3678
        %v3680 = vpop.f32.mrb[0].mxu0
        %v3681 = vadd.f32 %v3638, %v3680
        %v3682 = vpop.f32.mrb[0].mxu0
        %v3683 = vadd.f32 %v3640, %v3682
        %3684 = vdwg.mxu0
        %3685 = vmatprep.subr.bf16.mxu0 %v2710
        %3686 = vmatpush1.bf16.msra.mxu0 %v2709
        %3687 = vmatprep.subr.bf16.mxu0 %v2720
        %3688 = vmatpush1.bf16.msra.mxu0 %v2719
        %3689 = vmatprep.subr.bf16.mxu0 %v2730
        %3690 = vmatpush1.bf16.msra.mxu0 %v2729
        %3691 = vmatprep.subr.bf16.mxu0 %v2740
        %3692 = vmatpush1.bf16.msra.mxu0 %v2739
        %3693 = vmatprep.subr.bf16.mxu0 %v2750
        %3694 = vmatpush1.bf16.msra.mxu0 %v2749
        %3695 = vmatprep.subr.bf16.mxu0 %v2760
        %3696 = vmatpush1.bf16.msra.mxu0 %v2759
        %3697 = vmatprep.subr.bf16.mxu0 %v2770
        %3698 = vmatpush1.bf16.msra.mxu0 %v2769
        %3699 = vmatprep.subr.bf16.mxu0 %v2780
        %3700 = vmatpush1.bf16.msra.mxu0 %v2779
        %3701 = vmatprep.subr.bf16.mxu0 %v2790
        %3702 = vmatpush1.bf16.msra.mxu0 %v2789
        %3703 = vmatprep.subr.bf16.mxu0 %v2800
        %3704 = vmatpush1.bf16.msra.mxu0 %v2799
        %3705 = vmatprep.subr.bf16.mxu0 %v2810
        %3706 = vmatpush1.bf16.msra.mxu0 %v2809
        %3707 = vmatprep.subr.bf16.mxu0 %v2820
        %3708 = vmatpush1.bf16.msra.mxu0 %v2819
        %3709 = vmatprep.subr.bf16.mxu0 %v2830
        %3710 = vmatpush1.bf16.msra.mxu0 %v2829
        %3711 = vmatprep.subr.bf16.mxu0 %v2840
        %3712 = vmatpush1.bf16.msra.mxu0 %v2839
        %3713 = vmatprep.subr.bf16.mxu0 %v2850
        %3714 = vmatpush1.bf16.msra.mxu0 %v2849
        %3715 = vmatprep.subr.bf16.mxu0 %v2860
        %3716 = vmatpush1.bf16.msra.mxu0 %v2859
        %3717 = vmatprep.mubr.bf16.mxu0 %v1418
        %3718 = vmatmul.mubr.bf16.gmra.mrb[0].mxu0 %v1417
        %v3719 = vpop.f32.mrb[0].mxu0
        %v3720 = vadd.f32 0.0, %v3719
        %v3721 = vpop.f32.mrb[0].mxu0
        %v3722 = vadd.f32 0.0, %v3721
        %v3723 = vpop.f32.mrb[0].mxu0
        %v3724 = vadd.f32 0.0, %v3723
        %v3725 = vpop.f32.mrb[0].mxu0
        %v3726 = vadd.f32 0.0, %v3725
        %3727 = vdwg.mxu0
        %3728 = vmatprep.subr.bf16.mxu0 %v2870
        %3729 = vmatpush1.bf16.msra.mxu0 %v2869
        %3730 = vmatprep.subr.bf16.mxu0 %v2880
        %3731 = vmatpush1.bf16.msra.mxu0 %v2879
        %3732 = vmatprep.subr.bf16.mxu0 %v2890
        %3733 = vmatpush1.bf16.msra.mxu0 %v2889
        %3734 = vmatprep.subr.bf16.mxu0 %v2900
        %3735 = vmatpush1.bf16.msra.mxu0 %v2899
        %3736 = vmatprep.subr.bf16.mxu0 %v2910
        %3737 = vmatpush1.bf16.msra.mxu0 %v2909
        %3738 = vmatprep.subr.bf16.mxu0 %v2920
        %3739 = vmatpush1.bf16.msra.mxu0 %v2919
        %3740 = vmatprep.subr.bf16.mxu0 %v2930
        %3741 = vmatpush1.bf16.msra.mxu0 %v2929
        %3742 = vmatprep.subr.bf16.mxu0 %v2940
        %3743 = vmatpush1.bf16.msra.mxu0 %v2939
        %3744 = vmatprep.subr.bf16.mxu0 %v2950
        %3745 = vmatpush1.bf16.msra.mxu0 %v2949
        %3746 = vmatprep.subr.bf16.mxu0 %v2960
        %3747 = vmatpush1.bf16.msra.mxu0 %v2959
        %3748 = vmatprep.subr.bf16.mxu0 %v2970
        %3749 = vmatpush1.bf16.msra.mxu0 %v2969
        %3750 = vmatprep.subr.bf16.mxu0 %v2980
        %3751 = vmatpush1.bf16.msra.mxu0 %v2979
        %3752 = vmatprep.subr.bf16.mxu0 %v2990
        %3753 = vmatpush1.bf16.msra.mxu0 %v2989
        %3754 = vmatprep.subr.bf16.mxu0 %v3000
        %3755 = vmatpush1.bf16.msra.mxu0 %v2999
        %3756 = vmatprep.subr.bf16.mxu0 %v3010
        %3757 = vmatpush1.bf16.msra.mxu0 %v3009
        %3758 = vmatprep.subr.bf16.mxu0 %v3020
        %3759 = vmatpush1.bf16.msra.mxu0 %v3019
        %3760 = vmatprep.mubr.bf16.mxu0 %v1420
        %3761 = vmatmul.mubr.bf16.gmra.mrb[0].mxu0 %v1419
        %v3762 = vpop.f32.mrb[0].mxu0
        %v3763 = vadd.f32 %v3720, %v3762
        %v3764 = vpop.f32.mrb[0].mxu0
        %v3765 = vadd.f32 %v3722, %v3764
        %v3766 = vpop.f32.mrb[0].mxu0
        %v3767 = vadd.f32 %v3724, %v3766
        %v3768 = vpop.f32.mrb[0].mxu0
        %v3769 = vadd.f32 %v3726, %v3768
        %3770 = vdwg.mxu0
        %v3771 = vld [vmem:[#allocation18] sm:$0xff]
        %v3772 = vld [vmem:[#allocation18 + $0x8] sm:$0x3]
        %v3775 = vlaneseq
        %v3776 = vshrl.u32 %v3775, 7
        %v3777 = vsub.s32 0, %v3776
        %v3778 = vrot.slane %v3771, %v3777
        %v3779 = vlaneseq
        %v3780 = vshrl.u32 %v3779, 7
        %v3781 = vsub.s32 1, %v3780
        %v3782 = vrot.slane %v3771, %v3781
        %v3783 = vlaneseq
        %v3784 = vshrl.u32 %v3783, 7
        %v3785 = vsub.s32 2, %v3784
        %v3786 = vrot.slane %v3771, %v3785
        %v3787 = vlaneseq
        %v3788 = vshrl.u32 %v3787, 7
        %v3789 = vsub.s32 3, %v3788
        %v3790 = vrot.slane %v3771, %v3789
        %v3791 = vlaneseq
        %v3792 = vshrl.u32 %v3791, 7
        %v3793 = vsub.s32 4, %v3792
        %v3794 = vrot.slane %v3771, %v3793
        %v3795 = vlaneseq
        %v3796 = vshrl.u32 %v3795, 7
        %v3797 = vsub.s32 5, %v3796
        %v3798 = vrot.slane %v3771, %v3797
        %v3799 = vlaneseq
        %v3800 = vshrl.u32 %v3799, 7
        %v3801 = vsub.s32 6, %v3800
        %v3802 = vrot.slane %v3771, %v3801
        %v3803 = vlaneseq
        %v3804 = vshrl.u32 %v3803, 7
        %v3805 = vsub.s32 7, %v3804
        %v3806 = vrot.slane %v3771, %v3805
        %v3807 = vlaneseq
        %v3808 = vshrl.u32 %v3807, 7
        %v3809 = vsub.s32 0, %v3808
        %v3810 = vrot.slane %v3772, %v3809
        %v3811 = vlaneseq
        %v3812 = vshrl.u32 %v3811, 7
        %v3813 = vsub.s32 1, %v3812
        %v3814 = vrot.slane %v3772, %v3813
        %v3825 = vmul.f32 %v3419, %v3778
        %v3826 = vmul.f32 %v3421, %v3782
        %v3827 = vmul.f32 %v3505, %v3786
        %v3828 = vmul.f32 %v3507, %v3790
        %v3829 = vmul.f32 %v3591, %v3794
        %v3830 = vmul.f32 %v3593, %v3798
        %v3831 = vmul.f32 %v3677, %v3802
        %v3832 = vmul.f32 %v3679, %v3806
        %v3833 = vmul.f32 %v3763, %v3810
        %v3834 = vmul.f32 %v3765, %v3814
        %v3835 = vmul.f32 %v3423, %v3778
        %v3836 = vmul.f32 %v3425, %v3782
        %v3837 = vmul.f32 %v3509, %v3786
        %v3838 = vmul.f32 %v3511, %v3790
        %v3839 = vmul.f32 %v3595, %v3794
        %v3840 = vmul.f32 %v3597, %v3798
        %v3841 = vmul.f32 %v3681, %v3802
        %v3842 = vmul.f32 %v3683, %v3806
        %v3843 = vmul.f32 %v3767, %v3810
        %v3844 = vmul.f32 %v3769, %v3814
        %v3845 = vld [vmem:[#allocation19] sm:$0xff]
        %v3846 = vld [vmem:[#allocation19 + $0x8] sm:$0x3]
        %v3849 = vlaneseq
        %v3850 = vshrl.u32 %v3849, 7
        %v3851 = vsub.s32 0, %v3850
        %v3852 = vrot.slane %v3845, %v3851
        %v3853 = vlaneseq
        %v3854 = vshrl.u32 %v3853, 7
        %v3855 = vsub.s32 1, %v3854
        %v3856 = vrot.slane %v3845, %v3855
        %v3857 = vlaneseq
        %v3858 = vshrl.u32 %v3857, 7
        %v3859 = vsub.s32 2, %v3858
        %v3860 = vrot.slane %v3845, %v3859
        %v3861 = vlaneseq
        %v3862 = vshrl.u32 %v3861, 7
        %v3863 = vsub.s32 3, %v3862
        %v3864 = vrot.slane %v3845, %v3863
        %v3865 = vlaneseq
        %v3866 = vshrl.u32 %v3865, 7
        %v3867 = vsub.s32 4, %v3866
        %v3868 = vrot.slane %v3845, %v3867
        %v3869 = vlaneseq
        %v3870 = vshrl.u32 %v3869, 7
        %v3871 = vsub.s32 5, %v3870
        %v3872 = vrot.slane %v3845, %v3871
        %v3873 = vlaneseq
        %v3874 = vshrl.u32 %v3873, 7
        %v3875 = vsub.s32 6, %v3874
        %v3876 = vrot.slane %v3845, %v3875
        %v3877 = vlaneseq
        %v3878 = vshrl.u32 %v3877, 7
        %v3879 = vsub.s32 7, %v3878
        %v3880 = vrot.slane %v3845, %v3879
        %v3881 = vlaneseq
        %v3882 = vshrl.u32 %v3881, 7
        %v3883 = vsub.s32 0, %v3882
        %v3884 = vrot.slane %v3846, %v3883
        %v3885 = vlaneseq
        %v3886 = vshrl.u32 %v3885, 7
        %v3887 = vsub.s32 1, %v3886
        %v3888 = vrot.slane %v3846, %v3887
        %v3899 = vadd.f32 %v3825, %v3852
        %v3900 = vadd.f32 %v3826, %v3856
        %v3901 = vadd.f32 %v3827, %v3860
        %v3902 = vadd.f32 %v3828, %v3864
        %v3903 = vadd.f32 %v3829, %v3868
        %v3904 = vadd.f32 %v3830, %v3872
        %v3905 = vadd.f32 %v3831, %v3876
        %v3906 = vadd.f32 %v3832, %v3880
        %v3907 = vadd.f32 %v3833, %v3884
        %v3908 = vadd.f32 %v3834, %v3888
        %v3909 = vadd.f32 %v3835, %v3852
        %v3910 = vadd.f32 %v3836, %v3856
        %v3911 = vadd.f32 %v3837, %v3860
        %v3912 = vadd.f32 %v3838, %v3864
        %v3913 = vadd.f32 %v3839, %v3868
        %v3914 = vadd.f32 %v3840, %v3872
        %v3915 = vadd.f32 %v3841, %v3876
        %v3916 = vadd.f32 %v3842, %v3880
        %v3917 = vadd.f32 %v3843, %v3884
        %v3918 = vadd.f32 %v3844, %v3888
        %3919 = vst [vmem:[%s599] sm:$0xff] %v3899
        %3920 = vst [vmem:[%s599 + $0x8] sm:$0xff] %v3900
        %3921 = vst [vmem:[%s599 + $0x10] sm:$0xff] %v3901
        %3922 = vst [vmem:[%s599 + $0x18] sm:$0xff] %v3902
        %3923 = vst [vmem:[%s599 + $0x20] sm:$0xff] %v3903
        %3924 = vst [vmem:[%s599 + $0x28] sm:$0xff] %v3904
        %3925 = vst [vmem:[%s599 + $0x30] sm:$0xff] %v3905
        %3926 = vst [vmem:[%s599 + $0x38] sm:$0xff] %v3906
        %3927 = vst [vmem:[%s599 + $0x40] sm:$0xff] %v3907
        %3928 = vst [vmem:[%s599 + $0x48] sm:$0xff] %v3908
        %3929 = vst [vmem:[%s599 + $0x50] sm:$0xff] %v3909
        %3930 = vst [vmem:[%s599 + $0x58] sm:$0xff] %v3910
        %3931 = vst [vmem:[%s599 + $0x60] sm:$0xff] %v3911
        %3932 = vst [vmem:[%s599 + $0x68] sm:$0xff] %v3912
        %3933 = vst [vmem:[%s599 + $0x70] sm:$0xff] %v3913
        %3934 = vst [vmem:[%s599 + $0x78] sm:$0xff] %v3914
        %3935 = vst [vmem:[%s599 + $0x80] sm:$0xff] %v3915
        %3936 = vst [vmem:[%s599 + $0x88] sm:$0xff] %v3916
        %3937 = vst [vmem:[%s599 + $0x90] sm:$0xff] %v3917
        %3938 = vst [vmem:[%s599 + $0x98] sm:$0xff] %v3918
        %p3939 = scmp.lt.s32.totalorder %s31, 1
        %s3940 = scalar_select %p3939, %s31, 1
        %s3941 = smul.addr %s3940, 20
        %s3942 = smul.addr %s3941, 8
        %s3943 = scalar_lea.vmem %s13, %s3942
        // Predicated region
        $region121: #{segmentation_vit_forward.3} parent=71 // pred_check
          %p3944 = pneg %p327
        $region122: #{segmentation_vit_forward.3} parent=71 // pred_check_branch
          %3946 = sbr.rel (%p3944) target = $region124
        $region123: #{segmentation_vit_forward.3} parent=71 // pred_region
          _
        $region124: #{segmentation_vit_forward.3} parent=71 // pred_fallthru
          _
      $region72: #{segmentation_vit_forward.3} parent=5 // pred_fallthru
        _
      %p3947 = scmp.le.s32.totalorder 2, %s26
      // Predicated region
      $region125: #{segmentation_vit_forward.3} parent=5 // pred_check
        %p3948 = pneg %p3947
      $region126: #{segmentation_vit_forward.3} parent=5 // pred_check_branch
        %3950 = sbr.rel (%p3948) target = $region128
      $region127: #{segmentation_vit_forward.3} parent=5 // pred_region
        %s3951 = ssub.s32 %s26, 2
        // Predicated region
        $region129: #{segmentation_vit_forward.3} parent=127 // pred_check
          %p3952 = pneg %p333
        $region130: #{segmentation_vit_forward.3} parent=127 // pred_check_branch
          %3954 = sbr.rel (%p3952) target = $region132
        $region131: #{segmentation_vit_forward.3} parent=127 // pred_region
          %p3955 = scmp.lt.s32.totalorder %s32, 1
          %s3956 = scalar_select %p3955, %s32, 1
          %s3957 = smul.addr %s3956, 20
          %s3958 = smul.addr %s3957, 8
          %s3959 = scalar_lea.vmem %s13, %s3958
        $region132: #{segmentation_vit_forward.3} parent=127 // pred_fallthru
          _
      $region128: #{segmentation_vit_forward.3} parent=5 // pred_fallthru
        _
    $region6: #{segmentation_vit_forward.3} parent=1 // loop_footer
      %s30 = sadd.s32 1, %s26
    $region7: #{segmentation_vit_forward.3} parent=1 // loop_footer_branch
      %25 = sbr.rel target = $region3
    $region8: #{segmentation_vit_forward.3} parent=1 // loop_exit
      _
    %3960 = vsyncpa [#allocation3], 1
    %s3961 = scalar_lea.sflag [#allocation3], 1
    %3962 = vsyncpa %s3961, 1
    %3963 = vsyncpa [#allocation5], 1
    %3964 = vsyncpa [#allocation8], 1
    %3965 = vsyncpa [#allocation11], 1
    %3966 = vsyncpa [#allocation14], 1
    %3967 = vsyncpa [#allocation17], 1
    %3968 = vsyncpa [#allocation20], 1

</llo_original>
